<compile_context>
chip_gen: v7x
topology: tpu7x:2x2x1
jax: 0.10.0
libtpu: 0.0.40
codegen_flags: <defaults>
</compile_context>

<pallas_src>
import jax
import jax.numpy as jnp
from jax.experimental import pallas as pl
from jax.experimental.pallas import tpu as pltpu

EPS = 1e-5
GROUPS = [1, 1, 1, 1]              # one BasicBlock per stage (small config)
TASKCLA = [(0, 5), (1, 5)]         # len(taskcla) == num_tasks == 2

_SMALL_M = 512                     # below this: epilogue stays fused in XLA
_TINY_M = 32                       # below this: whole conv stays in XLA


def _vmem_limit_bytes():
    # Generation-aware VMEM request (~75% of physical): v7x 64 MiB -> 48 MiB,
    # v5e/v6e 128 MiB -> 96 MiB. Conservative fallback if the query fails.
    try:
        cap = pltpu.get_tpu_info().vmem_capacity_bytes
        return int(cap) * 3 // 4
    except Exception:
        return 48 * 1024 * 1024


_VMEM_LIMIT = _vmem_limit_bytes()


def _round_up(v, m):
    return (v + m - 1) // m * m


def _block_cfgs():
    cfgs = []
    for out_ch, n_blocks, first_stride in [(64, GROUPS[0], 1), (128, GROUPS[1], 2),
                                           (256, GROUPS[2], 2), (512, GROUPS[3], 2)]:
        for st in [first_stride] + [1] * (n_blocks - 1):
            cfgs.append((out_ch, st))
    return cfgs


BLOCK_CFGS = _block_cfgs()         # static (out_channels, stride) per BasicBlock


# ---------------------------------------------------------------------------
# Pallas kernels
# ---------------------------------------------------------------------------
def _matmul_stats_kernel(p_ref, w_ref, y_ref, st_ref):
    """One M-tile: bf16 matmul (f32 MXU acc) -> bf16 y + f32 partial BN stats."""
    y = jnp.dot(p_ref[...], w_ref[...], preferred_element_type=jnp.float32)
    y_ref[...] = y.astype(y_ref.dtype)                 # bf16 intermediate to HBM
    cp = y.shape[1]
    s = jnp.broadcast_to(jnp.sum(y, axis=0, keepdims=True), (8, cp))
    q = jnp.broadcast_to(jnp.sum(y * y, axis=0, keepdims=True), (8, cp))
    rows = jax.lax.broadcasted_iota(jnp.int32, (8, cp), 0)
    st_ref[...] = jnp.where(rows < 4, s, q)            # rows 0-3: sum, rows 4-7: sumsq


def _make_finalize_kernel(has_res):
    """One M-tile: y*scale + shift (+res), per-channel relu flag, HAT mask -> bf16."""
    def kernel(y_ref, pb_ref, *rest):
        if has_res:
            res_ref, o_ref = rest
        else:
            (o_ref,) = rest
        y = y_ref[...].astype(jnp.float32)
        scale = pb_ref[0:1, :]
        shift = pb_ref[1:2, :]
        rflag = pb_ref[2:3, :]
        msk = pb_ref[3:4, :]
        out = y * scale + shift
        if has_res:
            out = out + res_ref[...].astype(jnp.float32)
        out = jnp.where(rflag > 0.5, jnp.maximum(out, 0.0), out)
        o_ref[...] = (out * msk).astype(o_ref.dtype)
    return kernel


# ---------------------------------------------------------------------------
# Fused conv(im2col-matmul) + BN(train) + [residual] + [relu flag] + [mask]
# ---------------------------------------------------------------------------
def conv_bn_matmul(patches, w_mat, gamma, beta, relu_flag, mask, residual=None):
    """patches [M, K] bf16, w_mat [K, C] -> [M, C] bf16 (training-mode BN applied)."""
    M, K = patches.shape
    C = w_mat.shape[1]

    # --- tiny layers (stage 3/4 at this size): whole conv fused in XLA ----------
    if M <= _TINY_M:
        y = jnp.dot(patches, w_mat.astype(jnp.bfloat16),
                    preferred_element_type=jnp.float32)
        mean = jnp.mean(y, axis=0)
        var = jnp.maximum(jnp.mean(y * y, axis=0) - mean * mean, 0.0)
        scale = gamma * jax.lax.rsqrt(var + EPS)
        shift = beta - mean * scale
        out = y * scale + shift
        if residual is not None:
            out = out + residual.astype(jnp.float32)
        out = jnp.where(relu_flag > 0.5, jnp.maximum(out, 0.0), out)
        return (out * mask).astype(jnp.bfloat16)

    Kp = _round_up(K, 128)
    Cp = max(128, _round_up(C, 128))
    # >= 2 grid steps whenever possible (v7x: both TCs; all gens: pipelining),
    # tiles kept >= 256 rows to stay above the per-step-overhead cliff.
    if M >= 1024:
        Tm = 512
    elif M >= 512:
        Tm = 256
    else:
        Tm = _round_up(M, 16)          # bf16 output block: sublane multiple of 16
    Mp = _round_up(M, Tm)
    n_tiles = Mp // Tm

    # zero-padded, lane/MXU aligned bf16 operands (zeros do not perturb BN stats).
    # Skip the pad copy when shapes are already aligned (all Cin>=128 layers).
    p = patches if (Mp == M and Kp == K) else jnp.pad(patches,
                                                      ((0, Mp - M), (0, Kp - K)))
    w = w_mat.astype(jnp.bfloat16)
    if Kp != K or Cp != C:
        w = jnp.pad(w, ((0, Kp - K), (0, Cp - C)))

    flops = 2 * Mp * Kp * Cp
    bytes_accessed = Mp * Kp * 2 + Kp * Cp * 2 + Mp * Cp * 2 + n_tiles * 8 * Cp * 4
    y, stats = pl.pallas_call(
        _matmul_stats_kernel,
        grid=(n_tiles,),
        in_specs=[pl.BlockSpec((Tm, Kp), lambda i: (i, 0)),
                  pl.BlockSpec((Kp, Cp), lambda i: (0, 0))],
        out_specs=[pl.BlockSpec((Tm, Cp), lambda i: (i, 0)),
                   pl.BlockSpec((8, Cp), lambda i: (i, 0))],
        out_shape=[jax.ShapeDtypeStruct((Mp, Cp), jnp.bfloat16),
                   jax.ShapeDtypeStruct((n_tiles * 8, Cp), jnp.float32)],
        compiler_params=pltpu.CompilerParams(
            dimension_semantics=("parallel",),
            vmem_limit_bytes=_VMEM_LIMIT),
        cost_estimate=pl.CostEstimate(flops=flops, transcendentals=0,
                                      bytes_accessed=bytes_accessed),
    )(p, w)

    # Global training-mode (biased) batch statistics from the per-tile partials.
    # Padded rows contribute zeros, so dividing by the true M stays exact.
    st = stats.reshape(n_tiles, 8, Cp)
    s_sum = jnp.sum(st[:, 0, :], axis=0)
    s_sq = jnp.sum(st[:, 4, :], axis=0)
    mean = s_sum / M
    # TODO(synk): E[x^2]-E[x]^2 in f32 can cancel for large-magnitude activations;
    # a shifted/Welford accumulation would give closer parity with PyTorch.
    var = jnp.maximum(s_sq / M - mean * mean, 0.0)

    gamma_p = jnp.pad(gamma, (0, Cp - C))
    beta_p = jnp.pad(beta, (0, Cp - C))
    scale = gamma_p * jax.lax.rsqrt(var + EPS)
    shift = beta_p - mean * scale

    if M < _SMALL_M:
        # Launch-overhead dominated layers: tiny epilogue stays fused in XLA.
        out = y[:M, :C].astype(jnp.float32) * scale[:C] + shift[:C]
        if residual is not None:
            out = out + residual.astype(jnp.float32)
        out = jnp.where(relu_flag > 0.5, jnp.maximum(out, 0.0), out)
        return (out * mask).astype(jnp.bfloat16)

    rflag_p = jnp.pad(relu_flag, (0, Cp - C))
    mask_p = jnp.pad(mask, (0, Cp - C))
    zeros = jnp.zeros_like(scale)
    pb = jnp.stack([scale, shift, rflag_p, mask_p, zeros, zeros, zeros, zeros], axis=0)

    inputs = [y, pb]
    in_specs = [pl.BlockSpec((Tm, Cp), lambda i: (i, 0)),
                pl.BlockSpec((8, Cp), lambda i: (0, 0))]
    if residual is not None:
        res_p = residual.astype(jnp.bfloat16)
        if Mp != M or Cp != C:
            res_p = jnp.pad(res_p, ((0, Mp - M), (0, Cp - C)))
        inputs.append(res_p)
        in_specs.append(pl.BlockSpec((Tm, Cp), lambda i: (i, 0)))

    out = pl.pallas_call(
        _make_finalize_kernel(residual is not None),
        grid=(n_tiles,),
        in_specs=in_specs,
        out_specs=pl.BlockSpec((Tm, Cp), lambda i: (i, 0)),
        out_shape=jax.ShapeDtypeStruct((Mp, Cp), jnp.bfloat16),
        compiler_params=pltpu.CompilerParams(
            dimension_semantics=("parallel",),
            vmem_limit_bytes=_VMEM_LIMIT),
    )(*inputs)
    return out[:M, :C]


# ---------------------------------------------------------------------------
# im2col (XLA glue, bf16) and conv wrappers
# ---------------------------------------------------------------------------
def _im2col(x, kh, kw, stride, pad):
    # x: [N, H, W, C] bf16 -> [N*Ho*Wo, kh*kw*C]
    N, H, W, C = x.shape
    xp = jnp.pad(x, ((0, 0), (pad, pad), (pad, pad), (0, 0)))
    Ho = (H + 2 * pad - kh) // stride + 1
    Wo = (W + 2 * pad - kw) // stride + 1
    cols = []
    for i in range(kh):
        for j in range(kw):
            cols.append(xp[:, i:i + stride * Ho:stride, j:j + stride * Wo:stride, :])
    patches = jnp.stack(cols, axis=3)                      # [N, Ho, Wo, kh*kw, C]
    return patches.reshape(N * Ho * Wo, kh * kw * C), (N, Ho, Wo)


def _conv_w_to_mat(w):
    # PyTorch conv layout [Cout, Cin, KH, KW] -> [KH*KW*Cin, Cout]
    Cout, Cin, KH, KW = w.shape
    return jnp.transpose(w, (2, 3, 1, 0)).reshape(KH * KW * Cin, Cout)


def conv_bn(x, w, gamma, beta, stride, pad, relu=True, residual=None, mask=None):
    Cout, Cin, KH, KW = w.shape
    patches, (N, Ho, Wo) = _im2col(x.astype(jnp.bfloat16), KH, KW, stride, pad)
    w_mat = _conv_w_to_mat(w)
    rflag = (jnp.ones if relu else jnp.zeros)((Cout,), jnp.float32)
    maskv = mask if mask is not None else jnp.ones((Cout,), jnp.float32)
    out = conv_bn_matmul(patches, w_mat, gamma, beta, rflag, maskv, residual)
    return out.reshape(N, Ho, Wo, Cout)


# ---------------------------------------------------------------------------
# MaxPool2d(3, 2, 1) + HAT mask, AdaptiveAvgPool2d((1,1)) -- plain JAX
# (pairwise max tree / mean: no 9x stack materialization, no extra launches)
# ---------------------------------------------------------------------------
def maxpool_mask(x, mask, ksize=3, stride=2, pad=1):
    N, H, W, C = x.shape
    xp = jnp.pad(x, ((0, 0), (pad, pad), (pad, pad), (0, 0)), constant_values=-1e30)
    Ho = (H + 2 * pad - ksize) // stride + 1
    Wo = (W + 2 * pad - ksize) // stride + 1
    out = None
    for i in range(ksize):
        for j in range(ksize):
            win = xp[:, i:i + stride * Ho:stride, j:j + stride * Wo:stride, :]
            out = win if out is None else jnp.maximum(out, win)
    out = out.astype(jnp.float32) * mask.reshape(1, 1, 1, C)
    return out.astype(jnp.bfloat16)


def global_avgpool(x):
    return jnp.mean(x.astype(jnp.float32), axis=(1, 2))


# ---------------------------------------------------------------------------
# Parameters (deterministic, matching the module's __init__ shapes/inits)
# ---------------------------------------------------------------------------
def kaiming_fanout(key, shape):
    fan_out = shape[0] * shape[2] * shape[3]
    return ((2.0 / fan_out) ** 0.5) * jax.random.normal(key, shape, jnp.float32)


def init_params(key):
    keys = jax.random.split(key, 64)
    ki = iter(range(64))
    params = {
        'conv1_w': kaiming_fanout(keys[next(ki)], (64, 3, 7, 7)),
        'bn1_g': jnp.ones((64,), jnp.float32),
        'bn1_b': jnp.zeros((64,), jnp.float32),
        'ec': jax.random.normal(keys[next(ki)], (len(TASKCLA), 64), jnp.float32),
    }
    blocks = []
    in_ch = 64
    for out_ch, st in BLOCK_CFGS:
        bp = {
            'conv1_w': kaiming_fanout(keys[next(ki)], (out_ch, in_ch, 3, 3)),
            'bn1_g': jnp.ones((out_ch,), jnp.float32),
            'bn1_b': jnp.zeros((out_ch,), jnp.float32),
            'conv2_w': kaiming_fanout(keys[next(ki)], (out_ch, out_ch, 3, 3)),
            'bn2_g': jnp.ones((out_ch,), jnp.float32),
            'bn2_b': jnp.zeros((out_ch,), jnp.float32),
            'ec1': jax.random.normal(keys[next(ki)], (len(TASKCLA), out_ch), jnp.float32),
            'ec2': jax.random.normal(keys[next(ki)], (len(TASKCLA), out_ch), jnp.float32),
        }
        if st != 1:
            bp['sc_w'] = kaiming_fanout(keys[next(ki)], (out_ch, in_ch, 1, 1))
            bp['sc_bn_g'] = jnp.ones((out_ch,), jnp.float32)
            bp['sc_bn_b'] = jnp.zeros((out_ch,), jnp.float32)
        blocks.append(bp)
        in_ch = out_ch
    params['blocks'] = blocks
    return params


# ---------------------------------------------------------------------------
# Model forward
# ---------------------------------------------------------------------------
def compute_masks(params, t, s):
    masks = [jax.nn.sigmoid(s * params['ec'][t])]
    for bp in params['blocks']:
        masks.append(jax.nn.sigmoid(s * bp['ec1'][t]))
        masks.append(jax.nn.sigmoid(s * bp['ec2'][t]))
    return masks


def basic_block(x, bp, stride, gc1, gc2):
    N, H, W, Cin = x.shape
    Cout = bp['conv1_w'].shape[0]
    if stride != 1:
        # Fuse conv1 (3x3, stride, pad 1) with the 1x1 stride-s downsample shortcut:
        # the shortcut's input pixels are exactly the centre tap of the 3x3 patches,
        # so one shared im2col + one matmul over concatenated output channels works
        # (and the wider Cp >= 256 output tile fills the 256-wide MXU on v6e/v7x).
        patches, (N, Ho, Wo) = _im2col(x.astype(jnp.bfloat16), 3, 3, stride, 1)
        w1 = _conv_w_to_mat(bp['conv1_w'])                        # [9*Cin, Cout]
        w_sc = jnp.zeros((9 * Cin, Cout), jnp.float32)
        w_sc = w_sc.at[4 * Cin:5 * Cin, :].set(bp['sc_w'][:, :, 0, 0].T)
        w_cat = jnp.concatenate([w1, w_sc], axis=1)               # [9*Cin, 2*Cout]
        gamma = jnp.concatenate([bp['bn1_g'], bp['sc_bn_g']])
        beta = jnp.concatenate([bp['bn1_b'], bp['sc_bn_b']])
        rflag = jnp.concatenate([jnp.ones((Cout,), jnp.float32),
                                 jnp.zeros((Cout,), jnp.float32)])   # relu only on conv1
        maskv = jnp.concatenate([gc1, jnp.ones((Cout,), jnp.float32)])
        both = conv_bn_matmul(patches, w_cat, gamma, beta, rflag, maskv)  # [M, 2*Cout]
        out = both[:, :Cout].reshape(N, Ho, Wo, Cout)
        sc = both[:, Cout:]                                       # shortcut, flat [M, Cout]
    else:
        out = conv_bn(x, bp['conv1_w'], bp['bn1_g'], bp['bn1_b'],
                      stride=1, pad=1, relu=True, mask=gc1)
        # Identity shortcut: stride-1 BasicBlocks always have Cin == Cout here.
        sc = x.reshape(N * H * W, Cin)
    # conv2 (BN, no act) + shortcut residual, ReLU, mask -- fused epilogue
    out = conv_bn(out, bp['conv2_w'], bp['bn2_g'], bp['bn2_b'],
                  stride=1, pad=1, relu=True, residual=sc, mask=gc2)
    return out


def resnet_forward(params, x_nchw, t, s=1.0):
    masks = compute_masks(params, t, s)
    x = jnp.transpose(x_nchw, (0, 2, 3, 1))                       # NCHW -> NHWC
    out = conv_bn(x, params['conv1_w'], params['bn1_g'], params['bn1_b'],
                  stride=2, pad=3, relu=True)                     # conv1 + BN + ReLU
    out = maxpool_mask(out, masks[0])                             # pool1 + mask_out
    mi = 1
    for (_, stride), bp in zip(BLOCK_CFGS, params['blocks']):
        out = basic_block(out, bp, stride, masks[mi], masks[mi + 1])
        mi += 2
    feat = global_avgpool(out)                                    # pool2 + flatten
    return feat, masks
    # TODO(synk): BatchNorm running-stat buffer updates (training-mode side effect)
    # are not materialized; only the forward output is reproduced.


if __name__ == "__main__":
    key = jax.random.PRNGKey(0)
    pkey, xkey = jax.random.split(key)
    params = init_params(pkey)
    x = jax.random.normal(xkey, (2, 3, 64, 64), jnp.float32)      # NCHW like PyTorch input
    fwd = jax.jit(resnet_forward)
    feat, masks = fwd(params, x, 0, 1.0)                          # task id 0
    jax.block_until_ready(feat)
    assert feat.shape == (2, 512)
    assert feat.dtype == jnp.float32
    assert len(masks) == 1 + 2 * len(params['blocks'])
    print("KERNEL_OK")
</pallas_src>

<mosaic_0001>
module attributes {stable_mosaic.version = 11 : i64} {
  func.func @_matmul_stats_kernel(%arg0: i32, %arg1: memref<512x256xbf16, #tpu.memory_space<vmem>>, %arg2: memref<256x128xbf16, #tpu.memory_space<vmem>>, %arg3: memref<512x128xbf16, #tpu.memory_space<vmem>>, %arg4: memref<8x128xf32, #tpu.memory_space<vmem>>) attributes {dimension_semantics = [#tpu.dimension_semantics<parallel>], iteration_bounds = array<i64: 4>, scalar_prefetch = 0 : i64, scratch_operands = 0 : i64, tpu.core_type = #tpu.core_type<tc>, window_params = [{transform_indices = @transform_0, window_bounds = array<i64: 512, 256>}, {pipeline_mode = #tpu.pipeline_mode<synchronous>, transform_indices = @transform_1, window_bounds = array<i64: 256, 128>}, {transform_indices = @transform_2, window_bounds = array<i64: 512, 128>}, {transform_indices = @transform_3, window_bounds = array<i64: 8, 128>}]} {
    %c0 = arith.constant 0 : index
    %c0_0 = arith.constant 0 : index
    %0 = vector.load %arg1[%c0, %c0_0] : memref<512x256xbf16, #tpu.memory_space<vmem>>, vector<512x256xbf16>
    %c0_1 = arith.constant 0 : index
    %c0_2 = arith.constant 0 : index
    %1 = vector.load %arg2[%c0_1, %c0_2] : memref<256x128xbf16, #tpu.memory_space<vmem>>, vector<256x128xbf16>
    %cst = arith.constant dense<0.000000e+00> : vector<512x128xf32>
    %2 = tpu.matmul %0, %1, %cst {dimension_numbers = #tpu.dot_dimension_numbers<[1], [0], [0], [1], [0, 0, 1, 1], [], []>} : vector<512x256xbf16>, vector<256x128xbf16>, vector<512x128xf32> -> vector<512x128xf32>
    %3 = arith.truncf %2 : vector<512x128xf32> to vector<512x128xbf16>
    %c0_3 = arith.constant 0 : index
    %c0_4 = arith.constant 0 : index
    %4 = vector.load %arg3[%c0_3, %c0_4] : memref<512x128xbf16, #tpu.memory_space<vmem>>, vector<512x128xbf16>
    tpu.vector_store %arg3[%c0_3, %c0_4], %3 {strides = array<i32>} : memref<512x128xbf16, #tpu.memory_space<vmem>>, vector<512x128xbf16>,
    %cst_5 = arith.constant dense<0.000000e+00> : vector<128xf32>
    %5 = vector.multi_reduction <add>, %2, %cst_5 [0] : vector<512x128xf32> to vector<128xf32>
    %6 = vector.shape_cast %5 : vector<128xf32> to vector<1x128xf32>
    %7 = vector.shape_cast %6 : vector<1x128xf32> to vector<1x128xf32>
    %8 = vector.broadcast %7 : vector<1x128xf32> to vector<8x128xf32>
    %9 = arith.mulf %2, %2 : vector<512x128xf32>
    %cst_6 = arith.constant dense<0.000000e+00> : vector<128xf32>
    %10 = vector.multi_reduction <add>, %9, %cst_6 [0] : vector<512x128xf32> to vector<128xf32>
    %11 = vector.shape_cast %10 : vector<128xf32> to vector<1x128xf32>
    %12 = vector.shape_cast %11 : vector<1x128xf32> to vector<1x128xf32>
    %13 = vector.broadcast %12 : vector<1x128xf32> to vector<8x128xf32>
    %14 = tpu.iota {dimensions = array<i32: 0>} : vector<8x128xi32>
    %c4_i32 = arith.constant 4 : i32
    %15 = vector.broadcast %c4_i32 : i32 to vector<8x128xi32>
    %16 = arith.cmpi slt, %14, %15 : vector<8x128xi32>
    %17 = arith.select %16, %8, %13 : vector<8x128xi1>, vector<8x128xf32>
    %c0_7 = arith.constant 0 : index
    %c0_8 = arith.constant 0 : index
    %18 = vector.load %arg4[%c0_7, %c0_8] : memref<8x128xf32, #tpu.memory_space<vmem>>, vector<8x128xf32>
    tpu.vector_store %arg4[%c0_7, %c0_8], %17 {strides = array<i32>} : memref<8x128xf32, #tpu.memory_space<vmem>>, vector<8x128xf32>,
    return
  }
  func.func @transform_0(%arg0: i32) -> (i32, i32) {
    %c0_i32 = arith.constant 0 : i32
    %c0_i32_0 = arith.constant 0 : i32
    return %arg0, %c0_i32 : i32, i32
  }
  func.func @transform_1(%arg0: i32) -> (i32, i32) {
    %c0_i32 = arith.constant 0 : i32
    %c0_i32_0 = arith.constant 0 : i32
    %c0_i32_1 = arith.constant 0 : i32
    return %c0_i32, %c0_i32_0 : i32, i32
  }
  func.func @transform_2(%arg0: i32) -> (i32, i32) {
    %c0_i32 = arith.constant 0 : i32
    %c0_i32_0 = arith.constant 0 : i32
    return %arg0, %c0_i32 : i32, i32
  }
  func.func @transform_3(%arg0: i32) -> (i32, i32) {
    %c0_i32 = arith.constant 0 : i32
    %c0_i32_0 = arith.constant 0 : i32
    return %arg0, %c0_i32 : i32, i32
  }
}

module attributes {stable_mosaic.version = 11 : i64} {
  func.func @kernel(%arg0: i32, %arg1: memref<512x128xbf16, #tpu.memory_space<vmem>>, %arg2: memref<8x128xf32, #tpu.memory_space<vmem>>, %arg3: memref<512x128xbf16, #tpu.memory_space<vmem>>) attributes {dimension_semantics = [#tpu.dimension_semantics<parallel>], iteration_bounds = array<i64: 4>, scalar_prefetch = 0 : i64, scratch_operands = 0 : i64, tpu.core_type = #tpu.core_type<tc>, window_params = [{transform_indices = @transform_0, window_bounds = array<i64: 512, 128>}, {pipeline_mode = #tpu.pipeline_mode<synchronous>, transform_indices = @transform_1, window_bounds = array<i64: 8, 128>}, {transform_indices = @transform_2, window_bounds = array<i64: 512, 128>}]} {
    %c0 = arith.constant 0 : index
    %c0_0 = arith.constant 0 : index
    %0 = vector.load %arg1[%c0, %c0_0] : memref<512x128xbf16, #tpu.memory_space<vmem>>, vector<512x128xbf16>
    %1 = arith.extf %0 : vector<512x128xbf16> to vector<512x128xf32>
    %c0_1 = arith.constant 0 : index
    %c0_2 = arith.constant 0 : index
    %2 = vector.load %arg2[%c0_1, %c0_2] : memref<8x128xf32, #tpu.memory_space<vmem>>, vector<1x128xf32>
    %c1 = arith.constant 1 : index
    %c0_3 = arith.constant 0 : index
    %3 = vector.load %arg2[%c1, %c0_3] : memref<8x128xf32, #tpu.memory_space<vmem>>, vector<1x128xf32>
    %c2 = arith.constant 2 : index
    %c0_4 = arith.constant 0 : index
    %4 = vector.load %arg2[%c2, %c0_4] : memref<8x128xf32, #tpu.memory_space<vmem>>, vector<1x128xf32>
    %c3 = arith.constant 3 : index
    %c0_5 = arith.constant 0 : index
    %5 = vector.load %arg2[%c3, %c0_5] : memref<8x128xf32, #tpu.memory_space<vmem>>, vector<1x128xf32>
    %6 = vector.broadcast %2 : vector<1x128xf32> to vector<512x128xf32>
    %7 = arith.mulf %1, %6 : vector<512x128xf32>
    %8 = vector.broadcast %3 : vector<1x128xf32> to vector<512x128xf32>
    %9 = arith.addf %7, %8 : vector<512x128xf32>
    %cst = arith.constant 5.000000e-01 : f32
    %10 = vector.broadcast %cst : f32 to vector<1x128xf32>
    %11 = arith.cmpf ogt, %4, %10 : vector<1x128xf32>
    %cst_6 = arith.constant 0.000000e+00 : f32
    %12 = vector.broadcast %cst_6 : f32 to vector<512x128xf32>
    %13 = arith.maximumf %9, %12 : vector<512x128xf32>
    %14 = vector.shape_cast %11 : vector<1x128xi1> to vector<1x128xi1>
    %15 = vector.broadcast %14 : vector<1x128xi1> to vector<512x128xi1>
    %16 = arith.select %15, %13, %9 : vector<512x128xi1>, vector<512x128xf32>
    %17 = vector.broadcast %5 : vector<1x128xf32> to vector<512x128xf32>
    %18 = arith.mulf %16, %17 : vector<512x128xf32>
    %19 = arith.truncf %18 : vector<512x128xf32> to vector<512x128xbf16>
    %c0_7 = arith.constant 0 : index
    %c0_8 = arith.constant 0 : index
    %20 = vector.load %arg3[%c0_7, %c0_8] : memref<512x128xbf16, #tpu.memory_space<vmem>>, vector<512x128xbf16>
    tpu.vector_store %arg3[%c0_7, %c0_8], %19 {strides = array<i32>} : memref<512x128xbf16, #tpu.memory_space<vmem>>, vector<512x128xbf16>,
    return
  }
  func.func @transform_0(%arg0: i32) -> (i32, i32) {
    %c0_i32 = arith.constant 0 : i32
    %c0_i32_0 = arith.constant 0 : i32
    return %arg0, %c0_i32 : i32, i32
  }
  func.func @transform_1(%arg0: i32) -> (i32, i32) {
    %c0_i32 = arith.constant 0 : i32
    %c0_i32_0 = arith.constant 0 : i32
    %c0_i32_1 = arith.constant 0 : i32
    return %c0_i32, %c0_i32_0 : i32, i32
  }
  func.func @transform_2(%arg0: i32) -> (i32, i32) {
    %c0_i32 = arith.constant 0 : i32
    %c0_i32_0 = arith.constant 0 : i32
    return %arg0, %c0_i32 : i32, i32
  }
}

module attributes {stable_mosaic.version = 11 : i64} {
  func.func @_matmul_stats_kernel(%arg0: i32, %arg1: memref<256x640xbf16, #tpu.memory_space<vmem>>, %arg2: memref<640x128xbf16, #tpu.memory_space<vmem>>, %arg3: memref<256x128xbf16, #tpu.memory_space<vmem>>, %arg4: memref<8x128xf32, #tpu.memory_space<vmem>>) attributes {dimension_semantics = [#tpu.dimension_semantics<parallel>], iteration_bounds = array<i64: 2>, scalar_prefetch = 0 : i64, scratch_operands = 0 : i64, tpu.core_type = #tpu.core_type<tc>, window_params = [{transform_indices = @transform_0, window_bounds = array<i64: 256, 640>}, {pipeline_mode = #tpu.pipeline_mode<synchronous>, transform_indices = @transform_1, window_bounds = array<i64: 640, 128>}, {transform_indices = @transform_2, window_bounds = array<i64: 256, 128>}, {transform_indices = @transform_3, window_bounds = array<i64: 8, 128>}]} {
    %c0 = arith.constant 0 : index
    %c0_0 = arith.constant 0 : index
    %0 = vector.load %arg1[%c0, %c0_0] : memref<256x640xbf16, #tpu.memory_space<vmem>>, vector<256x640xbf16>
    %c0_1 = arith.constant 0 : index
    %c0_2 = arith.constant 0 : index
    %1 = vector.load %arg2[%c0_1, %c0_2] : memref<640x128xbf16, #tpu.memory_space<vmem>>, vector<640x128xbf16>
    %cst = arith.constant dense<0.000000e+00> : vector<256x128xf32>
    %2 = tpu.matmul %0, %1, %cst {dimension_numbers = #tpu.dot_dimension_numbers<[1], [0], [0], [1], [0, 0, 1, 1], [], []>} : vector<256x640xbf16>, vector<640x128xbf16>, vector<256x128xf32> -> vector<256x128xf32>
    %3 = arith.truncf %2 : vector<256x128xf32> to vector<256x128xbf16>
    %c0_3 = arith.constant 0 : index
    %c0_4 = arith.constant 0 : index
    %4 = vector.load %arg3[%c0_3, %c0_4] : memref<256x128xbf16, #tpu.memory_space<vmem>>, vector<256x128xbf16>
    tpu.vector_store %arg3[%c0_3, %c0_4], %3 {strides = array<i32>} : memref<256x128xbf16, #tpu.memory_space<vmem>>, vector<256x128xbf16>,
    %cst_5 = arith.constant dense<0.000000e+00> : vector<128xf32>
    %5 = vector.multi_reduction <add>, %2, %cst_5 [0] : vector<256x128xf32> to vector<128xf32>
    %6 = vector.shape_cast %5 : vector<128xf32> to vector<1x128xf32>
    %7 = vector.shape_cast %6 : vector<1x128xf32> to vector<1x128xf32>
    %8 = vector.broadcast %7 : vector<1x128xf32> to vector<8x128xf32>
    %9 = arith.mulf %2, %2 : vector<256x128xf32>
    %cst_6 = arith.constant dense<0.000000e+00> : vector<128xf32>
    %10 = vector.multi_reduction <add>, %9, %cst_6 [0] : vector<256x128xf32> to vector<128xf32>
    %11 = vector.shape_cast %10 : vector<128xf32> to vector<1x128xf32>
    %12 = vector.shape_cast %11 : vector<1x128xf32> to vector<1x128xf32>
    %13 = vector.broadcast %12 : vector<1x128xf32> to vector<8x128xf32>
    %14 = tpu.iota {dimensions = array<i32: 0>} : vector<8x128xi32>
    %c4_i32 = arith.constant 4 : i32
    %15 = vector.broadcast %c4_i32 : i32 to vector<8x128xi32>
    %16 = arith.cmpi slt, %14, %15 : vector<8x128xi32>
    %17 = arith.select %16, %8, %13 : vector<8x128xi1>, vector<8x128xf32>
    %c0_7 = arith.constant 0 : index
    %c0_8 = arith.constant 0 : index
    %18 = vector.load %arg4[%c0_7, %c0_8] : memref<8x128xf32, #tpu.memory_space<vmem>>, vector<8x128xf32>
    tpu.vector_store %arg4[%c0_7, %c0_8], %17 {strides = array<i32>} : memref<8x128xf32, #tpu.memory_space<vmem>>, vector<8x128xf32>,
    return
  }
  func.func @transform_0(%arg0: i32) -> (i32, i32) {
    %c0_i32 = arith.constant 0 : i32
    %c0_i32_0 = arith.constant 0 : i32
    return %arg0, %c0_i32 : i32, i32
  }
  func.func @transform_1(%arg0: i32) -> (i32, i32) {
    %c0_i32 = arith.constant 0 : i32
    %c0_i32_0 = arith.constant 0 : i32
    %c0_i32_1 = arith.constant 0 : i32
    return %c0_i32, %c0_i32_0 : i32, i32
  }
  func.func @transform_2(%arg0: i32) -> (i32, i32) {
    %c0_i32 = arith.constant 0 : i32
    %c0_i32_0 = arith.constant 0 : i32
    return %arg0, %c0_i32 : i32, i32
  }
  func.func @transform_3(%arg0: i32) -> (i32, i32) {
    %c0_i32 = arith.constant 0 : i32
    %c0_i32_0 = arith.constant 0 : i32
    return %arg0, %c0_i32 : i32, i32
  }
}

module attributes {stable_mosaic.version = 11 : i64} {
  func.func @kernel(%arg0: i32, %arg1: memref<256x128xbf16, #tpu.memory_space<vmem>>, %arg2: memref<8x128xf32, #tpu.memory_space<vmem>>, %arg3: memref<256x128xbf16, #tpu.memory_space<vmem>>) attributes {dimension_semantics = [#tpu.dimension_semantics<parallel>], iteration_bounds = array<i64: 2>, scalar_prefetch = 0 : i64, scratch_operands = 0 : i64, tpu.core_type = #tpu.core_type<tc>, window_params = [{transform_indices = @transform_0, window_bounds = array<i64: 256, 128>}, {pipeline_mode = #tpu.pipeline_mode<synchronous>, transform_indices = @transform_1, window_bounds = array<i64: 8, 128>}, {transform_indices = @transform_2, window_bounds = array<i64: 256, 128>}]} {
    %c0 = arith.constant 0 : index
    %c0_0 = arith.constant 0 : index
    %0 = vector.load %arg1[%c0, %c0_0] : memref<256x128xbf16, #tpu.memory_space<vmem>>, vector<256x128xbf16>
    %1 = arith.extf %0 : vector<256x128xbf16> to vector<256x128xf32>
    %c0_1 = arith.constant 0 : index
    %c0_2 = arith.constant 0 : index
    %2 = vector.load %arg2[%c0_1, %c0_2] : memref<8x128xf32, #tpu.memory_space<vmem>>, vector<1x128xf32>
    %c1 = arith.constant 1 : index
    %c0_3 = arith.constant 0 : index
    %3 = vector.load %arg2[%c1, %c0_3] : memref<8x128xf32, #tpu.memory_space<vmem>>, vector<1x128xf32>
    %c2 = arith.constant 2 : index
    %c0_4 = arith.constant 0 : index
    %4 = vector.load %arg2[%c2, %c0_4] : memref<8x128xf32, #tpu.memory_space<vmem>>, vector<1x128xf32>
    %c3 = arith.constant 3 : index
    %c0_5 = arith.constant 0 : index
    %5 = vector.load %arg2[%c3, %c0_5] : memref<8x128xf32, #tpu.memory_space<vmem>>, vector<1x128xf32>
    %6 = vector.broadcast %2 : vector<1x128xf32> to vector<256x128xf32>
    %7 = arith.mulf %1, %6 : vector<256x128xf32>
    %8 = vector.broadcast %3 : vector<1x128xf32> to vector<256x128xf32>
    %9 = arith.addf %7, %8 : vector<256x128xf32>
    %cst = arith.constant 5.000000e-01 : f32
    %10 = vector.broadcast %cst : f32 to vector<1x128xf32>
    %11 = arith.cmpf ogt, %4, %10 : vector<1x128xf32>
    %cst_6 = arith.constant 0.000000e+00 : f32
    %12 = vector.broadcast %cst_6 : f32 to vector<256x128xf32>
    %13 = arith.maximumf %9, %12 : vector<256x128xf32>
    %14 = vector.shape_cast %11 : vector<1x128xi1> to vector<1x128xi1>
    %15 = vector.broadcast %14 : vector<1x128xi1> to vector<256x128xi1>
    %16 = arith.select %15, %13, %9 : vector<256x128xi1>, vector<256x128xf32>
    %17 = vector.broadcast %5 : vector<1x128xf32> to vector<256x128xf32>
    %18 = arith.mulf %16, %17 : vector<256x128xf32>
    %19 = arith.truncf %18 : vector<256x128xf32> to vector<256x128xbf16>
    %c0_7 = arith.constant 0 : index
    %c0_8 = arith.constant 0 : index
    %20 = vector.load %arg3[%c0_7, %c0_8] : memref<256x128xbf16, #tpu.memory_space<vmem>>, vector<256x128xbf16>
    tpu.vector_store %arg3[%c0_7, %c0_8], %19 {strides = array<i32>} : memref<256x128xbf16, #tpu.memory_space<vmem>>, vector<256x128xbf16>,
    return
  }
  func.func @transform_0(%arg0: i32) -> (i32, i32) {
    %c0_i32 = arith.constant 0 : i32
    %c0_i32_0 = arith.constant 0 : i32
    return %arg0, %c0_i32 : i32, i32
  }
  func.func @transform_1(%arg0: i32) -> (i32, i32) {
    %c0_i32 = arith.constant 0 : i32
    %c0_i32_0 = arith.constant 0 : i32
    %c0_i32_1 = arith.constant 0 : i32
    return %c0_i32, %c0_i32_0 : i32, i32
  }
  func.func @transform_2(%arg0: i32) -> (i32, i32) {
    %c0_i32 = arith.constant 0 : i32
    %c0_i32_0 = arith.constant 0 : i32
    return %arg0, %c0_i32 : i32, i32
  }
}

module attributes {stable_mosaic.version = 11 : i64} {
  func.func @kernel(%arg0: i32, %arg1: memref<256x128xbf16, #tpu.memory_space<vmem>>, %arg2: memref<8x128xf32, #tpu.memory_space<vmem>>, %arg3: memref<256x128xbf16, #tpu.memory_space<vmem>>, %arg4: memref<256x128xbf16, #tpu.memory_space<vmem>>) attributes {dimension_semantics = [#tpu.dimension_semantics<parallel>], iteration_bounds = array<i64: 2>, scalar_prefetch = 0 : i64, scratch_operands = 0 : i64, tpu.core_type = #tpu.core_type<tc>, window_params = [{transform_indices = @transform_0, window_bounds = array<i64: 256, 128>}, {pipeline_mode = #tpu.pipeline_mode<synchronous>, transform_indices = @transform_1, window_bounds = array<i64: 8, 128>}, {transform_indices = @transform_2, window_bounds = array<i64: 256, 128>}, {transform_indices = @transform_3, window_bounds = array<i64: 256, 128>}]} {
    %c0 = arith.constant 0 : index
    %c0_0 = arith.constant 0 : index
    %0 = vector.load %arg1[%c0, %c0_0] : memref<256x128xbf16, #tpu.memory_space<vmem>>, vector<256x128xbf16>
    %1 = arith.extf %0 : vector<256x128xbf16> to vector<256x128xf32>
    %c0_1 = arith.constant 0 : index
    %c0_2 = arith.constant 0 : index
    %2 = vector.load %arg2[%c0_1, %c0_2] : memref<8x128xf32, #tpu.memory_space<vmem>>, vector<1x128xf32>
    %c1 = arith.constant 1 : index
    %c0_3 = arith.constant 0 : index
    %3 = vector.load %arg2[%c1, %c0_3] : memref<8x128xf32, #tpu.memory_space<vmem>>, vector<1x128xf32>
    %c2 = arith.constant 2 : index
    %c0_4 = arith.constant 0 : index
    %4 = vector.load %arg2[%c2, %c0_4] : memref<8x128xf32, #tpu.memory_space<vmem>>, vector<1x128xf32>
    %c3 = arith.constant 3 : index
    %c0_5 = arith.constant 0 : index
    %5 = vector.load %arg2[%c3, %c0_5] : memref<8x128xf32, #tpu.memory_space<vmem>>, vector<1x128xf32>
    %6 = vector.broadcast %2 : vector<1x128xf32> to vector<256x128xf32>
    %7 = arith.mulf %1, %6 : vector<256x128xf32>
    %8 = vector.broadcast %3 : vector<1x128xf32> to vector<256x128xf32>
    %9 = arith.addf %7, %8 : vector<256x128xf32>
    %c0_6 = arith.constant 0 : index
    %c0_7 = arith.constant 0 : index
    %10 = vector.load %arg3[%c0_6, %c0_7] : memref<256x128xbf16, #tpu.memory_space<vmem>>, vector<256x128xbf16>
    %11 = arith.extf %10 : vector<256x128xbf16> to vector<256x128xf32>
    %12 = arith.addf %9, %11 : vector<256x128xf32>
    %cst = arith.constant 5.000000e-01 : f32
    %13 = vector.broadcast %cst : f32 to vector<1x128xf32>
    %14 = arith.cmpf ogt, %4, %13 : vector<1x128xf32>
    %cst_8 = arith.constant 0.000000e+00 : f32
    %15 = vector.broadcast %cst_8 : f32 to vector<256x128xf32>
    %16 = arith.maximumf %12, %15 : vector<256x128xf32>
    %17 = vector.shape_cast %14 : vector<1x128xi1> to vector<1x128xi1>
    %18 = vector.broadcast %17 : vector<1x128xi1> to vector<256x128xi1>
    %19 = arith.select %18, %16, %12 : vector<256x128xi1>, vector<256x128xf32>
    %20 = vector.broadcast %5 : vector<1x128xf32> to vector<256x128xf32>
    %21 = arith.mulf %19, %20 : vector<256x128xf32>
    %22 = arith.truncf %21 : vector<256x128xf32> to vector<256x128xbf16>
    %c0_9 = arith.constant 0 : index
    %c0_10 = arith.constant 0 : index
    %23 = vector.load %arg4[%c0_9, %c0_10] : memref<256x128xbf16, #tpu.memory_space<vmem>>, vector<256x128xbf16>
    tpu.vector_store %arg4[%c0_9, %c0_10], %22 {strides = array<i32>} : memref<256x128xbf16, #tpu.memory_space<vmem>>, vector<256x128xbf16>,
    return
  }
  func.func @transform_0(%arg0: i32) -> (i32, i32) {
    %c0_i32 = arith.constant 0 : i32
    %c0_i32_0 = arith.constant 0 : i32
    return %arg0, %c0_i32 : i32, i32
  }
  func.func @transform_1(%arg0: i32) -> (i32, i32) {
    %c0_i32 = arith.constant 0 : i32
    %c0_i32_0 = arith.constant 0 : i32
    %c0_i32_1 = arith.constant 0 : i32
    return %c0_i32, %c0_i32_0 : i32, i32
  }
  func.func @transform_2(%arg0: i32) -> (i32, i32) {
    %c0_i32 = arith.constant 0 : i32
    %c0_i32_0 = arith.constant 0 : i32
    return %arg0, %c0_i32 : i32, i32
  }
  func.func @transform_3(%arg0: i32) -> (i32, i32) {
    %c0_i32 = arith.constant 0 : i32
    %c0_i32_0 = arith.constant 0 : i32
    return %arg0, %c0_i32 : i32, i32
  }
}

module attributes {stable_mosaic.version = 11 : i64} {
  func.func @_matmul_stats_kernel(%arg0: i32, %arg1: memref<128x640xbf16, #tpu.memory_space<vmem>>, %arg2: memref<640x256xbf16, #tpu.memory_space<vmem>>, %arg3: memref<128x256xbf16, #tpu.memory_space<vmem>>, %arg4: memref<8x256xf32, #tpu.memory_space<vmem>>) attributes {dimension_semantics = [#tpu.dimension_semantics<parallel>], iteration_bounds = array<i64: 1>, scalar_prefetch = 0 : i64, scratch_operands = 0 : i64, tpu.core_type = #tpu.core_type<tc>, window_params = [{transform_indices = @transform_0, window_bounds = array<i64: 128, 640>}, {pipeline_mode = #tpu.pipeline_mode<synchronous>, transform_indices = @transform_1, window_bounds = array<i64: 640, 256>}, {transform_indices = @transform_2, window_bounds = array<i64: 128, 256>}, {transform_indices = @transform_3, window_bounds = array<i64: 8, 256>}]} {
    %c0 = arith.constant 0 : index
    %c0_0 = arith.constant 0 : index
    %0 = vector.load %arg1[%c0, %c0_0] : memref<128x640xbf16, #tpu.memory_space<vmem>>, vector<128x640xbf16>
    %c0_1 = arith.constant 0 : index
    %c0_2 = arith.constant 0 : index
    %1 = vector.load %arg2[%c0_1, %c0_2] : memref<640x256xbf16, #tpu.memory_space<vmem>>, vector<640x256xbf16>
    %cst = arith.constant dense<0.000000e+00> : vector<128x256xf32>
    %2 = tpu.matmul %0, %1, %cst {dimension_numbers = #tpu.dot_dimension_numbers<[1], [0], [0], [1], [0, 0, 1, 1], [], []>} : vector<128x640xbf16>, vector<640x256xbf16>, vector<128x256xf32> -> vector<128x256xf32>
    %3 = arith.truncf %2 : vector<128x256xf32> to vector<128x256xbf16>
    %c0_3 = arith.constant 0 : index
    %c0_4 = arith.constant 0 : index
    %4 = vector.load %arg3[%c0_3, %c0_4] : memref<128x256xbf16, #tpu.memory_space<vmem>>, vector<128x256xbf16>
    tpu.vector_store %arg3[%c0_3, %c0_4], %3 {strides = array<i32>} : memref<128x256xbf16, #tpu.memory_space<vmem>>, vector<128x256xbf16>,
    %cst_5 = arith.constant dense<0.000000e+00> : vector<256xf32>
    %5 = vector.multi_reduction <add>, %2, %cst_5 [0] : vector<128x256xf32> to vector<256xf32>
    %6 = vector.shape_cast %5 : vector<256xf32> to vector<1x256xf32>
    %7 = vector.shape_cast %6 : vector<1x256xf32> to vector<1x256xf32>
    %8 = vector.broadcast %7 : vector<1x256xf32> to vector<8x256xf32>
    %9 = arith.mulf %2, %2 : vector<128x256xf32>
    %cst_6 = arith.constant dense<0.000000e+00> : vector<256xf32>
    %10 = vector.multi_reduction <add>, %9, %cst_6 [0] : vector<128x256xf32> to vector<256xf32>
    %11 = vector.shape_cast %10 : vector<256xf32> to vector<1x256xf32>
    %12 = vector.shape_cast %11 : vector<1x256xf32> to vector<1x256xf32>
    %13 = vector.broadcast %12 : vector<1x256xf32> to vector<8x256xf32>
    %14 = tpu.iota {dimensions = array<i32: 0>} : vector<8x256xi32>
    %c4_i32 = arith.constant 4 : i32
    %15 = vector.broadcast %c4_i32 : i32 to vector<8x256xi32>
    %16 = arith.cmpi slt, %14, %15 : vector<8x256xi32>
    %17 = arith.select %16, %8, %13 : vector<8x256xi1>, vector<8x256xf32>
    %c0_7 = arith.constant 0 : index
    %c0_8 = arith.constant 0 : index
    %18 = vector.load %arg4[%c0_7, %c0_8] : memref<8x256xf32, #tpu.memory_space<vmem>>, vector<8x256xf32>
    tpu.vector_store %arg4[%c0_7, %c0_8], %17 {strides = array<i32>} : memref<8x256xf32, #tpu.memory_space<vmem>>, vector<8x256xf32>,
    return
  }
  func.func @transform_0(%arg0: i32) -> (i32, i32) {
    %c0_i32 = arith.constant 0 : i32
    %c0_i32_0 = arith.constant 0 : i32
    return %arg0, %c0_i32 : i32, i32
  }
  func.func @transform_1(%arg0: i32) -> (i32, i32) {
    %c0_i32 = arith.constant 0 : i32
    %c0_i32_0 = arith.constant 0 : i32
    %c0_i32_1 = arith.constant 0 : i32
    return %c0_i32, %c0_i32_0 : i32, i32
  }
  func.func @transform_2(%arg0: i32) -> (i32, i32) {
    %c0_i32 = arith.constant 0 : i32
    %c0_i32_0 = arith.constant 0 : i32
    return %arg0, %c0_i32 : i32, i32
  }
  func.func @transform_3(%arg0: i32) -> (i32, i32) {
    %c0_i32 = arith.constant 0 : i32
    %c0_i32_0 = arith.constant 0 : i32
    return %arg0, %c0_i32 : i32, i32
  }
}

module attributes {stable_mosaic.version = 11 : i64} {
  func.func @_matmul_stats_kernel(%arg0: i32, %arg1: memref<128x1152xbf16, #tpu.memory_space<vmem>>, %arg2: memref<1152x128xbf16, #tpu.memory_space<vmem>>, %arg3: memref<128x128xbf16, #tpu.memory_space<vmem>>, %arg4: memref<8x128xf32, #tpu.memory_space<vmem>>) attributes {dimension_semantics = [#tpu.dimension_semantics<parallel>], iteration_bounds = array<i64: 1>, scalar_prefetch = 0 : i64, scratch_operands = 0 : i64, tpu.core_type = #tpu.core_type<tc>, window_params = [{transform_indices = @transform_0, window_bounds = array<i64: 128, 1152>}, {pipeline_mode = #tpu.pipeline_mode<synchronous>, transform_indices = @transform_1, window_bounds = array<i64: 1152, 128>}, {transform_indices = @transform_2, window_bounds = array<i64: 128, 128>}, {transform_indices = @transform_3, window_bounds = array<i64: 8, 128>}]} {
    %c0 = arith.constant 0 : index
    %c0_0 = arith.constant 0 : index
    %0 = vector.load %arg1[%c0, %c0_0] : memref<128x1152xbf16, #tpu.memory_space<vmem>>, vector<128x1152xbf16>
    %c0_1 = arith.constant 0 : index
    %c0_2 = arith.constant 0 : index
    %1 = vector.load %arg2[%c0_1, %c0_2] : memref<1152x128xbf16, #tpu.memory_space<vmem>>, vector<1152x128xbf16>
    %cst = arith.constant dense<0.000000e+00> : vector<128x128xf32>
    %2 = tpu.matmul %0, %1, %cst {dimension_numbers = #tpu.dot_dimension_numbers<[1], [0], [0], [1], [0, 0, 1, 1], [], []>} : vector<128x1152xbf16>, vector<1152x128xbf16>, vector<128x128xf32> -> vector<128x128xf32>
    %3 = arith.truncf %2 : vector<128x128xf32> to vector<128x128xbf16>
    %c0_3 = arith.constant 0 : index
    %c0_4 = arith.constant 0 : index
    %4 = vector.load %arg3[%c0_3, %c0_4] : memref<128x128xbf16, #tpu.memory_space<vmem>>, vector<128x128xbf16>
    tpu.vector_store %arg3[%c0_3, %c0_4], %3 {strides = array<i32>} : memref<128x128xbf16, #tpu.memory_space<vmem>>, vector<128x128xbf16>,
    %cst_5 = arith.constant dense<0.000000e+00> : vector<128xf32>
    %5 = vector.multi_reduction <add>, %2, %cst_5 [0] : vector<128x128xf32> to vector<128xf32>
    %6 = vector.shape_cast %5 : vector<128xf32> to vector<1x128xf32>
    %7 = vector.shape_cast %6 : vector<1x128xf32> to vector<1x128xf32>
    %8 = vector.broadcast %7 : vector<1x128xf32> to vector<8x128xf32>
    %9 = arith.mulf %2, %2 : vector<128x128xf32>
    %cst_6 = arith.constant dense<0.000000e+00> : vector<128xf32>
    %10 = vector.multi_reduction <add>, %9, %cst_6 [0] : vector<128x128xf32> to vector<128xf32>
    %11 = vector.shape_cast %10 : vector<128xf32> to vector<1x128xf32>
    %12 = vector.shape_cast %11 : vector<1x128xf32> to vector<1x128xf32>
    %13 = vector.broadcast %12 : vector<1x128xf32> to vector<8x128xf32>
    %14 = tpu.iota {dimensions = array<i32: 0>} : vector<8x128xi32>
    %c4_i32 = arith.constant 4 : i32
    %15 = vector.broadcast %c4_i32 : i32 to vector<8x128xi32>
    %16 = arith.cmpi slt, %14, %15 : vector<8x128xi32>
    %17 = arith.select %16, %8, %13 : vector<8x128xi1>, vector<8x128xf32>
    %c0_7 = arith.constant 0 : index
    %c0_8 = arith.constant 0 : index
    %18 = vector.load %arg4[%c0_7, %c0_8] : memref<8x128xf32, #tpu.memory_space<vmem>>, vector<8x128xf32>
    tpu.vector_store %arg4[%c0_7, %c0_8], %17 {strides = array<i32>} : memref<8x128xf32, #tpu.memory_space<vmem>>, vector<8x128xf32>,
    return
  }
  func.func @transform_0(%arg0: i32) -> (i32, i32) {
    %c0_i32 = arith.constant 0 : i32
    %c0_i32_0 = arith.constant 0 : i32
    return %arg0, %c0_i32 : i32, i32
  }
  func.func @transform_1(%arg0: i32) -> (i32, i32) {
    %c0_i32 = arith.constant 0 : i32
    %c0_i32_0 = arith.constant 0 : i32
    %c0_i32_1 = arith.constant 0 : i32
    return %c0_i32, %c0_i32_0 : i32, i32
  }
  func.func @transform_2(%arg0: i32) -> (i32, i32) {
    %c0_i32 = arith.constant 0 : i32
    %c0_i32_0 = arith.constant 0 : i32
    return %arg0, %c0_i32 : i32, i32
  }
  func.func @transform_3(%arg0: i32) -> (i32, i32) {
    %c0_i32 = arith.constant 0 : i32
    %c0_i32_0 = arith.constant 0 : i32
    return %arg0, %c0_i32 : i32, i32
  }
}

</mosaic_0001>

<llo_original>
// kernel: resnet_forward.9
$region0: #{resnet_forward.9}
  #allocation0 [shape = 'u32[]', space=smem, size = 0x4, offset = 0x4, fixed_abs, tag = 'smem constant byte address 0x4 - core index']
  #allocation1 [shape = 'u32[144,128]{1,0:T(1,128)}', space=vmem, size = 0x12000, scoped, tag = 'internal scratch']
  %s0 = inlined_call_operand.vmem [shape: bf16[2048,128], index: 0, kind: input, shape index: {}]
  %s1 = inlined_call_operand.vmem [shape: f32[8,128], index: 1, kind: input, shape index: {}]
  %s2 = inlined_call_operand.vmem [shape: bf16[2048,128], index: 2, kind: output, shape index: {}]
  %s3 = sld [smem:[#allocation0]]
  $region41: #{resnet_forward.9} parent=0
    _
  %s5 = ssub.s32 1, %s3
  %s6 = scalar_select 0, %s5, %s3
  loop: start=0, step=1, limit=6
  $region2: #{resnet_forward.9} parent=0 // loop_pre_header
    _
  $region3: #{resnet_forward.9} parent=0 // loop_header
    %s8 = sphi 0, %s12
    %p9 = scmp.ge.s32.totalorder %s8, 6
    %s18 = sphi 0, %s20
    %s21 = sphi 0, %s18
    %s22 = sphi 0, %s21
    %s38 = sphi 0, %s22
    %s42 = sphi 0, %s42
    %s44 = sphi 0, %s42
    %s45 = sphi 0, %s44
    %s59 = sphi 0, %s45
    %s65 = sphi 0, %s67
    %s68 = sphi 0, %s65
    %s69 = sphi 0, %s68
    %s85 = sphi 0, %s69
  $region4: #{resnet_forward.9} parent=0 // loop_header_branch
    %11 = sbr.rel (%p9) target = $region8
  $region5: #{resnet_forward.9} parent=0 // loop_body
    %s13 = ssub.s32 %s8, 1
    %s14 = ssub.s32 %s8, 2
    %s15 = sadd.s32 %s8, 1
    %s16 = ssub.s32 %s8, %s15
    %p17 = scmp.eq.s32.totalorder %s16, 0
    %s19 = sadd.s32 %s18, 1
    %s20 = scalar_select %p17, %s18, %s19
    %p23 = pneg %p17
    %p24 = scmp.eq.s32.totalorder %s8, 3
    %p25 = por %p23, %p24
    %p26 = scmp.ne.s32.totalorder %s18, %s21
    %p27 = scmp.eq.s32.totalorder %s8, 0
    %p28 = por %p26, %p27
    %p29 = scmp.ne.s32.totalorder %s18, %s21
    %p30 = scmp.eq.s32.totalorder %s13, 3
    %p31 = por %p29, %p30
    %p32 = scmp.ne.s32.totalorder %s21, %s22
    %p33 = scmp.eq.s32.totalorder %s13, 0
    %p34 = por %p32, %p33
    %p35 = scmp.ne.s32.totalorder %s21, %s22
    %p36 = scmp.eq.s32.totalorder %s14, 3
    %p37 = por %p35, %p36
    %p39 = scmp.ne.s32.totalorder %s22, %s38
    %p40 = scmp.eq.s32.totalorder %s14, 0
    %p41 = por %p39, %p40
    %s43 = sadd.s32 %s42, 1
    %p46 = scmp.eq.s32.totalorder %s8, 3
    %p47 = scmp.ne.s32.totalorder %s42, %s44
    %p48 = scmp.eq.s32.totalorder %s8, 0
    %p49 = por %p47, %p48
    %p50 = scmp.ne.s32.totalorder %s42, %s44
    %p51 = scmp.eq.s32.totalorder %s13, 3
    %p52 = por %p50, %p51
    %p53 = scmp.ne.s32.totalorder %s44, %s45
    %p54 = scmp.eq.s32.totalorder %s13, 0
    %p55 = por %p53, %p54
    %p56 = scmp.ne.s32.totalorder %s44, %s45
    %p57 = scmp.eq.s32.totalorder %s14, 3
    %p58 = por %p56, %p57
    %p60 = scmp.ne.s32.totalorder %s45, %s59
    %p61 = scmp.eq.s32.totalorder %s14, 0
    %p62 = por %p60, %p61
    %s63 = ssub.s32 %s8, %s15
    %p64 = scmp.eq.s32.totalorder %s63, 0
    %s66 = sadd.s32 %s65, 1
    %s67 = scalar_select %p64, %s65, %s66
    %p70 = pneg %p64
    %p71 = scmp.eq.s32.totalorder %s8, 3
    %p72 = por %p70, %p71
    %p73 = scmp.ne.s32.totalorder %s65, %s68
    %p74 = scmp.eq.s32.totalorder %s8, 0
    %p75 = por %p73, %p74
    %p76 = scmp.ne.s32.totalorder %s65, %s68
    %p77 = scmp.eq.s32.totalorder %s13, 3
    %p78 = por %p76, %p77
    %p79 = scmp.ne.s32.totalorder %s68, %s69
    %p80 = scmp.eq.s32.totalorder %s13, 0
    %p81 = por %p79, %p80
    %p82 = scmp.ne.s32.totalorder %s68, %s69
    %p83 = scmp.eq.s32.totalorder %s14, 3
    %p84 = por %p82, %p83
    %p86 = scmp.ne.s32.totalorder %s69, %s85
    %p87 = scmp.eq.s32.totalorder %s14, 0
    %p88 = por %p86, %p87
    %p89 = scmp.le.s32.totalorder 1, %s8
    %p90 = scmp.lt.s32.totalorder %s8, 5
    %p91 = pnand %p89, %p90
    %p92 = pneg %p91
    // Predicated region
    $region9: #{resnet_forward.9} parent=5 // pred_check
      _
    $region10: #{resnet_forward.9} parent=5 // pred_check_branch
      %94 = sbr.rel (%p91) target = $region12
    $region11: #{resnet_forward.9} parent=5 // pred_region
      %s95 = ssub.s32 %s8, 1
      // Predicated region
      $region13: #{resnet_forward.9} parent=11 // pred_check
        %p96 = pneg %p55
      $region14: #{resnet_forward.9} parent=11 // pred_check_branch
        %98 = sbr.rel (%p96) target = $region16
      $region15: #{resnet_forward.9} parent=11 // pred_region
        _
      $region16: #{resnet_forward.9} parent=11 // pred_fallthru
        _
    $region12: #{resnet_forward.9} parent=5 // pred_fallthru
      _
    %p99 = scmp.lt.s32.totalorder %s8, 4
    // Predicated region
    $region17: #{resnet_forward.9} parent=5 // pred_check
      %p100 = pneg %p99
    $region18: #{resnet_forward.9} parent=5 // pred_check_branch
      %102 = sbr.rel (%p100) target = $region20
    $region19: #{resnet_forward.9} parent=5 // pred_region
      // Predicated region
      $region21: #{resnet_forward.9} parent=19 // pred_check
        %p103 = pneg %p28
      $region22: #{resnet_forward.9} parent=19 // pred_check_branch
        %105 = sbr.rel (%p103) target = $region24
      $region23: #{resnet_forward.9} parent=19 // pred_region
        %s106 = smul.u32 64, %s8
        %p107 = scmp.lt.s32.totalorder %s106, 255
        %s108 = scalar_select %p107, %s106, 255
        %s109 = smul.addr %s108, 4
        %s110 = scalar_lea.vmem %s0, %s109
        %s111 = smul.u32 64, %s8
      $region24: #{resnet_forward.9} parent=19 // pred_fallthru
        _
    $region20: #{resnet_forward.9} parent=5 // pred_fallthru
      _
    %p112 = scmp.le.s32.totalorder 1, %s8
    %p113 = scmp.lt.s32.totalorder %s8, 5
    %p114 = pnand %p112, %p113
    %p115 = pneg %p114
    // Predicated region
    $region25: #{resnet_forward.9} parent=5 // pred_check
      _
    $region26: #{resnet_forward.9} parent=5 // pred_check_branch
      %117 = sbr.rel (%p114) target = $region28
    $region27: #{resnet_forward.9} parent=5 // pred_region
      %s118 = ssub.s32 %s8, 1
      %s119 = smul.u32 64, %s13
      %p120 = scmp.lt.s32.totalorder %s119, 255
      %s121 = scalar_select %p120, %s119, 255
      %s122 = smul.addr %s121, 4
      %s123 = scalar_lea.vmem %s0, %s122
      %p124 = pneg %p34
      %p125 = pneg %p31
      %p126 = pneg %p55
      %p127 = pneg %p52
      %p128 = pneg %p81
      %p129 = pneg %p78
      %s130 = smul.u32 64, %s13
      %p131 = scmp.lt.s32.totalorder %s130, 255
      %s132 = scalar_select %p131, %s130, 255
      %s133 = smul.addr %s132, 4
      %s134 = scalar_lea.vmem %s2, %s133
      %s135 = smul.u32 64, %s13
      %p136 = scmp.lt.s32.totalorder %s135, 255
      %s137 = scalar_select %p136, %s135, 255
      %s138 = smul.addr %s137, 4
      %s139 = scalar_lea.vmem %s0, %s138
      %s140 = smul.u32 64, %s13
      %s141 = smul.u32 64, %s13
      %p142 = scmp.lt.s32.totalorder %s141, 255
      %s143 = scalar_select %p142, %s141, 255
      %s144 = smul.addr %s143, 4
      %s145 = scalar_lea.vmem %s2, %s144
      %s146 = smul.u32 64, %s13
      %v147 = vld [vmem:[%s139] sm:$0xf]
      %v148 = vld [vmem:[%s139 + $0x4] sm:$0xf]
      %v149 = vld [vmem:[%s139 + $0x8] sm:$0xf]
      %v150 = vld [vmem:[%s139 + $0xc] sm:$0xf]
      %v151 = vld [vmem:[%s139 + $0x10] sm:$0xf]
      %v152 = vld [vmem:[%s139 + $0x14] sm:$0xf]
      %v153 = vld [vmem:[%s139 + $0x18] sm:$0xf]
      %v154 = vld [vmem:[%s139 + $0x1c] sm:$0xf]
      %v155 = vld [vmem:[%s139 + $0x20] sm:$0xf]
      %v156 = vld [vmem:[%s139 + $0x24] sm:$0xf]
      %v157 = vld [vmem:[%s139 + $0x28] sm:$0xf]
      %v158 = vld [vmem:[%s139 + $0x2c] sm:$0xf]
      %v159 = vld [vmem:[%s139 + $0x30] sm:$0xf]
      %v160 = vld [vmem:[%s139 + $0x34] sm:$0xf]
      %v161 = vld [vmem:[%s139 + $0x38] sm:$0xf]
      %v162 = vld [vmem:[%s139 + $0x3c] sm:$0xf]
      %v163 = vld [vmem:[%s139 + $0x40] sm:$0xf]
      %v164 = vld [vmem:[%s139 + $0x44] sm:$0xf]
      %v165 = vld [vmem:[%s139 + $0x48] sm:$0xf]
      %v166 = vld [vmem:[%s139 + $0x4c] sm:$0xf]
      %v167 = vld [vmem:[%s139 + $0x50] sm:$0xf]
      %v168 = vld [vmem:[%s139 + $0x54] sm:$0xf]
      %v169 = vld [vmem:[%s139 + $0x58] sm:$0xf]
      %v170 = vld [vmem:[%s139 + $0x5c] sm:$0xf]
      %v171 = vld [vmem:[%s139 + $0x60] sm:$0xf]
      %v172 = vld [vmem:[%s139 + $0x64] sm:$0xf]
      %v173 = vld [vmem:[%s139 + $0x68] sm:$0xf]
      %v174 = vld [vmem:[%s139 + $0x6c] sm:$0xf]
      %v175 = vld [vmem:[%s139 + $0x70] sm:$0xf]
      %v176 = vld [vmem:[%s139 + $0x74] sm:$0xf]
      %v177 = vld [vmem:[%s139 + $0x78] sm:$0xf]
      %v178 = vld [vmem:[%s139 + $0x7c] sm:$0xf]
      %v179 = vld [vmem:[%s139 + $0x80] sm:$0xf]
      %v180 = vld [vmem:[%s139 + $0x84] sm:$0xf]
      %v181 = vld [vmem:[%s139 + $0x88] sm:$0xf]
      %v182 = vld [vmem:[%s139 + $0x8c] sm:$0xf]
      %v183 = vld [vmem:[%s139 + $0x90] sm:$0xf]
      %v184 = vld [vmem:[%s139 + $0x94] sm:$0xf]
      %v185 = vld [vmem:[%s139 + $0x98] sm:$0xf]
      %v186 = vld [vmem:[%s139 + $0x9c] sm:$0xf]
      %v187 = vld [vmem:[%s139 + $0xa0] sm:$0xf]
      %v188 = vld [vmem:[%s139 + $0xa4] sm:$0xf]
      %v189 = vld [vmem:[%s139 + $0xa8] sm:$0xf]
      %v190 = vld [vmem:[%s139 + $0xac] sm:$0xf]
      %v191 = vld [vmem:[%s139 + $0xb0] sm:$0xf]
      %v192 = vld [vmem:[%s139 + $0xb4] sm:$0xf]
      %v193 = vld [vmem:[%s139 + $0xb8] sm:$0xf]
      %v194 = vld [vmem:[%s139 + $0xbc] sm:$0xf]
      %v195 = vld [vmem:[%s139 + $0xc0] sm:$0xf]
      %v196 = vld [vmem:[%s139 + $0xc4] sm:$0xf]
      %v197 = vld [vmem:[%s139 + $0xc8] sm:$0xf]
      %v198 = vld [vmem:[%s139 + $0xcc] sm:$0xf]
      %v199 = vld [vmem:[%s139 + $0xd0] sm:$0xf]
      %v200 = vld [vmem:[%s139 + $0xd4] sm:$0xf]
      %v201 = vld [vmem:[%s139 + $0xd8] sm:$0xf]
      %v202 = vld [vmem:[%s139 + $0xdc] sm:$0xf]
      %v203 = vld [vmem:[%s139 + $0xe0] sm:$0xf]
      %v204 = vld [vmem:[%s139 + $0xe4] sm:$0xf]
      %v205 = vld [vmem:[%s139 + $0xe8] sm:$0xf]
      %v206 = vld [vmem:[%s139 + $0xec] sm:$0xf]
      %v207 = vld [vmem:[%s139 + $0xf0] sm:$0xf]
      %v208 = vld [vmem:[%s139 + $0xf4] sm:$0xf]
      %v209 = vld [vmem:[%s139 + $0xf8] sm:$0xf]
      %v210 = vld [vmem:[%s139 + $0xfc] sm:$0xf]
      %v211 = vunpack.c.l.bf16 %v147
      %v212 = vunpack.c.l.bf16 %v148
      %v213 = vunpack.c.l.bf16 %v149
      %v214 = vunpack.c.l.bf16 %v150
      %v215 = vunpack.c.l.bf16 %v151
      %v216 = vunpack.c.l.bf16 %v152
      %v217 = vunpack.c.l.bf16 %v153
      %v218 = vunpack.c.l.bf16 %v154
      %v219 = vunpack.c.l.bf16 %v155
      %v220 = vunpack.c.l.bf16 %v156
      %v221 = vunpack.c.l.bf16 %v157
      %v222 = vunpack.c.l.bf16 %v158
      %v223 = vunpack.c.l.bf16 %v159
      %v224 = vunpack.c.l.bf16 %v160
      %v225 = vunpack.c.l.bf16 %v161
      %v226 = vunpack.c.l.bf16 %v162
      %v227 = vunpack.c.l.bf16 %v163
      %v228 = vunpack.c.l.bf16 %v164
      %v229 = vunpack.c.l.bf16 %v165
      %v230 = vunpack.c.l.bf16 %v166
      %v231 = vunpack.c.l.bf16 %v167
      %v232 = vunpack.c.l.bf16 %v168
      %v233 = vunpack.c.l.bf16 %v169
      %v234 = vunpack.c.l.bf16 %v170
      %v235 = vunpack.c.l.bf16 %v171
      %v236 = vunpack.c.l.bf16 %v172
      %v237 = vunpack.c.l.bf16 %v173
      %v238 = vunpack.c.l.bf16 %v174
      %v239 = vunpack.c.l.bf16 %v175
      %v240 = vunpack.c.l.bf16 %v176
      %v241 = vunpack.c.l.bf16 %v177
      %v242 = vunpack.c.l.bf16 %v178
      %v243 = vunpack.c.l.bf16 %v179
      %v244 = vunpack.c.l.bf16 %v180
      %v245 = vunpack.c.l.bf16 %v181
      %v246 = vunpack.c.l.bf16 %v182
      %v247 = vunpack.c.l.bf16 %v183
      %v248 = vunpack.c.l.bf16 %v184
      %v249 = vunpack.c.l.bf16 %v185
      %v250 = vunpack.c.l.bf16 %v186
      %v251 = vunpack.c.l.bf16 %v187
      %v252 = vunpack.c.l.bf16 %v188
      %v253 = vunpack.c.l.bf16 %v189
      %v254 = vunpack.c.l.bf16 %v190
      %v255 = vunpack.c.l.bf16 %v191
      %v256 = vunpack.c.l.bf16 %v192
      %v257 = vunpack.c.l.bf16 %v193
      %v258 = vunpack.c.l.bf16 %v194
      %v259 = vunpack.c.l.bf16 %v195
      %v260 = vunpack.c.l.bf16 %v196
      %v261 = vunpack.c.l.bf16 %v197
      %v262 = vunpack.c.l.bf16 %v198
      %v263 = vunpack.c.l.bf16 %v199
      %v264 = vunpack.c.l.bf16 %v200
      %v265 = vunpack.c.l.bf16 %v201
      %v266 = vunpack.c.l.bf16 %v202
      %v267 = vunpack.c.l.bf16 %v203
      %v268 = vunpack.c.l.bf16 %v204
      %v269 = vunpack.c.l.bf16 %v205
      %v270 = vunpack.c.l.bf16 %v206
      %v271 = vunpack.c.l.bf16 %v207
      %v272 = vunpack.c.l.bf16 %v208
      %v273 = vunpack.c.l.bf16 %v209
      %v274 = vunpack.c.l.bf16 %v210
      %v275 = vld [vmem:[%s1] sm:$0x1]
      %v276 = vld [vmem:[%s1 + $0x1] sm:$0x1]
      %v277 = vld [vmem:[%s1 + $0x2] sm:$0x1]
      %v278 = vld [vmem:[%s1 + $0x3] sm:$0x1]
      %v279 = vlaneseq
      %v280 = vshrl.u32 %v279, 7
      %v281 = vsub.s32 0, %v280
      %v282 = vrot.slane %v275, %v281
      %v283 = vmul.f32 %v211, %v282
      %v284 = vmul.f32 %v212, %v282
      %v285 = vmul.f32 %v213, %v282
      %v286 = vmul.f32 %v214, %v282
      %v287 = vmul.f32 %v215, %v282
      %v288 = vmul.f32 %v216, %v282
      %v289 = vmul.f32 %v217, %v282
      %v290 = vmul.f32 %v218, %v282
      %v291 = vmul.f32 %v219, %v282
      %v292 = vmul.f32 %v220, %v282
      %v293 = vmul.f32 %v221, %v282
      %v294 = vmul.f32 %v222, %v282
      %v295 = vmul.f32 %v223, %v282
      %v296 = vmul.f32 %v224, %v282
      %v297 = vmul.f32 %v225, %v282
      %v298 = vmul.f32 %v226, %v282
      %v299 = vmul.f32 %v227, %v282
      %v300 = vmul.f32 %v228, %v282
      %v301 = vmul.f32 %v229, %v282
      %v302 = vmul.f32 %v230, %v282
      %v303 = vmul.f32 %v231, %v282
      %v304 = vmul.f32 %v232, %v282
      %v305 = vmul.f32 %v233, %v282
      %v306 = vmul.f32 %v234, %v282
      %v307 = vmul.f32 %v235, %v282
      %v308 = vmul.f32 %v236, %v282
      %v309 = vmul.f32 %v237, %v282
      %v310 = vmul.f32 %v238, %v282
      %v311 = vmul.f32 %v239, %v282
      %v312 = vmul.f32 %v240, %v282
      %v313 = vmul.f32 %v241, %v282
      %v314 = vmul.f32 %v242, %v282
      %v315 = vmul.f32 %v243, %v282
      %v316 = vmul.f32 %v244, %v282
      %v317 = vmul.f32 %v245, %v282
      %v318 = vmul.f32 %v246, %v282
      %v319 = vmul.f32 %v247, %v282
      %v320 = vmul.f32 %v248, %v282
      %v321 = vmul.f32 %v249, %v282
      %v322 = vmul.f32 %v250, %v282
      %v323 = vmul.f32 %v251, %v282
      %v324 = vmul.f32 %v252, %v282
      %v325 = vmul.f32 %v253, %v282
      %v326 = vmul.f32 %v254, %v282
      %v327 = vmul.f32 %v255, %v282
      %v328 = vmul.f32 %v256, %v282
      %v329 = vmul.f32 %v257, %v282
      %v330 = vmul.f32 %v258, %v282
      %v331 = vmul.f32 %v259, %v282
      %v332 = vmul.f32 %v260, %v282
      %v333 = vmul.f32 %v261, %v282
      %v334 = vmul.f32 %v262, %v282
      %v335 = vmul.f32 %v263, %v282
      %v336 = vmul.f32 %v264, %v282
      %v337 = vmul.f32 %v265, %v282
      %v338 = vmul.f32 %v266, %v282
      %v339 = vmul.f32 %v267, %v282
      %v340 = vmul.f32 %v268, %v282
      %v341 = vmul.f32 %v269, %v282
      %v342 = vmul.f32 %v270, %v282
      %v343 = vmul.f32 %v271, %v282
      %v344 = vmul.f32 %v272, %v282
      %v345 = vmul.f32 %v273, %v282
      %v346 = vmul.f32 %v274, %v282
      %v347 = vlaneseq
      %v348 = vshrl.u32 %v347, 7
      %v349 = vsub.s32 0, %v348
      %v350 = vrot.slane %v276, %v349
      %v351 = vadd.f32 %v283, %v350
      %v352 = vadd.f32 %v284, %v350
      %v353 = vadd.f32 %v285, %v350
      %v354 = vadd.f32 %v286, %v350
      %v355 = vadd.f32 %v287, %v350
      %v356 = vadd.f32 %v288, %v350
      %v357 = vadd.f32 %v289, %v350
      %v358 = vadd.f32 %v290, %v350
      %v359 = vadd.f32 %v291, %v350
      %v360 = vadd.f32 %v292, %v350
      %v361 = vadd.f32 %v293, %v350
      %v362 = vadd.f32 %v294, %v350
      %v363 = vadd.f32 %v295, %v350
      %v364 = vadd.f32 %v296, %v350
      %v365 = vadd.f32 %v297, %v350
      %v366 = vadd.f32 %v298, %v350
      %v367 = vadd.f32 %v299, %v350
      %v368 = vadd.f32 %v300, %v350
      %v369 = vadd.f32 %v301, %v350
      %v370 = vadd.f32 %v302, %v350
      %v371 = vadd.f32 %v303, %v350
      %v372 = vadd.f32 %v304, %v350
      %v373 = vadd.f32 %v305, %v350
      %v374 = vadd.f32 %v306, %v350
      %v375 = vadd.f32 %v307, %v350
      %v376 = vadd.f32 %v308, %v350
      %v377 = vadd.f32 %v309, %v350
      %v378 = vadd.f32 %v310, %v350
      %v379 = vadd.f32 %v311, %v350
      %v380 = vadd.f32 %v312, %v350
      %v381 = vadd.f32 %v313, %v350
      %v382 = vadd.f32 %v314, %v350
      %v383 = vadd.f32 %v315, %v350
      %v384 = vadd.f32 %v316, %v350
      %v385 = vadd.f32 %v317, %v350
      %v386 = vadd.f32 %v318, %v350
      %v387 = vadd.f32 %v319, %v350
      %v388 = vadd.f32 %v320, %v350
      %v389 = vadd.f32 %v321, %v350
      %v390 = vadd.f32 %v322, %v350
      %v391 = vadd.f32 %v323, %v350
      %v392 = vadd.f32 %v324, %v350
      %v393 = vadd.f32 %v325, %v350
      %v394 = vadd.f32 %v326, %v350
      %v395 = vadd.f32 %v327, %v350
      %v396 = vadd.f32 %v328, %v350
      %v397 = vadd.f32 %v329, %v350
      %v398 = vadd.f32 %v330, %v350
      %v399 = vadd.f32 %v331, %v350
      %v400 = vadd.f32 %v332, %v350
      %v401 = vadd.f32 %v333, %v350
      %v402 = vadd.f32 %v334, %v350
      %v403 = vadd.f32 %v335, %v350
      %v404 = vadd.f32 %v336, %v350
      %v405 = vadd.f32 %v337, %v350
      %v406 = vadd.f32 %v338, %v350
      %v407 = vadd.f32 %v339, %v350
      %v408 = vadd.f32 %v340, %v350
      %v409 = vadd.f32 %v341, %v350
      %v410 = vadd.f32 %v342, %v350
      %v411 = vadd.f32 %v343, %v350
      %v412 = vadd.f32 %v344, %v350
      %v413 = vadd.f32 %v345, %v350
      %v414 = vadd.f32 %v346, %v350
      %vm415 = vcmp.gt.f32.partialorder %v277, 0.5
      %v416 = vmax.f32 %v351, 0.0
      %v417 = vmax.f32 %v352, 0.0
      %v418 = vmax.f32 %v353, 0.0
      %v419 = vmax.f32 %v354, 0.0
      %v420 = vmax.f32 %v355, 0.0
      %v421 = vmax.f32 %v356, 0.0
      %v422 = vmax.f32 %v357, 0.0
      %v423 = vmax.f32 %v358, 0.0
      %v424 = vmax.f32 %v359, 0.0
      %v425 = vmax.f32 %v360, 0.0
      %v426 = vmax.f32 %v361, 0.0
      %v427 = vmax.f32 %v362, 0.0
      %v428 = vmax.f32 %v363, 0.0
      %v429 = vmax.f32 %v364, 0.0
      %v430 = vmax.f32 %v365, 0.0
      %v431 = vmax.f32 %v366, 0.0
      %v432 = vmax.f32 %v367, 0.0
      %v433 = vmax.f32 %v368, 0.0
      %v434 = vmax.f32 %v369, 0.0
      %v435 = vmax.f32 %v370, 0.0
      %v436 = vmax.f32 %v371, 0.0
      %v437 = vmax.f32 %v372, 0.0
      %v438 = vmax.f32 %v373, 0.0
      %v439 = vmax.f32 %v374, 0.0
      %v440 = vmax.f32 %v375, 0.0
      %v441 = vmax.f32 %v376, 0.0
      %v442 = vmax.f32 %v377, 0.0
      %v443 = vmax.f32 %v378, 0.0
      %v444 = vmax.f32 %v379, 0.0
      %v445 = vmax.f32 %v380, 0.0
      %v446 = vmax.f32 %v381, 0.0
      %v447 = vmax.f32 %v382, 0.0
      %v448 = vmax.f32 %v383, 0.0
      %v449 = vmax.f32 %v384, 0.0
      %v450 = vmax.f32 %v385, 0.0
      %v451 = vmax.f32 %v386, 0.0
      %v452 = vmax.f32 %v387, 0.0
      %v453 = vmax.f32 %v388, 0.0
      %v454 = vmax.f32 %v389, 0.0
      %v455 = vmax.f32 %v390, 0.0
      %v456 = vmax.f32 %v391, 0.0
      %v457 = vmax.f32 %v392, 0.0
      %v458 = vmax.f32 %v393, 0.0
      %v459 = vmax.f32 %v394, 0.0
      %v460 = vmax.f32 %v395, 0.0
      %v461 = vmax.f32 %v396, 0.0
      %v462 = vmax.f32 %v397, 0.0
      %v463 = vmax.f32 %v398, 0.0
      %v464 = vmax.f32 %v399, 0.0
      %v465 = vmax.f32 %v400, 0.0
      %v466 = vmax.f32 %v401, 0.0
      %v467 = vmax.f32 %v402, 0.0
      %v468 = vmax.f32 %v403, 0.0
      %v469 = vmax.f32 %v404, 0.0
      %v470 = vmax.f32 %v405, 0.0
      %v471 = vmax.f32 %v406, 0.0
      %v472 = vmax.f32 %v407, 0.0
      %v473 = vmax.f32 %v408, 0.0
      %v474 = vmax.f32 %v409, 0.0
      %v475 = vmax.f32 %v410, 0.0
      %v476 = vmax.f32 %v411, 0.0
      %v477 = vmax.f32 %v412, 0.0
      %v478 = vmax.f32 %v413, 0.0
      %v479 = vmax.f32 %v414, 0.0
      %v480 = vsel %vm415, 1, 0
      %v481 = vlaneseq
      %v482 = vshrl.u32 %v481, 7
      %v483 = vsub.s32 0, %v482
      %v484 = vrot.slane %v480, %v483
      %vm485 = vcmp.eq.s32.totalorder %v484, 1
      %v486 = vsel %vm485, %v416, %v351
      %v487 = vsel %vm485, %v417, %v352
      %v488 = vsel %vm485, %v418, %v353
      %v489 = vsel %vm485, %v419, %v354
      %v490 = vsel %vm485, %v420, %v355
      %v491 = vsel %vm485, %v421, %v356
      %v492 = vsel %vm485, %v422, %v357
      %v493 = vsel %vm485, %v423, %v358
      %v494 = vsel %vm485, %v424, %v359
      %v495 = vsel %vm485, %v425, %v360
      %v496 = vsel %vm485, %v426, %v361
      %v497 = vsel %vm485, %v427, %v362
      %v498 = vsel %vm485, %v428, %v363
      %v499 = vsel %vm485, %v429, %v364
      %v500 = vsel %vm485, %v430, %v365
      %v501 = vsel %vm485, %v431, %v366
      %v502 = vsel %vm485, %v432, %v367
      %v503 = vsel %vm485, %v433, %v368
      %v504 = vsel %vm485, %v434, %v369
      %v505 = vsel %vm485, %v435, %v370
      %v506 = vsel %vm485, %v436, %v371
      %v507 = vsel %vm485, %v437, %v372
      %v508 = vsel %vm485, %v438, %v373
      %v509 = vsel %vm485, %v439, %v374
      %v510 = vsel %vm485, %v440, %v375
      %v511 = vsel %vm485, %v441, %v376
      %v512 = vsel %vm485, %v442, %v377
      %v513 = vsel %vm485, %v443, %v378
      %v514 = vsel %vm485, %v444, %v379
      %v515 = vsel %vm485, %v445, %v380
      %v516 = vsel %vm485, %v446, %v381
      %v517 = vsel %vm485, %v447, %v382
      %v518 = vsel %vm485, %v448, %v383
      %v519 = vsel %vm485, %v449, %v384
      %v520 = vsel %vm485, %v450, %v385
      %v521 = vsel %vm485, %v451, %v386
      %v522 = vsel %vm485, %v452, %v387
      %v523 = vsel %vm485, %v453, %v388
      %v524 = vsel %vm485, %v454, %v389
      %v525 = vsel %vm485, %v455, %v390
      %v526 = vsel %vm485, %v456, %v391
      %v527 = vsel %vm485, %v457, %v392
      %v528 = vsel %vm485, %v458, %v393
      %v529 = vsel %vm485, %v459, %v394
      %v530 = vsel %vm485, %v460, %v395
      %v531 = vsel %vm485, %v461, %v396
      %v532 = vsel %vm485, %v462, %v397
      %v533 = vsel %vm485, %v463, %v398
      %v534 = vsel %vm485, %v464, %v399
      %v535 = vsel %vm485, %v465, %v400
      %v536 = vsel %vm485, %v466, %v401
      %v537 = vsel %vm485, %v467, %v402
      %v538 = vsel %vm485, %v468, %v403
      %v539 = vsel %vm485, %v469, %v404
      %v540 = vsel %vm485, %v470, %v405
      %v541 = vsel %vm485, %v471, %v406
      %v542 = vsel %vm485, %v472, %v407
      %v543 = vsel %vm485, %v473, %v408
      %v544 = vsel %vm485, %v474, %v409
      %v545 = vsel %vm485, %v475, %v410
      %v546 = vsel %vm485, %v476, %v411
      %v547 = vsel %vm485, %v477, %v412
      %v548 = vsel %vm485, %v478, %v413
      %v549 = vsel %vm485, %v479, %v414
      %v550 = vlaneseq
      %v551 = vshrl.u32 %v550, 7
      %v552 = vsub.s32 0, %v551
      %v553 = vrot.slane %v278, %v552
      %v554 = vmul.f32 %v486, %v553
      %v555 = vmul.f32 %v487, %v553
      %v556 = vmul.f32 %v488, %v553
      %v557 = vmul.f32 %v489, %v553
      %v558 = vmul.f32 %v490, %v553
      %v559 = vmul.f32 %v491, %v553
      %v560 = vmul.f32 %v492, %v553
      %v561 = vmul.f32 %v493, %v553
      %v562 = vmul.f32 %v494, %v553
      %v563 = vmul.f32 %v495, %v553
      %v564 = vmul.f32 %v496, %v553
      %v565 = vmul.f32 %v497, %v553
      %v566 = vmul.f32 %v498, %v553
      %v567 = vmul.f32 %v499, %v553
      %v568 = vmul.f32 %v500, %v553
      %v569 = vmul.f32 %v501, %v553
      %v570 = vmul.f32 %v502, %v553
      %v571 = vmul.f32 %v503, %v553
      %v572 = vmul.f32 %v504, %v553
      %v573 = vmul.f32 %v505, %v553
      %v574 = vmul.f32 %v506, %v553
      %v575 = vmul.f32 %v507, %v553
      %v576 = vmul.f32 %v508, %v553
      %v577 = vmul.f32 %v509, %v553
      %v578 = vmul.f32 %v510, %v553
      %v579 = vmul.f32 %v511, %v553
      %v580 = vmul.f32 %v512, %v553
      %v581 = vmul.f32 %v513, %v553
      %v582 = vmul.f32 %v514, %v553
      %v583 = vmul.f32 %v515, %v553
      %v584 = vmul.f32 %v516, %v553
      %v585 = vmul.f32 %v517, %v553
      %v586 = vmul.f32 %v518, %v553
      %v587 = vmul.f32 %v519, %v553
      %v588 = vmul.f32 %v520, %v553
      %v589 = vmul.f32 %v521, %v553
      %v590 = vmul.f32 %v522, %v553
      %v591 = vmul.f32 %v523, %v553
      %v592 = vmul.f32 %v524, %v553
      %v593 = vmul.f32 %v525, %v553
      %v594 = vmul.f32 %v526, %v553
      %v595 = vmul.f32 %v527, %v553
      %v596 = vmul.f32 %v528, %v553
      %v597 = vmul.f32 %v529, %v553
      %v598 = vmul.f32 %v530, %v553
      %v599 = vmul.f32 %v531, %v553
      %v600 = vmul.f32 %v532, %v553
      %v601 = vmul.f32 %v533, %v553
      %v602 = vmul.f32 %v534, %v553
      %v603 = vmul.f32 %v535, %v553
      %v604 = vmul.f32 %v536, %v553
      %v605 = vmul.f32 %v537, %v553
      %v606 = vmul.f32 %v538, %v553
      %v607 = vmul.f32 %v539, %v553
      %v608 = vmul.f32 %v540, %v553
      %v609 = vmul.f32 %v541, %v553
      %v610 = vmul.f32 %v542, %v553
      %v611 = vmul.f32 %v543, %v553
      %v612 = vmul.f32 %v544, %v553
      %v613 = vmul.f32 %v545, %v553
      %v614 = vmul.f32 %v546, %v553
      %v615 = vmul.f32 %v547, %v553
      %v616 = vmul.f32 %v548, %v553
      %v617 = vmul.f32 %v549, %v553
      %v618 = vpack.c.bf16 %v555, %v554
      %v619 = vpack.c.bf16 %v557, %v556
      %v620 = vpack.c.bf16 %v559, %v558
      %v621 = vpack.c.bf16 %v561, %v560
      %v622 = vpack.c.bf16 %v563, %v562
      %v623 = vpack.c.bf16 %v565, %v564
      %v624 = vpack.c.bf16 %v567, %v566
      %v625 = vpack.c.bf16 %v569, %v568
      %v626 = vpack.c.bf16 %v571, %v570
      %v627 = vpack.c.bf16 %v573, %v572
      %v628 = vpack.c.bf16 %v575, %v574
      %v629 = vpack.c.bf16 %v577, %v576
      %v630 = vpack.c.bf16 %v579, %v578
      %v631 = vpack.c.bf16 %v581, %v580
      %v632 = vpack.c.bf16 %v583, %v582
      %v633 = vpack.c.bf16 %v585, %v584
      %v634 = vpack.c.bf16 %v587, %v586
      %v635 = vpack.c.bf16 %v589, %v588
      %v636 = vpack.c.bf16 %v591, %v590
      %v637 = vpack.c.bf16 %v593, %v592
      %v638 = vpack.c.bf16 %v595, %v594
      %v639 = vpack.c.bf16 %v597, %v596
      %v640 = vpack.c.bf16 %v599, %v598
      %v641 = vpack.c.bf16 %v601, %v600
      %v642 = vpack.c.bf16 %v603, %v602
      %v643 = vpack.c.bf16 %v605, %v604
      %v644 = vpack.c.bf16 %v607, %v606
      %v645 = vpack.c.bf16 %v609, %v608
      %v646 = vpack.c.bf16 %v611, %v610
      %v647 = vpack.c.bf16 %v613, %v612
      %v648 = vpack.c.bf16 %v615, %v614
      %v649 = vpack.c.bf16 %v617, %v616
      %v682 = vunpack.c.l.b16 %v618
      %v683 = vunpack.c.h.b16 %v618
      %v684 = vunpack.c.l.b16 %v619
      %v685 = vunpack.c.h.b16 %v619
      %v686 = vunpack.c.l.b16 %v620
      %v687 = vunpack.c.h.b16 %v620
      %v688 = vunpack.c.l.b16 %v621
      %v689 = vunpack.c.h.b16 %v621
      %v690 = vunpack.c.l.b16 %v622
      %v691 = vunpack.c.h.b16 %v622
      %v692 = vunpack.c.l.b16 %v623
      %v693 = vunpack.c.h.b16 %v623
      %v694 = vunpack.c.l.b16 %v624
      %v695 = vunpack.c.h.b16 %v624
      %v696 = vunpack.c.l.b16 %v625
      %v697 = vunpack.c.h.b16 %v625
      %v698 = vunpack.c.l.b16 %v626
      %v699 = vunpack.c.h.b16 %v626
      %v700 = vunpack.c.l.b16 %v627
      %v701 = vunpack.c.h.b16 %v627
      %v702 = vunpack.c.l.b16 %v628
      %v703 = vunpack.c.h.b16 %v628
      %v704 = vunpack.c.l.b16 %v629
      %v705 = vunpack.c.h.b16 %v629
      %v706 = vunpack.c.l.b16 %v630
      %v707 = vunpack.c.h.b16 %v630
      %v708 = vunpack.c.l.b16 %v631
      %v709 = vunpack.c.h.b16 %v631
      %v710 = vunpack.c.l.b16 %v632
      %v711 = vunpack.c.h.b16 %v632
      %v712 = vunpack.c.l.b16 %v633
      %v713 = vunpack.c.h.b16 %v633
      %v714 = vunpack.c.l.b16 %v634
      %v715 = vunpack.c.h.b16 %v634
      %v716 = vunpack.c.l.b16 %v635
      %v717 = vunpack.c.h.b16 %v635
      %v718 = vunpack.c.l.b16 %v636
      %v719 = vunpack.c.h.b16 %v636
      %v720 = vunpack.c.l.b16 %v637
      %v721 = vunpack.c.h.b16 %v637
      %v722 = vunpack.c.l.b16 %v638
      %v723 = vunpack.c.h.b16 %v638
      %v724 = vunpack.c.l.b16 %v639
      %v725 = vunpack.c.h.b16 %v639
      %v726 = vunpack.c.l.b16 %v640
      %v727 = vunpack.c.h.b16 %v640
      %v728 = vunpack.c.l.b16 %v641
      %v729 = vunpack.c.h.b16 %v641
      %v730 = vunpack.c.l.b16 %v642
      %v731 = vunpack.c.h.b16 %v642
      %v732 = vunpack.c.l.b16 %v643
      %v733 = vunpack.c.h.b16 %v643
      %v734 = vunpack.c.l.b16 %v644
      %v735 = vunpack.c.h.b16 %v644
      %v736 = vunpack.c.l.b16 %v645
      %v737 = vunpack.c.h.b16 %v645
      %v738 = vunpack.c.l.b16 %v646
      %v739 = vunpack.c.h.b16 %v646
      %v740 = vunpack.c.l.b16 %v647
      %v741 = vunpack.c.h.b16 %v647
      %v742 = vunpack.c.l.b16 %v648
      %v743 = vunpack.c.h.b16 %v648
      %v744 = vunpack.c.l.b16 %v649
      %v745 = vunpack.c.h.b16 %v649
      %v746 = vpack.c.b16 %v682, %v682
      %v747 = vpack.c.b16 %v683, %v683
      %v748 = vpack.c.b16 %v684, %v684
      %v749 = vpack.c.b16 %v685, %v685
      %v750 = vpack.c.b16 %v686, %v686
      %v751 = vpack.c.b16 %v687, %v687
      %v752 = vpack.c.b16 %v688, %v688
      %v753 = vpack.c.b16 %v689, %v689
      %v754 = vpack.c.b16 %v690, %v690
      %v755 = vpack.c.b16 %v691, %v691
      %v756 = vpack.c.b16 %v692, %v692
      %v757 = vpack.c.b16 %v693, %v693
      %v758 = vpack.c.b16 %v694, %v694
      %v759 = vpack.c.b16 %v695, %v695
      %v760 = vpack.c.b16 %v696, %v696
      %v761 = vpack.c.b16 %v697, %v697
      %v762 = vpack.c.b16 %v698, %v698
      %v763 = vpack.c.b16 %v699, %v699
      %v764 = vpack.c.b16 %v700, %v700
      %v765 = vpack.c.b16 %v701, %v701
      %v766 = vpack.c.b16 %v702, %v702
      %v767 = vpack.c.b16 %v703, %v703
      %v768 = vpack.c.b16 %v704, %v704
      %v769 = vpack.c.b16 %v705, %v705
      %v770 = vpack.c.b16 %v706, %v706
      %v771 = vpack.c.b16 %v707, %v707
      %v772 = vpack.c.b16 %v708, %v708
      %v773 = vpack.c.b16 %v709, %v709
      %v774 = vpack.c.b16 %v710, %v710
      %v775 = vpack.c.b16 %v711, %v711
      %v776 = vpack.c.b16 %v712, %v712
      %v777 = vpack.c.b16 %v713, %v713
      %v778 = vpack.c.b16 %v714, %v714
      %v779 = vpack.c.b16 %v715, %v715
      %v780 = vpack.c.b16 %v716, %v716
      %v781 = vpack.c.b16 %v717, %v717
      %v782 = vpack.c.b16 %v718, %v718
      %v783 = vpack.c.b16 %v719, %v719
      %v784 = vpack.c.b16 %v720, %v720
      %v785 = vpack.c.b16 %v721, %v721
      %v786 = vpack.c.b16 %v722, %v722
      %v787 = vpack.c.b16 %v723, %v723
      %v788 = vpack.c.b16 %v724, %v724
      %v789 = vpack.c.b16 %v725, %v725
      %v790 = vpack.c.b16 %v726, %v726
      %v791 = vpack.c.b16 %v727, %v727
      %v792 = vpack.c.b16 %v728, %v728
      %v793 = vpack.c.b16 %v729, %v729
      %v794 = vpack.c.b16 %v730, %v730
      %v795 = vpack.c.b16 %v731, %v731
      %v796 = vpack.c.b16 %v732, %v732
      %v797 = vpack.c.b16 %v733, %v733
      %v798 = vpack.c.b16 %v734, %v734
      %v799 = vpack.c.b16 %v735, %v735
      %v800 = vpack.c.b16 %v736, %v736
      %v801 = vpack.c.b16 %v737, %v737
      %v802 = vpack.c.b16 %v738, %v738
      %v803 = vpack.c.b16 %v739, %v739
      %v804 = vpack.c.b16 %v740, %v740
      %v805 = vpack.c.b16 %v741, %v741
      %v806 = vpack.c.b16 %v742, %v742
      %v807 = vpack.c.b16 %v743, %v743
      %v808 = vpack.c.b16 %v744, %v744
      %v809 = vpack.c.b16 %v745, %v745
      %874 = vst [vmem:[%s145] sm:$0xf] %v746
      %875 = vst [vmem:[%s145 + $0x4] sm:$0xf] %v747
      %876 = vst [vmem:[%s145 + $0x8] sm:$0xf] %v748
      %877 = vst [vmem:[%s145 + $0xc] sm:$0xf] %v749
      %878 = vst [vmem:[%s145 + $0x10] sm:$0xf] %v750
      %879 = vst [vmem:[%s145 + $0x14] sm:$0xf] %v751
      %880 = vst [vmem:[%s145 + $0x18] sm:$0xf] %v752
      %881 = vst [vmem:[%s145 + $0x1c] sm:$0xf] %v753
      %882 = vst [vmem:[%s145 + $0x20] sm:$0xf] %v754
      %883 = vst [vmem:[%s145 + $0x24] sm:$0xf] %v755
      %884 = vst [vmem:[%s145 + $0x28] sm:$0xf] %v756
      %885 = vst [vmem:[%s145 + $0x2c] sm:$0xf] %v757
      %886 = vst [vmem:[%s145 + $0x30] sm:$0xf] %v758
      %887 = vst [vmem:[%s145 + $0x34] sm:$0xf] %v759
      %888 = vst [vmem:[%s145 + $0x38] sm:$0xf] %v760
      %889 = vst [vmem:[%s145 + $0x3c] sm:$0xf] %v761
      %890 = vst [vmem:[%s145 + $0x40] sm:$0xf] %v762
      %891 = vst [vmem:[%s145 + $0x44] sm:$0xf] %v763
      %892 = vst [vmem:[%s145 + $0x48] sm:$0xf] %v764
      %893 = vst [vmem:[%s145 + $0x4c] sm:$0xf] %v765
      %894 = vst [vmem:[%s145 + $0x50] sm:$0xf] %v766
      %895 = vst [vmem:[%s145 + $0x54] sm:$0xf] %v767
      %896 = vst [vmem:[%s145 + $0x58] sm:$0xf] %v768
      %897 = vst [vmem:[%s145 + $0x5c] sm:$0xf] %v769
      %898 = vst [vmem:[%s145 + $0x60] sm:$0xf] %v770
      %899 = vst [vmem:[%s145 + $0x64] sm:$0xf] %v771
      %900 = vst [vmem:[%s145 + $0x68] sm:$0xf] %v772
      %901 = vst [vmem:[%s145 + $0x6c] sm:$0xf] %v773
      %902 = vst [vmem:[%s145 + $0x70] sm:$0xf] %v774
      %903 = vst [vmem:[%s145 + $0x74] sm:$0xf] %v775
      %904 = vst [vmem:[%s145 + $0x78] sm:$0xf] %v776
      %905 = vst [vmem:[%s145 + $0x7c] sm:$0xf] %v777
      %906 = vst [vmem:[%s145 + $0x80] sm:$0xf] %v778
      %907 = vst [vmem:[%s145 + $0x84] sm:$0xf] %v779
      %908 = vst [vmem:[%s145 + $0x88] sm:$0xf] %v780
      %909 = vst [vmem:[%s145 + $0x8c] sm:$0xf] %v781
      %910 = vst [vmem:[%s145 + $0x90] sm:$0xf] %v782
      %911 = vst [vmem:[%s145 + $0x94] sm:$0xf] %v783
      %912 = vst [vmem:[%s145 + $0x98] sm:$0xf] %v784
      %913 = vst [vmem:[%s145 + $0x9c] sm:$0xf] %v785
      %914 = vst [vmem:[%s145 + $0xa0] sm:$0xf] %v786
      %915 = vst [vmem:[%s145 + $0xa4] sm:$0xf] %v787
      %916 = vst [vmem:[%s145 + $0xa8] sm:$0xf] %v788
      %917 = vst [vmem:[%s145 + $0xac] sm:$0xf] %v789
      %918 = vst [vmem:[%s145 + $0xb0] sm:$0xf] %v790
      %919 = vst [vmem:[%s145 + $0xb4] sm:$0xf] %v791
      %920 = vst [vmem:[%s145 + $0xb8] sm:$0xf] %v792
      %921 = vst [vmem:[%s145 + $0xbc] sm:$0xf] %v793
      %922 = vst [vmem:[%s145 + $0xc0] sm:$0xf] %v794
      %923 = vst [vmem:[%s145 + $0xc4] sm:$0xf] %v795
      %924 = vst [vmem:[%s145 + $0xc8] sm:$0xf] %v796
      %925 = vst [vmem:[%s145 + $0xcc] sm:$0xf] %v797
      %926 = vst [vmem:[%s145 + $0xd0] sm:$0xf] %v798
      %927 = vst [vmem:[%s145 + $0xd4] sm:$0xf] %v799
      %928 = vst [vmem:[%s145 + $0xd8] sm:$0xf] %v800
      %929 = vst [vmem:[%s145 + $0xdc] sm:$0xf] %v801
      %930 = vst [vmem:[%s145 + $0xe0] sm:$0xf] %v802
      %931 = vst [vmem:[%s145 + $0xe4] sm:$0xf] %v803
      %932 = vst [vmem:[%s145 + $0xe8] sm:$0xf] %v804
      %933 = vst [vmem:[%s145 + $0xec] sm:$0xf] %v805
      %934 = vst [vmem:[%s145 + $0xf0] sm:$0xf] %v806
      %935 = vst [vmem:[%s145 + $0xf4] sm:$0xf] %v807
      %936 = vst [vmem:[%s145 + $0xf8] sm:$0xf] %v808
      %937 = vst [vmem:[%s145 + $0xfc] sm:$0xf] %v809
      %s938 = smul.u32 64, %s13
      %p939 = scmp.lt.s32.totalorder %s938, 255
      %s940 = scalar_select %p939, %s938, 255
      %s941 = smul.addr %s940, 4
      %s942 = scalar_lea.vmem %s2, %s941
      // Predicated region
      $region29: #{resnet_forward.9} parent=27 // pred_check
        %p943 = pneg %p78
      $region30: #{resnet_forward.9} parent=27 // pred_check_branch
        %945 = sbr.rel (%p943) target = $region32
      $region31: #{resnet_forward.9} parent=27 // pred_region
        %s946 = smul.u32 64, %s13
      $region32: #{resnet_forward.9} parent=27 // pred_fallthru
        _
    $region28: #{resnet_forward.9} parent=5 // pred_fallthru
      _
    %p947 = scmp.le.s32.totalorder 2, %s8
    // Predicated region
    $region33: #{resnet_forward.9} parent=5 // pred_check
      %p948 = pneg %p947
    $region34: #{resnet_forward.9} parent=5 // pred_check_branch
      %950 = sbr.rel (%p948) target = $region36
    $region35: #{resnet_forward.9} parent=5 // pred_region
      %s951 = ssub.s32 %s8, 2
      // Predicated region
      $region37: #{resnet_forward.9} parent=35 // pred_check
        %p952 = pneg %p84
      $region38: #{resnet_forward.9} parent=35 // pred_check_branch
        %954 = sbr.rel (%p952) target = $region40
      $region39: #{resnet_forward.9} parent=35 // pred_region
        %s955 = smul.u32 64, %s14
        %p956 = scmp.lt.s32.totalorder %s955, 255
        %s957 = scalar_select %p956, %s955, 255
        %s958 = smul.addr %s957, 4
        %s959 = scalar_lea.vmem %s2, %s958
      $region40: #{resnet_forward.9} parent=35 // pred_fallthru
        _
    $region36: #{resnet_forward.9} parent=5 // pred_fallthru
      _
  $region6: #{resnet_forward.9} parent=0 // loop_footer
    %s12 = sadd.s32 1, %s8
  $region7: #{resnet_forward.9} parent=0 // loop_footer_branch
    %7 = sbr.rel target = $region3
  $region8: #{resnet_forward.9} parent=0 // loop_exit
    _

// kernel: resnet_forward.8
$region0: #{resnet_forward.8}
  #allocation0 [shape = 'u32[]', space=smem, size = 0x4, offset = 0x4, fixed_abs, tag = 'smem constant byte address 0x4 - core index']
  #allocation1 [shape = 'u32[144,128]{1,0:T(1,128)}', space=vmem, size = 0x12000, scoped, tag = 'internal scratch']
  %s0 = inlined_call_operand.vmem [shape: bf16[2048,256], index: 0, kind: input, shape index: {}]
  %s1 = inlined_call_operand.vmem [shape: bf16[256,128], index: 1, kind: input, shape index: {}]
  %s2 = inlined_call_operand.vmem [shape: bf16[2048,128], index: 2, kind: output, shape index: {0}]
  %s3 = inlined_call_operand.vmem [shape: f32[32,128], index: 3, kind: output, shape index: {1}]
  %4 = xla_tuple %s2, %s3
  %s5 = sld [smem:[#allocation0]]
  $region49: #{resnet_forward.8} parent=0
    _
  %s7 = ssub.s32 1, %s5
  %s8 = scalar_select 0, %s7, %s5
  loop: start=0, step=1, limit=6
  $region2: #{resnet_forward.8} parent=0 // loop_pre_header
    _
  $region3: #{resnet_forward.8} parent=0 // loop_header
    %s10 = sphi 0, %s14
    %p11 = scmp.ge.s32.totalorder %s10, 6
    %s20 = sphi 0, %s22
    %s23 = sphi 0, %s20
    %s24 = sphi 0, %s23
    %s40 = sphi 0, %s24
    %s44 = sphi 0, %s44
    %s46 = sphi 0, %s44
    %s47 = sphi 0, %s46
    %s61 = sphi 0, %s47
    %s67 = sphi 0, %s69
    %s70 = sphi 0, %s67
    %s71 = sphi 0, %s70
    %s87 = sphi 0, %s71
    %s93 = sphi 0, %s95
    %s96 = sphi 0, %s93
    %s97 = sphi 0, %s96
    %s113 = sphi 0, %s97
  $region4: #{resnet_forward.8} parent=0 // loop_header_branch
    %13 = sbr.rel (%p11) target = $region8
  $region5: #{resnet_forward.8} parent=0 // loop_body
    %s15 = ssub.s32 %s10, 1
    %s16 = ssub.s32 %s10, 2
    %s17 = sadd.s32 %s10, 1
    %s18 = ssub.s32 %s10, %s17
    %p19 = scmp.eq.s32.totalorder %s18, 0
    %s21 = sadd.s32 %s20, 1
    %s22 = scalar_select %p19, %s20, %s21
    %p25 = pneg %p19
    %p26 = scmp.eq.s32.totalorder %s10, 3
    %p27 = por %p25, %p26
    %p28 = scmp.ne.s32.totalorder %s20, %s23
    %p29 = scmp.eq.s32.totalorder %s10, 0
    %p30 = por %p28, %p29
    %p31 = scmp.ne.s32.totalorder %s20, %s23
    %p32 = scmp.eq.s32.totalorder %s15, 3
    %p33 = por %p31, %p32
    %p34 = scmp.ne.s32.totalorder %s23, %s24
    %p35 = scmp.eq.s32.totalorder %s15, 0
    %p36 = por %p34, %p35
    %p37 = scmp.ne.s32.totalorder %s23, %s24
    %p38 = scmp.eq.s32.totalorder %s16, 3
    %p39 = por %p37, %p38
    %p41 = scmp.ne.s32.totalorder %s24, %s40
    %p42 = scmp.eq.s32.totalorder %s16, 0
    %p43 = por %p41, %p42
    %s45 = sadd.s32 %s44, 1
    %p48 = scmp.eq.s32.totalorder %s10, 3
    %p49 = scmp.ne.s32.totalorder %s44, %s46
    %p50 = scmp.eq.s32.totalorder %s10, 0
    %p51 = por %p49, %p50
    %p52 = scmp.ne.s32.totalorder %s44, %s46
    %p53 = scmp.eq.s32.totalorder %s15, 3
    %p54 = por %p52, %p53
    %p55 = scmp.ne.s32.totalorder %s46, %s47
    %p56 = scmp.eq.s32.totalorder %s15, 0
    %p57 = por %p55, %p56
    %p58 = scmp.ne.s32.totalorder %s46, %s47
    %p59 = scmp.eq.s32.totalorder %s16, 3
    %p60 = por %p58, %p59
    %p62 = scmp.ne.s32.totalorder %s47, %s61
    %p63 = scmp.eq.s32.totalorder %s16, 0
    %p64 = por %p62, %p63
    %s65 = ssub.s32 %s10, %s17
    %p66 = scmp.eq.s32.totalorder %s65, 0
    %s68 = sadd.s32 %s67, 1
    %s69 = scalar_select %p66, %s67, %s68
    %p72 = pneg %p66
    %p73 = scmp.eq.s32.totalorder %s10, 3
    %p74 = por %p72, %p73
    %p75 = scmp.ne.s32.totalorder %s67, %s70
    %p76 = scmp.eq.s32.totalorder %s10, 0
    %p77 = por %p75, %p76
    %p78 = scmp.ne.s32.totalorder %s67, %s70
    %p79 = scmp.eq.s32.totalorder %s15, 3
    %p80 = por %p78, %p79
    %p81 = scmp.ne.s32.totalorder %s70, %s71
    %p82 = scmp.eq.s32.totalorder %s15, 0
    %p83 = por %p81, %p82
    %p84 = scmp.ne.s32.totalorder %s70, %s71
    %p85 = scmp.eq.s32.totalorder %s16, 3
    %p86 = por %p84, %p85
    %p88 = scmp.ne.s32.totalorder %s71, %s87
    %p89 = scmp.eq.s32.totalorder %s16, 0
    %p90 = por %p88, %p89
    %s91 = ssub.s32 %s10, %s17
    %p92 = scmp.eq.s32.totalorder %s91, 0
    %s94 = sadd.s32 %s93, 1
    %s95 = scalar_select %p92, %s93, %s94
    %p98 = pneg %p92
    %p99 = scmp.eq.s32.totalorder %s10, 3
    %p100 = por %p98, %p99
    %p101 = scmp.ne.s32.totalorder %s93, %s96
    %p102 = scmp.eq.s32.totalorder %s10, 0
    %p103 = por %p101, %p102
    %p104 = scmp.ne.s32.totalorder %s93, %s96
    %p105 = scmp.eq.s32.totalorder %s15, 3
    %p106 = por %p104, %p105
    %p107 = scmp.ne.s32.totalorder %s96, %s97
    %p108 = scmp.eq.s32.totalorder %s15, 0
    %p109 = por %p107, %p108
    %p110 = scmp.ne.s32.totalorder %s96, %s97
    %p111 = scmp.eq.s32.totalorder %s16, 3
    %p112 = por %p110, %p111
    %p114 = scmp.ne.s32.totalorder %s97, %s113
    %p115 = scmp.eq.s32.totalorder %s16, 0
    %p116 = por %p114, %p115
    %p117 = scmp.le.s32.totalorder 1, %s10
    %p118 = scmp.lt.s32.totalorder %s10, 5
    %p119 = pnand %p117, %p118
    %p120 = pneg %p119
    // Predicated region
    $region9: #{resnet_forward.8} parent=5 // pred_check
      _
    $region10: #{resnet_forward.8} parent=5 // pred_check_branch
      %122 = sbr.rel (%p119) target = $region12
    $region11: #{resnet_forward.8} parent=5 // pred_region
      %s123 = ssub.s32 %s10, 1
      // Predicated region
      $region13: #{resnet_forward.8} parent=11 // pred_check
        %p124 = pneg %p57
      $region14: #{resnet_forward.8} parent=11 // pred_check_branch
        %126 = sbr.rel (%p124) target = $region16
      $region15: #{resnet_forward.8} parent=11 // pred_region
        _
      $region16: #{resnet_forward.8} parent=11 // pred_fallthru
        _
    $region12: #{resnet_forward.8} parent=5 // pred_fallthru
      _
    %p127 = scmp.lt.s32.totalorder %s10, 4
    // Predicated region
    $region17: #{resnet_forward.8} parent=5 // pred_check
      %p128 = pneg %p127
    $region18: #{resnet_forward.8} parent=5 // pred_check_branch
      %130 = sbr.rel (%p128) target = $region20
    $region19: #{resnet_forward.8} parent=5 // pred_region
      // Predicated region
      $region21: #{resnet_forward.8} parent=19 // pred_check
        %p131 = pneg %p30
      $region22: #{resnet_forward.8} parent=19 // pred_check_branch
        %133 = sbr.rel (%p131) target = $region24
      $region23: #{resnet_forward.8} parent=19 // pred_region
        %s134 = smul.u32 64, %s10
        %p135 = scmp.lt.s32.totalorder %s134, 255
        %s136 = scalar_select %p135, %s134, 255
        %s137 = smul.addr %s136, 2
        %s138 = smul.addr %s137, 4
        %s139 = scalar_lea.vmem %s0, %s138
        %s140 = smul.u32 64, %s10
      $region24: #{resnet_forward.8} parent=19 // pred_fallthru
        _
    $region20: #{resnet_forward.8} parent=5 // pred_fallthru
      _
    %p141 = scmp.le.s32.totalorder 1, %s10
    %p142 = scmp.lt.s32.totalorder %s10, 5
    %p143 = pnand %p141, %p142
    %p144 = pneg %p143
    // Predicated region
    $region25: #{resnet_forward.8} parent=5 // pred_check
      _
    $region26: #{resnet_forward.8} parent=5 // pred_check_branch
      %146 = sbr.rel (%p143) target = $region28
    $region27: #{resnet_forward.8} parent=5 // pred_region
      %s147 = ssub.s32 %s10, 1
      %s148 = smul.u32 64, %s15
      %p149 = scmp.lt.s32.totalorder %s148, 255
      %s150 = scalar_select %p149, %s148, 255
      %s151 = smul.addr %s150, 2
      %s152 = smul.addr %s151, 4
      %s153 = scalar_lea.vmem %s0, %s152
      %p154 = pneg %p36
      %p155 = pneg %p33
      %p156 = pneg %p57
      %p157 = pneg %p54
      %p158 = pneg %p83
      %p159 = pneg %p80
      %s160 = smul.u32 64, %s15
      %p161 = scmp.lt.s32.totalorder %s160, 255
      %s162 = scalar_select %p161, %s160, 255
      %s163 = smul.addr %s162, 4
      %s164 = scalar_lea.vmem %s2, %s163
      %p165 = pneg %p109
      %p166 = pneg %p106
      %p167 = scmp.lt.s32.totalorder %s15, 3
      %s168 = scalar_select %p167, %s15, 3
      %s169 = smul.addr %s168, 8
      %s170 = scalar_lea.vmem %s3, %s169
      %s171 = smul.u32 64, %s15
      %p172 = scmp.lt.s32.totalorder %s171, 255
      %s173 = scalar_select %p172, %s171, 255
      %s174 = smul.addr %s173, 2
      %s175 = smul.addr %s174, 4
      %s176 = scalar_lea.vmem %s0, %s175
      %s177 = smul.u32 64, %s15
      %s178 = smul.u32 64, %s15
      %p179 = scmp.lt.s32.totalorder %s178, 255
      %s180 = scalar_select %p179, %s178, 255
      %s181 = smul.addr %s180, 4
      %s182 = scalar_lea.vmem %s2, %s181
      %s183 = smul.u32 64, %s15
      %p184 = scmp.lt.s32.totalorder %s15, 3
      %s185 = scalar_select %p184, %s15, 3
      %s186 = smul.addr %s185, 8
      %s187 = scalar_lea.vmem %s3, %s186
      %v189 = vld [vmem:[%s176] sm:$0xff]
      %v190 = vld [vmem:[%s176 + $0x8] sm:$0xff]
      %v191 = vld [vmem:[%s176 + $0x10] sm:$0xff]
      %v192 = vld [vmem:[%s176 + $0x18] sm:$0xff]
      %v193 = vld [vmem:[%s176 + $0x20] sm:$0xff]
      %v194 = vld [vmem:[%s176 + $0x28] sm:$0xff]
      %v195 = vld [vmem:[%s176 + $0x30] sm:$0xff]
      %v196 = vld [vmem:[%s176 + $0x38] sm:$0xff]
      %v197 = vld [vmem:[%s176 + $0x40] sm:$0xff]
      %v198 = vld [vmem:[%s176 + $0x48] sm:$0xff]
      %v199 = vld [vmem:[%s176 + $0x50] sm:$0xff]
      %v200 = vld [vmem:[%s176 + $0x58] sm:$0xff]
      %v201 = vld [vmem:[%s176 + $0x60] sm:$0xff]
      %v202 = vld [vmem:[%s176 + $0x68] sm:$0xff]
      %v203 = vld [vmem:[%s176 + $0x70] sm:$0xff]
      %v204 = vld [vmem:[%s176 + $0x78] sm:$0xff]
      %v205 = vld [vmem:[%s176 + $0x80] sm:$0xff]
      %v206 = vld [vmem:[%s176 + $0x88] sm:$0xff]
      %v207 = vld [vmem:[%s176 + $0x90] sm:$0xff]
      %v208 = vld [vmem:[%s176 + $0x98] sm:$0xff]
      %v209 = vld [vmem:[%s176 + $0xa0] sm:$0xff]
      %v210 = vld [vmem:[%s176 + $0xa8] sm:$0xff]
      %v211 = vld [vmem:[%s176 + $0xb0] sm:$0xff]
      %v212 = vld [vmem:[%s176 + $0xb8] sm:$0xff]
      %v213 = vld [vmem:[%s176 + $0xc0] sm:$0xff]
      %v214 = vld [vmem:[%s176 + $0xc8] sm:$0xff]
      %v215 = vld [vmem:[%s176 + $0xd0] sm:$0xff]
      %v216 = vld [vmem:[%s176 + $0xd8] sm:$0xff]
      %v217 = vld [vmem:[%s176 + $0xe0] sm:$0xff]
      %v218 = vld [vmem:[%s176 + $0xe8] sm:$0xff]
      %v219 = vld [vmem:[%s176 + $0xf0] sm:$0xff]
      %v220 = vld [vmem:[%s176 + $0xf8] sm:$0xff]
      %v221 = vld [vmem:[%s176 + $0x100] sm:$0xff]
      %v222 = vld [vmem:[%s176 + $0x108] sm:$0xff]
      %v223 = vld [vmem:[%s176 + $0x110] sm:$0xff]
      %v224 = vld [vmem:[%s176 + $0x118] sm:$0xff]
      %v225 = vld [vmem:[%s176 + $0x120] sm:$0xff]
      %v226 = vld [vmem:[%s176 + $0x128] sm:$0xff]
      %v227 = vld [vmem:[%s176 + $0x130] sm:$0xff]
      %v228 = vld [vmem:[%s176 + $0x138] sm:$0xff]
      %v229 = vld [vmem:[%s176 + $0x140] sm:$0xff]
      %v230 = vld [vmem:[%s176 + $0x148] sm:$0xff]
      %v231 = vld [vmem:[%s176 + $0x150] sm:$0xff]
      %v232 = vld [vmem:[%s176 + $0x158] sm:$0xff]
      %v233 = vld [vmem:[%s176 + $0x160] sm:$0xff]
      %v234 = vld [vmem:[%s176 + $0x168] sm:$0xff]
      %v235 = vld [vmem:[%s176 + $0x170] sm:$0xff]
      %v236 = vld [vmem:[%s176 + $0x178] sm:$0xff]
      %v237 = vld [vmem:[%s176 + $0x180] sm:$0xff]
      %v238 = vld [vmem:[%s176 + $0x188] sm:$0xff]
      %v239 = vld [vmem:[%s176 + $0x190] sm:$0xff]
      %v240 = vld [vmem:[%s176 + $0x198] sm:$0xff]
      %v241 = vld [vmem:[%s176 + $0x1a0] sm:$0xff]
      %v242 = vld [vmem:[%s176 + $0x1a8] sm:$0xff]
      %v243 = vld [vmem:[%s176 + $0x1b0] sm:$0xff]
      %v244 = vld [vmem:[%s176 + $0x1b8] sm:$0xff]
      %v245 = vld [vmem:[%s176 + $0x1c0] sm:$0xff]
      %v246 = vld [vmem:[%s176 + $0x1c8] sm:$0xff]
      %v247 = vld [vmem:[%s176 + $0x1d0] sm:$0xff]
      %v248 = vld [vmem:[%s176 + $0x1d8] sm:$0xff]
      %v249 = vld [vmem:[%s176 + $0x1e0] sm:$0xff]
      %v250 = vld [vmem:[%s176 + $0x1e8] sm:$0xff]
      %v251 = vld [vmem:[%s176 + $0x1f0] sm:$0xff]
      %v252 = vld [vmem:[%s176 + $0x1f8] sm:$0xff]
      %v253 = vld [vmem:[%s1] sm:$0xf]
      %v254 = vld [vmem:[%s1 + $0x4] sm:$0xf]
      %v255 = vld [vmem:[%s1 + $0x8] sm:$0xf]
      %v256 = vld [vmem:[%s1 + $0xc] sm:$0xf]
      %v257 = vld [vmem:[%s1 + $0x10] sm:$0xf]
      %v258 = vld [vmem:[%s1 + $0x14] sm:$0xf]
      %v259 = vld [vmem:[%s1 + $0x18] sm:$0xf]
      %v260 = vld [vmem:[%s1 + $0x1c] sm:$0xf]
      %v261 = vld [vmem:[%s1 + $0x20] sm:$0xf]
      %v262 = vld [vmem:[%s1 + $0x24] sm:$0xf]
      %v263 = vld [vmem:[%s1 + $0x28] sm:$0xf]
      %v264 = vld [vmem:[%s1 + $0x2c] sm:$0xf]
      %v265 = vld [vmem:[%s1 + $0x30] sm:$0xf]
      %v266 = vld [vmem:[%s1 + $0x34] sm:$0xf]
      %v267 = vld [vmem:[%s1 + $0x38] sm:$0xf]
      %v268 = vld [vmem:[%s1 + $0x3c] sm:$0xf]
      %v269 = vld [vmem:[%s1 + $0x40] sm:$0xf]
      %v270 = vld [vmem:[%s1 + $0x44] sm:$0xf]
      %v271 = vld [vmem:[%s1 + $0x48] sm:$0xf]
      %v272 = vld [vmem:[%s1 + $0x4c] sm:$0xf]
      %v273 = vld [vmem:[%s1 + $0x50] sm:$0xf]
      %v274 = vld [vmem:[%s1 + $0x54] sm:$0xf]
      %v275 = vld [vmem:[%s1 + $0x58] sm:$0xf]
      %v276 = vld [vmem:[%s1 + $0x5c] sm:$0xf]
      %v277 = vld [vmem:[%s1 + $0x60] sm:$0xf]
      %v278 = vld [vmem:[%s1 + $0x64] sm:$0xf]
      %v279 = vld [vmem:[%s1 + $0x68] sm:$0xf]
      %v280 = vld [vmem:[%s1 + $0x6c] sm:$0xf]
      %v281 = vld [vmem:[%s1 + $0x70] sm:$0xf]
      %v282 = vld [vmem:[%s1 + $0x74] sm:$0xf]
      %v283 = vld [vmem:[%s1 + $0x78] sm:$0xf]
      %v284 = vld [vmem:[%s1 + $0x7c] sm:$0xf]
      %v349 = vunpack.c.l.b16 %v189
      %v350 = vunpack.c.h.b16 %v189
      %v351 = vunpack.c.l.b16 %v190
      %v352 = vunpack.c.h.b16 %v190
      %v353 = vunpack.c.l.b16 %v191
      %v354 = vunpack.c.h.b16 %v191
      %v355 = vunpack.c.l.b16 %v192
      %v356 = vunpack.c.h.b16 %v192
      %v357 = vunpack.c.l.b16 %v193
      %v358 = vunpack.c.h.b16 %v193
      %v359 = vunpack.c.l.b16 %v194
      %v360 = vunpack.c.h.b16 %v194
      %v361 = vunpack.c.l.b16 %v195
      %v362 = vunpack.c.h.b16 %v195
      %v363 = vunpack.c.l.b16 %v196
      %v364 = vunpack.c.h.b16 %v196
      %v365 = vunpack.c.l.b16 %v197
      %v366 = vunpack.c.h.b16 %v197
      %v367 = vunpack.c.l.b16 %v198
      %v368 = vunpack.c.h.b16 %v198
      %v369 = vunpack.c.l.b16 %v199
      %v370 = vunpack.c.h.b16 %v199
      %v371 = vunpack.c.l.b16 %v200
      %v372 = vunpack.c.h.b16 %v200
      %v373 = vunpack.c.l.b16 %v201
      %v374 = vunpack.c.h.b16 %v201
      %v375 = vunpack.c.l.b16 %v202
      %v376 = vunpack.c.h.b16 %v202
      %v377 = vunpack.c.l.b16 %v203
      %v378 = vunpack.c.h.b16 %v203
      %v379 = vunpack.c.l.b16 %v204
      %v380 = vunpack.c.h.b16 %v204
      %v381 = vunpack.c.l.b16 %v205
      %v382 = vunpack.c.h.b16 %v205
      %v383 = vunpack.c.l.b16 %v206
      %v384 = vunpack.c.h.b16 %v206
      %v385 = vunpack.c.l.b16 %v207
      %v386 = vunpack.c.h.b16 %v207
      %v387 = vunpack.c.l.b16 %v208
      %v388 = vunpack.c.h.b16 %v208
      %v389 = vunpack.c.l.b16 %v209
      %v390 = vunpack.c.h.b16 %v209
      %v391 = vunpack.c.l.b16 %v210
      %v392 = vunpack.c.h.b16 %v210
      %v393 = vunpack.c.l.b16 %v211
      %v394 = vunpack.c.h.b16 %v211
      %v395 = vunpack.c.l.b16 %v212
      %v396 = vunpack.c.h.b16 %v212
      %v397 = vunpack.c.l.b16 %v213
      %v398 = vunpack.c.h.b16 %v213
      %v399 = vunpack.c.l.b16 %v214
      %v400 = vunpack.c.h.b16 %v214
      %v401 = vunpack.c.l.b16 %v215
      %v402 = vunpack.c.h.b16 %v215
      %v403 = vunpack.c.l.b16 %v216
      %v404 = vunpack.c.h.b16 %v216
      %v405 = vunpack.c.l.b16 %v217
      %v406 = vunpack.c.h.b16 %v217
      %v407 = vunpack.c.l.b16 %v218
      %v408 = vunpack.c.h.b16 %v218
      %v409 = vunpack.c.l.b16 %v219
      %v410 = vunpack.c.h.b16 %v219
      %v411 = vunpack.c.l.b16 %v220
      %v412 = vunpack.c.h.b16 %v220
      %v413 = vunpack.c.l.b16 %v221
      %v414 = vunpack.c.h.b16 %v221
      %v415 = vunpack.c.l.b16 %v222
      %v416 = vunpack.c.h.b16 %v222
      %v417 = vunpack.c.l.b16 %v223
      %v418 = vunpack.c.h.b16 %v223
      %v419 = vunpack.c.l.b16 %v224
      %v420 = vunpack.c.h.b16 %v224
      %v421 = vunpack.c.l.b16 %v225
      %v422 = vunpack.c.h.b16 %v225
      %v423 = vunpack.c.l.b16 %v226
      %v424 = vunpack.c.h.b16 %v226
      %v425 = vunpack.c.l.b16 %v227
      %v426 = vunpack.c.h.b16 %v227
      %v427 = vunpack.c.l.b16 %v228
      %v428 = vunpack.c.h.b16 %v228
      %v429 = vunpack.c.l.b16 %v229
      %v430 = vunpack.c.h.b16 %v229
      %v431 = vunpack.c.l.b16 %v230
      %v432 = vunpack.c.h.b16 %v230
      %v433 = vunpack.c.l.b16 %v231
      %v434 = vunpack.c.h.b16 %v231
      %v435 = vunpack.c.l.b16 %v232
      %v436 = vunpack.c.h.b16 %v232
      %v437 = vunpack.c.l.b16 %v233
      %v438 = vunpack.c.h.b16 %v233
      %v439 = vunpack.c.l.b16 %v234
      %v440 = vunpack.c.h.b16 %v234
      %v441 = vunpack.c.l.b16 %v235
      %v442 = vunpack.c.h.b16 %v235
      %v443 = vunpack.c.l.b16 %v236
      %v444 = vunpack.c.h.b16 %v236
      %v445 = vunpack.c.l.b16 %v237
      %v446 = vunpack.c.h.b16 %v237
      %v447 = vunpack.c.l.b16 %v238
      %v448 = vunpack.c.h.b16 %v238
      %v449 = vunpack.c.l.b16 %v239
      %v450 = vunpack.c.h.b16 %v239
      %v451 = vunpack.c.l.b16 %v240
      %v452 = vunpack.c.h.b16 %v240
      %v453 = vunpack.c.l.b16 %v241
      %v454 = vunpack.c.h.b16 %v241
      %v455 = vunpack.c.l.b16 %v242
      %v456 = vunpack.c.h.b16 %v242
      %v457 = vunpack.c.l.b16 %v243
      %v458 = vunpack.c.h.b16 %v243
      %v459 = vunpack.c.l.b16 %v244
      %v460 = vunpack.c.h.b16 %v244
      %v461 = vunpack.c.l.b16 %v245
      %v462 = vunpack.c.h.b16 %v245
      %v463 = vunpack.c.l.b16 %v246
      %v464 = vunpack.c.h.b16 %v246
      %v465 = vunpack.c.l.b16 %v247
      %v466 = vunpack.c.h.b16 %v247
      %v467 = vunpack.c.l.b16 %v248
      %v468 = vunpack.c.h.b16 %v248
      %v469 = vunpack.c.l.b16 %v249
      %v470 = vunpack.c.h.b16 %v249
      %v471 = vunpack.c.l.b16 %v250
      %v472 = vunpack.c.h.b16 %v250
      %v473 = vunpack.c.l.b16 %v251
      %v474 = vunpack.c.h.b16 %v251
      %v475 = vunpack.c.l.b16 %v252
      %v476 = vunpack.c.h.b16 %v252
      %v477 = vpack.c.b16 %v351, %v349
      %v478 = vpack.c.b16 %v352, %v350
      %v479 = vpack.c.b16 %v355, %v353
      %v480 = vpack.c.b16 %v356, %v354
      %v481 = vpack.c.b16 %v359, %v357
      %v482 = vpack.c.b16 %v360, %v358
      %v483 = vpack.c.b16 %v363, %v361
      %v484 = vpack.c.b16 %v364, %v362
      %v485 = vpack.c.b16 %v367, %v365
      %v486 = vpack.c.b16 %v368, %v366
      %v487 = vpack.c.b16 %v371, %v369
      %v488 = vpack.c.b16 %v372, %v370
      %v489 = vpack.c.b16 %v375, %v373
      %v490 = vpack.c.b16 %v376, %v374
      %v491 = vpack.c.b16 %v379, %v377
      %v492 = vpack.c.b16 %v380, %v378
      %v493 = vpack.c.b16 %v383, %v381
      %v494 = vpack.c.b16 %v384, %v382
      %v495 = vpack.c.b16 %v387, %v385
      %v496 = vpack.c.b16 %v388, %v386
      %v497 = vpack.c.b16 %v391, %v389
      %v498 = vpack.c.b16 %v392, %v390
      %v499 = vpack.c.b16 %v395, %v393
      %v500 = vpack.c.b16 %v396, %v394
      %v501 = vpack.c.b16 %v399, %v397
      %v502 = vpack.c.b16 %v400, %v398
      %v503 = vpack.c.b16 %v403, %v401
      %v504 = vpack.c.b16 %v404, %v402
      %v505 = vpack.c.b16 %v407, %v405
      %v506 = vpack.c.b16 %v408, %v406
      %v507 = vpack.c.b16 %v411, %v409
      %v508 = vpack.c.b16 %v412, %v410
      %v509 = vpack.c.b16 %v415, %v413
      %v510 = vpack.c.b16 %v416, %v414
      %v511 = vpack.c.b16 %v419, %v417
      %v512 = vpack.c.b16 %v420, %v418
      %v513 = vpack.c.b16 %v423, %v421
      %v514 = vpack.c.b16 %v424, %v422
      %v515 = vpack.c.b16 %v427, %v425
      %v516 = vpack.c.b16 %v428, %v426
      %v517 = vpack.c.b16 %v431, %v429
      %v518 = vpack.c.b16 %v432, %v430
      %v519 = vpack.c.b16 %v435, %v433
      %v520 = vpack.c.b16 %v436, %v434
      %v521 = vpack.c.b16 %v439, %v437
      %v522 = vpack.c.b16 %v440, %v438
      %v523 = vpack.c.b16 %v443, %v441
      %v524 = vpack.c.b16 %v444, %v442
      %v525 = vpack.c.b16 %v447, %v445
      %v526 = vpack.c.b16 %v448, %v446
      %v527 = vpack.c.b16 %v451, %v449
      %v528 = vpack.c.b16 %v452, %v450
      %v529 = vpack.c.b16 %v455, %v453
      %v530 = vpack.c.b16 %v456, %v454
      %v531 = vpack.c.b16 %v459, %v457
      %v532 = vpack.c.b16 %v460, %v458
      %v533 = vpack.c.b16 %v463, %v461
      %v534 = vpack.c.b16 %v464, %v462
      %v535 = vpack.c.b16 %v467, %v465
      %v536 = vpack.c.b16 %v468, %v466
      %v537 = vpack.c.b16 %v471, %v469
      %v538 = vpack.c.b16 %v472, %v470
      %v539 = vpack.c.b16 %v475, %v473
      %v540 = vpack.c.b16 %v476, %v474
      %v637 = vunpack.c.l.b16 %v253
      %v638 = vunpack.c.l.b16 %v254
      %v639 = vunpack.c.l.b16 %v255
      %v640 = vunpack.c.l.b16 %v256
      %v641 = vunpack.c.l.b16 %v257
      %v642 = vunpack.c.l.b16 %v258
      %v643 = vunpack.c.l.b16 %v259
      %v644 = vunpack.c.l.b16 %v260
      %v645 = vunpack.c.l.b16 %v261
      %v646 = vunpack.c.l.b16 %v262
      %v647 = vunpack.c.l.b16 %v263
      %v648 = vunpack.c.l.b16 %v264
      %v649 = vunpack.c.l.b16 %v265
      %v650 = vunpack.c.l.b16 %v266
      %v651 = vunpack.c.l.b16 %v267
      %v652 = vunpack.c.l.b16 %v268
      %v653 = vunpack.c.l.b16 %v269
      %v654 = vunpack.c.l.b16 %v270
      %v655 = vunpack.c.l.b16 %v271
      %v656 = vunpack.c.l.b16 %v272
      %v657 = vunpack.c.l.b16 %v273
      %v658 = vunpack.c.l.b16 %v274
      %v659 = vunpack.c.l.b16 %v275
      %v660 = vunpack.c.l.b16 %v276
      %v661 = vunpack.c.l.b16 %v277
      %v662 = vunpack.c.l.b16 %v278
      %v663 = vunpack.c.l.b16 %v279
      %v664 = vunpack.c.l.b16 %v280
      %v665 = vunpack.c.l.b16 %v281
      %v666 = vunpack.c.l.b16 %v282
      %v667 = vunpack.c.l.b16 %v283
      %v668 = vunpack.c.l.b16 %v284
      %v669 = vpack.c.b16 %v638, %v637
      %v670 = vpack.c.b16 %v640, %v639
      %v671 = vpack.c.b16 %v642, %v641
      %v672 = vpack.c.b16 %v644, %v643
      %v673 = vpack.c.b16 %v646, %v645
      %v674 = vpack.c.b16 %v648, %v647
      %v675 = vpack.c.b16 %v650, %v649
      %v676 = vpack.c.b16 %v652, %v651
      %v677 = vpack.c.b16 %v654, %v653
      %v678 = vpack.c.b16 %v656, %v655
      %v679 = vpack.c.b16 %v658, %v657
      %v680 = vpack.c.b16 %v660, %v659
      %v681 = vpack.c.b16 %v662, %v661
      %v682 = vpack.c.b16 %v664, %v663
      %v683 = vpack.c.b16 %v666, %v665
      %v684 = vpack.c.b16 %v668, %v667
      %701 = vmatprep.subr.bf16.mxu0 0
      %702 = vmatpush1.bf16.msra.mxu0 %v669
      %703 = vmatprep.subr.bf16.mxu0 0
      %704 = vmatpush1.bf16.msra.mxu0 %v670
      %705 = vmatprep.subr.bf16.mxu0 0
      %706 = vmatpush1.bf16.msra.mxu0 %v671
      %707 = vmatprep.subr.bf16.mxu0 0
      %708 = vmatpush1.bf16.msra.mxu0 %v672
      %709 = vmatprep.subr.bf16.mxu0 0
      %710 = vmatpush1.bf16.msra.mxu0 %v673
      %711 = vmatprep.subr.bf16.mxu0 0
      %712 = vmatpush1.bf16.msra.mxu0 %v674
      %713 = vmatprep.subr.bf16.mxu0 0
      %714 = vmatpush1.bf16.msra.mxu0 %v675
      %715 = vmatprep.subr.bf16.mxu0 0
      %716 = vmatpush1.bf16.msra.mxu0 %v676
      %717 = vmatprep.subr.bf16.mxu0 0
      %718 = vmatpush1.bf16.msra.mxu0 %v677
      %719 = vmatprep.subr.bf16.mxu0 0
      %720 = vmatpush1.bf16.msra.mxu0 %v678
      %721 = vmatprep.subr.bf16.mxu0 0
      %722 = vmatpush1.bf16.msra.mxu0 %v679
      %723 = vmatprep.subr.bf16.mxu0 0
      %724 = vmatpush1.bf16.msra.mxu0 %v680
      %725 = vmatprep.subr.bf16.mxu0 0
      %726 = vmatpush1.bf16.msra.mxu0 %v681
      %727 = vmatprep.subr.bf16.mxu0 0
      %728 = vmatpush1.bf16.msra.mxu0 %v682
      %729 = vmatprep.subr.bf16.mxu0 0
      %730 = vmatpush1.bf16.msra.mxu0 %v683
      %731 = vmatprep.subr.bf16.mxu0 0
      %732 = vmatpush1.bf16.msra.mxu0 %v684
      %733 = vmatprep.mubr.bf16.mxu0 %v478
      %734 = vmatmul.mubr.bf16.gmra.mrb[0].mxu0 %v477
      %v735 = vpop.f32.mrb[0].mxu0
      %v736 = vadd.f32 0.0, %v735
      %v737 = vpop.f32.mrb[0].mxu0
      %v738 = vpop.f32.mrb[0].mxu0
      %v739 = vadd.f32 0.0, %v738
      %v740 = vpop.f32.mrb[0].mxu0
      %741 = vmatprep.mubr.bf16.mxu0 %v480
      %742 = vmatmul.mubr.bf16.gmra.mrb[0].mxu0 %v479
      %v743 = vpop.f32.mrb[0].mxu0
      %v744 = vadd.f32 0.0, %v743
      %v745 = vpop.f32.mrb[0].mxu0
      %v746 = vpop.f32.mrb[0].mxu0
      %v747 = vadd.f32 0.0, %v746
      %v748 = vpop.f32.mrb[0].mxu0
      %749 = vmatprep.mubr.bf16.mxu0 %v482
      %750 = vmatmul.mubr.bf16.gmra.mrb[0].mxu0 %v481
      %v751 = vpop.f32.mrb[0].mxu0
      %v752 = vadd.f32 0.0, %v751
      %v753 = vpop.f32.mrb[0].mxu0
      %v754 = vpop.f32.mrb[0].mxu0
      %v755 = vadd.f32 0.0, %v754
      %v756 = vpop.f32.mrb[0].mxu0
      %757 = vmatprep.mubr.bf16.mxu0 %v484
      %758 = vmatmul.mubr.bf16.gmra.mrb[0].mxu0 %v483
      %v759 = vpop.f32.mrb[0].mxu0
      %v760 = vadd.f32 0.0, %v759
      %v761 = vpop.f32.mrb[0].mxu0
      %v762 = vpop.f32.mrb[0].mxu0
      %v763 = vadd.f32 0.0, %v762
      %v764 = vpop.f32.mrb[0].mxu0
      %765 = vmatprep.mubr.bf16.mxu0 %v486
      %766 = vmatmul.mubr.bf16.gmra.mrb[0].mxu0 %v485
      %v767 = vpop.f32.mrb[0].mxu0
      %v768 = vadd.f32 0.0, %v767
      %v769 = vpop.f32.mrb[0].mxu0
      %v770 = vpop.f32.mrb[0].mxu0
      %v771 = vadd.f32 0.0, %v770
      %v772 = vpop.f32.mrb[0].mxu0
      %773 = vmatprep.mubr.bf16.mxu0 %v488
      %774 = vmatmul.mubr.bf16.gmra.mrb[0].mxu0 %v487
      %v775 = vpop.f32.mrb[0].mxu0
      %v776 = vadd.f32 0.0, %v775
      %v777 = vpop.f32.mrb[0].mxu0
      %v778 = vpop.f32.mrb[0].mxu0
      %v779 = vadd.f32 0.0, %v778
      %v780 = vpop.f32.mrb[0].mxu0
      %781 = vmatprep.mubr.bf16.mxu0 %v490
      %782 = vmatmul.mubr.bf16.gmra.mrb[0].mxu0 %v489
      %v783 = vpop.f32.mrb[0].mxu0
      %v784 = vadd.f32 0.0, %v783
      %v785 = vpop.f32.mrb[0].mxu0
      %v786 = vpop.f32.mrb[0].mxu0
      %v787 = vadd.f32 0.0, %v786
      %v788 = vpop.f32.mrb[0].mxu0
      %789 = vmatprep.mubr.bf16.mxu0 %v492
      %790 = vmatmul.mubr.bf16.gmra.mrb[0].mxu0 %v491
      %v791 = vpop.f32.mrb[0].mxu0
      %v792 = vadd.f32 0.0, %v791
      %v793 = vpop.f32.mrb[0].mxu0
      %v794 = vpop.f32.mrb[0].mxu0
      %v795 = vadd.f32 0.0, %v794
      %v796 = vpop.f32.mrb[0].mxu0
      %797 = vmatprep.mubr.bf16.mxu0 %v494
      %798 = vmatmul.mubr.bf16.gmra.mrb[0].mxu0 %v493
      %v799 = vpop.f32.mrb[0].mxu0
      %v800 = vadd.f32 0.0, %v799
      %v801 = vpop.f32.mrb[0].mxu0
      %v802 = vpop.f32.mrb[0].mxu0
      %v803 = vadd.f32 0.0, %v802
      %v804 = vpop.f32.mrb[0].mxu0
      %805 = vmatprep.mubr.bf16.mxu0 %v496
      %806 = vmatmul.mubr.bf16.gmra.mrb[0].mxu0 %v495
      %v807 = vpop.f32.mrb[0].mxu0
      %v808 = vadd.f32 0.0, %v807
      %v809 = vpop.f32.mrb[0].mxu0
      %v810 = vpop.f32.mrb[0].mxu0
      %v811 = vadd.f32 0.0, %v810
      %v812 = vpop.f32.mrb[0].mxu0
      %813 = vmatprep.mubr.bf16.mxu0 %v498
      %814 = vmatmul.mubr.bf16.gmra.mrb[0].mxu0 %v497
      %v815 = vpop.f32.mrb[0].mxu0
      %v816 = vadd.f32 0.0, %v815
      %v817 = vpop.f32.mrb[0].mxu0
      %v818 = vpop.f32.mrb[0].mxu0
      %v819 = vadd.f32 0.0, %v818
      %v820 = vpop.f32.mrb[0].mxu0
      %821 = vmatprep.mubr.bf16.mxu0 %v500
      %822 = vmatmul.mubr.bf16.gmra.mrb[0].mxu0 %v499
      %v823 = vpop.f32.mrb[0].mxu0
      %v824 = vadd.f32 0.0, %v823
      %v825 = vpop.f32.mrb[0].mxu0
      %v826 = vpop.f32.mrb[0].mxu0
      %v827 = vadd.f32 0.0, %v826
      %v828 = vpop.f32.mrb[0].mxu0
      %829 = vmatprep.mubr.bf16.mxu0 %v502
      %830 = vmatmul.mubr.bf16.gmra.mrb[0].mxu0 %v501
      %v831 = vpop.f32.mrb[0].mxu0
      %v832 = vadd.f32 0.0, %v831
      %v833 = vpop.f32.mrb[0].mxu0
      %v834 = vpop.f32.mrb[0].mxu0
      %v835 = vadd.f32 0.0, %v834
      %v836 = vpop.f32.mrb[0].mxu0
      %837 = vmatprep.mubr.bf16.mxu0 %v504
      %838 = vmatmul.mubr.bf16.gmra.mrb[0].mxu0 %v503
      %v839 = vpop.f32.mrb[0].mxu0
      %v840 = vadd.f32 0.0, %v839
      %v841 = vpop.f32.mrb[0].mxu0
      %v842 = vpop.f32.mrb[0].mxu0
      %v843 = vadd.f32 0.0, %v842
      %v844 = vpop.f32.mrb[0].mxu0
      %845 = vmatprep.mubr.bf16.mxu0 %v506
      %846 = vmatmul.mubr.bf16.gmra.mrb[0].mxu0 %v505
      %v847 = vpop.f32.mrb[0].mxu0
      %v848 = vadd.f32 0.0, %v847
      %v849 = vpop.f32.mrb[0].mxu0
      %v850 = vpop.f32.mrb[0].mxu0
      %v851 = vadd.f32 0.0, %v850
      %v852 = vpop.f32.mrb[0].mxu0
      %853 = vmatprep.mubr.bf16.mxu0 %v508
      %854 = vmatmul.mubr.bf16.gmra.mrb[0].mxu0 %v507
      %v855 = vpop.f32.mrb[0].mxu0
      %v856 = vadd.f32 0.0, %v855
      %v857 = vpop.f32.mrb[0].mxu0
      %v858 = vpop.f32.mrb[0].mxu0
      %v859 = vadd.f32 0.0, %v858
      %v860 = vpop.f32.mrb[0].mxu0
      %861 = vmatprep.mubr.bf16.mxu0 %v510
      %862 = vmatmul.mubr.bf16.gmra.mrb[0].mxu0 %v509
      %v863 = vpop.f32.mrb[0].mxu0
      %v864 = vadd.f32 0.0, %v863
      %v865 = vpop.f32.mrb[0].mxu0
      %v866 = vpop.f32.mrb[0].mxu0
      %v867 = vadd.f32 0.0, %v866
      %v868 = vpop.f32.mrb[0].mxu0
      %869 = vmatprep.mubr.bf16.mxu0 %v512
      %870 = vmatmul.mubr.bf16.gmra.mrb[0].mxu0 %v511
      %v871 = vpop.f32.mrb[0].mxu0
      %v872 = vadd.f32 0.0, %v871
      %v873 = vpop.f32.mrb[0].mxu0
      %v874 = vpop.f32.mrb[0].mxu0
      %v875 = vadd.f32 0.0, %v874
      %v876 = vpop.f32.mrb[0].mxu0
      %877 = vmatprep.mubr.bf16.mxu0 %v514
      %878 = vmatmul.mubr.bf16.gmra.mrb[0].mxu0 %v513
      %v879 = vpop.f32.mrb[0].mxu0
      %v880 = vadd.f32 0.0, %v879
      %v881 = vpop.f32.mrb[0].mxu0
      %v882 = vpop.f32.mrb[0].mxu0
      %v883 = vadd.f32 0.0, %v882
      %v884 = vpop.f32.mrb[0].mxu0
      %885 = vmatprep.mubr.bf16.mxu0 %v516
      %886 = vmatmul.mubr.bf16.gmra.mrb[0].mxu0 %v515
      %v887 = vpop.f32.mrb[0].mxu0
      %v888 = vadd.f32 0.0, %v887
      %v889 = vpop.f32.mrb[0].mxu0
      %v890 = vpop.f32.mrb[0].mxu0
      %v891 = vadd.f32 0.0, %v890
      %v892 = vpop.f32.mrb[0].mxu0
      %893 = vmatprep.mubr.bf16.mxu0 %v518
      %894 = vmatmul.mubr.bf16.gmra.mrb[0].mxu0 %v517
      %v895 = vpop.f32.mrb[0].mxu0
      %v896 = vadd.f32 0.0, %v895
      %v897 = vpop.f32.mrb[0].mxu0
      %v898 = vpop.f32.mrb[0].mxu0
      %v899 = vadd.f32 0.0, %v898
      %v900 = vpop.f32.mrb[0].mxu0
      %901 = vmatprep.mubr.bf16.mxu0 %v520
      %902 = vmatmul.mubr.bf16.gmra.mrb[0].mxu0 %v519
      %v903 = vpop.f32.mrb[0].mxu0
      %v904 = vadd.f32 0.0, %v903
      %v905 = vpop.f32.mrb[0].mxu0
      %v906 = vpop.f32.mrb[0].mxu0
      %v907 = vadd.f32 0.0, %v906
      %v908 = vpop.f32.mrb[0].mxu0
      %909 = vmatprep.mubr.bf16.mxu0 %v522
      %910 = vmatmul.mubr.bf16.gmra.mrb[0].mxu0 %v521
      %v911 = vpop.f32.mrb[0].mxu0
      %v912 = vadd.f32 0.0, %v911
      %v913 = vpop.f32.mrb[0].mxu0
      %v914 = vpop.f32.mrb[0].mxu0
      %v915 = vadd.f32 0.0, %v914
      %v916 = vpop.f32.mrb[0].mxu0
      %917 = vmatprep.mubr.bf16.mxu0 %v524
      %918 = vmatmul.mubr.bf16.gmra.mrb[0].mxu0 %v523
      %v919 = vpop.f32.mrb[0].mxu0
      %v920 = vadd.f32 0.0, %v919
      %v921 = vpop.f32.mrb[0].mxu0
      %v922 = vpop.f32.mrb[0].mxu0
      %v923 = vadd.f32 0.0, %v922
      %v924 = vpop.f32.mrb[0].mxu0
      %925 = vmatprep.mubr.bf16.mxu0 %v526
      %926 = vmatmul.mubr.bf16.gmra.mrb[0].mxu0 %v525
      %v927 = vpop.f32.mrb[0].mxu0
      %v928 = vadd.f32 0.0, %v927
      %v929 = vpop.f32.mrb[0].mxu0
      %v930 = vpop.f32.mrb[0].mxu0
      %v931 = vadd.f32 0.0, %v930
      %v932 = vpop.f32.mrb[0].mxu0
      %933 = vmatprep.mubr.bf16.mxu0 %v528
      %934 = vmatmul.mubr.bf16.gmra.mrb[0].mxu0 %v527
      %v935 = vpop.f32.mrb[0].mxu0
      %v936 = vadd.f32 0.0, %v935
      %v937 = vpop.f32.mrb[0].mxu0
      %v938 = vpop.f32.mrb[0].mxu0
      %v939 = vadd.f32 0.0, %v938
      %v940 = vpop.f32.mrb[0].mxu0
      %941 = vmatprep.mubr.bf16.mxu0 %v530
      %942 = vmatmul.mubr.bf16.gmra.mrb[0].mxu0 %v529
      %v943 = vpop.f32.mrb[0].mxu0
      %v944 = vadd.f32 0.0, %v943
      %v945 = vpop.f32.mrb[0].mxu0
      %v946 = vpop.f32.mrb[0].mxu0
      %v947 = vadd.f32 0.0, %v946
      %v948 = vpop.f32.mrb[0].mxu0
      %949 = vmatprep.mubr.bf16.mxu0 %v532
      %950 = vmatmul.mubr.bf16.gmra.mrb[0].mxu0 %v531
      %v951 = vpop.f32.mrb[0].mxu0
      %v952 = vadd.f32 0.0, %v951
      %v953 = vpop.f32.mrb[0].mxu0
      %v954 = vpop.f32.mrb[0].mxu0
      %v955 = vadd.f32 0.0, %v954
      %v956 = vpop.f32.mrb[0].mxu0
      %957 = vmatprep.mubr.bf16.mxu0 %v534
      %958 = vmatmul.mubr.bf16.gmra.mrb[0].mxu0 %v533
      %v959 = vpop.f32.mrb[0].mxu0
      %v960 = vadd.f32 0.0, %v959
      %v961 = vpop.f32.mrb[0].mxu0
      %v962 = vpop.f32.mrb[0].mxu0
      %v963 = vadd.f32 0.0, %v962
      %v964 = vpop.f32.mrb[0].mxu0
      %965 = vmatprep.mubr.bf16.mxu0 %v536
      %966 = vmatmul.mubr.bf16.gmra.mrb[0].mxu0 %v535
      %v967 = vpop.f32.mrb[0].mxu0
      %v968 = vadd.f32 0.0, %v967
      %v969 = vpop.f32.mrb[0].mxu0
      %v970 = vpop.f32.mrb[0].mxu0
      %v971 = vadd.f32 0.0, %v970
      %v972 = vpop.f32.mrb[0].mxu0
      %973 = vmatprep.mubr.bf16.mxu0 %v538
      %974 = vmatmul.mubr.bf16.gmra.mrb[0].mxu0 %v537
      %v975 = vpop.f32.mrb[0].mxu0
      %v976 = vadd.f32 0.0, %v975
      %v977 = vpop.f32.mrb[0].mxu0
      %v978 = vpop.f32.mrb[0].mxu0
      %v979 = vadd.f32 0.0, %v978
      %v980 = vpop.f32.mrb[0].mxu0
      %981 = vmatprep.mubr.bf16.mxu0 %v540
      %982 = vmatmul.mubr.bf16.gmra.mrb[0].mxu0 %v539
      %v983 = vpop.f32.mrb[0].mxu0
      %v984 = vadd.f32 0.0, %v983
      %v985 = vpop.f32.mrb[0].mxu0
      %v986 = vpop.f32.mrb[0].mxu0
      %v987 = vadd.f32 0.0, %v986
      %v988 = vpop.f32.mrb[0].mxu0
      %989 = vdwg.mxu0
      %v990 = vpack.c.bf16 %v739, %v736
      %v991 = vpack.c.bf16 %v747, %v744
      %v992 = vpack.c.bf16 %v755, %v752
      %v993 = vpack.c.bf16 %v763, %v760
      %v994 = vpack.c.bf16 %v771, %v768
      %v995 = vpack.c.bf16 %v779, %v776
      %v996 = vpack.c.bf16 %v787, %v784
      %v997 = vpack.c.bf16 %v795, %v792
      %v998 = vpack.c.bf16 %v803, %v800
      %v999 = vpack.c.bf16 %v811, %v808
      %v1000 = vpack.c.bf16 %v819, %v816
      %v1001 = vpack.c.bf16 %v827, %v824
      %v1002 = vpack.c.bf16 %v835, %v832
      %v1003 = vpack.c.bf16 %v843, %v840
      %v1004 = vpack.c.bf16 %v851, %v848
      %v1005 = vpack.c.bf16 %v859, %v856
      %v1006 = vpack.c.bf16 %v867, %v864
      %v1007 = vpack.c.bf16 %v875, %v872
      %v1008 = vpack.c.bf16 %v883, %v880
      %v1009 = vpack.c.bf16 %v891, %v888
      %v1010 = vpack.c.bf16 %v899, %v896
      %v1011 = vpack.c.bf16 %v907, %v904
      %v1012 = vpack.c.bf16 %v915, %v912
      %v1013 = vpack.c.bf16 %v923, %v920
      %v1014 = vpack.c.bf16 %v931, %v928
      %v1015 = vpack.c.bf16 %v939, %v936
      %v1016 = vpack.c.bf16 %v947, %v944
      %v1017 = vpack.c.bf16 %v955, %v952
      %v1018 = vpack.c.bf16 %v963, %v960
      %v1019 = vpack.c.bf16 %v971, %v968
      %v1020 = vpack.c.bf16 %v979, %v976
      %v1021 = vpack.c.bf16 %v987, %v984
      %v1054 = vunpack.c.l.b16 %v990
      %v1055 = vunpack.c.h.b16 %v990
      %v1056 = vunpack.c.l.b16 %v991
      %v1057 = vunpack.c.h.b16 %v991
      %v1058 = vunpack.c.l.b16 %v992
      %v1059 = vunpack.c.h.b16 %v992
      %v1060 = vunpack.c.l.b16 %v993
      %v1061 = vunpack.c.h.b16 %v993
      %v1062 = vunpack.c.l.b16 %v994
      %v1063 = vunpack.c.h.b16 %v994
      %v1064 = vunpack.c.l.b16 %v995
      %v1065 = vunpack.c.h.b16 %v995
      %v1066 = vunpack.c.l.b16 %v996
      %v1067 = vunpack.c.h.b16 %v996
      %v1068 = vunpack.c.l.b16 %v997
      %v1069 = vunpack.c.h.b16 %v997
      %v1070 = vunpack.c.l.b16 %v998
      %v1071 = vunpack.c.h.b16 %v998
      %v1072 = vunpack.c.l.b16 %v999
      %v1073 = vunpack.c.h.b16 %v999
      %v1074 = vunpack.c.l.b16 %v1000
      %v1075 = vunpack.c.h.b16 %v1000
      %v1076 = vunpack.c.l.b16 %v1001
      %v1077 = vunpack.c.h.b16 %v1001
      %v1078 = vunpack.c.l.b16 %v1002
      %v1079 = vunpack.c.h.b16 %v1002
      %v1080 = vunpack.c.l.b16 %v1003
      %v1081 = vunpack.c.h.b16 %v1003
      %v1082 = vunpack.c.l.b16 %v1004
      %v1083 = vunpack.c.h.b16 %v1004
      %v1084 = vunpack.c.l.b16 %v1005
      %v1085 = vunpack.c.h.b16 %v1005
      %v1086 = vunpack.c.l.b16 %v1006
      %v1087 = vunpack.c.h.b16 %v1006
      %v1088 = vunpack.c.l.b16 %v1007
      %v1089 = vunpack.c.h.b16 %v1007
      %v1090 = vunpack.c.l.b16 %v1008
      %v1091 = vunpack.c.h.b16 %v1008
      %v1092 = vunpack.c.l.b16 %v1009
      %v1093 = vunpack.c.h.b16 %v1009
      %v1094 = vunpack.c.l.b16 %v1010
      %v1095 = vunpack.c.h.b16 %v1010
      %v1096 = vunpack.c.l.b16 %v1011
      %v1097 = vunpack.c.h.b16 %v1011
      %v1098 = vunpack.c.l.b16 %v1012
      %v1099 = vunpack.c.h.b16 %v1012
      %v1100 = vunpack.c.l.b16 %v1013
      %v1101 = vunpack.c.h.b16 %v1013
      %v1102 = vunpack.c.l.b16 %v1014
      %v1103 = vunpack.c.h.b16 %v1014
      %v1104 = vunpack.c.l.b16 %v1015
      %v1105 = vunpack.c.h.b16 %v1015
      %v1106 = vunpack.c.l.b16 %v1016
      %v1107 = vunpack.c.h.b16 %v1016
      %v1108 = vunpack.c.l.b16 %v1017
      %v1109 = vunpack.c.h.b16 %v1017
      %v1110 = vunpack.c.l.b16 %v1018
      %v1111 = vunpack.c.h.b16 %v1018
      %v1112 = vunpack.c.l.b16 %v1019
      %v1113 = vunpack.c.h.b16 %v1019
      %v1114 = vunpack.c.l.b16 %v1020
      %v1115 = vunpack.c.h.b16 %v1020
      %v1116 = vunpack.c.l.b16 %v1021
      %v1117 = vunpack.c.h.b16 %v1021
      %v1118 = vpack.c.b16 %v1054, %v1054
      %v1119 = vpack.c.b16 %v1055, %v1055
      %v1120 = vpack.c.b16 %v1056, %v1056
      %v1121 = vpack.c.b16 %v1057, %v1057
      %v1122 = vpack.c.b16 %v1058, %v1058
      %v1123 = vpack.c.b16 %v1059, %v1059
      %v1124 = vpack.c.b16 %v1060, %v1060
      %v1125 = vpack.c.b16 %v1061, %v1061
      %v1126 = vpack.c.b16 %v1062, %v1062
      %v1127 = vpack.c.b16 %v1063, %v1063
      %v1128 = vpack.c.b16 %v1064, %v1064
      %v1129 = vpack.c.b16 %v1065, %v1065
      %v1130 = vpack.c.b16 %v1066, %v1066
      %v1131 = vpack.c.b16 %v1067, %v1067
      %v1132 = vpack.c.b16 %v1068, %v1068
      %v1133 = vpack.c.b16 %v1069, %v1069
      %v1134 = vpack.c.b16 %v1070, %v1070
      %v1135 = vpack.c.b16 %v1071, %v1071
      %v1136 = vpack.c.b16 %v1072, %v1072
      %v1137 = vpack.c.b16 %v1073, %v1073
      %v1138 = vpack.c.b16 %v1074, %v1074
      %v1139 = vpack.c.b16 %v1075, %v1075
      %v1140 = vpack.c.b16 %v1076, %v1076
      %v1141 = vpack.c.b16 %v1077, %v1077
      %v1142 = vpack.c.b16 %v1078, %v1078
      %v1143 = vpack.c.b16 %v1079, %v1079
      %v1144 = vpack.c.b16 %v1080, %v1080
      %v1145 = vpack.c.b16 %v1081, %v1081
      %v1146 = vpack.c.b16 %v1082, %v1082
      %v1147 = vpack.c.b16 %v1083, %v1083
      %v1148 = vpack.c.b16 %v1084, %v1084
      %v1149 = vpack.c.b16 %v1085, %v1085
      %v1150 = vpack.c.b16 %v1086, %v1086
      %v1151 = vpack.c.b16 %v1087, %v1087
      %v1152 = vpack.c.b16 %v1088, %v1088
      %v1153 = vpack.c.b16 %v1089, %v1089
      %v1154 = vpack.c.b16 %v1090, %v1090
      %v1155 = vpack.c.b16 %v1091, %v1091
      %v1156 = vpack.c.b16 %v1092, %v1092
      %v1157 = vpack.c.b16 %v1093, %v1093
      %v1158 = vpack.c.b16 %v1094, %v1094
      %v1159 = vpack.c.b16 %v1095, %v1095
      %v1160 = vpack.c.b16 %v1096, %v1096
      %v1161 = vpack.c.b16 %v1097, %v1097
      %v1162 = vpack.c.b16 %v1098, %v1098
      %v1163 = vpack.c.b16 %v1099, %v1099
      %v1164 = vpack.c.b16 %v1100, %v1100
      %v1165 = vpack.c.b16 %v1101, %v1101
      %v1166 = vpack.c.b16 %v1102, %v1102
      %v1167 = vpack.c.b16 %v1103, %v1103
      %v1168 = vpack.c.b16 %v1104, %v1104
      %v1169 = vpack.c.b16 %v1105, %v1105
      %v1170 = vpack.c.b16 %v1106, %v1106
      %v1171 = vpack.c.b16 %v1107, %v1107
      %v1172 = vpack.c.b16 %v1108, %v1108
      %v1173 = vpack.c.b16 %v1109, %v1109
      %v1174 = vpack.c.b16 %v1110, %v1110
      %v1175 = vpack.c.b16 %v1111, %v1111
      %v1176 = vpack.c.b16 %v1112, %v1112
      %v1177 = vpack.c.b16 %v1113, %v1113
      %v1178 = vpack.c.b16 %v1114, %v1114
      %v1179 = vpack.c.b16 %v1115, %v1115
      %v1180 = vpack.c.b16 %v1116, %v1116
      %v1181 = vpack.c.b16 %v1117, %v1117
      %1246 = vst [vmem:[%s182] sm:$0xf] %v1118
      %1247 = vst [vmem:[%s182 + $0x4] sm:$0xf] %v1119
      %1248 = vst [vmem:[%s182 + $0x8] sm:$0xf] %v1120
      %1249 = vst [vmem:[%s182 + $0xc] sm:$0xf] %v1121
      %1250 = vst [vmem:[%s182 + $0x10] sm:$0xf] %v1122
      %1251 = vst [vmem:[%s182 + $0x14] sm:$0xf] %v1123
      %1252 = vst [vmem:[%s182 + $0x18] sm:$0xf] %v1124
      %1253 = vst [vmem:[%s182 + $0x1c] sm:$0xf] %v1125
      %1254 = vst [vmem:[%s182 + $0x20] sm:$0xf] %v1126
      %1255 = vst [vmem:[%s182 + $0x24] sm:$0xf] %v1127
      %1256 = vst [vmem:[%s182 + $0x28] sm:$0xf] %v1128
      %1257 = vst [vmem:[%s182 + $0x2c] sm:$0xf] %v1129
      %1258 = vst [vmem:[%s182 + $0x30] sm:$0xf] %v1130
      %1259 = vst [vmem:[%s182 + $0x34] sm:$0xf] %v1131
      %1260 = vst [vmem:[%s182 + $0x38] sm:$0xf] %v1132
      %1261 = vst [vmem:[%s182 + $0x3c] sm:$0xf] %v1133
      %1262 = vst [vmem:[%s182 + $0x40] sm:$0xf] %v1134
      %1263 = vst [vmem:[%s182 + $0x44] sm:$0xf] %v1135
      %1264 = vst [vmem:[%s182 + $0x48] sm:$0xf] %v1136
      %1265 = vst [vmem:[%s182 + $0x4c] sm:$0xf] %v1137
      %1266 = vst [vmem:[%s182 + $0x50] sm:$0xf] %v1138
      %1267 = vst [vmem:[%s182 + $0x54] sm:$0xf] %v1139
      %1268 = vst [vmem:[%s182 + $0x58] sm:$0xf] %v1140
      %1269 = vst [vmem:[%s182 + $0x5c] sm:$0xf] %v1141
      %1270 = vst [vmem:[%s182 + $0x60] sm:$0xf] %v1142
      %1271 = vst [vmem:[%s182 + $0x64] sm:$0xf] %v1143
      %1272 = vst [vmem:[%s182 + $0x68] sm:$0xf] %v1144
      %1273 = vst [vmem:[%s182 + $0x6c] sm:$0xf] %v1145
      %1274 = vst [vmem:[%s182 + $0x70] sm:$0xf] %v1146
      %1275 = vst [vmem:[%s182 + $0x74] sm:$0xf] %v1147
      %1276 = vst [vmem:[%s182 + $0x78] sm:$0xf] %v1148
      %1277 = vst [vmem:[%s182 + $0x7c] sm:$0xf] %v1149
      %1278 = vst [vmem:[%s182 + $0x80] sm:$0xf] %v1150
      %1279 = vst [vmem:[%s182 + $0x84] sm:$0xf] %v1151
      %1280 = vst [vmem:[%s182 + $0x88] sm:$0xf] %v1152
      %1281 = vst [vmem:[%s182 + $0x8c] sm:$0xf] %v1153
      %1282 = vst [vmem:[%s182 + $0x90] sm:$0xf] %v1154
      %1283 = vst [vmem:[%s182 + $0x94] sm:$0xf] %v1155
      %1284 = vst [vmem:[%s182 + $0x98] sm:$0xf] %v1156
      %1285 = vst [vmem:[%s182 + $0x9c] sm:$0xf] %v1157
      %1286 = vst [vmem:[%s182 + $0xa0] sm:$0xf] %v1158
      %1287 = vst [vmem:[%s182 + $0xa4] sm:$0xf] %v1159
      %1288 = vst [vmem:[%s182 + $0xa8] sm:$0xf] %v1160
      %1289 = vst [vmem:[%s182 + $0xac] sm:$0xf] %v1161
      %1290 = vst [vmem:[%s182 + $0xb0] sm:$0xf] %v1162
      %1291 = vst [vmem:[%s182 + $0xb4] sm:$0xf] %v1163
      %1292 = vst [vmem:[%s182 + $0xb8] sm:$0xf] %v1164
      %1293 = vst [vmem:[%s182 + $0xbc] sm:$0xf] %v1165
      %1294 = vst [vmem:[%s182 + $0xc0] sm:$0xf] %v1166
      %1295 = vst [vmem:[%s182 + $0xc4] sm:$0xf] %v1167
      %1296 = vst [vmem:[%s182 + $0xc8] sm:$0xf] %v1168
      %1297 = vst [vmem:[%s182 + $0xcc] sm:$0xf] %v1169
      %1298 = vst [vmem:[%s182 + $0xd0] sm:$0xf] %v1170
      %1299 = vst [vmem:[%s182 + $0xd4] sm:$0xf] %v1171
      %1300 = vst [vmem:[%s182 + $0xd8] sm:$0xf] %v1172
      %1301 = vst [vmem:[%s182 + $0xdc] sm:$0xf] %v1173
      %1302 = vst [vmem:[%s182 + $0xe0] sm:$0xf] %v1174
      %1303 = vst [vmem:[%s182 + $0xe4] sm:$0xf] %v1175
      %1304 = vst [vmem:[%s182 + $0xe8] sm:$0xf] %v1176
      %1305 = vst [vmem:[%s182 + $0xec] sm:$0xf] %v1177
      %1306 = vst [vmem:[%s182 + $0xf0] sm:$0xf] %v1178
      %1307 = vst [vmem:[%s182 + $0xf4] sm:$0xf] %v1179
      %1308 = vst [vmem:[%s182 + $0xf8] sm:$0xf] %v1180
      %1309 = vst [vmem:[%s182 + $0xfc] sm:$0xf] %v1181
      %v1310 = vadd.f32 %v736, %v739
      %v1311 = vadd.f32 %v1310, %v744
      %v1312 = vadd.f32 %v1311, %v747
      %v1313 = vadd.f32 %v1312, %v752
      %v1314 = vadd.f32 %v1313, %v755
      %v1315 = vadd.f32 %v1314, %v760
      %v1316 = vadd.f32 %v1315, %v763
      %v1317 = vadd.f32 %v1316, %v768
      %v1318 = vadd.f32 %v1317, %v771
      %v1319 = vadd.f32 %v1318, %v776
      %v1320 = vadd.f32 %v1319, %v779
      %v1321 = vadd.f32 %v1320, %v784
      %v1322 = vadd.f32 %v1321, %v787
      %v1323 = vadd.f32 %v1322, %v792
      %v1324 = vadd.f32 %v1323, %v795
      %v1325 = vadd.f32 %v1324, %v800
      %v1326 = vadd.f32 %v1325, %v803
      %v1327 = vadd.f32 %v1326, %v808
      %v1328 = vadd.f32 %v1327, %v811
      %v1329 = vadd.f32 %v1328, %v816
      %v1330 = vadd.f32 %v1329, %v819
      %v1331 = vadd.f32 %v1330, %v824
      %v1332 = vadd.f32 %v1331, %v827
      %v1333 = vadd.f32 %v1332, %v832
      %v1334 = vadd.f32 %v1333, %v835
      %v1335 = vadd.f32 %v1334, %v840
      %v1336 = vadd.f32 %v1335, %v843
      %v1337 = vadd.f32 %v1336, %v848
      %v1338 = vadd.f32 %v1337, %v851
      %v1339 = vadd.f32 %v1338, %v856
      %v1340 = vadd.f32 %v1339, %v859
      %v1341 = vadd.f32 %v1340, %v864
      %v1342 = vadd.f32 %v1341, %v867
      %v1343 = vadd.f32 %v1342, %v872
      %v1344 = vadd.f32 %v1343, %v875
      %v1345 = vadd.f32 %v1344, %v880
      %v1346 = vadd.f32 %v1345, %v883
      %v1347 = vadd.f32 %v1346, %v888
      %v1348 = vadd.f32 %v1347, %v891
      %v1349 = vadd.f32 %v1348, %v896
      %v1350 = vadd.f32 %v1349, %v899
      %v1351 = vadd.f32 %v1350, %v904
      %v1352 = vadd.f32 %v1351, %v907
      %v1353 = vadd.f32 %v1352, %v912
      %v1354 = vadd.f32 %v1353, %v915
      %v1355 = vadd.f32 %v1354, %v920
      %v1356 = vadd.f32 %v1355, %v923
      %v1357 = vadd.f32 %v1356, %v928
      %v1358 = vadd.f32 %v1357, %v931
      %v1359 = vadd.f32 %v1358, %v936
      %v1360 = vadd.f32 %v1359, %v939
      %v1361 = vadd.f32 %v1360, %v944
      %v1362 = vadd.f32 %v1361, %v947
      %v1363 = vadd.f32 %v1362, %v952
      %v1364 = vadd.f32 %v1363, %v955
      %v1365 = vadd.f32 %v1364, %v960
      %v1366 = vadd.f32 %v1365, %v963
      %v1367 = vadd.f32 %v1366, %v968
      %v1368 = vadd.f32 %v1367, %v971
      %v1369 = vadd.f32 %v1368, %v976
      %v1370 = vadd.f32 %v1369, %v979
      %v1371 = vadd.f32 %v1370, %v984
      %v1372 = vadd.f32 %v1371, %v987
      %v1373 = vrot.slane %v1372, 4
      %v1374 = vadd.f32 %v1372, %v1373
      %v1375 = vrot.slane %v1374, 2
      %v1376 = vadd.f32 %v1374, %v1375
      %v1377 = vrot.slane %v1376, 1
      %v1378 = vadd.f32 %v1376, %v1377
      %v1379 = vmul.f32 %v736, %v736
      %v1380 = vmul.f32 %v739, %v739
      %v1381 = vmul.f32 %v744, %v744
      %v1382 = vmul.f32 %v747, %v747
      %v1383 = vmul.f32 %v752, %v752
      %v1384 = vmul.f32 %v755, %v755
      %v1385 = vmul.f32 %v760, %v760
      %v1386 = vmul.f32 %v763, %v763
      %v1387 = vmul.f32 %v768, %v768
      %v1388 = vmul.f32 %v771, %v771
      %v1389 = vmul.f32 %v776, %v776
      %v1390 = vmul.f32 %v779, %v779
      %v1391 = vmul.f32 %v784, %v784
      %v1392 = vmul.f32 %v787, %v787
      %v1393 = vmul.f32 %v792, %v792
      %v1394 = vmul.f32 %v795, %v795
      %v1395 = vmul.f32 %v800, %v800
      %v1396 = vmul.f32 %v803, %v803
      %v1397 = vmul.f32 %v808, %v808
      %v1398 = vmul.f32 %v811, %v811
      %v1399 = vmul.f32 %v816, %v816
      %v1400 = vmul.f32 %v819, %v819
      %v1401 = vmul.f32 %v824, %v824
      %v1402 = vmul.f32 %v827, %v827
      %v1403 = vmul.f32 %v832, %v832
      %v1404 = vmul.f32 %v835, %v835
      %v1405 = vmul.f32 %v840, %v840
      %v1406 = vmul.f32 %v843, %v843
      %v1407 = vmul.f32 %v848, %v848
      %v1408 = vmul.f32 %v851, %v851
      %v1409 = vmul.f32 %v856, %v856
      %v1410 = vmul.f32 %v859, %v859
      %v1411 = vmul.f32 %v864, %v864
      %v1412 = vmul.f32 %v867, %v867
      %v1413 = vmul.f32 %v872, %v872
      %v1414 = vmul.f32 %v875, %v875
      %v1415 = vmul.f32 %v880, %v880
      %v1416 = vmul.f32 %v883, %v883
      %v1417 = vmul.f32 %v888, %v888
      %v1418 = vmul.f32 %v891, %v891
      %v1419 = vmul.f32 %v896, %v896
      %v1420 = vmul.f32 %v899, %v899
      %v1421 = vmul.f32 %v904, %v904
      %v1422 = vmul.f32 %v907, %v907
      %v1423 = vmul.f32 %v912, %v912
      %v1424 = vmul.f32 %v915, %v915
      %v1425 = vmul.f32 %v920, %v920
      %v1426 = vmul.f32 %v923, %v923
      %v1427 = vmul.f32 %v928, %v928
      %v1428 = vmul.f32 %v931, %v931
      %v1429 = vmul.f32 %v936, %v936
      %v1430 = vmul.f32 %v939, %v939
      %v1431 = vmul.f32 %v944, %v944
      %v1432 = vmul.f32 %v947, %v947
      %v1433 = vmul.f32 %v952, %v952
      %v1434 = vmul.f32 %v955, %v955
      %v1435 = vmul.f32 %v960, %v960
      %v1436 = vmul.f32 %v963, %v963
      %v1437 = vmul.f32 %v968, %v968
      %v1438 = vmul.f32 %v971, %v971
      %v1439 = vmul.f32 %v976, %v976
      %v1440 = vmul.f32 %v979, %v979
      %v1441 = vmul.f32 %v984, %v984
      %v1442 = vmul.f32 %v987, %v987
      %v1443 = vadd.f32 %v1379, %v1380
      %v1444 = vadd.f32 %v1443, %v1381
      %v1445 = vadd.f32 %v1444, %v1382
      %v1446 = vadd.f32 %v1445, %v1383
      %v1447 = vadd.f32 %v1446, %v1384
      %v1448 = vadd.f32 %v1447, %v1385
      %v1449 = vadd.f32 %v1448, %v1386
      %v1450 = vadd.f32 %v1449, %v1387
      %v1451 = vadd.f32 %v1450, %v1388
      %v1452 = vadd.f32 %v1451, %v1389
      %v1453 = vadd.f32 %v1452, %v1390
      %v1454 = vadd.f32 %v1453, %v1391
      %v1455 = vadd.f32 %v1454, %v1392
      %v1456 = vadd.f32 %v1455, %v1393
      %v1457 = vadd.f32 %v1456, %v1394
      %v1458 = vadd.f32 %v1457, %v1395
      %v1459 = vadd.f32 %v1458, %v1396
      %v1460 = vadd.f32 %v1459, %v1397
      %v1461 = vadd.f32 %v1460, %v1398
      %v1462 = vadd.f32 %v1461, %v1399
      %v1463 = vadd.f32 %v1462, %v1400
      %v1464 = vadd.f32 %v1463, %v1401
      %v1465 = vadd.f32 %v1464, %v1402
      %v1466 = vadd.f32 %v1465, %v1403
      %v1467 = vadd.f32 %v1466, %v1404
      %v1468 = vadd.f32 %v1467, %v1405
      %v1469 = vadd.f32 %v1468, %v1406
      %v1470 = vadd.f32 %v1469, %v1407
      %v1471 = vadd.f32 %v1470, %v1408
      %v1472 = vadd.f32 %v1471, %v1409
      %v1473 = vadd.f32 %v1472, %v1410
      %v1474 = vadd.f32 %v1473, %v1411
      %v1475 = vadd.f32 %v1474, %v1412
      %v1476 = vadd.f32 %v1475, %v1413
      %v1477 = vadd.f32 %v1476, %v1414
      %v1478 = vadd.f32 %v1477, %v1415
      %v1479 = vadd.f32 %v1478, %v1416
      %v1480 = vadd.f32 %v1479, %v1417
      %v1481 = vadd.f32 %v1480, %v1418
      %v1482 = vadd.f32 %v1481, %v1419
      %v1483 = vadd.f32 %v1482, %v1420
      %v1484 = vadd.f32 %v1483, %v1421
      %v1485 = vadd.f32 %v1484, %v1422
      %v1486 = vadd.f32 %v1485, %v1423
      %v1487 = vadd.f32 %v1486, %v1424
      %v1488 = vadd.f32 %v1487, %v1425
      %v1489 = vadd.f32 %v1488, %v1426
      %v1490 = vadd.f32 %v1489, %v1427
      %v1491 = vadd.f32 %v1490, %v1428
      %v1492 = vadd.f32 %v1491, %v1429
      %v1493 = vadd.f32 %v1492, %v1430
      %v1494 = vadd.f32 %v1493, %v1431
      %v1495 = vadd.f32 %v1494, %v1432
      %v1496 = vadd.f32 %v1495, %v1433
      %v1497 = vadd.f32 %v1496, %v1434
      %v1498 = vadd.f32 %v1497, %v1435
      %v1499 = vadd.f32 %v1498, %v1436
      %v1500 = vadd.f32 %v1499, %v1437
      %v1501 = vadd.f32 %v1500, %v1438
      %v1502 = vadd.f32 %v1501, %v1439
      %v1503 = vadd.f32 %v1502, %v1440
      %v1504 = vadd.f32 %v1503, %v1441
      %v1505 = vadd.f32 %v1504, %v1442
      %v1506 = vrot.slane %v1505, 4
      %v1507 = vadd.f32 %v1505, %v1506
      %v1508 = vrot.slane %v1507, 2
      %v1509 = vadd.f32 %v1507, %v1508
      %v1510 = vrot.slane %v1509, 1
      %v1511 = vadd.f32 %v1509, %v1510
      %v1512 = vlaneseq
      %v1513 = vshrl.u32 %v1512, 7
      %vm1514 = vcmp.lt.s32.totalorder %v1513, 4
      %v1515 = vsel %vm1514, %v1378, %v1511
      %1516 = vst [vmem:[%s187] sm:$0xff] %v1515
      %s1517 = smul.u32 64, %s15
      %p1518 = scmp.lt.s32.totalorder %s1517, 255
      %s1519 = scalar_select %p1518, %s1517, 255
      %s1520 = smul.addr %s1519, 4
      %s1521 = scalar_lea.vmem %s2, %s1520
      %p1522 = scmp.lt.s32.totalorder %s15, 3
      %s1523 = scalar_select %p1522, %s15, 3
      %s1524 = smul.addr %s1523, 8
      %s1525 = scalar_lea.vmem %s3, %s1524
      // Predicated region
      $region29: #{resnet_forward.8} parent=27 // pred_check
        %p1526 = pneg %p80
      $region30: #{resnet_forward.8} parent=27 // pred_check_branch
        %1528 = sbr.rel (%p1526) target = $region32
      $region31: #{resnet_forward.8} parent=27 // pred_region
        %s1529 = smul.u32 64, %s15
      $region32: #{resnet_forward.8} parent=27 // pred_fallthru
        _
      // Predicated region
      $region33: #{resnet_forward.8} parent=27 // pred_check
        %p1530 = pneg %p106
      $region34: #{resnet_forward.8} parent=27 // pred_check_branch
        %1532 = sbr.rel (%p1530) target = $region36
      $region35: #{resnet_forward.8} parent=27 // pred_region
        _
      $region36: #{resnet_forward.8} parent=27 // pred_fallthru
        _
    $region28: #{resnet_forward.8} parent=5 // pred_fallthru
      _
    %p1533 = scmp.le.s32.totalorder 2, %s10
    // Predicated region
    $region37: #{resnet_forward.8} parent=5 // pred_check
      %p1534 = pneg %p1533
    $region38: #{resnet_forward.8} parent=5 // pred_check_branch
      %1536 = sbr.rel (%p1534) target = $region40
    $region39: #{resnet_forward.8} parent=5 // pred_region
      %s1537 = ssub.s32 %s10, 2
      // Predicated region
      $region41: #{resnet_forward.8} parent=39 // pred_check
        %p1538 = pneg %p86
      $region42: #{resnet_forward.8} parent=39 // pred_check_branch
        %1540 = sbr.rel (%p1538) target = $region44
      $region43: #{resnet_forward.8} parent=39 // pred_region
        %s1541 = smul.u32 64, %s16
        %p1542 = scmp.lt.s32.totalorder %s1541, 255
        %s1543 = scalar_select %p1542, %s1541, 255
        %s1544 = smul.addr %s1543, 4
        %s1545 = scalar_lea.vmem %s2, %s1544
      $region44: #{resnet_forward.8} parent=39 // pred_fallthru
        _
      // Predicated region
      $region45: #{resnet_forward.8} parent=39 // pred_check
        %p1546 = pneg %p112
      $region46: #{resnet_forward.8} parent=39 // pred_check_branch
        %1548 = sbr.rel (%p1546) target = $region48
      $region47: #{resnet_forward.8} parent=39 // pred_region
        %p1549 = scmp.lt.s32.totalorder %s16, 3
        %s1550 = scalar_select %p1549, %s16, 3
        %s1551 = smul.addr %s1550, 8
        %s1552 = scalar_lea.vmem %s3, %s1551
      $region48: #{resnet_forward.8} parent=39 // pred_fallthru
        _
    $region40: #{resnet_forward.8} parent=5 // pred_fallthru
      _
  $region6: #{resnet_forward.8} parent=0 // loop_footer
    %s14 = sadd.s32 1, %s10
  $region7: #{resnet_forward.8} parent=0 // loop_footer_branch
    %9 = sbr.rel target = $region3
  $region8: #{resnet_forward.8} parent=0 // loop_exit
    _

// kernel: resnet_forward.10
$region0: #{resnet_forward.10}
  #allocation0 [shape = 'u32[]', space=smem, size = 0x4, offset = 0x4, fixed_abs, tag = 'smem constant byte address 0x4 - core index']
  #allocation1 [shape = 'u32[144,128]{1,0:T(1,128)}', space=vmem, size = 0x12000, scoped, tag = 'internal scratch']
  %s0 = inlined_call_operand.vmem [shape: bf16[512,640], index: 0, kind: input, shape index: {}]
  %s1 = inlined_call_operand.vmem [shape: bf16[640,128], index: 1, kind: input, shape index: {}]
  %s2 = inlined_call_operand.vmem [shape: bf16[512,128], index: 2, kind: output, shape index: {0}]
  %s3 = inlined_call_operand.vmem [shape: f32[16,128], index: 3, kind: output, shape index: {1}]
  %4 = xla_tuple %s2, %s3
  %s5 = sld [smem:[#allocation0]]
  $region49: #{resnet_forward.10} parent=0
    _
  %s7 = ssub.s32 1, %s5
  %s8 = scalar_select 0, %s7, %s5
  loop: start=0, step=1, limit=4
  $region2: #{resnet_forward.10} parent=0 // loop_pre_header
    _
  $region3: #{resnet_forward.10} parent=0 // loop_header
    %s10 = sphi 0, %s14
    %p11 = scmp.ge.s32.totalorder %s10, 4
    %s20 = sphi 0, %s22
    %s23 = sphi 0, %s20
    %s24 = sphi 0, %s23
    %s40 = sphi 0, %s24
    %s44 = sphi 0, %s44
    %s46 = sphi 0, %s44
    %s47 = sphi 0, %s46
    %s61 = sphi 0, %s47
    %s67 = sphi 0, %s69
    %s70 = sphi 0, %s67
    %s71 = sphi 0, %s70
    %s87 = sphi 0, %s71
    %s93 = sphi 0, %s95
    %s96 = sphi 0, %s93
    %s97 = sphi 0, %s96
    %s113 = sphi 0, %s97
  $region4: #{resnet_forward.10} parent=0 // loop_header_branch
    %13 = sbr.rel (%p11) target = $region8
  $region5: #{resnet_forward.10} parent=0 // loop_body
    %s15 = ssub.s32 %s10, 1
    %s16 = ssub.s32 %s10, 2
    %s17 = sadd.s32 %s10, 1
    %s18 = ssub.s32 %s10, %s17
    %p19 = scmp.eq.s32.totalorder %s18, 0
    %s21 = sadd.s32 %s20, 1
    %s22 = scalar_select %p19, %s20, %s21
    %p25 = pneg %p19
    %p26 = scmp.eq.s32.totalorder %s10, 1
    %p27 = por %p25, %p26
    %p28 = scmp.ne.s32.totalorder %s20, %s23
    %p29 = scmp.eq.s32.totalorder %s10, 0
    %p30 = por %p28, %p29
    %p31 = scmp.ne.s32.totalorder %s20, %s23
    %p32 = scmp.eq.s32.totalorder %s15, 1
    %p33 = por %p31, %p32
    %p34 = scmp.ne.s32.totalorder %s23, %s24
    %p35 = scmp.eq.s32.totalorder %s15, 0
    %p36 = por %p34, %p35
    %p37 = scmp.ne.s32.totalorder %s23, %s24
    %p38 = scmp.eq.s32.totalorder %s16, 1
    %p39 = por %p37, %p38
    %p41 = scmp.ne.s32.totalorder %s24, %s40
    %p42 = scmp.eq.s32.totalorder %s16, 0
    %p43 = por %p41, %p42
    %s45 = sadd.s32 %s44, 1
    %p48 = scmp.eq.s32.totalorder %s10, 1
    %p49 = scmp.ne.s32.totalorder %s44, %s46
    %p50 = scmp.eq.s32.totalorder %s10, 0
    %p51 = por %p49, %p50
    %p52 = scmp.ne.s32.totalorder %s44, %s46
    %p53 = scmp.eq.s32.totalorder %s15, 1
    %p54 = por %p52, %p53
    %p55 = scmp.ne.s32.totalorder %s46, %s47
    %p56 = scmp.eq.s32.totalorder %s15, 0
    %p57 = por %p55, %p56
    %p58 = scmp.ne.s32.totalorder %s46, %s47
    %p59 = scmp.eq.s32.totalorder %s16, 1
    %p60 = por %p58, %p59
    %p62 = scmp.ne.s32.totalorder %s47, %s61
    %p63 = scmp.eq.s32.totalorder %s16, 0
    %p64 = por %p62, %p63
    %s65 = ssub.s32 %s10, %s17
    %p66 = scmp.eq.s32.totalorder %s65, 0
    %s68 = sadd.s32 %s67, 1
    %s69 = scalar_select %p66, %s67, %s68
    %p72 = pneg %p66
    %p73 = scmp.eq.s32.totalorder %s10, 1
    %p74 = por %p72, %p73
    %p75 = scmp.ne.s32.totalorder %s67, %s70
    %p76 = scmp.eq.s32.totalorder %s10, 0
    %p77 = por %p75, %p76
    %p78 = scmp.ne.s32.totalorder %s67, %s70
    %p79 = scmp.eq.s32.totalorder %s15, 1
    %p80 = por %p78, %p79
    %p81 = scmp.ne.s32.totalorder %s70, %s71
    %p82 = scmp.eq.s32.totalorder %s15, 0
    %p83 = por %p81, %p82
    %p84 = scmp.ne.s32.totalorder %s70, %s71
    %p85 = scmp.eq.s32.totalorder %s16, 1
    %p86 = por %p84, %p85
    %p88 = scmp.ne.s32.totalorder %s71, %s87
    %p89 = scmp.eq.s32.totalorder %s16, 0
    %p90 = por %p88, %p89
    %s91 = ssub.s32 %s10, %s17
    %p92 = scmp.eq.s32.totalorder %s91, 0
    %s94 = sadd.s32 %s93, 1
    %s95 = scalar_select %p92, %s93, %s94
    %p98 = pneg %p92
    %p99 = scmp.eq.s32.totalorder %s10, 1
    %p100 = por %p98, %p99
    %p101 = scmp.ne.s32.totalorder %s93, %s96
    %p102 = scmp.eq.s32.totalorder %s10, 0
    %p103 = por %p101, %p102
    %p104 = scmp.ne.s32.totalorder %s93, %s96
    %p105 = scmp.eq.s32.totalorder %s15, 1
    %p106 = por %p104, %p105
    %p107 = scmp.ne.s32.totalorder %s96, %s97
    %p108 = scmp.eq.s32.totalorder %s15, 0
    %p109 = por %p107, %p108
    %p110 = scmp.ne.s32.totalorder %s96, %s97
    %p111 = scmp.eq.s32.totalorder %s16, 1
    %p112 = por %p110, %p111
    %p114 = scmp.ne.s32.totalorder %s97, %s113
    %p115 = scmp.eq.s32.totalorder %s16, 0
    %p116 = por %p114, %p115
    %p117 = scmp.le.s32.totalorder 1, %s10
    %p118 = scmp.lt.s32.totalorder %s10, 3
    %p119 = pnand %p117, %p118
    %p120 = pneg %p119
    // Predicated region
    $region9: #{resnet_forward.10} parent=5 // pred_check
      _
    $region10: #{resnet_forward.10} parent=5 // pred_check_branch
      %122 = sbr.rel (%p119) target = $region12
    $region11: #{resnet_forward.10} parent=5 // pred_region
      %s123 = ssub.s32 %s10, 1
      // Predicated region
      $region13: #{resnet_forward.10} parent=11 // pred_check
        %p124 = pneg %p57
      $region14: #{resnet_forward.10} parent=11 // pred_check_branch
        %126 = sbr.rel (%p124) target = $region16
      $region15: #{resnet_forward.10} parent=11 // pred_region
        _
      $region16: #{resnet_forward.10} parent=11 // pred_fallthru
        _
    $region12: #{resnet_forward.10} parent=5 // pred_fallthru
      _
    %p127 = scmp.lt.s32.totalorder %s10, 2
    // Predicated region
    $region17: #{resnet_forward.10} parent=5 // pred_check
      %p128 = pneg %p127
    $region18: #{resnet_forward.10} parent=5 // pred_check_branch
      %130 = sbr.rel (%p128) target = $region20
    $region19: #{resnet_forward.10} parent=5 // pred_region
      // Predicated region
      $region21: #{resnet_forward.10} parent=19 // pred_check
        %p131 = pneg %p30
      $region22: #{resnet_forward.10} parent=19 // pred_check_branch
        %133 = sbr.rel (%p131) target = $region24
      $region23: #{resnet_forward.10} parent=19 // pred_region
        %s134 = smul.u32 32, %s10
        %p135 = scmp.lt.s32.totalorder %s134, 63
        %s136 = scalar_select %p135, %s134, 63
        %s137 = smul.addr %s136, 5
        %s138 = smul.addr %s137, 4
        %s139 = scalar_lea.vmem %s0, %s138
        %s140 = smul.u32 32, %s10
      $region24: #{resnet_forward.10} parent=19 // pred_fallthru
        _
    $region20: #{resnet_forward.10} parent=5 // pred_fallthru
      _
    %p141 = scmp.le.s32.totalorder 1, %s10
    %p142 = scmp.lt.s32.totalorder %s10, 3
    %p143 = pnand %p141, %p142
    %p144 = pneg %p143
    // Predicated region
    $region25: #{resnet_forward.10} parent=5 // pred_check
      _
    $region26: #{resnet_forward.10} parent=5 // pred_check_branch
      %146 = sbr.rel (%p143) target = $region28
    $region27: #{resnet_forward.10} parent=5 // pred_region
      %s147 = ssub.s32 %s10, 1
      %s148 = smul.u32 32, %s15
      %p149 = scmp.lt.s32.totalorder %s148, 63
      %s150 = scalar_select %p149, %s148, 63
      %s151 = smul.addr %s150, 5
      %s152 = smul.addr %s151, 4
      %s153 = scalar_lea.vmem %s0, %s152
      %p154 = pneg %p36
      %p155 = pneg %p33
      %p156 = pneg %p57
      %p157 = pneg %p54
      %p158 = pneg %p83
      %p159 = pneg %p80
      %s160 = smul.u32 32, %s15
      %p161 = scmp.lt.s32.totalorder %s160, 63
      %s162 = scalar_select %p161, %s160, 63
      %s163 = smul.addr %s162, 4
      %s164 = scalar_lea.vmem %s2, %s163
      %p165 = pneg %p109
      %p166 = pneg %p106
      %p167 = scmp.lt.s32.totalorder %s15, 1
      %s168 = scalar_select %p167, %s15, 1
      %s169 = smul.addr %s168, 8
      %s170 = scalar_lea.vmem %s3, %s169
      %s171 = smul.u32 32, %s15
      %p172 = scmp.lt.s32.totalorder %s171, 63
      %s173 = scalar_select %p172, %s171, 63
      %s174 = smul.addr %s173, 5
      %s175 = smul.addr %s174, 4
      %s176 = scalar_lea.vmem %s0, %s175
      %s177 = smul.u32 32, %s15
      %s178 = smul.u32 32, %s15
      %p179 = scmp.lt.s32.totalorder %s178, 63
      %s180 = scalar_select %p179, %s178, 63
      %s181 = smul.addr %s180, 4
      %s182 = scalar_lea.vmem %s2, %s181
      %s183 = smul.u32 32, %s15
      %p184 = scmp.lt.s32.totalorder %s15, 1
      %s185 = scalar_select %p184, %s15, 1
      %s186 = smul.addr %s185, 8
      %s187 = scalar_lea.vmem %s3, %s186
      %v189 = vld [vmem:[%s176] sm:$0xff]
      %v190 = vld [vmem:[%s176 + $0x8] sm:$0xff]
      %v191 = vld [vmem:[%s176 + $0x10] sm:$0xf]
      %v192 = vld [vmem:[%s176 + $0x14] sm:$0xff]
      %v193 = vld [vmem:[%s176 + $0x1c] sm:$0xff]
      %v194 = vld [vmem:[%s176 + $0x24] sm:$0xf]
      %v195 = vld [vmem:[%s176 + $0x28] sm:$0xff]
      %v196 = vld [vmem:[%s176 + $0x30] sm:$0xff]
      %v197 = vld [vmem:[%s176 + $0x38] sm:$0xf]
      %v198 = vld [vmem:[%s176 + $0x3c] sm:$0xff]
      %v199 = vld [vmem:[%s176 + $0x44] sm:$0xff]
      %v200 = vld [vmem:[%s176 + $0x4c] sm:$0xf]
      %v201 = vld [vmem:[%s176 + $0x50] sm:$0xff]
      %v202 = vld [vmem:[%s176 + $0x58] sm:$0xff]
      %v203 = vld [vmem:[%s176 + $0x60] sm:$0xf]
      %v204 = vld [vmem:[%s176 + $0x64] sm:$0xff]
      %v205 = vld [vmem:[%s176 + $0x6c] sm:$0xff]
      %v206 = vld [vmem:[%s176 + $0x74] sm:$0xf]
      %v207 = vld [vmem:[%s176 + $0x78] sm:$0xff]
      %v208 = vld [vmem:[%s176 + $0x80] sm:$0xff]
      %v209 = vld [vmem:[%s176 + $0x88] sm:$0xf]
      %v210 = vld [vmem:[%s176 + $0x8c] sm:$0xff]
      %v211 = vld [vmem:[%s176 + $0x94] sm:$0xff]
      %v212 = vld [vmem:[%s176 + $0x9c] sm:$0xf]
      %v213 = vld [vmem:[%s176 + $0xa0] sm:$0xff]
      %v214 = vld [vmem:[%s176 + $0xa8] sm:$0xff]
      %v215 = vld [vmem:[%s176 + $0xb0] sm:$0xf]
      %v216 = vld [vmem:[%s176 + $0xb4] sm:$0xff]
      %v217 = vld [vmem:[%s176 + $0xbc] sm:$0xff]
      %v218 = vld [vmem:[%s176 + $0xc4] sm:$0xf]
      %v219 = vld [vmem:[%s176 + $0xc8] sm:$0xff]
      %v220 = vld [vmem:[%s176 + $0xd0] sm:$0xff]
      %v221 = vld [vmem:[%s176 + $0xd8] sm:$0xf]
      %v222 = vld [vmem:[%s176 + $0xdc] sm:$0xff]
      %v223 = vld [vmem:[%s176 + $0xe4] sm:$0xff]
      %v224 = vld [vmem:[%s176 + $0xec] sm:$0xf]
      %v225 = vld [vmem:[%s176 + $0xf0] sm:$0xff]
      %v226 = vld [vmem:[%s176 + $0xf8] sm:$0xff]
      %v227 = vld [vmem:[%s176 + $0x100] sm:$0xf]
      %v228 = vld [vmem:[%s176 + $0x104] sm:$0xff]
      %v229 = vld [vmem:[%s176 + $0x10c] sm:$0xff]
      %v230 = vld [vmem:[%s176 + $0x114] sm:$0xf]
      %v231 = vld [vmem:[%s176 + $0x118] sm:$0xff]
      %v232 = vld [vmem:[%s176 + $0x120] sm:$0xff]
      %v233 = vld [vmem:[%s176 + $0x128] sm:$0xf]
      %v234 = vld [vmem:[%s176 + $0x12c] sm:$0xff]
      %v235 = vld [vmem:[%s176 + $0x134] sm:$0xff]
      %v236 = vld [vmem:[%s176 + $0x13c] sm:$0xf]
      %v237 = vld [vmem:[%s176 + $0x140] sm:$0xff]
      %v238 = vld [vmem:[%s176 + $0x148] sm:$0xff]
      %v239 = vld [vmem:[%s176 + $0x150] sm:$0xf]
      %v240 = vld [vmem:[%s176 + $0x154] sm:$0xff]
      %v241 = vld [vmem:[%s176 + $0x15c] sm:$0xff]
      %v242 = vld [vmem:[%s176 + $0x164] sm:$0xf]
      %v243 = vld [vmem:[%s176 + $0x168] sm:$0xff]
      %v244 = vld [vmem:[%s176 + $0x170] sm:$0xff]
      %v245 = vld [vmem:[%s176 + $0x178] sm:$0xf]
      %v246 = vld [vmem:[%s176 + $0x17c] sm:$0xff]
      %v247 = vld [vmem:[%s176 + $0x184] sm:$0xff]
      %v248 = vld [vmem:[%s176 + $0x18c] sm:$0xf]
      %v249 = vld [vmem:[%s176 + $0x190] sm:$0xff]
      %v250 = vld [vmem:[%s176 + $0x198] sm:$0xff]
      %v251 = vld [vmem:[%s176 + $0x1a0] sm:$0xf]
      %v252 = vld [vmem:[%s176 + $0x1a4] sm:$0xff]
      %v253 = vld [vmem:[%s176 + $0x1ac] sm:$0xff]
      %v254 = vld [vmem:[%s176 + $0x1b4] sm:$0xf]
      %v255 = vld [vmem:[%s176 + $0x1b8] sm:$0xff]
      %v256 = vld [vmem:[%s176 + $0x1c0] sm:$0xff]
      %v257 = vld [vmem:[%s176 + $0x1c8] sm:$0xf]
      %v258 = vld [vmem:[%s176 + $0x1cc] sm:$0xff]
      %v259 = vld [vmem:[%s176 + $0x1d4] sm:$0xff]
      %v260 = vld [vmem:[%s176 + $0x1dc] sm:$0xf]
      %v261 = vld [vmem:[%s176 + $0x1e0] sm:$0xff]
      %v262 = vld [vmem:[%s176 + $0x1e8] sm:$0xff]
      %v263 = vld [vmem:[%s176 + $0x1f0] sm:$0xf]
      %v264 = vld [vmem:[%s176 + $0x1f4] sm:$0xff]
      %v265 = vld [vmem:[%s176 + $0x1fc] sm:$0xff]
      %v266 = vld [vmem:[%s176 + $0x204] sm:$0xf]
      %v267 = vld [vmem:[%s176 + $0x208] sm:$0xff]
      %v268 = vld [vmem:[%s176 + $0x210] sm:$0xff]
      %v269 = vld [vmem:[%s176 + $0x218] sm:$0xf]
      %v270 = vld [vmem:[%s176 + $0x21c] sm:$0xff]
      %v271 = vld [vmem:[%s176 + $0x224] sm:$0xff]
      %v272 = vld [vmem:[%s176 + $0x22c] sm:$0xf]
      %v273 = vld [vmem:[%s176 + $0x230] sm:$0xff]
      %v274 = vld [vmem:[%s176 + $0x238] sm:$0xff]
      %v275 = vld [vmem:[%s176 + $0x240] sm:$0xf]
      %v276 = vld [vmem:[%s176 + $0x244] sm:$0xff]
      %v277 = vld [vmem:[%s176 + $0x24c] sm:$0xff]
      %v278 = vld [vmem:[%s176 + $0x254] sm:$0xf]
      %v279 = vld [vmem:[%s176 + $0x258] sm:$0xff]
      %v280 = vld [vmem:[%s176 + $0x260] sm:$0xff]
      %v281 = vld [vmem:[%s176 + $0x268] sm:$0xf]
      %v282 = vld [vmem:[%s176 + $0x26c] sm:$0xff]
      %v283 = vld [vmem:[%s176 + $0x274] sm:$0xff]
      %v284 = vld [vmem:[%s176 + $0x27c] sm:$0xf]
      %v285 = vld [vmem:[%s1] sm:$0xf]
      %v286 = vld [vmem:[%s1 + $0x4] sm:$0xf]
      %v287 = vld [vmem:[%s1 + $0x8] sm:$0xf]
      %v288 = vld [vmem:[%s1 + $0xc] sm:$0xf]
      %v289 = vld [vmem:[%s1 + $0x10] sm:$0xf]
      %v290 = vld [vmem:[%s1 + $0x14] sm:$0xf]
      %v291 = vld [vmem:[%s1 + $0x18] sm:$0xf]
      %v292 = vld [vmem:[%s1 + $0x1c] sm:$0xf]
      %v293 = vld [vmem:[%s1 + $0x20] sm:$0xf]
      %v294 = vld [vmem:[%s1 + $0x24] sm:$0xf]
      %v295 = vld [vmem:[%s1 + $0x28] sm:$0xf]
      %v296 = vld [vmem:[%s1 + $0x2c] sm:$0xf]
      %v297 = vld [vmem:[%s1 + $0x30] sm:$0xf]
      %v298 = vld [vmem:[%s1 + $0x34] sm:$0xf]
      %v299 = vld [vmem:[%s1 + $0x38] sm:$0xf]
      %v300 = vld [vmem:[%s1 + $0x3c] sm:$0xf]
      %v301 = vld [vmem:[%s1 + $0x40] sm:$0xf]
      %v302 = vld [vmem:[%s1 + $0x44] sm:$0xf]
      %v303 = vld [vmem:[%s1 + $0x48] sm:$0xf]
      %v304 = vld [vmem:[%s1 + $0x4c] sm:$0xf]
      %v305 = vld [vmem:[%s1 + $0x50] sm:$0xf]
      %v306 = vld [vmem:[%s1 + $0x54] sm:$0xf]
      %v307 = vld [vmem:[%s1 + $0x58] sm:$0xf]
      %v308 = vld [vmem:[%s1 + $0x5c] sm:$0xf]
      %v309 = vld [vmem:[%s1 + $0x60] sm:$0xf]
      %v310 = vld [vmem:[%s1 + $0x64] sm:$0xf]
      %v311 = vld [vmem:[%s1 + $0x68] sm:$0xf]
      %v312 = vld [vmem:[%s1 + $0x6c] sm:$0xf]
      %v313 = vld [vmem:[%s1 + $0x70] sm:$0xf]
      %v314 = vld [vmem:[%s1 + $0x74] sm:$0xf]
      %v315 = vld [vmem:[%s1 + $0x78] sm:$0xf]
      %v316 = vld [vmem:[%s1 + $0x7c] sm:$0xf]
      %v317 = vld [vmem:[%s1 + $0x80] sm:$0xf]
      %v318 = vld [vmem:[%s1 + $0x84] sm:$0xf]
      %v319 = vld [vmem:[%s1 + $0x88] sm:$0xf]
      %v320 = vld [vmem:[%s1 + $0x8c] sm:$0xf]
      %v321 = vld [vmem:[%s1 + $0x90] sm:$0xf]
      %v322 = vld [vmem:[%s1 + $0x94] sm:$0xf]
      %v323 = vld [vmem:[%s1 + $0x98] sm:$0xf]
      %v324 = vld [vmem:[%s1 + $0x9c] sm:$0xf]
      %v325 = vld [vmem:[%s1 + $0xa0] sm:$0xf]
      %v326 = vld [vmem:[%s1 + $0xa4] sm:$0xf]
      %v327 = vld [vmem:[%s1 + $0xa8] sm:$0xf]
      %v328 = vld [vmem:[%s1 + $0xac] sm:$0xf]
      %v329 = vld [vmem:[%s1 + $0xb0] sm:$0xf]
      %v330 = vld [vmem:[%s1 + $0xb4] sm:$0xf]
      %v331 = vld [vmem:[%s1 + $0xb8] sm:$0xf]
      %v332 = vld [vmem:[%s1 + $0xbc] sm:$0xf]
      %v333 = vld [vmem:[%s1 + $0xc0] sm:$0xf]
      %v334 = vld [vmem:[%s1 + $0xc4] sm:$0xf]
      %v335 = vld [vmem:[%s1 + $0xc8] sm:$0xf]
      %v336 = vld [vmem:[%s1 + $0xcc] sm:$0xf]
      %v337 = vld [vmem:[%s1 + $0xd0] sm:$0xf]
      %v338 = vld [vmem:[%s1 + $0xd4] sm:$0xf]
      %v339 = vld [vmem:[%s1 + $0xd8] sm:$0xf]
      %v340 = vld [vmem:[%s1 + $0xdc] sm:$0xf]
      %v341 = vld [vmem:[%s1 + $0xe0] sm:$0xf]
      %v342 = vld [vmem:[%s1 + $0xe4] sm:$0xf]
      %v343 = vld [vmem:[%s1 + $0xe8] sm:$0xf]
      %v344 = vld [vmem:[%s1 + $0xec] sm:$0xf]
      %v345 = vld [vmem:[%s1 + $0xf0] sm:$0xf]
      %v346 = vld [vmem:[%s1 + $0xf4] sm:$0xf]
      %v347 = vld [vmem:[%s1 + $0xf8] sm:$0xf]
      %v348 = vld [vmem:[%s1 + $0xfc] sm:$0xf]
      %v349 = vld [vmem:[%s1 + $0x100] sm:$0xf]
      %v350 = vld [vmem:[%s1 + $0x104] sm:$0xf]
      %v351 = vld [vmem:[%s1 + $0x108] sm:$0xf]
      %v352 = vld [vmem:[%s1 + $0x10c] sm:$0xf]
      %v353 = vld [vmem:[%s1 + $0x110] sm:$0xf]
      %v354 = vld [vmem:[%s1 + $0x114] sm:$0xf]
      %v355 = vld [vmem:[%s1 + $0x118] sm:$0xf]
      %v356 = vld [vmem:[%s1 + $0x11c] sm:$0xf]
      %v357 = vld [vmem:[%s1 + $0x120] sm:$0xf]
      %v358 = vld [vmem:[%s1 + $0x124] sm:$0xf]
      %v359 = vld [vmem:[%s1 + $0x128] sm:$0xf]
      %v360 = vld [vmem:[%s1 + $0x12c] sm:$0xf]
      %v361 = vld [vmem:[%s1 + $0x130] sm:$0xf]
      %v362 = vld [vmem:[%s1 + $0x134] sm:$0xf]
      %v363 = vld [vmem:[%s1 + $0x138] sm:$0xf]
      %v364 = vld [vmem:[%s1 + $0x13c] sm:$0xf]
      %v461 = vunpack.c.l.b16 %v189
      %v462 = vunpack.c.h.b16 %v189
      %v463 = vunpack.c.l.b16 %v190
      %v464 = vunpack.c.h.b16 %v190
      %v465 = vunpack.c.l.b16 %v191
      %v466 = vunpack.c.l.b16 %v192
      %v467 = vunpack.c.h.b16 %v192
      %v468 = vunpack.c.l.b16 %v193
      %v469 = vunpack.c.h.b16 %v193
      %v470 = vunpack.c.l.b16 %v194
      %v471 = vunpack.c.l.b16 %v195
      %v472 = vunpack.c.h.b16 %v195
      %v473 = vunpack.c.l.b16 %v196
      %v474 = vunpack.c.h.b16 %v196
      %v475 = vunpack.c.l.b16 %v197
      %v476 = vunpack.c.l.b16 %v198
      %v477 = vunpack.c.h.b16 %v198
      %v478 = vunpack.c.l.b16 %v199
      %v479 = vunpack.c.h.b16 %v199
      %v480 = vunpack.c.l.b16 %v200
      %v481 = vunpack.c.l.b16 %v201
      %v482 = vunpack.c.h.b16 %v201
      %v483 = vunpack.c.l.b16 %v202
      %v484 = vunpack.c.h.b16 %v202
      %v485 = vunpack.c.l.b16 %v203
      %v486 = vunpack.c.l.b16 %v204
      %v487 = vunpack.c.h.b16 %v204
      %v488 = vunpack.c.l.b16 %v205
      %v489 = vunpack.c.h.b16 %v205
      %v490 = vunpack.c.l.b16 %v206
      %v491 = vunpack.c.l.b16 %v207
      %v492 = vunpack.c.h.b16 %v207
      %v493 = vunpack.c.l.b16 %v208
      %v494 = vunpack.c.h.b16 %v208
      %v495 = vunpack.c.l.b16 %v209
      %v496 = vunpack.c.l.b16 %v210
      %v497 = vunpack.c.h.b16 %v210
      %v498 = vunpack.c.l.b16 %v211
      %v499 = vunpack.c.h.b16 %v211
      %v500 = vunpack.c.l.b16 %v212
      %v501 = vunpack.c.l.b16 %v213
      %v502 = vunpack.c.h.b16 %v213
      %v503 = vunpack.c.l.b16 %v214
      %v504 = vunpack.c.h.b16 %v214
      %v505 = vunpack.c.l.b16 %v215
      %v506 = vunpack.c.l.b16 %v216
      %v507 = vunpack.c.h.b16 %v216
      %v508 = vunpack.c.l.b16 %v217
      %v509 = vunpack.c.h.b16 %v217
      %v510 = vunpack.c.l.b16 %v218
      %v511 = vunpack.c.l.b16 %v219
      %v512 = vunpack.c.h.b16 %v219
      %v513 = vunpack.c.l.b16 %v220
      %v514 = vunpack.c.h.b16 %v220
      %v515 = vunpack.c.l.b16 %v221
      %v516 = vunpack.c.l.b16 %v222
      %v517 = vunpack.c.h.b16 %v222
      %v518 = vunpack.c.l.b16 %v223
      %v519 = vunpack.c.h.b16 %v223
      %v520 = vunpack.c.l.b16 %v224
      %v521 = vunpack.c.l.b16 %v225
      %v522 = vunpack.c.h.b16 %v225
      %v523 = vunpack.c.l.b16 %v226
      %v524 = vunpack.c.h.b16 %v226
      %v525 = vunpack.c.l.b16 %v227
      %v526 = vunpack.c.l.b16 %v228
      %v527 = vunpack.c.h.b16 %v228
      %v528 = vunpack.c.l.b16 %v229
      %v529 = vunpack.c.h.b16 %v229
      %v530 = vunpack.c.l.b16 %v230
      %v531 = vunpack.c.l.b16 %v231
      %v532 = vunpack.c.h.b16 %v231
      %v533 = vunpack.c.l.b16 %v232
      %v534 = vunpack.c.h.b16 %v232
      %v535 = vunpack.c.l.b16 %v233
      %v536 = vunpack.c.l.b16 %v234
      %v537 = vunpack.c.h.b16 %v234
      %v538 = vunpack.c.l.b16 %v235
      %v539 = vunpack.c.h.b16 %v235
      %v540 = vunpack.c.l.b16 %v236
      %v541 = vunpack.c.l.b16 %v237
      %v542 = vunpack.c.h.b16 %v237
      %v543 = vunpack.c.l.b16 %v238
      %v544 = vunpack.c.h.b16 %v238
      %v545 = vunpack.c.l.b16 %v239
      %v546 = vunpack.c.l.b16 %v240
      %v547 = vunpack.c.h.b16 %v240
      %v548 = vunpack.c.l.b16 %v241
      %v549 = vunpack.c.h.b16 %v241
      %v550 = vunpack.c.l.b16 %v242
      %v551 = vunpack.c.l.b16 %v243
      %v552 = vunpack.c.h.b16 %v243
      %v553 = vunpack.c.l.b16 %v244
      %v554 = vunpack.c.h.b16 %v244
      %v555 = vunpack.c.l.b16 %v245
      %v556 = vunpack.c.l.b16 %v246
      %v557 = vunpack.c.h.b16 %v246
      %v558 = vunpack.c.l.b16 %v247
      %v559 = vunpack.c.h.b16 %v247
      %v560 = vunpack.c.l.b16 %v248
      %v561 = vunpack.c.l.b16 %v249
      %v562 = vunpack.c.h.b16 %v249
      %v563 = vunpack.c.l.b16 %v250
      %v564 = vunpack.c.h.b16 %v250
      %v565 = vunpack.c.l.b16 %v251
      %v566 = vunpack.c.l.b16 %v252
      %v567 = vunpack.c.h.b16 %v252
      %v568 = vunpack.c.l.b16 %v253
      %v569 = vunpack.c.h.b16 %v253
      %v570 = vunpack.c.l.b16 %v254
      %v571 = vunpack.c.l.b16 %v255
      %v572 = vunpack.c.h.b16 %v255
      %v573 = vunpack.c.l.b16 %v256
      %v574 = vunpack.c.h.b16 %v256
      %v575 = vunpack.c.l.b16 %v257
      %v576 = vunpack.c.l.b16 %v258
      %v577 = vunpack.c.h.b16 %v258
      %v578 = vunpack.c.l.b16 %v259
      %v579 = vunpack.c.h.b16 %v259
      %v580 = vunpack.c.l.b16 %v260
      %v581 = vunpack.c.l.b16 %v261
      %v582 = vunpack.c.h.b16 %v261
      %v583 = vunpack.c.l.b16 %v262
      %v584 = vunpack.c.h.b16 %v262
      %v585 = vunpack.c.l.b16 %v263
      %v586 = vunpack.c.l.b16 %v264
      %v587 = vunpack.c.h.b16 %v264
      %v588 = vunpack.c.l.b16 %v265
      %v589 = vunpack.c.h.b16 %v265
      %v590 = vunpack.c.l.b16 %v266
      %v591 = vunpack.c.l.b16 %v267
      %v592 = vunpack.c.h.b16 %v267
      %v593 = vunpack.c.l.b16 %v268
      %v594 = vunpack.c.h.b16 %v268
      %v595 = vunpack.c.l.b16 %v269
      %v596 = vunpack.c.l.b16 %v270
      %v597 = vunpack.c.h.b16 %v270
      %v598 = vunpack.c.l.b16 %v271
      %v599 = vunpack.c.h.b16 %v271
      %v600 = vunpack.c.l.b16 %v272
      %v601 = vunpack.c.l.b16 %v273
      %v602 = vunpack.c.h.b16 %v273
      %v603 = vunpack.c.l.b16 %v274
      %v604 = vunpack.c.h.b16 %v274
      %v605 = vunpack.c.l.b16 %v275
      %v606 = vunpack.c.l.b16 %v276
      %v607 = vunpack.c.h.b16 %v276
      %v608 = vunpack.c.l.b16 %v277
      %v609 = vunpack.c.h.b16 %v277
      %v610 = vunpack.c.l.b16 %v278
      %v611 = vunpack.c.l.b16 %v279
      %v612 = vunpack.c.h.b16 %v279
      %v613 = vunpack.c.l.b16 %v280
      %v614 = vunpack.c.h.b16 %v280
      %v615 = vunpack.c.l.b16 %v281
      %v616 = vunpack.c.l.b16 %v282
      %v617 = vunpack.c.h.b16 %v282
      %v618 = vunpack.c.l.b16 %v283
      %v619 = vunpack.c.h.b16 %v283
      %v620 = vunpack.c.l.b16 %v284
      %v621 = vpack.c.b16 %v466, %v461
      %v622 = vpack.c.b16 %v467, %v462
      %v623 = vpack.c.b16 %v468, %v463
      %v624 = vpack.c.b16 %v469, %v464
      %v625 = vpack.c.b16 %v470, %v465
      %v626 = vpack.c.b16 %v476, %v471
      %v627 = vpack.c.b16 %v477, %v472
      %v628 = vpack.c.b16 %v478, %v473
      %v629 = vpack.c.b16 %v479, %v474
      %v630 = vpack.c.b16 %v480, %v475
      %v631 = vpack.c.b16 %v486, %v481
      %v632 = vpack.c.b16 %v487, %v482
      %v633 = vpack.c.b16 %v488, %v483
      %v634 = vpack.c.b16 %v489, %v484
      %v635 = vpack.c.b16 %v490, %v485
      %v636 = vpack.c.b16 %v496, %v491
      %v637 = vpack.c.b16 %v497, %v492
      %v638 = vpack.c.b16 %v498, %v493
      %v639 = vpack.c.b16 %v499, %v494
      %v640 = vpack.c.b16 %v500, %v495
      %v641 = vpack.c.b16 %v506, %v501
      %v642 = vpack.c.b16 %v507, %v502
      %v643 = vpack.c.b16 %v508, %v503
      %v644 = vpack.c.b16 %v509, %v504
      %v645 = vpack.c.b16 %v510, %v505
      %v646 = vpack.c.b16 %v516, %v511
      %v647 = vpack.c.b16 %v517, %v512
      %v648 = vpack.c.b16 %v518, %v513
      %v649 = vpack.c.b16 %v519, %v514
      %v650 = vpack.c.b16 %v520, %v515
      %v651 = vpack.c.b16 %v526, %v521
      %v652 = vpack.c.b16 %v527, %v522
      %v653 = vpack.c.b16 %v528, %v523
      %v654 = vpack.c.b16 %v529, %v524
      %v655 = vpack.c.b16 %v530, %v525
      %v656 = vpack.c.b16 %v536, %v531
      %v657 = vpack.c.b16 %v537, %v532
      %v658 = vpack.c.b16 %v538, %v533
      %v659 = vpack.c.b16 %v539, %v534
      %v660 = vpack.c.b16 %v540, %v535
      %v661 = vpack.c.b16 %v546, %v541
      %v662 = vpack.c.b16 %v547, %v542
      %v663 = vpack.c.b16 %v548, %v543
      %v664 = vpack.c.b16 %v549, %v544
      %v665 = vpack.c.b16 %v550, %v545
      %v666 = vpack.c.b16 %v556, %v551
      %v667 = vpack.c.b16 %v557, %v552
      %v668 = vpack.c.b16 %v558, %v553
      %v669 = vpack.c.b16 %v559, %v554
      %v670 = vpack.c.b16 %v560, %v555
      %v671 = vpack.c.b16 %v566, %v561
      %v672 = vpack.c.b16 %v567, %v562
      %v673 = vpack.c.b16 %v568, %v563
      %v674 = vpack.c.b16 %v569, %v564
      %v675 = vpack.c.b16 %v570, %v565
      %v676 = vpack.c.b16 %v576, %v571
      %v677 = vpack.c.b16 %v577, %v572
      %v678 = vpack.c.b16 %v578, %v573
      %v679 = vpack.c.b16 %v579, %v574
      %v680 = vpack.c.b16 %v580, %v575
      %v681 = vpack.c.b16 %v586, %v581
      %v682 = vpack.c.b16 %v587, %v582
      %v683 = vpack.c.b16 %v588, %v583
      %v684 = vpack.c.b16 %v589, %v584
      %v685 = vpack.c.b16 %v590, %v585
      %v686 = vpack.c.b16 %v596, %v591
      %v687 = vpack.c.b16 %v597, %v592
      %v688 = vpack.c.b16 %v598, %v593
      %v689 = vpack.c.b16 %v599, %v594
      %v690 = vpack.c.b16 %v600, %v595
      %v691 = vpack.c.b16 %v606, %v601
      %v692 = vpack.c.b16 %v607, %v602
      %v693 = vpack.c.b16 %v608, %v603
      %v694 = vpack.c.b16 %v609, %v604
      %v695 = vpack.c.b16 %v610, %v605
      %v696 = vpack.c.b16 %v616, %v611
      %v697 = vpack.c.b16 %v617, %v612
      %v698 = vpack.c.b16 %v618, %v613
      %v699 = vpack.c.b16 %v619, %v614
      %v700 = vpack.c.b16 %v620, %v615
      %v861 = vunpack.c.l.b16 %v285
      %v862 = vunpack.c.l.b16 %v286
      %v863 = vunpack.c.l.b16 %v287
      %v864 = vunpack.c.l.b16 %v288
      %v865 = vunpack.c.l.b16 %v289
      %v866 = vunpack.c.l.b16 %v290
      %v867 = vunpack.c.l.b16 %v291
      %v868 = vunpack.c.l.b16 %v292
      %v869 = vunpack.c.l.b16 %v293
      %v870 = vunpack.c.l.b16 %v294
      %v871 = vunpack.c.l.b16 %v295
      %v872 = vunpack.c.l.b16 %v296
      %v873 = vunpack.c.l.b16 %v297
      %v874 = vunpack.c.l.b16 %v298
      %v875 = vunpack.c.l.b16 %v299
      %v876 = vunpack.c.l.b16 %v300
      %v877 = vunpack.c.l.b16 %v301
      %v878 = vunpack.c.l.b16 %v302
      %v879 = vunpack.c.l.b16 %v303
      %v880 = vunpack.c.l.b16 %v304
      %v881 = vunpack.c.l.b16 %v305
      %v882 = vunpack.c.l.b16 %v306
      %v883 = vunpack.c.l.b16 %v307
      %v884 = vunpack.c.l.b16 %v308
      %v885 = vunpack.c.l.b16 %v309
      %v886 = vunpack.c.l.b16 %v310
      %v887 = vunpack.c.l.b16 %v311
      %v888 = vunpack.c.l.b16 %v312
      %v889 = vunpack.c.l.b16 %v313
      %v890 = vunpack.c.l.b16 %v314
      %v891 = vunpack.c.l.b16 %v315
      %v892 = vunpack.c.l.b16 %v316
      %v893 = vunpack.c.l.b16 %v317
      %v894 = vunpack.c.l.b16 %v318
      %v895 = vunpack.c.l.b16 %v319
      %v896 = vunpack.c.l.b16 %v320
      %v897 = vunpack.c.l.b16 %v321
      %v898 = vunpack.c.l.b16 %v322
      %v899 = vunpack.c.l.b16 %v323
      %v900 = vunpack.c.l.b16 %v324
      %v901 = vunpack.c.l.b16 %v325
      %v902 = vunpack.c.l.b16 %v326
      %v903 = vunpack.c.l.b16 %v327
      %v904 = vunpack.c.l.b16 %v328
      %v905 = vunpack.c.l.b16 %v329
      %v906 = vunpack.c.l.b16 %v330
      %v907 = vunpack.c.l.b16 %v331
      %v908 = vunpack.c.l.b16 %v332
      %v909 = vunpack.c.l.b16 %v333
      %v910 = vunpack.c.l.b16 %v334
      %v911 = vunpack.c.l.b16 %v335
      %v912 = vunpack.c.l.b16 %v336
      %v913 = vunpack.c.l.b16 %v337
      %v914 = vunpack.c.l.b16 %v338
      %v915 = vunpack.c.l.b16 %v339
      %v916 = vunpack.c.l.b16 %v340
      %v917 = vunpack.c.l.b16 %v341
      %v918 = vunpack.c.l.b16 %v342
      %v919 = vunpack.c.l.b16 %v343
      %v920 = vunpack.c.l.b16 %v344
      %v921 = vunpack.c.l.b16 %v345
      %v922 = vunpack.c.l.b16 %v346
      %v923 = vunpack.c.l.b16 %v347
      %v924 = vunpack.c.l.b16 %v348
      %v925 = vunpack.c.l.b16 %v349
      %v926 = vunpack.c.l.b16 %v350
      %v927 = vunpack.c.l.b16 %v351
      %v928 = vunpack.c.l.b16 %v352
      %v929 = vunpack.c.l.b16 %v353
      %v930 = vunpack.c.l.b16 %v354
      %v931 = vunpack.c.l.b16 %v355
      %v932 = vunpack.c.l.b16 %v356
      %v933 = vunpack.c.l.b16 %v357
      %v934 = vunpack.c.l.b16 %v358
      %v935 = vunpack.c.l.b16 %v359
      %v936 = vunpack.c.l.b16 %v360
      %v937 = vunpack.c.l.b16 %v361
      %v938 = vunpack.c.l.b16 %v362
      %v939 = vunpack.c.l.b16 %v363
      %v940 = vunpack.c.l.b16 %v364
      %v941 = vpack.c.b16 %v862, %v861
      %v942 = vpack.c.b16 %v864, %v863
      %v943 = vpack.c.b16 %v866, %v865
      %v944 = vpack.c.b16 %v868, %v867
      %v945 = vpack.c.b16 %v870, %v869
      %v946 = vpack.c.b16 %v872, %v871
      %v947 = vpack.c.b16 %v874, %v873
      %v948 = vpack.c.b16 %v876, %v875
      %v949 = vpack.c.b16 %v878, %v877
      %v950 = vpack.c.b16 %v880, %v879
      %v951 = vpack.c.b16 %v882, %v881
      %v952 = vpack.c.b16 %v884, %v883
      %v953 = vpack.c.b16 %v886, %v885
      %v954 = vpack.c.b16 %v888, %v887
      %v955 = vpack.c.b16 %v890, %v889
      %v956 = vpack.c.b16 %v892, %v891
      %v957 = vpack.c.b16 %v894, %v893
      %v958 = vpack.c.b16 %v896, %v895
      %v959 = vpack.c.b16 %v898, %v897
      %v960 = vpack.c.b16 %v900, %v899
      %v961 = vpack.c.b16 %v902, %v901
      %v962 = vpack.c.b16 %v904, %v903
      %v963 = vpack.c.b16 %v906, %v905
      %v964 = vpack.c.b16 %v908, %v907
      %v965 = vpack.c.b16 %v910, %v909
      %v966 = vpack.c.b16 %v912, %v911
      %v967 = vpack.c.b16 %v914, %v913
      %v968 = vpack.c.b16 %v916, %v915
      %v969 = vpack.c.b16 %v918, %v917
      %v970 = vpack.c.b16 %v920, %v919
      %v971 = vpack.c.b16 %v922, %v921
      %v972 = vpack.c.b16 %v924, %v923
      %v973 = vpack.c.b16 %v926, %v925
      %v974 = vpack.c.b16 %v928, %v927
      %v975 = vpack.c.b16 %v930, %v929
      %v976 = vpack.c.b16 %v932, %v931
      %v977 = vpack.c.b16 %v934, %v933
      %v978 = vpack.c.b16 %v936, %v935
      %v979 = vpack.c.b16 %v938, %v937
      %v980 = vpack.c.b16 %v940, %v939
      %1021 = vmatprep.subr.bf16.mxu0 0
      %1022 = vmatpush1.bf16.msra.mxu0 %v941
      %1023 = vmatprep.subr.bf16.mxu0 0
      %1024 = vmatpush1.bf16.msra.mxu0 %v942
      %1025 = vmatprep.subr.bf16.mxu0 0
      %1026 = vmatpush1.bf16.msra.mxu0 %v943
      %1027 = vmatprep.subr.bf16.mxu0 0
      %1028 = vmatpush1.bf16.msra.mxu0 %v944
      %1029 = vmatprep.subr.bf16.mxu0 0
      %1030 = vmatpush1.bf16.msra.mxu0 %v945
      %1031 = vmatprep.subr.bf16.mxu0 0
      %1032 = vmatpush1.bf16.msra.mxu0 %v946
      %1033 = vmatprep.subr.bf16.mxu0 0
      %1034 = vmatpush1.bf16.msra.mxu0 %v947
      %1035 = vmatprep.subr.bf16.mxu0 0
      %1036 = vmatpush1.bf16.msra.mxu0 %v948
      %1037 = vmatprep.subr.bf16.mxu0 0
      %1038 = vmatpush1.bf16.msra.mxu0 %v949
      %1039 = vmatprep.subr.bf16.mxu0 0
      %1040 = vmatpush1.bf16.msra.mxu0 %v950
      %1041 = vmatprep.subr.bf16.mxu0 0
      %1042 = vmatpush1.bf16.msra.mxu0 %v951
      %1043 = vmatprep.subr.bf16.mxu0 0
      %1044 = vmatpush1.bf16.msra.mxu0 %v952
      %1045 = vmatprep.subr.bf16.mxu0 0
      %1046 = vmatpush1.bf16.msra.mxu0 %v953
      %1047 = vmatprep.subr.bf16.mxu0 0
      %1048 = vmatpush1.bf16.msra.mxu0 %v954
      %1049 = vmatprep.subr.bf16.mxu0 0
      %1050 = vmatpush1.bf16.msra.mxu0 %v955
      %1051 = vmatprep.subr.bf16.mxu0 0
      %1052 = vmatpush1.bf16.msra.mxu0 %v956
      %1053 = vmatprep.mubr.bf16.mxu0 %v622
      %1054 = vmatmul.mubr.bf16.gmra.mrb[0].mxu0 %v621
      %v1055 = vpop.f32.mrb[0].mxu0
      %v1056 = vadd.f32 0.0, %v1055
      %v1057 = vpop.f32.mrb[0].mxu0
      %v1058 = vpop.f32.mrb[0].mxu0
      %v1059 = vadd.f32 0.0, %v1058
      %v1060 = vpop.f32.mrb[0].mxu0
      %1061 = vmatprep.mubr.bf16.mxu0 %v627
      %1062 = vmatmul.mubr.bf16.gmra.mrb[0].mxu0 %v626
      %v1063 = vpop.f32.mrb[0].mxu0
      %v1064 = vadd.f32 0.0, %v1063
      %v1065 = vpop.f32.mrb[0].mxu0
      %v1066 = vpop.f32.mrb[0].mxu0
      %v1067 = vadd.f32 0.0, %v1066
      %v1068 = vpop.f32.mrb[0].mxu0
      %1069 = vmatprep.mubr.bf16.mxu0 %v632
      %1070 = vmatmul.mubr.bf16.gmra.mrb[0].mxu0 %v631
      %v1071 = vpop.f32.mrb[0].mxu0
      %v1072 = vadd.f32 0.0, %v1071
      %v1073 = vpop.f32.mrb[0].mxu0
      %v1074 = vpop.f32.mrb[0].mxu0
      %v1075 = vadd.f32 0.0, %v1074
      %v1076 = vpop.f32.mrb[0].mxu0
      %1077 = vmatprep.mubr.bf16.mxu0 %v637
      %1078 = vmatmul.mubr.bf16.gmra.mrb[0].mxu0 %v636
      %v1079 = vpop.f32.mrb[0].mxu0
      %v1080 = vadd.f32 0.0, %v1079
      %v1081 = vpop.f32.mrb[0].mxu0
      %v1082 = vpop.f32.mrb[0].mxu0
      %v1083 = vadd.f32 0.0, %v1082
      %v1084 = vpop.f32.mrb[0].mxu0
      %1085 = vmatprep.mubr.bf16.mxu0 %v642
      %1086 = vmatmul.mubr.bf16.gmra.mrb[0].mxu0 %v641
      %v1087 = vpop.f32.mrb[0].mxu0
      %v1088 = vadd.f32 0.0, %v1087
      %v1089 = vpop.f32.mrb[0].mxu0
      %v1090 = vpop.f32.mrb[0].mxu0
      %v1091 = vadd.f32 0.0, %v1090
      %v1092 = vpop.f32.mrb[0].mxu0
      %1093 = vmatprep.mubr.bf16.mxu0 %v647
      %1094 = vmatmul.mubr.bf16.gmra.mrb[0].mxu0 %v646
      %v1095 = vpop.f32.mrb[0].mxu0
      %v1096 = vadd.f32 0.0, %v1095
      %v1097 = vpop.f32.mrb[0].mxu0
      %v1098 = vpop.f32.mrb[0].mxu0
      %v1099 = vadd.f32 0.0, %v1098
      %v1100 = vpop.f32.mrb[0].mxu0
      %1101 = vmatprep.mubr.bf16.mxu0 %v652
      %1102 = vmatmul.mubr.bf16.gmra.mrb[0].mxu0 %v651
      %v1103 = vpop.f32.mrb[0].mxu0
      %v1104 = vadd.f32 0.0, %v1103
      %v1105 = vpop.f32.mrb[0].mxu0
      %v1106 = vpop.f32.mrb[0].mxu0
      %v1107 = vadd.f32 0.0, %v1106
      %v1108 = vpop.f32.mrb[0].mxu0
      %1109 = vmatprep.mubr.bf16.mxu0 %v657
      %1110 = vmatmul.mubr.bf16.gmra.mrb[0].mxu0 %v656
      %v1111 = vpop.f32.mrb[0].mxu0
      %v1112 = vadd.f32 0.0, %v1111
      %v1113 = vpop.f32.mrb[0].mxu0
      %v1114 = vpop.f32.mrb[0].mxu0
      %v1115 = vadd.f32 0.0, %v1114
      %v1116 = vpop.f32.mrb[0].mxu0
      %1117 = vmatprep.mubr.bf16.mxu0 %v662
      %1118 = vmatmul.mubr.bf16.gmra.mrb[0].mxu0 %v661
      %v1119 = vpop.f32.mrb[0].mxu0
      %v1120 = vadd.f32 0.0, %v1119
      %v1121 = vpop.f32.mrb[0].mxu0
      %v1122 = vpop.f32.mrb[0].mxu0
      %v1123 = vadd.f32 0.0, %v1122
      %v1124 = vpop.f32.mrb[0].mxu0
      %1125 = vmatprep.mubr.bf16.mxu0 %v667
      %1126 = vmatmul.mubr.bf16.gmra.mrb[0].mxu0 %v666
      %v1127 = vpop.f32.mrb[0].mxu0
      %v1128 = vadd.f32 0.0, %v1127
      %v1129 = vpop.f32.mrb[0].mxu0
      %v1130 = vpop.f32.mrb[0].mxu0
      %v1131 = vadd.f32 0.0, %v1130
      %v1132 = vpop.f32.mrb[0].mxu0
      %1133 = vmatprep.mubr.bf16.mxu0 %v672
      %1134 = vmatmul.mubr.bf16.gmra.mrb[0].mxu0 %v671
      %v1135 = vpop.f32.mrb[0].mxu0
      %v1136 = vadd.f32 0.0, %v1135
      %v1137 = vpop.f32.mrb[0].mxu0
      %v1138 = vpop.f32.mrb[0].mxu0
      %v1139 = vadd.f32 0.0, %v1138
      %v1140 = vpop.f32.mrb[0].mxu0
      %1141 = vmatprep.mubr.bf16.mxu0 %v677
      %1142 = vmatmul.mubr.bf16.gmra.mrb[0].mxu0 %v676
      %v1143 = vpop.f32.mrb[0].mxu0
      %v1144 = vadd.f32 0.0, %v1143
      %v1145 = vpop.f32.mrb[0].mxu0
      %v1146 = vpop.f32.mrb[0].mxu0
      %v1147 = vadd.f32 0.0, %v1146
      %v1148 = vpop.f32.mrb[0].mxu0
      %1149 = vmatprep.mubr.bf16.mxu0 %v682
      %1150 = vmatmul.mubr.bf16.gmra.mrb[0].mxu0 %v681
      %v1151 = vpop.f32.mrb[0].mxu0
      %v1152 = vadd.f32 0.0, %v1151
      %v1153 = vpop.f32.mrb[0].mxu0
      %v1154 = vpop.f32.mrb[0].mxu0
      %v1155 = vadd.f32 0.0, %v1154
      %v1156 = vpop.f32.mrb[0].mxu0
      %1157 = vmatprep.mubr.bf16.mxu0 %v687
      %1158 = vmatmul.mubr.bf16.gmra.mrb[0].mxu0 %v686
      %v1159 = vpop.f32.mrb[0].mxu0
      %v1160 = vadd.f32 0.0, %v1159
      %v1161 = vpop.f32.mrb[0].mxu0
      %v1162 = vpop.f32.mrb[0].mxu0
      %v1163 = vadd.f32 0.0, %v1162
      %v1164 = vpop.f32.mrb[0].mxu0
      %1165 = vmatprep.mubr.bf16.mxu0 %v692
      %1166 = vmatmul.mubr.bf16.gmra.mrb[0].mxu0 %v691
      %v1167 = vpop.f32.mrb[0].mxu0
      %v1168 = vadd.f32 0.0, %v1167
      %v1169 = vpop.f32.mrb[0].mxu0
      %v1170 = vpop.f32.mrb[0].mxu0
      %v1171 = vadd.f32 0.0, %v1170
      %v1172 = vpop.f32.mrb[0].mxu0
      %1173 = vmatprep.mubr.bf16.mxu0 %v697
      %1174 = vmatmul.mubr.bf16.gmra.mrb[0].mxu0 %v696
      %v1175 = vpop.f32.mrb[0].mxu0
      %v1176 = vadd.f32 0.0, %v1175
      %v1177 = vpop.f32.mrb[0].mxu0
      %v1178 = vpop.f32.mrb[0].mxu0
      %v1179 = vadd.f32 0.0, %v1178
      %v1180 = vpop.f32.mrb[0].mxu0
      %1181 = vdwg.mxu0
      %1182 = vmatprep.subr.bf16.mxu0 0
      %1183 = vmatpush1.bf16.msra.mxu0 %v957
      %1184 = vmatprep.subr.bf16.mxu0 0
      %1185 = vmatpush1.bf16.msra.mxu0 %v958
      %1186 = vmatprep.subr.bf16.mxu0 0
      %1187 = vmatpush1.bf16.msra.mxu0 %v959
      %1188 = vmatprep.subr.bf16.mxu0 0
      %1189 = vmatpush1.bf16.msra.mxu0 %v960
      %1190 = vmatprep.subr.bf16.mxu0 0
      %1191 = vmatpush1.bf16.msra.mxu0 %v961
      %1192 = vmatprep.subr.bf16.mxu0 0
      %1193 = vmatpush1.bf16.msra.mxu0 %v962
      %1194 = vmatprep.subr.bf16.mxu0 0
      %1195 = vmatpush1.bf16.msra.mxu0 %v963
      %1196 = vmatprep.subr.bf16.mxu0 0
      %1197 = vmatpush1.bf16.msra.mxu0 %v964
      %1198 = vmatprep.subr.bf16.mxu0 0
      %1199 = vmatpush1.bf16.msra.mxu0 %v965
      %1200 = vmatprep.subr.bf16.mxu0 0
      %1201 = vmatpush1.bf16.msra.mxu0 %v966
      %1202 = vmatprep.subr.bf16.mxu0 0
      %1203 = vmatpush1.bf16.msra.mxu0 %v967
      %1204 = vmatprep.subr.bf16.mxu0 0
      %1205 = vmatpush1.bf16.msra.mxu0 %v968
      %1206 = vmatprep.subr.bf16.mxu0 0
      %1207 = vmatpush1.bf16.msra.mxu0 %v969
      %1208 = vmatprep.subr.bf16.mxu0 0
      %1209 = vmatpush1.bf16.msra.mxu0 %v970
      %1210 = vmatprep.subr.bf16.mxu0 0
      %1211 = vmatpush1.bf16.msra.mxu0 %v971
      %1212 = vmatprep.subr.bf16.mxu0 0
      %1213 = vmatpush1.bf16.msra.mxu0 %v972
      %1214 = vmatprep.mubr.bf16.mxu0 %v624
      %1215 = vmatmul.mubr.bf16.gmra.mrb[0].mxu0 %v623
      %v1216 = vpop.f32.mrb[0].mxu0
      %v1217 = vadd.f32 %v1056, %v1216
      %v1218 = vpop.f32.mrb[0].mxu0
      %v1219 = vpop.f32.mrb[0].mxu0
      %v1220 = vadd.f32 %v1059, %v1219
      %v1221 = vpop.f32.mrb[0].mxu0
      %1222 = vmatprep.mubr.bf16.mxu0 %v629
      %1223 = vmatmul.mubr.bf16.gmra.mrb[0].mxu0 %v628
      %v1224 = vpop.f32.mrb[0].mxu0
      %v1225 = vadd.f32 %v1064, %v1224
      %v1226 = vpop.f32.mrb[0].mxu0
      %v1227 = vpop.f32.mrb[0].mxu0
      %v1228 = vadd.f32 %v1067, %v1227
      %v1229 = vpop.f32.mrb[0].mxu0
      %1230 = vmatprep.mubr.bf16.mxu0 %v634
      %1231 = vmatmul.mubr.bf16.gmra.mrb[0].mxu0 %v633
      %v1232 = vpop.f32.mrb[0].mxu0
      %v1233 = vadd.f32 %v1072, %v1232
      %v1234 = vpop.f32.mrb[0].mxu0
      %v1235 = vpop.f32.mrb[0].mxu0
      %v1236 = vadd.f32 %v1075, %v1235
      %v1237 = vpop.f32.mrb[0].mxu0
      %1238 = vmatprep.mubr.bf16.mxu0 %v639
      %1239 = vmatmul.mubr.bf16.gmra.mrb[0].mxu0 %v638
      %v1240 = vpop.f32.mrb[0].mxu0
      %v1241 = vadd.f32 %v1080, %v1240
      %v1242 = vpop.f32.mrb[0].mxu0
      %v1243 = vpop.f32.mrb[0].mxu0
      %v1244 = vadd.f32 %v1083, %v1243
      %v1245 = vpop.f32.mrb[0].mxu0
      %1246 = vmatprep.mubr.bf16.mxu0 %v644
      %1247 = vmatmul.mubr.bf16.gmra.mrb[0].mxu0 %v643
      %v1248 = vpop.f32.mrb[0].mxu0
      %v1249 = vadd.f32 %v1088, %v1248
      %v1250 = vpop.f32.mrb[0].mxu0
      %v1251 = vpop.f32.mrb[0].mxu0
      %v1252 = vadd.f32 %v1091, %v1251
      %v1253 = vpop.f32.mrb[0].mxu0
      %1254 = vmatprep.mubr.bf16.mxu0 %v649
      %1255 = vmatmul.mubr.bf16.gmra.mrb[0].mxu0 %v648
      %v1256 = vpop.f32.mrb[0].mxu0
      %v1257 = vadd.f32 %v1096, %v1256
      %v1258 = vpop.f32.mrb[0].mxu0
      %v1259 = vpop.f32.mrb[0].mxu0
      %v1260 = vadd.f32 %v1099, %v1259
      %v1261 = vpop.f32.mrb[0].mxu0
      %1262 = vmatprep.mubr.bf16.mxu0 %v654
      %1263 = vmatmul.mubr.bf16.gmra.mrb[0].mxu0 %v653
      %v1264 = vpop.f32.mrb[0].mxu0
      %v1265 = vadd.f32 %v1104, %v1264
      %v1266 = vpop.f32.mrb[0].mxu0
      %v1267 = vpop.f32.mrb[0].mxu0
      %v1268 = vadd.f32 %v1107, %v1267
      %v1269 = vpop.f32.mrb[0].mxu0
      %1270 = vmatprep.mubr.bf16.mxu0 %v659
      %1271 = vmatmul.mubr.bf16.gmra.mrb[0].mxu0 %v658
      %v1272 = vpop.f32.mrb[0].mxu0
      %v1273 = vadd.f32 %v1112, %v1272
      %v1274 = vpop.f32.mrb[0].mxu0
      %v1275 = vpop.f32.mrb[0].mxu0
      %v1276 = vadd.f32 %v1115, %v1275
      %v1277 = vpop.f32.mrb[0].mxu0
      %1278 = vmatprep.mubr.bf16.mxu0 %v664
      %1279 = vmatmul.mubr.bf16.gmra.mrb[0].mxu0 %v663
      %v1280 = vpop.f32.mrb[0].mxu0
      %v1281 = vadd.f32 %v1120, %v1280
      %v1282 = vpop.f32.mrb[0].mxu0
      %v1283 = vpop.f32.mrb[0].mxu0
      %v1284 = vadd.f32 %v1123, %v1283
      %v1285 = vpop.f32.mrb[0].mxu0
      %1286 = vmatprep.mubr.bf16.mxu0 %v669
      %1287 = vmatmul.mubr.bf16.gmra.mrb[0].mxu0 %v668
      %v1288 = vpop.f32.mrb[0].mxu0
      %v1289 = vadd.f32 %v1128, %v1288
      %v1290 = vpop.f32.mrb[0].mxu0
      %v1291 = vpop.f32.mrb[0].mxu0
      %v1292 = vadd.f32 %v1131, %v1291
      %v1293 = vpop.f32.mrb[0].mxu0
      %1294 = vmatprep.mubr.bf16.mxu0 %v674
      %1295 = vmatmul.mubr.bf16.gmra.mrb[0].mxu0 %v673
      %v1296 = vpop.f32.mrb[0].mxu0
      %v1297 = vadd.f32 %v1136, %v1296
      %v1298 = vpop.f32.mrb[0].mxu0
      %v1299 = vpop.f32.mrb[0].mxu0
      %v1300 = vadd.f32 %v1139, %v1299
      %v1301 = vpop.f32.mrb[0].mxu0
      %1302 = vmatprep.mubr.bf16.mxu0 %v679
      %1303 = vmatmul.mubr.bf16.gmra.mrb[0].mxu0 %v678
      %v1304 = vpop.f32.mrb[0].mxu0
      %v1305 = vadd.f32 %v1144, %v1304
      %v1306 = vpop.f32.mrb[0].mxu0
      %v1307 = vpop.f32.mrb[0].mxu0
      %v1308 = vadd.f32 %v1147, %v1307
      %v1309 = vpop.f32.mrb[0].mxu0
      %1310 = vmatprep.mubr.bf16.mxu0 %v684
      %1311 = vmatmul.mubr.bf16.gmra.mrb[0].mxu0 %v683
      %v1312 = vpop.f32.mrb[0].mxu0
      %v1313 = vadd.f32 %v1152, %v1312
      %v1314 = vpop.f32.mrb[0].mxu0
      %v1315 = vpop.f32.mrb[0].mxu0
      %v1316 = vadd.f32 %v1155, %v1315
      %v1317 = vpop.f32.mrb[0].mxu0
      %1318 = vmatprep.mubr.bf16.mxu0 %v689
      %1319 = vmatmul.mubr.bf16.gmra.mrb[0].mxu0 %v688
      %v1320 = vpop.f32.mrb[0].mxu0
      %v1321 = vadd.f32 %v1160, %v1320
      %v1322 = vpop.f32.mrb[0].mxu0
      %v1323 = vpop.f32.mrb[0].mxu0
      %v1324 = vadd.f32 %v1163, %v1323
      %v1325 = vpop.f32.mrb[0].mxu0
      %1326 = vmatprep.mubr.bf16.mxu0 %v694
      %1327 = vmatmul.mubr.bf16.gmra.mrb[0].mxu0 %v693
      %v1328 = vpop.f32.mrb[0].mxu0
      %v1329 = vadd.f32 %v1168, %v1328
      %v1330 = vpop.f32.mrb[0].mxu0
      %v1331 = vpop.f32.mrb[0].mxu0
      %v1332 = vadd.f32 %v1171, %v1331
      %v1333 = vpop.f32.mrb[0].mxu0
      %1334 = vmatprep.mubr.bf16.mxu0 %v699
      %1335 = vmatmul.mubr.bf16.gmra.mrb[0].mxu0 %v698
      %v1336 = vpop.f32.mrb[0].mxu0
      %v1337 = vadd.f32 %v1176, %v1336
      %v1338 = vpop.f32.mrb[0].mxu0
      %v1339 = vpop.f32.mrb[0].mxu0
      %v1340 = vadd.f32 %v1179, %v1339
      %v1341 = vpop.f32.mrb[0].mxu0
      %1342 = vdwg.mxu0
      %1343 = vmatprep.subr.bf16.mxu0 0
      %1344 = vmatpush1.bf16.msra.mxu0 %v973
      %1345 = vmatprep.subr.bf16.mxu0 0
      %1346 = vmatpush1.bf16.msra.mxu0 %v974
      %1347 = vmatprep.subr.bf16.mxu0 0
      %1348 = vmatpush1.bf16.msra.mxu0 %v975
      %1349 = vmatprep.subr.bf16.mxu0 0
      %1350 = vmatpush1.bf16.msra.mxu0 %v976
      %1351 = vmatprep.subr.bf16.mxu0 0
      %1352 = vmatpush1.bf16.msra.mxu0 %v977
      %1353 = vmatprep.subr.bf16.mxu0 0
      %1354 = vmatpush1.bf16.msra.mxu0 %v978
      %1355 = vmatprep.subr.bf16.mxu0 0
      %1356 = vmatpush1.bf16.msra.mxu0 %v979
      %1357 = vmatprep.subr.bf16.mxu0 0
      %1358 = vmatpush1.bf16.msra.mxu0 %v980
      %1359 = vmatprep.subr.bf16.mxu0 0
      %1360 = vmatpush1.bf16.msra.mxu0 0
      %1361 = vmatprep.subr.bf16.mxu0 0
      %1362 = vmatpush1.bf16.msra.mxu0 0
      %1363 = vmatprep.subr.bf16.mxu0 0
      %1364 = vmatpush1.bf16.msra.mxu0 0
      %1365 = vmatprep.subr.bf16.mxu0 0
      %1366 = vmatpush1.bf16.msra.mxu0 0
      %1367 = vmatprep.subr.bf16.mxu0 0
      %1368 = vmatpush1.bf16.msra.mxu0 0
      %1369 = vmatprep.subr.bf16.mxu0 0
      %1370 = vmatpush1.bf16.msra.mxu0 0
      %1371 = vmatprep.subr.bf16.mxu0 0
      %1372 = vmatpush1.bf16.msra.mxu0 0
      %1373 = vmatprep.subr.bf16.mxu0 0
      %1374 = vmatpush1.bf16.msra.mxu0 0
      %1375 = vmatprep.mubr.bf16.mxu0 0
      %1376 = vmatmul.mubr.bf16.gmra.mrb[0].mxu0 %v625
      %v1377 = vpop.f32.mrb[0].mxu0
      %v1378 = vadd.f32 %v1217, %v1377
      %v1379 = vpop.f32.mrb[0].mxu0
      %v1380 = vpop.f32.mrb[0].mxu0
      %v1381 = vadd.f32 %v1220, %v1380
      %v1382 = vpop.f32.mrb[0].mxu0
      %1383 = vmatprep.mubr.bf16.mxu0 0
      %1384 = vmatmul.mubr.bf16.gmra.mrb[0].mxu0 %v630
      %v1385 = vpop.f32.mrb[0].mxu0
      %v1386 = vadd.f32 %v1225, %v1385
      %v1387 = vpop.f32.mrb[0].mxu0
      %v1388 = vpop.f32.mrb[0].mxu0
      %v1389 = vadd.f32 %v1228, %v1388
      %v1390 = vpop.f32.mrb[0].mxu0
      %1391 = vmatprep.mubr.bf16.mxu0 0
      %1392 = vmatmul.mubr.bf16.gmra.mrb[0].mxu0 %v635
      %v1393 = vpop.f32.mrb[0].mxu0
      %v1394 = vadd.f32 %v1233, %v1393
      %v1395 = vpop.f32.mrb[0].mxu0
      %v1396 = vpop.f32.mrb[0].mxu0
      %v1397 = vadd.f32 %v1236, %v1396
      %v1398 = vpop.f32.mrb[0].mxu0
      %1399 = vmatprep.mubr.bf16.mxu0 0
      %1400 = vmatmul.mubr.bf16.gmra.mrb[0].mxu0 %v640
      %v1401 = vpop.f32.mrb[0].mxu0
      %v1402 = vadd.f32 %v1241, %v1401
      %v1403 = vpop.f32.mrb[0].mxu0
      %v1404 = vpop.f32.mrb[0].mxu0
      %v1405 = vadd.f32 %v1244, %v1404
      %v1406 = vpop.f32.mrb[0].mxu0
      %1407 = vmatprep.mubr.bf16.mxu0 0
      %1408 = vmatmul.mubr.bf16.gmra.mrb[0].mxu0 %v645
      %v1409 = vpop.f32.mrb[0].mxu0
      %v1410 = vadd.f32 %v1249, %v1409
      %v1411 = vpop.f32.mrb[0].mxu0
      %v1412 = vpop.f32.mrb[0].mxu0
      %v1413 = vadd.f32 %v1252, %v1412
      %v1414 = vpop.f32.mrb[0].mxu0
      %1415 = vmatprep.mubr.bf16.mxu0 0
      %1416 = vmatmul.mubr.bf16.gmra.mrb[0].mxu0 %v650
      %v1417 = vpop.f32.mrb[0].mxu0
      %v1418 = vadd.f32 %v1257, %v1417
      %v1419 = vpop.f32.mrb[0].mxu0
      %v1420 = vpop.f32.mrb[0].mxu0
      %v1421 = vadd.f32 %v1260, %v1420
      %v1422 = vpop.f32.mrb[0].mxu0
      %1423 = vmatprep.mubr.bf16.mxu0 0
      %1424 = vmatmul.mubr.bf16.gmra.mrb[0].mxu0 %v655
      %v1425 = vpop.f32.mrb[0].mxu0
      %v1426 = vadd.f32 %v1265, %v1425
      %v1427 = vpop.f32.mrb[0].mxu0
      %v1428 = vpop.f32.mrb[0].mxu0
      %v1429 = vadd.f32 %v1268, %v1428
      %v1430 = vpop.f32.mrb[0].mxu0
      %1431 = vmatprep.mubr.bf16.mxu0 0
      %1432 = vmatmul.mubr.bf16.gmra.mrb[0].mxu0 %v660
      %v1433 = vpop.f32.mrb[0].mxu0
      %v1434 = vadd.f32 %v1273, %v1433
      %v1435 = vpop.f32.mrb[0].mxu0
      %v1436 = vpop.f32.mrb[0].mxu0
      %v1437 = vadd.f32 %v1276, %v1436
      %v1438 = vpop.f32.mrb[0].mxu0
      %1439 = vmatprep.mubr.bf16.mxu0 0
      %1440 = vmatmul.mubr.bf16.gmra.mrb[0].mxu0 %v665
      %v1441 = vpop.f32.mrb[0].mxu0
      %v1442 = vadd.f32 %v1281, %v1441
      %v1443 = vpop.f32.mrb[0].mxu0
      %v1444 = vpop.f32.mrb[0].mxu0
      %v1445 = vadd.f32 %v1284, %v1444
      %v1446 = vpop.f32.mrb[0].mxu0
      %1447 = vmatprep.mubr.bf16.mxu0 0
      %1448 = vmatmul.mubr.bf16.gmra.mrb[0].mxu0 %v670
      %v1449 = vpop.f32.mrb[0].mxu0
      %v1450 = vadd.f32 %v1289, %v1449
      %v1451 = vpop.f32.mrb[0].mxu0
      %v1452 = vpop.f32.mrb[0].mxu0
      %v1453 = vadd.f32 %v1292, %v1452
      %v1454 = vpop.f32.mrb[0].mxu0
      %1455 = vmatprep.mubr.bf16.mxu0 0
      %1456 = vmatmul.mubr.bf16.gmra.mrb[0].mxu0 %v675
      %v1457 = vpop.f32.mrb[0].mxu0
      %v1458 = vadd.f32 %v1297, %v1457
      %v1459 = vpop.f32.mrb[0].mxu0
      %v1460 = vpop.f32.mrb[0].mxu0
      %v1461 = vadd.f32 %v1300, %v1460
      %v1462 = vpop.f32.mrb[0].mxu0
      %1463 = vmatprep.mubr.bf16.mxu0 0
      %1464 = vmatmul.mubr.bf16.gmra.mrb[0].mxu0 %v680
      %v1465 = vpop.f32.mrb[0].mxu0
      %v1466 = vadd.f32 %v1305, %v1465
      %v1467 = vpop.f32.mrb[0].mxu0
      %v1468 = vpop.f32.mrb[0].mxu0
      %v1469 = vadd.f32 %v1308, %v1468
      %v1470 = vpop.f32.mrb[0].mxu0
      %1471 = vmatprep.mubr.bf16.mxu0 0
      %1472 = vmatmul.mubr.bf16.gmra.mrb[0].mxu0 %v685
      %v1473 = vpop.f32.mrb[0].mxu0
      %v1474 = vadd.f32 %v1313, %v1473
      %v1475 = vpop.f32.mrb[0].mxu0
      %v1476 = vpop.f32.mrb[0].mxu0
      %v1477 = vadd.f32 %v1316, %v1476
      %v1478 = vpop.f32.mrb[0].mxu0
      %1479 = vmatprep.mubr.bf16.mxu0 0
      %1480 = vmatmul.mubr.bf16.gmra.mrb[0].mxu0 %v690
      %v1481 = vpop.f32.mrb[0].mxu0
      %v1482 = vadd.f32 %v1321, %v1481
      %v1483 = vpop.f32.mrb[0].mxu0
      %v1484 = vpop.f32.mrb[0].mxu0
      %v1485 = vadd.f32 %v1324, %v1484
      %v1486 = vpop.f32.mrb[0].mxu0
      %1487 = vmatprep.mubr.bf16.mxu0 0
      %1488 = vmatmul.mubr.bf16.gmra.mrb[0].mxu0 %v695
      %v1489 = vpop.f32.mrb[0].mxu0
      %v1490 = vadd.f32 %v1329, %v1489
      %v1491 = vpop.f32.mrb[0].mxu0
      %v1492 = vpop.f32.mrb[0].mxu0
      %v1493 = vadd.f32 %v1332, %v1492
      %v1494 = vpop.f32.mrb[0].mxu0
      %1495 = vmatprep.mubr.bf16.mxu0 0
      %1496 = vmatmul.mubr.bf16.gmra.mrb[0].mxu0 %v700
      %v1497 = vpop.f32.mrb[0].mxu0
      %v1498 = vadd.f32 %v1337, %v1497
      %v1499 = vpop.f32.mrb[0].mxu0
      %v1500 = vpop.f32.mrb[0].mxu0
      %v1501 = vadd.f32 %v1340, %v1500
      %v1502 = vpop.f32.mrb[0].mxu0
      %1503 = vdwg.mxu0
      %v1504 = vpack.c.bf16 %v1381, %v1378
      %v1505 = vpack.c.bf16 %v1389, %v1386
      %v1506 = vpack.c.bf16 %v1397, %v1394
      %v1507 = vpack.c.bf16 %v1405, %v1402
      %v1508 = vpack.c.bf16 %v1413, %v1410
      %v1509 = vpack.c.bf16 %v1421, %v1418
      %v1510 = vpack.c.bf16 %v1429, %v1426
      %v1511 = vpack.c.bf16 %v1437, %v1434
      %v1512 = vpack.c.bf16 %v1445, %v1442
      %v1513 = vpack.c.bf16 %v1453, %v1450
      %v1514 = vpack.c.bf16 %v1461, %v1458
      %v1515 = vpack.c.bf16 %v1469, %v1466
      %v1516 = vpack.c.bf16 %v1477, %v1474
      %v1517 = vpack.c.bf16 %v1485, %v1482
      %v1518 = vpack.c.bf16 %v1493, %v1490
      %v1519 = vpack.c.bf16 %v1501, %v1498
      %v1536 = vunpack.c.l.b16 %v1504
      %v1537 = vunpack.c.h.b16 %v1504
      %v1538 = vunpack.c.l.b16 %v1505
      %v1539 = vunpack.c.h.b16 %v1505
      %v1540 = vunpack.c.l.b16 %v1506
      %v1541 = vunpack.c.h.b16 %v1506
      %v1542 = vunpack.c.l.b16 %v1507
      %v1543 = vunpack.c.h.b16 %v1507
      %v1544 = vunpack.c.l.b16 %v1508
      %v1545 = vunpack.c.h.b16 %v1508
      %v1546 = vunpack.c.l.b16 %v1509
      %v1547 = vunpack.c.h.b16 %v1509
      %v1548 = vunpack.c.l.b16 %v1510
      %v1549 = vunpack.c.h.b16 %v1510
      %v1550 = vunpack.c.l.b16 %v1511
      %v1551 = vunpack.c.h.b16 %v1511
      %v1552 = vunpack.c.l.b16 %v1512
      %v1553 = vunpack.c.h.b16 %v1512
      %v1554 = vunpack.c.l.b16 %v1513
      %v1555 = vunpack.c.h.b16 %v1513
      %v1556 = vunpack.c.l.b16 %v1514
      %v1557 = vunpack.c.h.b16 %v1514
      %v1558 = vunpack.c.l.b16 %v1515
      %v1559 = vunpack.c.h.b16 %v1515
      %v1560 = vunpack.c.l.b16 %v1516
      %v1561 = vunpack.c.h.b16 %v1516
      %v1562 = vunpack.c.l.b16 %v1517
      %v1563 = vunpack.c.h.b16 %v1517
      %v1564 = vunpack.c.l.b16 %v1518
      %v1565 = vunpack.c.h.b16 %v1518
      %v1566 = vunpack.c.l.b16 %v1519
      %v1567 = vunpack.c.h.b16 %v1519
      %v1568 = vpack.c.b16 %v1536, %v1536
      %v1569 = vpack.c.b16 %v1537, %v1537
      %v1570 = vpack.c.b16 %v1538, %v1538
      %v1571 = vpack.c.b16 %v1539, %v1539
      %v1572 = vpack.c.b16 %v1540, %v1540
      %v1573 = vpack.c.b16 %v1541, %v1541
      %v1574 = vpack.c.b16 %v1542, %v1542
      %v1575 = vpack.c.b16 %v1543, %v1543
      %v1576 = vpack.c.b16 %v1544, %v1544
      %v1577 = vpack.c.b16 %v1545, %v1545
      %v1578 = vpack.c.b16 %v1546, %v1546
      %v1579 = vpack.c.b16 %v1547, %v1547
      %v1580 = vpack.c.b16 %v1548, %v1548
      %v1581 = vpack.c.b16 %v1549, %v1549
      %v1582 = vpack.c.b16 %v1550, %v1550
      %v1583 = vpack.c.b16 %v1551, %v1551
      %v1584 = vpack.c.b16 %v1552, %v1552
      %v1585 = vpack.c.b16 %v1553, %v1553
      %v1586 = vpack.c.b16 %v1554, %v1554
      %v1587 = vpack.c.b16 %v1555, %v1555
      %v1588 = vpack.c.b16 %v1556, %v1556
      %v1589 = vpack.c.b16 %v1557, %v1557
      %v1590 = vpack.c.b16 %v1558, %v1558
      %v1591 = vpack.c.b16 %v1559, %v1559
      %v1592 = vpack.c.b16 %v1560, %v1560
      %v1593 = vpack.c.b16 %v1561, %v1561
      %v1594 = vpack.c.b16 %v1562, %v1562
      %v1595 = vpack.c.b16 %v1563, %v1563
      %v1596 = vpack.c.b16 %v1564, %v1564
      %v1597 = vpack.c.b16 %v1565, %v1565
      %v1598 = vpack.c.b16 %v1566, %v1566
      %v1599 = vpack.c.b16 %v1567, %v1567
      %1632 = vst [vmem:[%s182] sm:$0xf] %v1568
      %1633 = vst [vmem:[%s182 + $0x4] sm:$0xf] %v1569
      %1634 = vst [vmem:[%s182 + $0x8] sm:$0xf] %v1570
      %1635 = vst [vmem:[%s182 + $0xc] sm:$0xf] %v1571
      %1636 = vst [vmem:[%s182 + $0x10] sm:$0xf] %v1572
      %1637 = vst [vmem:[%s182 + $0x14] sm:$0xf] %v1573
      %1638 = vst [vmem:[%s182 + $0x18] sm:$0xf] %v1574
      %1639 = vst [vmem:[%s182 + $0x1c] sm:$0xf] %v1575
      %1640 = vst [vmem:[%s182 + $0x20] sm:$0xf] %v1576
      %1641 = vst [vmem:[%s182 + $0x24] sm:$0xf] %v1577
      %1642 = vst [vmem:[%s182 + $0x28] sm:$0xf] %v1578
      %1643 = vst [vmem:[%s182 + $0x2c] sm:$0xf] %v1579
      %1644 = vst [vmem:[%s182 + $0x30] sm:$0xf] %v1580
      %1645 = vst [vmem:[%s182 + $0x34] sm:$0xf] %v1581
      %1646 = vst [vmem:[%s182 + $0x38] sm:$0xf] %v1582
      %1647 = vst [vmem:[%s182 + $0x3c] sm:$0xf] %v1583
      %1648 = vst [vmem:[%s182 + $0x40] sm:$0xf] %v1584
      %1649 = vst [vmem:[%s182 + $0x44] sm:$0xf] %v1585
      %1650 = vst [vmem:[%s182 + $0x48] sm:$0xf] %v1586
      %1651 = vst [vmem:[%s182 + $0x4c] sm:$0xf] %v1587
      %1652 = vst [vmem:[%s182 + $0x50] sm:$0xf] %v1588
      %1653 = vst [vmem:[%s182 + $0x54] sm:$0xf] %v1589
      %1654 = vst [vmem:[%s182 + $0x58] sm:$0xf] %v1590
      %1655 = vst [vmem:[%s182 + $0x5c] sm:$0xf] %v1591
      %1656 = vst [vmem:[%s182 + $0x60] sm:$0xf] %v1592
      %1657 = vst [vmem:[%s182 + $0x64] sm:$0xf] %v1593
      %1658 = vst [vmem:[%s182 + $0x68] sm:$0xf] %v1594
      %1659 = vst [vmem:[%s182 + $0x6c] sm:$0xf] %v1595
      %1660 = vst [vmem:[%s182 + $0x70] sm:$0xf] %v1596
      %1661 = vst [vmem:[%s182 + $0x74] sm:$0xf] %v1597
      %1662 = vst [vmem:[%s182 + $0x78] sm:$0xf] %v1598
      %1663 = vst [vmem:[%s182 + $0x7c] sm:$0xf] %v1599
      %v1664 = vadd.f32 %v1378, %v1381
      %v1665 = vadd.f32 %v1664, %v1386
      %v1666 = vadd.f32 %v1665, %v1389
      %v1667 = vadd.f32 %v1666, %v1394
      %v1668 = vadd.f32 %v1667, %v1397
      %v1669 = vadd.f32 %v1668, %v1402
      %v1670 = vadd.f32 %v1669, %v1405
      %v1671 = vadd.f32 %v1670, %v1410
      %v1672 = vadd.f32 %v1671, %v1413
      %v1673 = vadd.f32 %v1672, %v1418
      %v1674 = vadd.f32 %v1673, %v1421
      %v1675 = vadd.f32 %v1674, %v1426
      %v1676 = vadd.f32 %v1675, %v1429
      %v1677 = vadd.f32 %v1676, %v1434
      %v1678 = vadd.f32 %v1677, %v1437
      %v1679 = vadd.f32 %v1678, %v1442
      %v1680 = vadd.f32 %v1679, %v1445
      %v1681 = vadd.f32 %v1680, %v1450
      %v1682 = vadd.f32 %v1681, %v1453
      %v1683 = vadd.f32 %v1682, %v1458
      %v1684 = vadd.f32 %v1683, %v1461
      %v1685 = vadd.f32 %v1684, %v1466
      %v1686 = vadd.f32 %v1685, %v1469
      %v1687 = vadd.f32 %v1686, %v1474
      %v1688 = vadd.f32 %v1687, %v1477
      %v1689 = vadd.f32 %v1688, %v1482
      %v1690 = vadd.f32 %v1689, %v1485
      %v1691 = vadd.f32 %v1690, %v1490
      %v1692 = vadd.f32 %v1691, %v1493
      %v1693 = vadd.f32 %v1692, %v1498
      %v1694 = vadd.f32 %v1693, %v1501
      %v1695 = vrot.slane %v1694, 4
      %v1696 = vadd.f32 %v1694, %v1695
      %v1697 = vrot.slane %v1696, 2
      %v1698 = vadd.f32 %v1696, %v1697
      %v1699 = vrot.slane %v1698, 1
      %v1700 = vadd.f32 %v1698, %v1699
      %v1701 = vmul.f32 %v1378, %v1378
      %v1702 = vmul.f32 %v1381, %v1381
      %v1703 = vmul.f32 %v1386, %v1386
      %v1704 = vmul.f32 %v1389, %v1389
      %v1705 = vmul.f32 %v1394, %v1394
      %v1706 = vmul.f32 %v1397, %v1397
      %v1707 = vmul.f32 %v1402, %v1402
      %v1708 = vmul.f32 %v1405, %v1405
      %v1709 = vmul.f32 %v1410, %v1410
      %v1710 = vmul.f32 %v1413, %v1413
      %v1711 = vmul.f32 %v1418, %v1418
      %v1712 = vmul.f32 %v1421, %v1421
      %v1713 = vmul.f32 %v1426, %v1426
      %v1714 = vmul.f32 %v1429, %v1429
      %v1715 = vmul.f32 %v1434, %v1434
      %v1716 = vmul.f32 %v1437, %v1437
      %v1717 = vmul.f32 %v1442, %v1442
      %v1718 = vmul.f32 %v1445, %v1445
      %v1719 = vmul.f32 %v1450, %v1450
      %v1720 = vmul.f32 %v1453, %v1453
      %v1721 = vmul.f32 %v1458, %v1458
      %v1722 = vmul.f32 %v1461, %v1461
      %v1723 = vmul.f32 %v1466, %v1466
      %v1724 = vmul.f32 %v1469, %v1469
      %v1725 = vmul.f32 %v1474, %v1474
      %v1726 = vmul.f32 %v1477, %v1477
      %v1727 = vmul.f32 %v1482, %v1482
      %v1728 = vmul.f32 %v1485, %v1485
      %v1729 = vmul.f32 %v1490, %v1490
      %v1730 = vmul.f32 %v1493, %v1493
      %v1731 = vmul.f32 %v1498, %v1498
      %v1732 = vmul.f32 %v1501, %v1501
      %v1733 = vadd.f32 %v1701, %v1702
      %v1734 = vadd.f32 %v1733, %v1703
      %v1735 = vadd.f32 %v1734, %v1704
      %v1736 = vadd.f32 %v1735, %v1705
      %v1737 = vadd.f32 %v1736, %v1706
      %v1738 = vadd.f32 %v1737, %v1707
      %v1739 = vadd.f32 %v1738, %v1708
      %v1740 = vadd.f32 %v1739, %v1709
      %v1741 = vadd.f32 %v1740, %v1710
      %v1742 = vadd.f32 %v1741, %v1711
      %v1743 = vadd.f32 %v1742, %v1712
      %v1744 = vadd.f32 %v1743, %v1713
      %v1745 = vadd.f32 %v1744, %v1714
      %v1746 = vadd.f32 %v1745, %v1715
      %v1747 = vadd.f32 %v1746, %v1716
      %v1748 = vadd.f32 %v1747, %v1717
      %v1749 = vadd.f32 %v1748, %v1718
      %v1750 = vadd.f32 %v1749, %v1719
      %v1751 = vadd.f32 %v1750, %v1720
      %v1752 = vadd.f32 %v1751, %v1721
      %v1753 = vadd.f32 %v1752, %v1722
      %v1754 = vadd.f32 %v1753, %v1723
      %v1755 = vadd.f32 %v1754, %v1724
      %v1756 = vadd.f32 %v1755, %v1725
      %v1757 = vadd.f32 %v1756, %v1726
      %v1758 = vadd.f32 %v1757, %v1727
      %v1759 = vadd.f32 %v1758, %v1728
      %v1760 = vadd.f32 %v1759, %v1729
      %v1761 = vadd.f32 %v1760, %v1730
      %v1762 = vadd.f32 %v1761, %v1731
      %v1763 = vadd.f32 %v1762, %v1732
      %v1764 = vrot.slane %v1763, 4
      %v1765 = vadd.f32 %v1763, %v1764
      %v1766 = vrot.slane %v1765, 2
      %v1767 = vadd.f32 %v1765, %v1766
      %v1768 = vrot.slane %v1767, 1
      %v1769 = vadd.f32 %v1767, %v1768
      %v1770 = vlaneseq
      %v1771 = vshrl.u32 %v1770, 7
      %vm1772 = vcmp.lt.s32.totalorder %v1771, 4
      %v1773 = vsel %vm1772, %v1700, %v1769
      %1774 = vst [vmem:[%s187] sm:$0xff] %v1773
      %s1775 = smul.u32 32, %s15
      %p1776 = scmp.lt.s32.totalorder %s1775, 63
      %s1777 = scalar_select %p1776, %s1775, 63
      %s1778 = smul.addr %s1777, 4
      %s1779 = scalar_lea.vmem %s2, %s1778
      %p1780 = scmp.lt.s32.totalorder %s15, 1
      %s1781 = scalar_select %p1780, %s15, 1
      %s1782 = smul.addr %s1781, 8
      %s1783 = scalar_lea.vmem %s3, %s1782
      // Predicated region
      $region29: #{resnet_forward.10} parent=27 // pred_check
        %p1784 = pneg %p80
      $region30: #{resnet_forward.10} parent=27 // pred_check_branch
        %1786 = sbr.rel (%p1784) target = $region32
      $region31: #{resnet_forward.10} parent=27 // pred_region
        %s1787 = smul.u32 32, %s15
      $region32: #{resnet_forward.10} parent=27 // pred_fallthru
        _
      // Predicated region
      $region33: #{resnet_forward.10} parent=27 // pred_check
        %p1788 = pneg %p106
      $region34: #{resnet_forward.10} parent=27 // pred_check_branch
        %1790 = sbr.rel (%p1788) target = $region36
      $region35: #{resnet_forward.10} parent=27 // pred_region
        _
      $region36: #{resnet_forward.10} parent=27 // pred_fallthru
        _
    $region28: #{resnet_forward.10} parent=5 // pred_fallthru
      _
    %p1791 = scmp.le.s32.totalorder 2, %s10
    // Predicated region
    $region37: #{resnet_forward.10} parent=5 // pred_check
      %p1792 = pneg %p1791
    $region38: #{resnet_forward.10} parent=5 // pred_check_branch
      %1794 = sbr.rel (%p1792) target = $region40
    $region39: #{resnet_forward.10} parent=5 // pred_region
      %s1795 = ssub.s32 %s10, 2
      // Predicated region
      $region41: #{resnet_forward.10} parent=39 // pred_check
        %p1796 = pneg %p86
      $region42: #{resnet_forward.10} parent=39 // pred_check_branch
        %1798 = sbr.rel (%p1796) target = $region44
      $region43: #{resnet_forward.10} parent=39 // pred_region
        %s1799 = smul.u32 32, %s16
        %p1800 = scmp.lt.s32.totalorder %s1799, 63
        %s1801 = scalar_select %p1800, %s1799, 63
        %s1802 = smul.addr %s1801, 4
        %s1803 = scalar_lea.vmem %s2, %s1802
      $region44: #{resnet_forward.10} parent=39 // pred_fallthru
        _
      // Predicated region
      $region45: #{resnet_forward.10} parent=39 // pred_check
        %p1804 = pneg %p112
      $region46: #{resnet_forward.10} parent=39 // pred_check_branch
        %1806 = sbr.rel (%p1804) target = $region48
      $region47: #{resnet_forward.10} parent=39 // pred_region
        %p1807 = scmp.lt.s32.totalorder %s16, 1
        %s1808 = scalar_select %p1807, %s16, 1
        %s1809 = smul.addr %s1808, 8
        %s1810 = scalar_lea.vmem %s3, %s1809
      $region48: #{resnet_forward.10} parent=39 // pred_fallthru
        _
    $region40: #{resnet_forward.10} parent=5 // pred_fallthru
      _
  $region6: #{resnet_forward.10} parent=0 // loop_footer
    %s14 = sadd.s32 1, %s10
  $region7: #{resnet_forward.10} parent=0 // loop_footer_branch
    %9 = sbr.rel target = $region3
  $region8: #{resnet_forward.10} parent=0 // loop_exit
    _

// kernel: resnet_forward.11
$region0: #{resnet_forward.11}
  #allocation0 [shape = 'u32[]', space=smem, size = 0x4, offset = 0x4, fixed_abs, tag = 'smem constant byte address 0x4 - core index']
  #allocation1 [shape = 'u32[144,128]{1,0:T(1,128)}', space=vmem, size = 0x12000, scoped, tag = 'internal scratch']
  %s0 = inlined_call_operand.vmem [shape: bf16[512,128], index: 0, kind: input, shape index: {}]
  %s1 = inlined_call_operand.vmem [shape: f32[8,128], index: 1, kind: input, shape index: {}]
  %s2 = inlined_call_operand.vmem [shape: bf16[512,128], index: 2, kind: output, shape index: {}]
  %s3 = sld [smem:[#allocation0]]
  $region41: #{resnet_forward.11} parent=0
    _
  %s5 = ssub.s32 1, %s3
  %s6 = scalar_select 0, %s5, %s3
  loop: start=0, step=1, limit=4
  $region2: #{resnet_forward.11} parent=0 // loop_pre_header
    _
  $region3: #{resnet_forward.11} parent=0 // loop_header
    %s8 = sphi 0, %s12
    %p9 = scmp.ge.s32.totalorder %s8, 4
    %s18 = sphi 0, %s20
    %s21 = sphi 0, %s18
    %s22 = sphi 0, %s21
    %s38 = sphi 0, %s22
    %s42 = sphi 0, %s42
    %s44 = sphi 0, %s42
    %s45 = sphi 0, %s44
    %s59 = sphi 0, %s45
    %s65 = sphi 0, %s67
    %s68 = sphi 0, %s65
    %s69 = sphi 0, %s68
    %s85 = sphi 0, %s69
  $region4: #{resnet_forward.11} parent=0 // loop_header_branch
    %11 = sbr.rel (%p9) target = $region8
  $region5: #{resnet_forward.11} parent=0 // loop_body
    %s13 = ssub.s32 %s8, 1
    %s14 = ssub.s32 %s8, 2
    %s15 = sadd.s32 %s8, 1
    %s16 = ssub.s32 %s8, %s15
    %p17 = scmp.eq.s32.totalorder %s16, 0
    %s19 = sadd.s32 %s18, 1
    %s20 = scalar_select %p17, %s18, %s19
    %p23 = pneg %p17
    %p24 = scmp.eq.s32.totalorder %s8, 1
    %p25 = por %p23, %p24
    %p26 = scmp.ne.s32.totalorder %s18, %s21
    %p27 = scmp.eq.s32.totalorder %s8, 0
    %p28 = por %p26, %p27
    %p29 = scmp.ne.s32.totalorder %s18, %s21
    %p30 = scmp.eq.s32.totalorder %s13, 1
    %p31 = por %p29, %p30
    %p32 = scmp.ne.s32.totalorder %s21, %s22
    %p33 = scmp.eq.s32.totalorder %s13, 0
    %p34 = por %p32, %p33
    %p35 = scmp.ne.s32.totalorder %s21, %s22
    %p36 = scmp.eq.s32.totalorder %s14, 1
    %p37 = por %p35, %p36
    %p39 = scmp.ne.s32.totalorder %s22, %s38
    %p40 = scmp.eq.s32.totalorder %s14, 0
    %p41 = por %p39, %p40
    %s43 = sadd.s32 %s42, 1
    %p46 = scmp.eq.s32.totalorder %s8, 1
    %p47 = scmp.ne.s32.totalorder %s42, %s44
    %p48 = scmp.eq.s32.totalorder %s8, 0
    %p49 = por %p47, %p48
    %p50 = scmp.ne.s32.totalorder %s42, %s44
    %p51 = scmp.eq.s32.totalorder %s13, 1
    %p52 = por %p50, %p51
    %p53 = scmp.ne.s32.totalorder %s44, %s45
    %p54 = scmp.eq.s32.totalorder %s13, 0
    %p55 = por %p53, %p54
    %p56 = scmp.ne.s32.totalorder %s44, %s45
    %p57 = scmp.eq.s32.totalorder %s14, 1
    %p58 = por %p56, %p57
    %p60 = scmp.ne.s32.totalorder %s45, %s59
    %p61 = scmp.eq.s32.totalorder %s14, 0
    %p62 = por %p60, %p61
    %s63 = ssub.s32 %s8, %s15
    %p64 = scmp.eq.s32.totalorder %s63, 0
    %s66 = sadd.s32 %s65, 1
    %s67 = scalar_select %p64, %s65, %s66
    %p70 = pneg %p64
    %p71 = scmp.eq.s32.totalorder %s8, 1
    %p72 = por %p70, %p71
    %p73 = scmp.ne.s32.totalorder %s65, %s68
    %p74 = scmp.eq.s32.totalorder %s8, 0
    %p75 = por %p73, %p74
    %p76 = scmp.ne.s32.totalorder %s65, %s68
    %p77 = scmp.eq.s32.totalorder %s13, 1
    %p78 = por %p76, %p77
    %p79 = scmp.ne.s32.totalorder %s68, %s69
    %p80 = scmp.eq.s32.totalorder %s13, 0
    %p81 = por %p79, %p80
    %p82 = scmp.ne.s32.totalorder %s68, %s69
    %p83 = scmp.eq.s32.totalorder %s14, 1
    %p84 = por %p82, %p83
    %p86 = scmp.ne.s32.totalorder %s69, %s85
    %p87 = scmp.eq.s32.totalorder %s14, 0
    %p88 = por %p86, %p87
    %p89 = scmp.le.s32.totalorder 1, %s8
    %p90 = scmp.lt.s32.totalorder %s8, 3
    %p91 = pnand %p89, %p90
    %p92 = pneg %p91
    // Predicated region
    $region9: #{resnet_forward.11} parent=5 // pred_check
      _
    $region10: #{resnet_forward.11} parent=5 // pred_check_branch
      %94 = sbr.rel (%p91) target = $region12
    $region11: #{resnet_forward.11} parent=5 // pred_region
      %s95 = ssub.s32 %s8, 1
      // Predicated region
      $region13: #{resnet_forward.11} parent=11 // pred_check
        %p96 = pneg %p55
      $region14: #{resnet_forward.11} parent=11 // pred_check_branch
        %98 = sbr.rel (%p96) target = $region16
      $region15: #{resnet_forward.11} parent=11 // pred_region
        _
      $region16: #{resnet_forward.11} parent=11 // pred_fallthru
        _
    $region12: #{resnet_forward.11} parent=5 // pred_fallthru
      _
    %p99 = scmp.lt.s32.totalorder %s8, 2
    // Predicated region
    $region17: #{resnet_forward.11} parent=5 // pred_check
      %p100 = pneg %p99
    $region18: #{resnet_forward.11} parent=5 // pred_check_branch
      %102 = sbr.rel (%p100) target = $region20
    $region19: #{resnet_forward.11} parent=5 // pred_region
      // Predicated region
      $region21: #{resnet_forward.11} parent=19 // pred_check
        %p103 = pneg %p28
      $region22: #{resnet_forward.11} parent=19 // pred_check_branch
        %105 = sbr.rel (%p103) target = $region24
      $region23: #{resnet_forward.11} parent=19 // pred_region
        %s106 = smul.u32 32, %s8
        %p107 = scmp.lt.s32.totalorder %s106, 63
        %s108 = scalar_select %p107, %s106, 63
        %s109 = smul.addr %s108, 4
        %s110 = scalar_lea.vmem %s0, %s109
        %s111 = smul.u32 32, %s8
      $region24: #{resnet_forward.11} parent=19 // pred_fallthru
        _
    $region20: #{resnet_forward.11} parent=5 // pred_fallthru
      _
    %p112 = scmp.le.s32.totalorder 1, %s8
    %p113 = scmp.lt.s32.totalorder %s8, 3
    %p114 = pnand %p112, %p113
    %p115 = pneg %p114
    // Predicated region
    $region25: #{resnet_forward.11} parent=5 // pred_check
      _
    $region26: #{resnet_forward.11} parent=5 // pred_check_branch
      %117 = sbr.rel (%p114) target = $region28
    $region27: #{resnet_forward.11} parent=5 // pred_region
      %s118 = ssub.s32 %s8, 1
      %s119 = smul.u32 32, %s13
      %p120 = scmp.lt.s32.totalorder %s119, 63
      %s121 = scalar_select %p120, %s119, 63
      %s122 = smul.addr %s121, 4
      %s123 = scalar_lea.vmem %s0, %s122
      %p124 = pneg %p34
      %p125 = pneg %p31
      %p126 = pneg %p55
      %p127 = pneg %p52
      %p128 = pneg %p81
      %p129 = pneg %p78
      %s130 = smul.u32 32, %s13
      %p131 = scmp.lt.s32.totalorder %s130, 63
      %s132 = scalar_select %p131, %s130, 63
      %s133 = smul.addr %s132, 4
      %s134 = scalar_lea.vmem %s2, %s133
      %s135 = smul.u32 32, %s13
      %p136 = scmp.lt.s32.totalorder %s135, 63
      %s137 = scalar_select %p136, %s135, 63
      %s138 = smul.addr %s137, 4
      %s139 = scalar_lea.vmem %s0, %s138
      %s140 = smul.u32 32, %s13
      %s141 = smul.u32 32, %s13
      %p142 = scmp.lt.s32.totalorder %s141, 63
      %s143 = scalar_select %p142, %s141, 63
      %s144 = smul.addr %s143, 4
      %s145 = scalar_lea.vmem %s2, %s144
      %s146 = smul.u32 32, %s13
      %v147 = vld [vmem:[%s139] sm:$0xf]
      %v148 = vld [vmem:[%s139 + $0x4] sm:$0xf]
      %v149 = vld [vmem:[%s139 + $0x8] sm:$0xf]
      %v150 = vld [vmem:[%s139 + $0xc] sm:$0xf]
      %v151 = vld [vmem:[%s139 + $0x10] sm:$0xf]
      %v152 = vld [vmem:[%s139 + $0x14] sm:$0xf]
      %v153 = vld [vmem:[%s139 + $0x18] sm:$0xf]
      %v154 = vld [vmem:[%s139 + $0x1c] sm:$0xf]
      %v155 = vld [vmem:[%s139 + $0x20] sm:$0xf]
      %v156 = vld [vmem:[%s139 + $0x24] sm:$0xf]
      %v157 = vld [vmem:[%s139 + $0x28] sm:$0xf]
      %v158 = vld [vmem:[%s139 + $0x2c] sm:$0xf]
      %v159 = vld [vmem:[%s139 + $0x30] sm:$0xf]
      %v160 = vld [vmem:[%s139 + $0x34] sm:$0xf]
      %v161 = vld [vmem:[%s139 + $0x38] sm:$0xf]
      %v162 = vld [vmem:[%s139 + $0x3c] sm:$0xf]
      %v163 = vld [vmem:[%s139 + $0x40] sm:$0xf]
      %v164 = vld [vmem:[%s139 + $0x44] sm:$0xf]
      %v165 = vld [vmem:[%s139 + $0x48] sm:$0xf]
      %v166 = vld [vmem:[%s139 + $0x4c] sm:$0xf]
      %v167 = vld [vmem:[%s139 + $0x50] sm:$0xf]
      %v168 = vld [vmem:[%s139 + $0x54] sm:$0xf]
      %v169 = vld [vmem:[%s139 + $0x58] sm:$0xf]
      %v170 = vld [vmem:[%s139 + $0x5c] sm:$0xf]
      %v171 = vld [vmem:[%s139 + $0x60] sm:$0xf]
      %v172 = vld [vmem:[%s139 + $0x64] sm:$0xf]
      %v173 = vld [vmem:[%s139 + $0x68] sm:$0xf]
      %v174 = vld [vmem:[%s139 + $0x6c] sm:$0xf]
      %v175 = vld [vmem:[%s139 + $0x70] sm:$0xf]
      %v176 = vld [vmem:[%s139 + $0x74] sm:$0xf]
      %v177 = vld [vmem:[%s139 + $0x78] sm:$0xf]
      %v178 = vld [vmem:[%s139 + $0x7c] sm:$0xf]
      %v179 = vunpack.c.l.bf16 %v147
      %v180 = vunpack.c.l.bf16 %v148
      %v181 = vunpack.c.l.bf16 %v149
      %v182 = vunpack.c.l.bf16 %v150
      %v183 = vunpack.c.l.bf16 %v151
      %v184 = vunpack.c.l.bf16 %v152
      %v185 = vunpack.c.l.bf16 %v153
      %v186 = vunpack.c.l.bf16 %v154
      %v187 = vunpack.c.l.bf16 %v155
      %v188 = vunpack.c.l.bf16 %v156
      %v189 = vunpack.c.l.bf16 %v157
      %v190 = vunpack.c.l.bf16 %v158
      %v191 = vunpack.c.l.bf16 %v159
      %v192 = vunpack.c.l.bf16 %v160
      %v193 = vunpack.c.l.bf16 %v161
      %v194 = vunpack.c.l.bf16 %v162
      %v195 = vunpack.c.l.bf16 %v163
      %v196 = vunpack.c.l.bf16 %v164
      %v197 = vunpack.c.l.bf16 %v165
      %v198 = vunpack.c.l.bf16 %v166
      %v199 = vunpack.c.l.bf16 %v167
      %v200 = vunpack.c.l.bf16 %v168
      %v201 = vunpack.c.l.bf16 %v169
      %v202 = vunpack.c.l.bf16 %v170
      %v203 = vunpack.c.l.bf16 %v171
      %v204 = vunpack.c.l.bf16 %v172
      %v205 = vunpack.c.l.bf16 %v173
      %v206 = vunpack.c.l.bf16 %v174
      %v207 = vunpack.c.l.bf16 %v175
      %v208 = vunpack.c.l.bf16 %v176
      %v209 = vunpack.c.l.bf16 %v177
      %v210 = vunpack.c.l.bf16 %v178
      %v211 = vld [vmem:[%s1] sm:$0x1]
      %v212 = vld [vmem:[%s1 + $0x1] sm:$0x1]
      %v213 = vld [vmem:[%s1 + $0x2] sm:$0x1]
      %v214 = vld [vmem:[%s1 + $0x3] sm:$0x1]
      %v215 = vlaneseq
      %v216 = vshrl.u32 %v215, 7
      %v217 = vsub.s32 0, %v216
      %v218 = vrot.slane %v211, %v217
      %v219 = vmul.f32 %v179, %v218
      %v220 = vmul.f32 %v180, %v218
      %v221 = vmul.f32 %v181, %v218
      %v222 = vmul.f32 %v182, %v218
      %v223 = vmul.f32 %v183, %v218
      %v224 = vmul.f32 %v184, %v218
      %v225 = vmul.f32 %v185, %v218
      %v226 = vmul.f32 %v186, %v218
      %v227 = vmul.f32 %v187, %v218
      %v228 = vmul.f32 %v188, %v218
      %v229 = vmul.f32 %v189, %v218
      %v230 = vmul.f32 %v190, %v218
      %v231 = vmul.f32 %v191, %v218
      %v232 = vmul.f32 %v192, %v218
      %v233 = vmul.f32 %v193, %v218
      %v234 = vmul.f32 %v194, %v218
      %v235 = vmul.f32 %v195, %v218
      %v236 = vmul.f32 %v196, %v218
      %v237 = vmul.f32 %v197, %v218
      %v238 = vmul.f32 %v198, %v218
      %v239 = vmul.f32 %v199, %v218
      %v240 = vmul.f32 %v200, %v218
      %v241 = vmul.f32 %v201, %v218
      %v242 = vmul.f32 %v202, %v218
      %v243 = vmul.f32 %v203, %v218
      %v244 = vmul.f32 %v204, %v218
      %v245 = vmul.f32 %v205, %v218
      %v246 = vmul.f32 %v206, %v218
      %v247 = vmul.f32 %v207, %v218
      %v248 = vmul.f32 %v208, %v218
      %v249 = vmul.f32 %v209, %v218
      %v250 = vmul.f32 %v210, %v218
      %v251 = vlaneseq
      %v252 = vshrl.u32 %v251, 7
      %v253 = vsub.s32 0, %v252
      %v254 = vrot.slane %v212, %v253
      %v255 = vadd.f32 %v219, %v254
      %v256 = vadd.f32 %v220, %v254
      %v257 = vadd.f32 %v221, %v254
      %v258 = vadd.f32 %v222, %v254
      %v259 = vadd.f32 %v223, %v254
      %v260 = vadd.f32 %v224, %v254
      %v261 = vadd.f32 %v225, %v254
      %v262 = vadd.f32 %v226, %v254
      %v263 = vadd.f32 %v227, %v254
      %v264 = vadd.f32 %v228, %v254
      %v265 = vadd.f32 %v229, %v254
      %v266 = vadd.f32 %v230, %v254
      %v267 = vadd.f32 %v231, %v254
      %v268 = vadd.f32 %v232, %v254
      %v269 = vadd.f32 %v233, %v254
      %v270 = vadd.f32 %v234, %v254
      %v271 = vadd.f32 %v235, %v254
      %v272 = vadd.f32 %v236, %v254
      %v273 = vadd.f32 %v237, %v254
      %v274 = vadd.f32 %v238, %v254
      %v275 = vadd.f32 %v239, %v254
      %v276 = vadd.f32 %v240, %v254
      %v277 = vadd.f32 %v241, %v254
      %v278 = vadd.f32 %v242, %v254
      %v279 = vadd.f32 %v243, %v254
      %v280 = vadd.f32 %v244, %v254
      %v281 = vadd.f32 %v245, %v254
      %v282 = vadd.f32 %v246, %v254
      %v283 = vadd.f32 %v247, %v254
      %v284 = vadd.f32 %v248, %v254
      %v285 = vadd.f32 %v249, %v254
      %v286 = vadd.f32 %v250, %v254
      %vm287 = vcmp.gt.f32.partialorder %v213, 0.5
      %v288 = vmax.f32 %v255, 0.0
      %v289 = vmax.f32 %v256, 0.0
      %v290 = vmax.f32 %v257, 0.0
      %v291 = vmax.f32 %v258, 0.0
      %v292 = vmax.f32 %v259, 0.0
      %v293 = vmax.f32 %v260, 0.0
      %v294 = vmax.f32 %v261, 0.0
      %v295 = vmax.f32 %v262, 0.0
      %v296 = vmax.f32 %v263, 0.0
      %v297 = vmax.f32 %v264, 0.0
      %v298 = vmax.f32 %v265, 0.0
      %v299 = vmax.f32 %v266, 0.0
      %v300 = vmax.f32 %v267, 0.0
      %v301 = vmax.f32 %v268, 0.0
      %v302 = vmax.f32 %v269, 0.0
      %v303 = vmax.f32 %v270, 0.0
      %v304 = vmax.f32 %v271, 0.0
      %v305 = vmax.f32 %v272, 0.0
      %v306 = vmax.f32 %v273, 0.0
      %v307 = vmax.f32 %v274, 0.0
      %v308 = vmax.f32 %v275, 0.0
      %v309 = vmax.f32 %v276, 0.0
      %v310 = vmax.f32 %v277, 0.0
      %v311 = vmax.f32 %v278, 0.0
      %v312 = vmax.f32 %v279, 0.0
      %v313 = vmax.f32 %v280, 0.0
      %v314 = vmax.f32 %v281, 0.0
      %v315 = vmax.f32 %v282, 0.0
      %v316 = vmax.f32 %v283, 0.0
      %v317 = vmax.f32 %v284, 0.0
      %v318 = vmax.f32 %v285, 0.0
      %v319 = vmax.f32 %v286, 0.0
      %v320 = vsel %vm287, 1, 0
      %v321 = vlaneseq
      %v322 = vshrl.u32 %v321, 7
      %v323 = vsub.s32 0, %v322
      %v324 = vrot.slane %v320, %v323
      %vm325 = vcmp.eq.s32.totalorder %v324, 1
      %v326 = vsel %vm325, %v288, %v255
      %v327 = vsel %vm325, %v289, %v256
      %v328 = vsel %vm325, %v290, %v257
      %v329 = vsel %vm325, %v291, %v258
      %v330 = vsel %vm325, %v292, %v259
      %v331 = vsel %vm325, %v293, %v260
      %v332 = vsel %vm325, %v294, %v261
      %v333 = vsel %vm325, %v295, %v262
      %v334 = vsel %vm325, %v296, %v263
      %v335 = vsel %vm325, %v297, %v264
      %v336 = vsel %vm325, %v298, %v265
      %v337 = vsel %vm325, %v299, %v266
      %v338 = vsel %vm325, %v300, %v267
      %v339 = vsel %vm325, %v301, %v268
      %v340 = vsel %vm325, %v302, %v269
      %v341 = vsel %vm325, %v303, %v270
      %v342 = vsel %vm325, %v304, %v271
      %v343 = vsel %vm325, %v305, %v272
      %v344 = vsel %vm325, %v306, %v273
      %v345 = vsel %vm325, %v307, %v274
      %v346 = vsel %vm325, %v308, %v275
      %v347 = vsel %vm325, %v309, %v276
      %v348 = vsel %vm325, %v310, %v277
      %v349 = vsel %vm325, %v311, %v278
      %v350 = vsel %vm325, %v312, %v279
      %v351 = vsel %vm325, %v313, %v280
      %v352 = vsel %vm325, %v314, %v281
      %v353 = vsel %vm325, %v315, %v282
      %v354 = vsel %vm325, %v316, %v283
      %v355 = vsel %vm325, %v317, %v284
      %v356 = vsel %vm325, %v318, %v285
      %v357 = vsel %vm325, %v319, %v286
      %v358 = vlaneseq
      %v359 = vshrl.u32 %v358, 7
      %v360 = vsub.s32 0, %v359
      %v361 = vrot.slane %v214, %v360
      %v362 = vmul.f32 %v326, %v361
      %v363 = vmul.f32 %v327, %v361
      %v364 = vmul.f32 %v328, %v361
      %v365 = vmul.f32 %v329, %v361
      %v366 = vmul.f32 %v330, %v361
      %v367 = vmul.f32 %v331, %v361
      %v368 = vmul.f32 %v332, %v361
      %v369 = vmul.f32 %v333, %v361
      %v370 = vmul.f32 %v334, %v361
      %v371 = vmul.f32 %v335, %v361
      %v372 = vmul.f32 %v336, %v361
      %v373 = vmul.f32 %v337, %v361
      %v374 = vmul.f32 %v338, %v361
      %v375 = vmul.f32 %v339, %v361
      %v376 = vmul.f32 %v340, %v361
      %v377 = vmul.f32 %v341, %v361
      %v378 = vmul.f32 %v342, %v361
      %v379 = vmul.f32 %v343, %v361
      %v380 = vmul.f32 %v344, %v361
      %v381 = vmul.f32 %v345, %v361
      %v382 = vmul.f32 %v346, %v361
      %v383 = vmul.f32 %v347, %v361
      %v384 = vmul.f32 %v348, %v361
      %v385 = vmul.f32 %v349, %v361
      %v386 = vmul.f32 %v350, %v361
      %v387 = vmul.f32 %v351, %v361
      %v388 = vmul.f32 %v352, %v361
      %v389 = vmul.f32 %v353, %v361
      %v390 = vmul.f32 %v354, %v361
      %v391 = vmul.f32 %v355, %v361
      %v392 = vmul.f32 %v356, %v361
      %v393 = vmul.f32 %v357, %v361
      %v394 = vpack.c.bf16 %v363, %v362
      %v395 = vpack.c.bf16 %v365, %v364
      %v396 = vpack.c.bf16 %v367, %v366
      %v397 = vpack.c.bf16 %v369, %v368
      %v398 = vpack.c.bf16 %v371, %v370
      %v399 = vpack.c.bf16 %v373, %v372
      %v400 = vpack.c.bf16 %v375, %v374
      %v401 = vpack.c.bf16 %v377, %v376
      %v402 = vpack.c.bf16 %v379, %v378
      %v403 = vpack.c.bf16 %v381, %v380
      %v404 = vpack.c.bf16 %v383, %v382
      %v405 = vpack.c.bf16 %v385, %v384
      %v406 = vpack.c.bf16 %v387, %v386
      %v407 = vpack.c.bf16 %v389, %v388
      %v408 = vpack.c.bf16 %v391, %v390
      %v409 = vpack.c.bf16 %v393, %v392
      %v426 = vunpack.c.l.b16 %v394
      %v427 = vunpack.c.h.b16 %v394
      %v428 = vunpack.c.l.b16 %v395
      %v429 = vunpack.c.h.b16 %v395
      %v430 = vunpack.c.l.b16 %v396
      %v431 = vunpack.c.h.b16 %v396
      %v432 = vunpack.c.l.b16 %v397
      %v433 = vunpack.c.h.b16 %v397
      %v434 = vunpack.c.l.b16 %v398
      %v435 = vunpack.c.h.b16 %v398
      %v436 = vunpack.c.l.b16 %v399
      %v437 = vunpack.c.h.b16 %v399
      %v438 = vunpack.c.l.b16 %v400
      %v439 = vunpack.c.h.b16 %v400
      %v440 = vunpack.c.l.b16 %v401
      %v441 = vunpack.c.h.b16 %v401
      %v442 = vunpack.c.l.b16 %v402
      %v443 = vunpack.c.h.b16 %v402
      %v444 = vunpack.c.l.b16 %v403
      %v445 = vunpack.c.h.b16 %v403
      %v446 = vunpack.c.l.b16 %v404
      %v447 = vunpack.c.h.b16 %v404
      %v448 = vunpack.c.l.b16 %v405
      %v449 = vunpack.c.h.b16 %v405
      %v450 = vunpack.c.l.b16 %v406
      %v451 = vunpack.c.h.b16 %v406
      %v452 = vunpack.c.l.b16 %v407
      %v453 = vunpack.c.h.b16 %v407
      %v454 = vunpack.c.l.b16 %v408
      %v455 = vunpack.c.h.b16 %v408
      %v456 = vunpack.c.l.b16 %v409
      %v457 = vunpack.c.h.b16 %v409
      %v458 = vpack.c.b16 %v426, %v426
      %v459 = vpack.c.b16 %v427, %v427
      %v460 = vpack.c.b16 %v428, %v428
      %v461 = vpack.c.b16 %v429, %v429
      %v462 = vpack.c.b16 %v430, %v430
      %v463 = vpack.c.b16 %v431, %v431
      %v464 = vpack.c.b16 %v432, %v432
      %v465 = vpack.c.b16 %v433, %v433
      %v466 = vpack.c.b16 %v434, %v434
      %v467 = vpack.c.b16 %v435, %v435
      %v468 = vpack.c.b16 %v436, %v436
      %v469 = vpack.c.b16 %v437, %v437
      %v470 = vpack.c.b16 %v438, %v438
      %v471 = vpack.c.b16 %v439, %v439
      %v472 = vpack.c.b16 %v440, %v440
      %v473 = vpack.c.b16 %v441, %v441
      %v474 = vpack.c.b16 %v442, %v442
      %v475 = vpack.c.b16 %v443, %v443
      %v476 = vpack.c.b16 %v444, %v444
      %v477 = vpack.c.b16 %v445, %v445
      %v478 = vpack.c.b16 %v446, %v446
      %v479 = vpack.c.b16 %v447, %v447
      %v480 = vpack.c.b16 %v448, %v448
      %v481 = vpack.c.b16 %v449, %v449
      %v482 = vpack.c.b16 %v450, %v450
      %v483 = vpack.c.b16 %v451, %v451
      %v484 = vpack.c.b16 %v452, %v452
      %v485 = vpack.c.b16 %v453, %v453
      %v486 = vpack.c.b16 %v454, %v454
      %v487 = vpack.c.b16 %v455, %v455
      %v488 = vpack.c.b16 %v456, %v456
      %v489 = vpack.c.b16 %v457, %v457
      %522 = vst [vmem:[%s145] sm:$0xf] %v458
      %523 = vst [vmem:[%s145 + $0x4] sm:$0xf] %v459
      %524 = vst [vmem:[%s145 + $0x8] sm:$0xf] %v460
      %525 = vst [vmem:[%s145 + $0xc] sm:$0xf] %v461
      %526 = vst [vmem:[%s145 + $0x10] sm:$0xf] %v462
      %527 = vst [vmem:[%s145 + $0x14] sm:$0xf] %v463
      %528 = vst [vmem:[%s145 + $0x18] sm:$0xf] %v464
      %529 = vst [vmem:[%s145 + $0x1c] sm:$0xf] %v465
      %530 = vst [vmem:[%s145 + $0x20] sm:$0xf] %v466
      %531 = vst [vmem:[%s145 + $0x24] sm:$0xf] %v467
      %532 = vst [vmem:[%s145 + $0x28] sm:$0xf] %v468
      %533 = vst [vmem:[%s145 + $0x2c] sm:$0xf] %v469
      %534 = vst [vmem:[%s145 + $0x30] sm:$0xf] %v470
      %535 = vst [vmem:[%s145 + $0x34] sm:$0xf] %v471
      %536 = vst [vmem:[%s145 + $0x38] sm:$0xf] %v472
      %537 = vst [vmem:[%s145 + $0x3c] sm:$0xf] %v473
      %538 = vst [vmem:[%s145 + $0x40] sm:$0xf] %v474
      %539 = vst [vmem:[%s145 + $0x44] sm:$0xf] %v475
      %540 = vst [vmem:[%s145 + $0x48] sm:$0xf] %v476
      %541 = vst [vmem:[%s145 + $0x4c] sm:$0xf] %v477
      %542 = vst [vmem:[%s145 + $0x50] sm:$0xf] %v478
      %543 = vst [vmem:[%s145 + $0x54] sm:$0xf] %v479
      %544 = vst [vmem:[%s145 + $0x58] sm:$0xf] %v480
      %545 = vst [vmem:[%s145 + $0x5c] sm:$0xf] %v481
      %546 = vst [vmem:[%s145 + $0x60] sm:$0xf] %v482
      %547 = vst [vmem:[%s145 + $0x64] sm:$0xf] %v483
      %548 = vst [vmem:[%s145 + $0x68] sm:$0xf] %v484
      %549 = vst [vmem:[%s145 + $0x6c] sm:$0xf] %v485
      %550 = vst [vmem:[%s145 + $0x70] sm:$0xf] %v486
      %551 = vst [vmem:[%s145 + $0x74] sm:$0xf] %v487
      %552 = vst [vmem:[%s145 + $0x78] sm:$0xf] %v488
      %553 = vst [vmem:[%s145 + $0x7c] sm:$0xf] %v489
      %s554 = smul.u32 32, %s13
      %p555 = scmp.lt.s32.totalorder %s554, 63
      %s556 = scalar_select %p555, %s554, 63
      %s557 = smul.addr %s556, 4
      %s558 = scalar_lea.vmem %s2, %s557
      // Predicated region
      $region29: #{resnet_forward.11} parent=27 // pred_check
        %p559 = pneg %p78
      $region30: #{resnet_forward.11} parent=27 // pred_check_branch
        %561 = sbr.rel (%p559) target = $region32
      $region31: #{resnet_forward.11} parent=27 // pred_region
        %s562 = smul.u32 32, %s13
      $region32: #{resnet_forward.11} parent=27 // pred_fallthru
        _
    $region28: #{resnet_forward.11} parent=5 // pred_fallthru
      _
    %p563 = scmp.le.s32.totalorder 2, %s8
    // Predicated region
    $region33: #{resnet_forward.11} parent=5 // pred_check
      %p564 = pneg %p563
    $region34: #{resnet_forward.11} parent=5 // pred_check_branch
      %566 = sbr.rel (%p564) target = $region36
    $region35: #{resnet_forward.11} parent=5 // pred_region
      %s567 = ssub.s32 %s8, 2
      // Predicated region
      $region37: #{resnet_forward.11} parent=35 // pred_check
        %p568 = pneg %p84
      $region38: #{resnet_forward.11} parent=35 // pred_check_branch
        %570 = sbr.rel (%p568) target = $region40
      $region39: #{resnet_forward.11} parent=35 // pred_region
        %s571 = smul.u32 32, %s14
        %p572 = scmp.lt.s32.totalorder %s571, 63
        %s573 = scalar_select %p572, %s571, 63
        %s574 = smul.addr %s573, 4
        %s575 = scalar_lea.vmem %s2, %s574
      $region40: #{resnet_forward.11} parent=35 // pred_fallthru
        _
    $region36: #{resnet_forward.11} parent=5 // pred_fallthru
      _
  $region6: #{resnet_forward.11} parent=0 // loop_footer
    %s12 = sadd.s32 1, %s8
  $region7: #{resnet_forward.11} parent=0 // loop_footer_branch
    %7 = sbr.rel target = $region3
  $region8: #{resnet_forward.11} parent=0 // loop_exit
    _

// kernel: resnet_forward.13
$region0: #{resnet_forward.13}
  #allocation0 [shape = 'u32[]', space=smem, size = 0x4, offset = 0x4, fixed_abs, tag = 'smem constant byte address 0x4 - core index']
  #allocation1 [shape = 'u32[144,128]{1,0:T(1,128)}', space=vmem, size = 0x12000, scoped, tag = 'internal scratch']
  %s0 = inlined_call_operand.vmem [shape: bf16[512,128], index: 0, kind: input, shape index: {}]
  %s1 = inlined_call_operand.vmem [shape: f32[8,128], index: 1, kind: input, shape index: {}]
  %s2 = inlined_call_operand.vmem [shape: bf16[512,128], index: 2, kind: input, shape index: {}]
  %s3 = inlined_call_operand.vmem [shape: bf16[512,128], index: 3, kind: output, shape index: {}]
  %s4 = sld [smem:[#allocation0]]
  $region45: #{resnet_forward.13} parent=0
    _
  %s6 = ssub.s32 1, %s4
  %s7 = scalar_select 0, %s6, %s4
  loop: start=0, step=1, limit=4
  $region2: #{resnet_forward.13} parent=0 // loop_pre_header
    _
  $region3: #{resnet_forward.13} parent=0 // loop_header
    %s9 = sphi 0, %s13
    %p10 = scmp.ge.s32.totalorder %s9, 4
    %s19 = sphi 0, %s21
    %s22 = sphi 0, %s19
    %s23 = sphi 0, %s22
    %s39 = sphi 0, %s23
    %s43 = sphi 0, %s43
    %s45 = sphi 0, %s43
    %s46 = sphi 0, %s45
    %s60 = sphi 0, %s46
    %s66 = sphi 0, %s68
    %s69 = sphi 0, %s66
    %s70 = sphi 0, %s69
    %s86 = sphi 0, %s70
    %s92 = sphi 0, %s94
    %s95 = sphi 0, %s92
    %s96 = sphi 0, %s95
    %s112 = sphi 0, %s96
  $region4: #{resnet_forward.13} parent=0 // loop_header_branch
    %12 = sbr.rel (%p10) target = $region8
  $region5: #{resnet_forward.13} parent=0 // loop_body
    %s14 = ssub.s32 %s9, 1
    %s15 = ssub.s32 %s9, 2
    %s16 = sadd.s32 %s9, 1
    %s17 = ssub.s32 %s9, %s16
    %p18 = scmp.eq.s32.totalorder %s17, 0
    %s20 = sadd.s32 %s19, 1
    %s21 = scalar_select %p18, %s19, %s20
    %p24 = pneg %p18
    %p25 = scmp.eq.s32.totalorder %s9, 1
    %p26 = por %p24, %p25
    %p27 = scmp.ne.s32.totalorder %s19, %s22
    %p28 = scmp.eq.s32.totalorder %s9, 0
    %p29 = por %p27, %p28
    %p30 = scmp.ne.s32.totalorder %s19, %s22
    %p31 = scmp.eq.s32.totalorder %s14, 1
    %p32 = por %p30, %p31
    %p33 = scmp.ne.s32.totalorder %s22, %s23
    %p34 = scmp.eq.s32.totalorder %s14, 0
    %p35 = por %p33, %p34
    %p36 = scmp.ne.s32.totalorder %s22, %s23
    %p37 = scmp.eq.s32.totalorder %s15, 1
    %p38 = por %p36, %p37
    %p40 = scmp.ne.s32.totalorder %s23, %s39
    %p41 = scmp.eq.s32.totalorder %s15, 0
    %p42 = por %p40, %p41
    %s44 = sadd.s32 %s43, 1
    %p47 = scmp.eq.s32.totalorder %s9, 1
    %p48 = scmp.ne.s32.totalorder %s43, %s45
    %p49 = scmp.eq.s32.totalorder %s9, 0
    %p50 = por %p48, %p49
    %p51 = scmp.ne.s32.totalorder %s43, %s45
    %p52 = scmp.eq.s32.totalorder %s14, 1
    %p53 = por %p51, %p52
    %p54 = scmp.ne.s32.totalorder %s45, %s46
    %p55 = scmp.eq.s32.totalorder %s14, 0
    %p56 = por %p54, %p55
    %p57 = scmp.ne.s32.totalorder %s45, %s46
    %p58 = scmp.eq.s32.totalorder %s15, 1
    %p59 = por %p57, %p58
    %p61 = scmp.ne.s32.totalorder %s46, %s60
    %p62 = scmp.eq.s32.totalorder %s15, 0
    %p63 = por %p61, %p62
    %s64 = ssub.s32 %s9, %s16
    %p65 = scmp.eq.s32.totalorder %s64, 0
    %s67 = sadd.s32 %s66, 1
    %s68 = scalar_select %p65, %s66, %s67
    %p71 = pneg %p65
    %p72 = scmp.eq.s32.totalorder %s9, 1
    %p73 = por %p71, %p72
    %p74 = scmp.ne.s32.totalorder %s66, %s69
    %p75 = scmp.eq.s32.totalorder %s9, 0
    %p76 = por %p74, %p75
    %p77 = scmp.ne.s32.totalorder %s66, %s69
    %p78 = scmp.eq.s32.totalorder %s14, 1
    %p79 = por %p77, %p78
    %p80 = scmp.ne.s32.totalorder %s69, %s70
    %p81 = scmp.eq.s32.totalorder %s14, 0
    %p82 = por %p80, %p81
    %p83 = scmp.ne.s32.totalorder %s69, %s70
    %p84 = scmp.eq.s32.totalorder %s15, 1
    %p85 = por %p83, %p84
    %p87 = scmp.ne.s32.totalorder %s70, %s86
    %p88 = scmp.eq.s32.totalorder %s15, 0
    %p89 = por %p87, %p88
    %s90 = ssub.s32 %s9, %s16
    %p91 = scmp.eq.s32.totalorder %s90, 0
    %s93 = sadd.s32 %s92, 1
    %s94 = scalar_select %p91, %s92, %s93
    %p97 = pneg %p91
    %p98 = scmp.eq.s32.totalorder %s9, 1
    %p99 = por %p97, %p98
    %p100 = scmp.ne.s32.totalorder %s92, %s95
    %p101 = scmp.eq.s32.totalorder %s9, 0
    %p102 = por %p100, %p101
    %p103 = scmp.ne.s32.totalorder %s92, %s95
    %p104 = scmp.eq.s32.totalorder %s14, 1
    %p105 = por %p103, %p104
    %p106 = scmp.ne.s32.totalorder %s95, %s96
    %p107 = scmp.eq.s32.totalorder %s14, 0
    %p108 = por %p106, %p107
    %p109 = scmp.ne.s32.totalorder %s95, %s96
    %p110 = scmp.eq.s32.totalorder %s15, 1
    %p111 = por %p109, %p110
    %p113 = scmp.ne.s32.totalorder %s96, %s112
    %p114 = scmp.eq.s32.totalorder %s15, 0
    %p115 = por %p113, %p114
    %p116 = scmp.le.s32.totalorder 1, %s9
    %p117 = scmp.lt.s32.totalorder %s9, 3
    %p118 = pnand %p116, %p117
    %p119 = pneg %p118
    // Predicated region
    $region9: #{resnet_forward.13} parent=5 // pred_check
      _
    $region10: #{resnet_forward.13} parent=5 // pred_check_branch
      %121 = sbr.rel (%p118) target = $region12
    $region11: #{resnet_forward.13} parent=5 // pred_region
      %s122 = ssub.s32 %s9, 1
      // Predicated region
      $region13: #{resnet_forward.13} parent=11 // pred_check
        %p123 = pneg %p56
      $region14: #{resnet_forward.13} parent=11 // pred_check_branch
        %125 = sbr.rel (%p123) target = $region16
      $region15: #{resnet_forward.13} parent=11 // pred_region
        _
      $region16: #{resnet_forward.13} parent=11 // pred_fallthru
        _
    $region12: #{resnet_forward.13} parent=5 // pred_fallthru
      _
    %p126 = scmp.lt.s32.totalorder %s9, 2
    // Predicated region
    $region17: #{resnet_forward.13} parent=5 // pred_check
      %p127 = pneg %p126
    $region18: #{resnet_forward.13} parent=5 // pred_check_branch
      %129 = sbr.rel (%p127) target = $region20
    $region19: #{resnet_forward.13} parent=5 // pred_region
      // Predicated region
      $region21: #{resnet_forward.13} parent=19 // pred_check
        %p130 = pneg %p29
      $region22: #{resnet_forward.13} parent=19 // pred_check_branch
        %132 = sbr.rel (%p130) target = $region24
      $region23: #{resnet_forward.13} parent=19 // pred_region
        %s133 = smul.u32 32, %s9
        %p134 = scmp.lt.s32.totalorder %s133, 63
        %s135 = scalar_select %p134, %s133, 63
        %s136 = smul.addr %s135, 4
        %s137 = scalar_lea.vmem %s0, %s136
        %s138 = smul.u32 32, %s9
      $region24: #{resnet_forward.13} parent=19 // pred_fallthru
        _
      // Predicated region
      $region25: #{resnet_forward.13} parent=19 // pred_check
        %p139 = pneg %p76
      $region26: #{resnet_forward.13} parent=19 // pred_check_branch
        %141 = sbr.rel (%p139) target = $region28
      $region27: #{resnet_forward.13} parent=19 // pred_region
        %s142 = smul.u32 32, %s9
        %p143 = scmp.lt.s32.totalorder %s142, 63
        %s144 = scalar_select %p143, %s142, 63
        %s145 = smul.addr %s144, 4
        %s146 = scalar_lea.vmem %s2, %s145
        %s147 = smul.u32 32, %s9
      $region28: #{resnet_forward.13} parent=19 // pred_fallthru
        _
    $region20: #{resnet_forward.13} parent=5 // pred_fallthru
      _
    %p148 = scmp.le.s32.totalorder 1, %s9
    %p149 = scmp.lt.s32.totalorder %s9, 3
    %p150 = pnand %p148, %p149
    %p151 = pneg %p150
    // Predicated region
    $region29: #{resnet_forward.13} parent=5 // pred_check
      _
    $region30: #{resnet_forward.13} parent=5 // pred_check_branch
      %153 = sbr.rel (%p150) target = $region32
    $region31: #{resnet_forward.13} parent=5 // pred_region
      %s154 = ssub.s32 %s9, 1
      %s155 = smul.u32 32, %s14
      %p156 = scmp.lt.s32.totalorder %s155, 63
      %s157 = scalar_select %p156, %s155, 63
      %s158 = smul.addr %s157, 4
      %s159 = scalar_lea.vmem %s0, %s158
      %p160 = pneg %p35
      %p161 = pneg %p32
      %p162 = pneg %p56
      %p163 = pneg %p53
      %s164 = smul.u32 32, %s14
      %p165 = scmp.lt.s32.totalorder %s164, 63
      %s166 = scalar_select %p165, %s164, 63
      %s167 = smul.addr %s166, 4
      %s168 = scalar_lea.vmem %s2, %s167
      %p169 = pneg %p82
      %p170 = pneg %p79
      %p171 = pneg %p108
      %p172 = pneg %p105
      %s173 = smul.u32 32, %s14
      %p174 = scmp.lt.s32.totalorder %s173, 63
      %s175 = scalar_select %p174, %s173, 63
      %s176 = smul.addr %s175, 4
      %s177 = scalar_lea.vmem %s3, %s176
      %s178 = smul.u32 32, %s14
      %p179 = scmp.lt.s32.totalorder %s178, 63
      %s180 = scalar_select %p179, %s178, 63
      %s181 = smul.addr %s180, 4
      %s182 = scalar_lea.vmem %s0, %s181
      %s183 = smul.u32 32, %s14
      %s184 = smul.u32 32, %s14
      %p185 = scmp.lt.s32.totalorder %s184, 63
      %s186 = scalar_select %p185, %s184, 63
      %s187 = smul.addr %s186, 4
      %s188 = scalar_lea.vmem %s2, %s187
      %s189 = smul.u32 32, %s14
      %s190 = smul.u32 32, %s14
      %p191 = scmp.lt.s32.totalorder %s190, 63
      %s192 = scalar_select %p191, %s190, 63
      %s193 = smul.addr %s192, 4
      %s194 = scalar_lea.vmem %s3, %s193
      %s195 = smul.u32 32, %s14
      %v196 = vld [vmem:[%s182] sm:$0xf]
      %v197 = vld [vmem:[%s182 + $0x4] sm:$0xf]
      %v198 = vld [vmem:[%s182 + $0x8] sm:$0xf]
      %v199 = vld [vmem:[%s182 + $0xc] sm:$0xf]
      %v200 = vld [vmem:[%s182 + $0x10] sm:$0xf]
      %v201 = vld [vmem:[%s182 + $0x14] sm:$0xf]
      %v202 = vld [vmem:[%s182 + $0x18] sm:$0xf]
      %v203 = vld [vmem:[%s182 + $0x1c] sm:$0xf]
      %v204 = vld [vmem:[%s182 + $0x20] sm:$0xf]
      %v205 = vld [vmem:[%s182 + $0x24] sm:$0xf]
      %v206 = vld [vmem:[%s182 + $0x28] sm:$0xf]
      %v207 = vld [vmem:[%s182 + $0x2c] sm:$0xf]
      %v208 = vld [vmem:[%s182 + $0x30] sm:$0xf]
      %v209 = vld [vmem:[%s182 + $0x34] sm:$0xf]
      %v210 = vld [vmem:[%s182 + $0x38] sm:$0xf]
      %v211 = vld [vmem:[%s182 + $0x3c] sm:$0xf]
      %v212 = vld [vmem:[%s182 + $0x40] sm:$0xf]
      %v213 = vld [vmem:[%s182 + $0x44] sm:$0xf]
      %v214 = vld [vmem:[%s182 + $0x48] sm:$0xf]
      %v215 = vld [vmem:[%s182 + $0x4c] sm:$0xf]
      %v216 = vld [vmem:[%s182 + $0x50] sm:$0xf]
      %v217 = vld [vmem:[%s182 + $0x54] sm:$0xf]
      %v218 = vld [vmem:[%s182 + $0x58] sm:$0xf]
      %v219 = vld [vmem:[%s182 + $0x5c] sm:$0xf]
      %v220 = vld [vmem:[%s182 + $0x60] sm:$0xf]
      %v221 = vld [vmem:[%s182 + $0x64] sm:$0xf]
      %v222 = vld [vmem:[%s182 + $0x68] sm:$0xf]
      %v223 = vld [vmem:[%s182 + $0x6c] sm:$0xf]
      %v224 = vld [vmem:[%s182 + $0x70] sm:$0xf]
      %v225 = vld [vmem:[%s182 + $0x74] sm:$0xf]
      %v226 = vld [vmem:[%s182 + $0x78] sm:$0xf]
      %v227 = vld [vmem:[%s182 + $0x7c] sm:$0xf]
      %v228 = vunpack.c.l.bf16 %v196
      %v229 = vunpack.c.l.bf16 %v197
      %v230 = vunpack.c.l.bf16 %v198
      %v231 = vunpack.c.l.bf16 %v199
      %v232 = vunpack.c.l.bf16 %v200
      %v233 = vunpack.c.l.bf16 %v201
      %v234 = vunpack.c.l.bf16 %v202
      %v235 = vunpack.c.l.bf16 %v203
      %v236 = vunpack.c.l.bf16 %v204
      %v237 = vunpack.c.l.bf16 %v205
      %v238 = vunpack.c.l.bf16 %v206
      %v239 = vunpack.c.l.bf16 %v207
      %v240 = vunpack.c.l.bf16 %v208
      %v241 = vunpack.c.l.bf16 %v209
      %v242 = vunpack.c.l.bf16 %v210
      %v243 = vunpack.c.l.bf16 %v211
      %v244 = vunpack.c.l.bf16 %v212
      %v245 = vunpack.c.l.bf16 %v213
      %v246 = vunpack.c.l.bf16 %v214
      %v247 = vunpack.c.l.bf16 %v215
      %v248 = vunpack.c.l.bf16 %v216
      %v249 = vunpack.c.l.bf16 %v217
      %v250 = vunpack.c.l.bf16 %v218
      %v251 = vunpack.c.l.bf16 %v219
      %v252 = vunpack.c.l.bf16 %v220
      %v253 = vunpack.c.l.bf16 %v221
      %v254 = vunpack.c.l.bf16 %v222
      %v255 = vunpack.c.l.bf16 %v223
      %v256 = vunpack.c.l.bf16 %v224
      %v257 = vunpack.c.l.bf16 %v225
      %v258 = vunpack.c.l.bf16 %v226
      %v259 = vunpack.c.l.bf16 %v227
      %v260 = vld [vmem:[%s1] sm:$0x1]
      %v261 = vld [vmem:[%s1 + $0x1] sm:$0x1]
      %v262 = vld [vmem:[%s1 + $0x2] sm:$0x1]
      %v263 = vld [vmem:[%s1 + $0x3] sm:$0x1]
      %v264 = vlaneseq
      %v265 = vshrl.u32 %v264, 7
      %v266 = vsub.s32 0, %v265
      %v267 = vrot.slane %v260, %v266
      %v268 = vmul.f32 %v228, %v267
      %v269 = vmul.f32 %v229, %v267
      %v270 = vmul.f32 %v230, %v267
      %v271 = vmul.f32 %v231, %v267
      %v272 = vmul.f32 %v232, %v267
      %v273 = vmul.f32 %v233, %v267
      %v274 = vmul.f32 %v234, %v267
      %v275 = vmul.f32 %v235, %v267
      %v276 = vmul.f32 %v236, %v267
      %v277 = vmul.f32 %v237, %v267
      %v278 = vmul.f32 %v238, %v267
      %v279 = vmul.f32 %v239, %v267
      %v280 = vmul.f32 %v240, %v267
      %v281 = vmul.f32 %v241, %v267
      %v282 = vmul.f32 %v242, %v267
      %v283 = vmul.f32 %v243, %v267
      %v284 = vmul.f32 %v244, %v267
      %v285 = vmul.f32 %v245, %v267
      %v286 = vmul.f32 %v246, %v267
      %v287 = vmul.f32 %v247, %v267
      %v288 = vmul.f32 %v248, %v267
      %v289 = vmul.f32 %v249, %v267
      %v290 = vmul.f32 %v250, %v267
      %v291 = vmul.f32 %v251, %v267
      %v292 = vmul.f32 %v252, %v267
      %v293 = vmul.f32 %v253, %v267
      %v294 = vmul.f32 %v254, %v267
      %v295 = vmul.f32 %v255, %v267
      %v296 = vmul.f32 %v256, %v267
      %v297 = vmul.f32 %v257, %v267
      %v298 = vmul.f32 %v258, %v267
      %v299 = vmul.f32 %v259, %v267
      %v300 = vlaneseq
      %v301 = vshrl.u32 %v300, 7
      %v302 = vsub.s32 0, %v301
      %v303 = vrot.slane %v261, %v302
      %v304 = vadd.f32 %v268, %v303
      %v305 = vadd.f32 %v269, %v303
      %v306 = vadd.f32 %v270, %v303
      %v307 = vadd.f32 %v271, %v303
      %v308 = vadd.f32 %v272, %v303
      %v309 = vadd.f32 %v273, %v303
      %v310 = vadd.f32 %v274, %v303
      %v311 = vadd.f32 %v275, %v303
      %v312 = vadd.f32 %v276, %v303
      %v313 = vadd.f32 %v277, %v303
      %v314 = vadd.f32 %v278, %v303
      %v315 = vadd.f32 %v279, %v303
      %v316 = vadd.f32 %v280, %v303
      %v317 = vadd.f32 %v281, %v303
      %v318 = vadd.f32 %v282, %v303
      %v319 = vadd.f32 %v283, %v303
      %v320 = vadd.f32 %v284, %v303
      %v321 = vadd.f32 %v285, %v303
      %v322 = vadd.f32 %v286, %v303
      %v323 = vadd.f32 %v287, %v303
      %v324 = vadd.f32 %v288, %v303
      %v325 = vadd.f32 %v289, %v303
      %v326 = vadd.f32 %v290, %v303
      %v327 = vadd.f32 %v291, %v303
      %v328 = vadd.f32 %v292, %v303
      %v329 = vadd.f32 %v293, %v303
      %v330 = vadd.f32 %v294, %v303
      %v331 = vadd.f32 %v295, %v303
      %v332 = vadd.f32 %v296, %v303
      %v333 = vadd.f32 %v297, %v303
      %v334 = vadd.f32 %v298, %v303
      %v335 = vadd.f32 %v299, %v303
      %v336 = vld [vmem:[%s188] sm:$0xf]
      %v337 = vld [vmem:[%s188 + $0x4] sm:$0xf]
      %v338 = vld [vmem:[%s188 + $0x8] sm:$0xf]
      %v339 = vld [vmem:[%s188 + $0xc] sm:$0xf]
      %v340 = vld [vmem:[%s188 + $0x10] sm:$0xf]
      %v341 = vld [vmem:[%s188 + $0x14] sm:$0xf]
      %v342 = vld [vmem:[%s188 + $0x18] sm:$0xf]
      %v343 = vld [vmem:[%s188 + $0x1c] sm:$0xf]
      %v344 = vld [vmem:[%s188 + $0x20] sm:$0xf]
      %v345 = vld [vmem:[%s188 + $0x24] sm:$0xf]
      %v346 = vld [vmem:[%s188 + $0x28] sm:$0xf]
      %v347 = vld [vmem:[%s188 + $0x2c] sm:$0xf]
      %v348 = vld [vmem:[%s188 + $0x30] sm:$0xf]
      %v349 = vld [vmem:[%s188 + $0x34] sm:$0xf]
      %v350 = vld [vmem:[%s188 + $0x38] sm:$0xf]
      %v351 = vld [vmem:[%s188 + $0x3c] sm:$0xf]
      %v352 = vld [vmem:[%s188 + $0x40] sm:$0xf]
      %v353 = vld [vmem:[%s188 + $0x44] sm:$0xf]
      %v354 = vld [vmem:[%s188 + $0x48] sm:$0xf]
      %v355 = vld [vmem:[%s188 + $0x4c] sm:$0xf]
      %v356 = vld [vmem:[%s188 + $0x50] sm:$0xf]
      %v357 = vld [vmem:[%s188 + $0x54] sm:$0xf]
      %v358 = vld [vmem:[%s188 + $0x58] sm:$0xf]
      %v359 = vld [vmem:[%s188 + $0x5c] sm:$0xf]
      %v360 = vld [vmem:[%s188 + $0x60] sm:$0xf]
      %v361 = vld [vmem:[%s188 + $0x64] sm:$0xf]
      %v362 = vld [vmem:[%s188 + $0x68] sm:$0xf]
      %v363 = vld [vmem:[%s188 + $0x6c] sm:$0xf]
      %v364 = vld [vmem:[%s188 + $0x70] sm:$0xf]
      %v365 = vld [vmem:[%s188 + $0x74] sm:$0xf]
      %v366 = vld [vmem:[%s188 + $0x78] sm:$0xf]
      %v367 = vld [vmem:[%s188 + $0x7c] sm:$0xf]
      %v368 = vunpack.c.l.bf16 %v336
      %v369 = vunpack.c.l.bf16 %v337
      %v370 = vunpack.c.l.bf16 %v338
      %v371 = vunpack.c.l.bf16 %v339
      %v372 = vunpack.c.l.bf16 %v340
      %v373 = vunpack.c.l.bf16 %v341
      %v374 = vunpack.c.l.bf16 %v342
      %v375 = vunpack.c.l.bf16 %v343
      %v376 = vunpack.c.l.bf16 %v344
      %v377 = vunpack.c.l.bf16 %v345
      %v378 = vunpack.c.l.bf16 %v346
      %v379 = vunpack.c.l.bf16 %v347
      %v380 = vunpack.c.l.bf16 %v348
      %v381 = vunpack.c.l.bf16 %v349
      %v382 = vunpack.c.l.bf16 %v350
      %v383 = vunpack.c.l.bf16 %v351
      %v384 = vunpack.c.l.bf16 %v352
      %v385 = vunpack.c.l.bf16 %v353
      %v386 = vunpack.c.l.bf16 %v354
      %v387 = vunpack.c.l.bf16 %v355
      %v388 = vunpack.c.l.bf16 %v356
      %v389 = vunpack.c.l.bf16 %v357
      %v390 = vunpack.c.l.bf16 %v358
      %v391 = vunpack.c.l.bf16 %v359
      %v392 = vunpack.c.l.bf16 %v360
      %v393 = vunpack.c.l.bf16 %v361
      %v394 = vunpack.c.l.bf16 %v362
      %v395 = vunpack.c.l.bf16 %v363
      %v396 = vunpack.c.l.bf16 %v364
      %v397 = vunpack.c.l.bf16 %v365
      %v398 = vunpack.c.l.bf16 %v366
      %v399 = vunpack.c.l.bf16 %v367
      %v400 = vadd.f32 %v304, %v368
      %v401 = vadd.f32 %v305, %v369
      %v402 = vadd.f32 %v306, %v370
      %v403 = vadd.f32 %v307, %v371
      %v404 = vadd.f32 %v308, %v372
      %v405 = vadd.f32 %v309, %v373
      %v406 = vadd.f32 %v310, %v374
      %v407 = vadd.f32 %v311, %v375
      %v408 = vadd.f32 %v312, %v376
      %v409 = vadd.f32 %v313, %v377
      %v410 = vadd.f32 %v314, %v378
      %v411 = vadd.f32 %v315, %v379
      %v412 = vadd.f32 %v316, %v380
      %v413 = vadd.f32 %v317, %v381
      %v414 = vadd.f32 %v318, %v382
      %v415 = vadd.f32 %v319, %v383
      %v416 = vadd.f32 %v320, %v384
      %v417 = vadd.f32 %v321, %v385
      %v418 = vadd.f32 %v322, %v386
      %v419 = vadd.f32 %v323, %v387
      %v420 = vadd.f32 %v324, %v388
      %v421 = vadd.f32 %v325, %v389
      %v422 = vadd.f32 %v326, %v390
      %v423 = vadd.f32 %v327, %v391
      %v424 = vadd.f32 %v328, %v392
      %v425 = vadd.f32 %v329, %v393
      %v426 = vadd.f32 %v330, %v394
      %v427 = vadd.f32 %v331, %v395
      %v428 = vadd.f32 %v332, %v396
      %v429 = vadd.f32 %v333, %v397
      %v430 = vadd.f32 %v334, %v398
      %v431 = vadd.f32 %v335, %v399
      %vm432 = vcmp.gt.f32.partialorder %v262, 0.5
      %v433 = vmax.f32 %v400, 0.0
      %v434 = vmax.f32 %v401, 0.0
      %v435 = vmax.f32 %v402, 0.0
      %v436 = vmax.f32 %v403, 0.0
      %v437 = vmax.f32 %v404, 0.0
      %v438 = vmax.f32 %v405, 0.0
      %v439 = vmax.f32 %v406, 0.0
      %v440 = vmax.f32 %v407, 0.0
      %v441 = vmax.f32 %v408, 0.0
      %v442 = vmax.f32 %v409, 0.0
      %v443 = vmax.f32 %v410, 0.0
      %v444 = vmax.f32 %v411, 0.0
      %v445 = vmax.f32 %v412, 0.0
      %v446 = vmax.f32 %v413, 0.0
      %v447 = vmax.f32 %v414, 0.0
      %v448 = vmax.f32 %v415, 0.0
      %v449 = vmax.f32 %v416, 0.0
      %v450 = vmax.f32 %v417, 0.0
      %v451 = vmax.f32 %v418, 0.0
      %v452 = vmax.f32 %v419, 0.0
      %v453 = vmax.f32 %v420, 0.0
      %v454 = vmax.f32 %v421, 0.0
      %v455 = vmax.f32 %v422, 0.0
      %v456 = vmax.f32 %v423, 0.0
      %v457 = vmax.f32 %v424, 0.0
      %v458 = vmax.f32 %v425, 0.0
      %v459 = vmax.f32 %v426, 0.0
      %v460 = vmax.f32 %v427, 0.0
      %v461 = vmax.f32 %v428, 0.0
      %v462 = vmax.f32 %v429, 0.0
      %v463 = vmax.f32 %v430, 0.0
      %v464 = vmax.f32 %v431, 0.0
      %v465 = vsel %vm432, 1, 0
      %v466 = vlaneseq
      %v467 = vshrl.u32 %v466, 7
      %v468 = vsub.s32 0, %v467
      %v469 = vrot.slane %v465, %v468
      %vm470 = vcmp.eq.s32.totalorder %v469, 1
      %v471 = vsel %vm470, %v433, %v400
      %v472 = vsel %vm470, %v434, %v401
      %v473 = vsel %vm470, %v435, %v402
      %v474 = vsel %vm470, %v436, %v403
      %v475 = vsel %vm470, %v437, %v404
      %v476 = vsel %vm470, %v438, %v405
      %v477 = vsel %vm470, %v439, %v406
      %v478 = vsel %vm470, %v440, %v407
      %v479 = vsel %vm470, %v441, %v408
      %v480 = vsel %vm470, %v442, %v409
      %v481 = vsel %vm470, %v443, %v410
      %v482 = vsel %vm470, %v444, %v411
      %v483 = vsel %vm470, %v445, %v412
      %v484 = vsel %vm470, %v446, %v413
      %v485 = vsel %vm470, %v447, %v414
      %v486 = vsel %vm470, %v448, %v415
      %v487 = vsel %vm470, %v449, %v416
      %v488 = vsel %vm470, %v450, %v417
      %v489 = vsel %vm470, %v451, %v418
      %v490 = vsel %vm470, %v452, %v419
      %v491 = vsel %vm470, %v453, %v420
      %v492 = vsel %vm470, %v454, %v421
      %v493 = vsel %vm470, %v455, %v422
      %v494 = vsel %vm470, %v456, %v423
      %v495 = vsel %vm470, %v457, %v424
      %v496 = vsel %vm470, %v458, %v425
      %v497 = vsel %vm470, %v459, %v426
      %v498 = vsel %vm470, %v460, %v427
      %v499 = vsel %vm470, %v461, %v428
      %v500 = vsel %vm470, %v462, %v429
      %v501 = vsel %vm470, %v463, %v430
      %v502 = vsel %vm470, %v464, %v431
      %v503 = vlaneseq
      %v504 = vshrl.u32 %v503, 7
      %v505 = vsub.s32 0, %v504
      %v506 = vrot.slane %v263, %v505
      %v507 = vmul.f32 %v471, %v506
      %v508 = vmul.f32 %v472, %v506
      %v509 = vmul.f32 %v473, %v506
      %v510 = vmul.f32 %v474, %v506
      %v511 = vmul.f32 %v475, %v506
      %v512 = vmul.f32 %v476, %v506
      %v513 = vmul.f32 %v477, %v506
      %v514 = vmul.f32 %v478, %v506
      %v515 = vmul.f32 %v479, %v506
      %v516 = vmul.f32 %v480, %v506
      %v517 = vmul.f32 %v481, %v506
      %v518 = vmul.f32 %v482, %v506
      %v519 = vmul.f32 %v483, %v506
      %v520 = vmul.f32 %v484, %v506
      %v521 = vmul.f32 %v485, %v506
      %v522 = vmul.f32 %v486, %v506
      %v523 = vmul.f32 %v487, %v506
      %v524 = vmul.f32 %v488, %v506
      %v525 = vmul.f32 %v489, %v506
      %v526 = vmul.f32 %v490, %v506
      %v527 = vmul.f32 %v491, %v506
      %v528 = vmul.f32 %v492, %v506
      %v529 = vmul.f32 %v493, %v506
      %v530 = vmul.f32 %v494, %v506
      %v531 = vmul.f32 %v495, %v506
      %v532 = vmul.f32 %v496, %v506
      %v533 = vmul.f32 %v497, %v506
      %v534 = vmul.f32 %v498, %v506
      %v535 = vmul.f32 %v499, %v506
      %v536 = vmul.f32 %v500, %v506
      %v537 = vmul.f32 %v501, %v506
      %v538 = vmul.f32 %v502, %v506
      %v539 = vpack.c.bf16 %v508, %v507
      %v540 = vpack.c.bf16 %v510, %v509
      %v541 = vpack.c.bf16 %v512, %v511
      %v542 = vpack.c.bf16 %v514, %v513
      %v543 = vpack.c.bf16 %v516, %v515
      %v544 = vpack.c.bf16 %v518, %v517
      %v545 = vpack.c.bf16 %v520, %v519
      %v546 = vpack.c.bf16 %v522, %v521
      %v547 = vpack.c.bf16 %v524, %v523
      %v548 = vpack.c.bf16 %v526, %v525
      %v549 = vpack.c.bf16 %v528, %v527
      %v550 = vpack.c.bf16 %v530, %v529
      %v551 = vpack.c.bf16 %v532, %v531
      %v552 = vpack.c.bf16 %v534, %v533
      %v553 = vpack.c.bf16 %v536, %v535
      %v554 = vpack.c.bf16 %v538, %v537
      %v571 = vunpack.c.l.b16 %v539
      %v572 = vunpack.c.h.b16 %v539
      %v573 = vunpack.c.l.b16 %v540
      %v574 = vunpack.c.h.b16 %v540
      %v575 = vunpack.c.l.b16 %v541
      %v576 = vunpack.c.h.b16 %v541
      %v577 = vunpack.c.l.b16 %v542
      %v578 = vunpack.c.h.b16 %v542
      %v579 = vunpack.c.l.b16 %v543
      %v580 = vunpack.c.h.b16 %v543
      %v581 = vunpack.c.l.b16 %v544
      %v582 = vunpack.c.h.b16 %v544
      %v583 = vunpack.c.l.b16 %v545
      %v584 = vunpack.c.h.b16 %v545
      %v585 = vunpack.c.l.b16 %v546
      %v586 = vunpack.c.h.b16 %v546
      %v587 = vunpack.c.l.b16 %v547
      %v588 = vunpack.c.h.b16 %v547
      %v589 = vunpack.c.l.b16 %v548
      %v590 = vunpack.c.h.b16 %v548
      %v591 = vunpack.c.l.b16 %v549
      %v592 = vunpack.c.h.b16 %v549
      %v593 = vunpack.c.l.b16 %v550
      %v594 = vunpack.c.h.b16 %v550
      %v595 = vunpack.c.l.b16 %v551
      %v596 = vunpack.c.h.b16 %v551
      %v597 = vunpack.c.l.b16 %v552
      %v598 = vunpack.c.h.b16 %v552
      %v599 = vunpack.c.l.b16 %v553
      %v600 = vunpack.c.h.b16 %v553
      %v601 = vunpack.c.l.b16 %v554
      %v602 = vunpack.c.h.b16 %v554
      %v603 = vpack.c.b16 %v571, %v571
      %v604 = vpack.c.b16 %v572, %v572
      %v605 = vpack.c.b16 %v573, %v573
      %v606 = vpack.c.b16 %v574, %v574
      %v607 = vpack.c.b16 %v575, %v575
      %v608 = vpack.c.b16 %v576, %v576
      %v609 = vpack.c.b16 %v577, %v577
      %v610 = vpack.c.b16 %v578, %v578
      %v611 = vpack.c.b16 %v579, %v579
      %v612 = vpack.c.b16 %v580, %v580
      %v613 = vpack.c.b16 %v581, %v581
      %v614 = vpack.c.b16 %v582, %v582
      %v615 = vpack.c.b16 %v583, %v583
      %v616 = vpack.c.b16 %v584, %v584
      %v617 = vpack.c.b16 %v585, %v585
      %v618 = vpack.c.b16 %v586, %v586
      %v619 = vpack.c.b16 %v587, %v587
      %v620 = vpack.c.b16 %v588, %v588
      %v621 = vpack.c.b16 %v589, %v589
      %v622 = vpack.c.b16 %v590, %v590
      %v623 = vpack.c.b16 %v591, %v591
      %v624 = vpack.c.b16 %v592, %v592
      %v625 = vpack.c.b16 %v593, %v593
      %v626 = vpack.c.b16 %v594, %v594
      %v627 = vpack.c.b16 %v595, %v595
      %v628 = vpack.c.b16 %v596, %v596
      %v629 = vpack.c.b16 %v597, %v597
      %v630 = vpack.c.b16 %v598, %v598
      %v631 = vpack.c.b16 %v599, %v599
      %v632 = vpack.c.b16 %v600, %v600
      %v633 = vpack.c.b16 %v601, %v601
      %v634 = vpack.c.b16 %v602, %v602
      %667 = vst [vmem:[%s194] sm:$0xf] %v603
      %668 = vst [vmem:[%s194 + $0x4] sm:$0xf] %v604
      %669 = vst [vmem:[%s194 + $0x8] sm:$0xf] %v605
      %670 = vst [vmem:[%s194 + $0xc] sm:$0xf] %v606
      %671 = vst [vmem:[%s194 + $0x10] sm:$0xf] %v607
      %672 = vst [vmem:[%s194 + $0x14] sm:$0xf] %v608
      %673 = vst [vmem:[%s194 + $0x18] sm:$0xf] %v609
      %674 = vst [vmem:[%s194 + $0x1c] sm:$0xf] %v610
      %675 = vst [vmem:[%s194 + $0x20] sm:$0xf] %v611
      %676 = vst [vmem:[%s194 + $0x24] sm:$0xf] %v612
      %677 = vst [vmem:[%s194 + $0x28] sm:$0xf] %v613
      %678 = vst [vmem:[%s194 + $0x2c] sm:$0xf] %v614
      %679 = vst [vmem:[%s194 + $0x30] sm:$0xf] %v615
      %680 = vst [vmem:[%s194 + $0x34] sm:$0xf] %v616
      %681 = vst [vmem:[%s194 + $0x38] sm:$0xf] %v617
      %682 = vst [vmem:[%s194 + $0x3c] sm:$0xf] %v618
      %683 = vst [vmem:[%s194 + $0x40] sm:$0xf] %v619
      %684 = vst [vmem:[%s194 + $0x44] sm:$0xf] %v620
      %685 = vst [vmem:[%s194 + $0x48] sm:$0xf] %v621
      %686 = vst [vmem:[%s194 + $0x4c] sm:$0xf] %v622
      %687 = vst [vmem:[%s194 + $0x50] sm:$0xf] %v623
      %688 = vst [vmem:[%s194 + $0x54] sm:$0xf] %v624
      %689 = vst [vmem:[%s194 + $0x58] sm:$0xf] %v625
      %690 = vst [vmem:[%s194 + $0x5c] sm:$0xf] %v626
      %691 = vst [vmem:[%s194 + $0x60] sm:$0xf] %v627
      %692 = vst [vmem:[%s194 + $0x64] sm:$0xf] %v628
      %693 = vst [vmem:[%s194 + $0x68] sm:$0xf] %v629
      %694 = vst [vmem:[%s194 + $0x6c] sm:$0xf] %v630
      %695 = vst [vmem:[%s194 + $0x70] sm:$0xf] %v631
      %696 = vst [vmem:[%s194 + $0x74] sm:$0xf] %v632
      %697 = vst [vmem:[%s194 + $0x78] sm:$0xf] %v633
      %698 = vst [vmem:[%s194 + $0x7c] sm:$0xf] %v634
      %s699 = smul.u32 32, %s14
      %p700 = scmp.lt.s32.totalorder %s699, 63
      %s701 = scalar_select %p700, %s699, 63
      %s702 = smul.addr %s701, 4
      %s703 = scalar_lea.vmem %s3, %s702
      // Predicated region
      $region33: #{resnet_forward.13} parent=31 // pred_check
        %p704 = pneg %p105
      $region34: #{resnet_forward.13} parent=31 // pred_check_branch
        %706 = sbr.rel (%p704) target = $region36
      $region35: #{resnet_forward.13} parent=31 // pred_region
        %s707 = smul.u32 32, %s14
      $region36: #{resnet_forward.13} parent=31 // pred_fallthru
        _
    $region32: #{resnet_forward.13} parent=5 // pred_fallthru
      _
    %p708 = scmp.le.s32.totalorder 2, %s9
    // Predicated region
    $region37: #{resnet_forward.13} parent=5 // pred_check
      %p709 = pneg %p708
    $region38: #{resnet_forward.13} parent=5 // pred_check_branch
      %711 = sbr.rel (%p709) target = $region40
    $region39: #{resnet_forward.13} parent=5 // pred_region
      %s712 = ssub.s32 %s9, 2
      // Predicated region
      $region41: #{resnet_forward.13} parent=39 // pred_check
        %p713 = pneg %p111
      $region42: #{resnet_forward.13} parent=39 // pred_check_branch
        %715 = sbr.rel (%p713) target = $region44
      $region43: #{resnet_forward.13} parent=39 // pred_region
        %s716 = smul.u32 32, %s15
        %p717 = scmp.lt.s32.totalorder %s716, 63
        %s718 = scalar_select %p717, %s716, 63
        %s719 = smul.addr %s718, 4
        %s720 = scalar_lea.vmem %s3, %s719
      $region44: #{resnet_forward.13} parent=39 // pred_fallthru
        _
    $region40: #{resnet_forward.13} parent=5 // pred_fallthru
      _
  $region6: #{resnet_forward.13} parent=0 // loop_footer
    %s13 = sadd.s32 1, %s9
  $region7: #{resnet_forward.13} parent=0 // loop_footer_branch
    %8 = sbr.rel target = $region3
  $region8: #{resnet_forward.13} parent=0 // loop_exit
    _

// kernel: resnet_forward.14
$region0: #{resnet_forward.14}
  #allocation0 [shape = 'u32[]', space=smem, size = 0x4, offset = 0x4, fixed_abs, tag = 'smem constant byte address 0x4 - core index']
  #allocation1 [shape = 'u32[144,128]{1,0:T(1,128)}', space=vmem, size = 0x12000, scoped, tag = 'internal scratch']
  %s0 = inlined_call_operand.vmem [shape: bf16[128,640], index: 0, kind: input, shape index: {}]
  %s1 = inlined_call_operand.vmem [shape: bf16[640,256], index: 1, kind: input, shape index: {}]
  %s2 = inlined_call_operand.vmem [shape: bf16[128,256], index: 2, kind: output, shape index: {0}]
  %s3 = inlined_call_operand.vmem [shape: f32[8,256], index: 3, kind: output, shape index: {1}]
  %4 = xla_tuple %s2, %s3
  %s5 = sld [smem:[#allocation0]]
  $region26: #{resnet_forward.14} parent=0
    _
  %s7 = ssub.s32 1, %s5
  %s8 = scalar_select 0, %s7, %s5
  // Predicated region
  $region2: #{resnet_forward.14} parent=0 // pred_check
    _
  $region3: #{resnet_forward.14} parent=0 // pred_check_branch
    %10 = sbr.rel (0) target = $region5
  $region4: #{resnet_forward.14} parent=0 // pred_region
    _
  $region5: #{resnet_forward.14} parent=0 // pred_fallthru
    _
  // Predicated region
  $region6: #{resnet_forward.14} parent=0 // pred_check
    _
  $region7: #{resnet_forward.14} parent=0 // pred_check_branch
    %12 = sbr.rel (0) target = $region9
  $region8: #{resnet_forward.14} parent=0 // pred_region
    _
  $region9: #{resnet_forward.14} parent=0 // pred_fallthru
    _
  %v14 = vld [vmem:[%s0] sm:$0xff]
  %v15 = vld [vmem:[%s0 + $0x8] sm:$0xff]
  %v16 = vld [vmem:[%s0 + $0x10] sm:$0xf]
  %v17 = vld [vmem:[%s0 + $0x14] sm:$0xff]
  %v18 = vld [vmem:[%s0 + $0x1c] sm:$0xff]
  %v19 = vld [vmem:[%s0 + $0x24] sm:$0xf]
  %v20 = vld [vmem:[%s0 + $0x28] sm:$0xff]
  %v21 = vld [vmem:[%s0 + $0x30] sm:$0xff]
  %v22 = vld [vmem:[%s0 + $0x38] sm:$0xf]
  %v23 = vld [vmem:[%s0 + $0x3c] sm:$0xff]
  %v24 = vld [vmem:[%s0 + $0x44] sm:$0xff]
  %v25 = vld [vmem:[%s0 + $0x4c] sm:$0xf]
  %v26 = vld [vmem:[%s0 + $0x50] sm:$0xff]
  %v27 = vld [vmem:[%s0 + $0x58] sm:$0xff]
  %v28 = vld [vmem:[%s0 + $0x60] sm:$0xf]
  %v29 = vld [vmem:[%s0 + $0x64] sm:$0xff]
  %v30 = vld [vmem:[%s0 + $0x6c] sm:$0xff]
  %v31 = vld [vmem:[%s0 + $0x74] sm:$0xf]
  %v32 = vld [vmem:[%s0 + $0x78] sm:$0xff]
  %v33 = vld [vmem:[%s0 + $0x80] sm:$0xff]
  %v34 = vld [vmem:[%s0 + $0x88] sm:$0xf]
  %v35 = vld [vmem:[%s0 + $0x8c] sm:$0xff]
  %v36 = vld [vmem:[%s0 + $0x94] sm:$0xff]
  %v37 = vld [vmem:[%s0 + $0x9c] sm:$0xf]
  %v38 = vld [vmem:[%s0 + $0xa0] sm:$0xff]
  %v39 = vld [vmem:[%s0 + $0xa8] sm:$0xff]
  %v40 = vld [vmem:[%s0 + $0xb0] sm:$0xf]
  %v41 = vld [vmem:[%s0 + $0xb4] sm:$0xff]
  %v42 = vld [vmem:[%s0 + $0xbc] sm:$0xff]
  %v43 = vld [vmem:[%s0 + $0xc4] sm:$0xf]
  %v44 = vld [vmem:[%s0 + $0xc8] sm:$0xff]
  %v45 = vld [vmem:[%s0 + $0xd0] sm:$0xff]
  %v46 = vld [vmem:[%s0 + $0xd8] sm:$0xf]
  %v47 = vld [vmem:[%s0 + $0xdc] sm:$0xff]
  %v48 = vld [vmem:[%s0 + $0xe4] sm:$0xff]
  %v49 = vld [vmem:[%s0 + $0xec] sm:$0xf]
  %v50 = vld [vmem:[%s0 + $0xf0] sm:$0xff]
  %v51 = vld [vmem:[%s0 + $0xf8] sm:$0xff]
  %v52 = vld [vmem:[%s0 + $0x100] sm:$0xf]
  %v53 = vld [vmem:[%s0 + $0x104] sm:$0xff]
  %v54 = vld [vmem:[%s0 + $0x10c] sm:$0xff]
  %v55 = vld [vmem:[%s0 + $0x114] sm:$0xf]
  %v56 = vld [vmem:[%s0 + $0x118] sm:$0xff]
  %v57 = vld [vmem:[%s0 + $0x120] sm:$0xff]
  %v58 = vld [vmem:[%s0 + $0x128] sm:$0xf]
  %v59 = vld [vmem:[%s0 + $0x12c] sm:$0xff]
  %v60 = vld [vmem:[%s0 + $0x134] sm:$0xff]
  %v61 = vld [vmem:[%s0 + $0x13c] sm:$0xf]
  %v62 = vld [vmem:[%s1] sm:$0xff]
  %v63 = vld [vmem:[%s1 + $0x8] sm:$0xff]
  %v64 = vld [vmem:[%s1 + $0x10] sm:$0xff]
  %v65 = vld [vmem:[%s1 + $0x18] sm:$0xff]
  %v66 = vld [vmem:[%s1 + $0x20] sm:$0xff]
  %v67 = vld [vmem:[%s1 + $0x28] sm:$0xff]
  %v68 = vld [vmem:[%s1 + $0x30] sm:$0xff]
  %v69 = vld [vmem:[%s1 + $0x38] sm:$0xff]
  %v70 = vld [vmem:[%s1 + $0x40] sm:$0xff]
  %v71 = vld [vmem:[%s1 + $0x48] sm:$0xff]
  %v72 = vld [vmem:[%s1 + $0x50] sm:$0xff]
  %v73 = vld [vmem:[%s1 + $0x58] sm:$0xff]
  %v74 = vld [vmem:[%s1 + $0x60] sm:$0xff]
  %v75 = vld [vmem:[%s1 + $0x68] sm:$0xff]
  %v76 = vld [vmem:[%s1 + $0x70] sm:$0xff]
  %v77 = vld [vmem:[%s1 + $0x78] sm:$0xff]
  %v78 = vld [vmem:[%s1 + $0x80] sm:$0xff]
  %v79 = vld [vmem:[%s1 + $0x88] sm:$0xff]
  %v80 = vld [vmem:[%s1 + $0x90] sm:$0xff]
  %v81 = vld [vmem:[%s1 + $0x98] sm:$0xff]
  %v82 = vld [vmem:[%s1 + $0xa0] sm:$0xff]
  %v83 = vld [vmem:[%s1 + $0xa8] sm:$0xff]
  %v84 = vld [vmem:[%s1 + $0xb0] sm:$0xff]
  %v85 = vld [vmem:[%s1 + $0xb8] sm:$0xff]
  %v86 = vld [vmem:[%s1 + $0xc0] sm:$0xff]
  %v87 = vld [vmem:[%s1 + $0xc8] sm:$0xff]
  %v88 = vld [vmem:[%s1 + $0xd0] sm:$0xff]
  %v89 = vld [vmem:[%s1 + $0xd8] sm:$0xff]
  %v90 = vld [vmem:[%s1 + $0xe0] sm:$0xff]
  %v91 = vld [vmem:[%s1 + $0xe8] sm:$0xff]
  %v92 = vld [vmem:[%s1 + $0xf0] sm:$0xff]
  %v93 = vld [vmem:[%s1 + $0xf8] sm:$0xff]
  %v94 = vld [vmem:[%s1 + $0x100] sm:$0xff]
  %v95 = vld [vmem:[%s1 + $0x108] sm:$0xff]
  %v96 = vld [vmem:[%s1 + $0x110] sm:$0xff]
  %v97 = vld [vmem:[%s1 + $0x118] sm:$0xff]
  %v98 = vld [vmem:[%s1 + $0x120] sm:$0xff]
  %v99 = vld [vmem:[%s1 + $0x128] sm:$0xff]
  %v100 = vld [vmem:[%s1 + $0x130] sm:$0xff]
  %v101 = vld [vmem:[%s1 + $0x138] sm:$0xff]
  %v102 = vld [vmem:[%s1 + $0x140] sm:$0xff]
  %v103 = vld [vmem:[%s1 + $0x148] sm:$0xff]
  %v104 = vld [vmem:[%s1 + $0x150] sm:$0xff]
  %v105 = vld [vmem:[%s1 + $0x158] sm:$0xff]
  %v106 = vld [vmem:[%s1 + $0x160] sm:$0xff]
  %v107 = vld [vmem:[%s1 + $0x168] sm:$0xff]
  %v108 = vld [vmem:[%s1 + $0x170] sm:$0xff]
  %v109 = vld [vmem:[%s1 + $0x178] sm:$0xff]
  %v110 = vld [vmem:[%s1 + $0x180] sm:$0xff]
  %v111 = vld [vmem:[%s1 + $0x188] sm:$0xff]
  %v112 = vld [vmem:[%s1 + $0x190] sm:$0xff]
  %v113 = vld [vmem:[%s1 + $0x198] sm:$0xff]
  %v114 = vld [vmem:[%s1 + $0x1a0] sm:$0xff]
  %v115 = vld [vmem:[%s1 + $0x1a8] sm:$0xff]
  %v116 = vld [vmem:[%s1 + $0x1b0] sm:$0xff]
  %v117 = vld [vmem:[%s1 + $0x1b8] sm:$0xff]
  %v118 = vld [vmem:[%s1 + $0x1c0] sm:$0xff]
  %v119 = vld [vmem:[%s1 + $0x1c8] sm:$0xff]
  %v120 = vld [vmem:[%s1 + $0x1d0] sm:$0xff]
  %v121 = vld [vmem:[%s1 + $0x1d8] sm:$0xff]
  %v122 = vld [vmem:[%s1 + $0x1e0] sm:$0xff]
  %v123 = vld [vmem:[%s1 + $0x1e8] sm:$0xff]
  %v124 = vld [vmem:[%s1 + $0x1f0] sm:$0xff]
  %v125 = vld [vmem:[%s1 + $0x1f8] sm:$0xff]
  %v126 = vld [vmem:[%s1 + $0x200] sm:$0xff]
  %v127 = vld [vmem:[%s1 + $0x208] sm:$0xff]
  %v128 = vld [vmem:[%s1 + $0x210] sm:$0xff]
  %v129 = vld [vmem:[%s1 + $0x218] sm:$0xff]
  %v130 = vld [vmem:[%s1 + $0x220] sm:$0xff]
  %v131 = vld [vmem:[%s1 + $0x228] sm:$0xff]
  %v132 = vld [vmem:[%s1 + $0x230] sm:$0xff]
  %v133 = vld [vmem:[%s1 + $0x238] sm:$0xff]
  %v134 = vld [vmem:[%s1 + $0x240] sm:$0xff]
  %v135 = vld [vmem:[%s1 + $0x248] sm:$0xff]
  %v136 = vld [vmem:[%s1 + $0x250] sm:$0xff]
  %v137 = vld [vmem:[%s1 + $0x258] sm:$0xff]
  %v138 = vld [vmem:[%s1 + $0x260] sm:$0xff]
  %v139 = vld [vmem:[%s1 + $0x268] sm:$0xff]
  %v140 = vld [vmem:[%s1 + $0x270] sm:$0xff]
  %v141 = vld [vmem:[%s1 + $0x278] sm:$0xff]
  %v190 = vunpack.c.l.b16 %v14
  %v191 = vunpack.c.h.b16 %v14
  %v192 = vunpack.c.l.b16 %v15
  %v193 = vunpack.c.h.b16 %v15
  %v194 = vunpack.c.l.b16 %v16
  %v195 = vunpack.c.l.b16 %v17
  %v196 = vunpack.c.h.b16 %v17
  %v197 = vunpack.c.l.b16 %v18
  %v198 = vunpack.c.h.b16 %v18
  %v199 = vunpack.c.l.b16 %v19
  %v200 = vunpack.c.l.b16 %v20
  %v201 = vunpack.c.h.b16 %v20
  %v202 = vunpack.c.l.b16 %v21
  %v203 = vunpack.c.h.b16 %v21
  %v204 = vunpack.c.l.b16 %v22
  %v205 = vunpack.c.l.b16 %v23
  %v206 = vunpack.c.h.b16 %v23
  %v207 = vunpack.c.l.b16 %v24
  %v208 = vunpack.c.h.b16 %v24
  %v209 = vunpack.c.l.b16 %v25
  %v210 = vunpack.c.l.b16 %v26
  %v211 = vunpack.c.h.b16 %v26
  %v212 = vunpack.c.l.b16 %v27
  %v213 = vunpack.c.h.b16 %v27
  %v214 = vunpack.c.l.b16 %v28
  %v215 = vunpack.c.l.b16 %v29
  %v216 = vunpack.c.h.b16 %v29
  %v217 = vunpack.c.l.b16 %v30
  %v218 = vunpack.c.h.b16 %v30
  %v219 = vunpack.c.l.b16 %v31
  %v220 = vunpack.c.l.b16 %v32
  %v221 = vunpack.c.h.b16 %v32
  %v222 = vunpack.c.l.b16 %v33
  %v223 = vunpack.c.h.b16 %v33
  %v224 = vunpack.c.l.b16 %v34
  %v225 = vunpack.c.l.b16 %v35
  %v226 = vunpack.c.h.b16 %v35
  %v227 = vunpack.c.l.b16 %v36
  %v228 = vunpack.c.h.b16 %v36
  %v229 = vunpack.c.l.b16 %v37
  %v230 = vunpack.c.l.b16 %v38
  %v231 = vunpack.c.h.b16 %v38
  %v232 = vunpack.c.l.b16 %v39
  %v233 = vunpack.c.h.b16 %v39
  %v234 = vunpack.c.l.b16 %v40
  %v235 = vunpack.c.l.b16 %v41
  %v236 = vunpack.c.h.b16 %v41
  %v237 = vunpack.c.l.b16 %v42
  %v238 = vunpack.c.h.b16 %v42
  %v239 = vunpack.c.l.b16 %v43
  %v240 = vunpack.c.l.b16 %v44
  %v241 = vunpack.c.h.b16 %v44
  %v242 = vunpack.c.l.b16 %v45
  %v243 = vunpack.c.h.b16 %v45
  %v244 = vunpack.c.l.b16 %v46
  %v245 = vunpack.c.l.b16 %v47
  %v246 = vunpack.c.h.b16 %v47
  %v247 = vunpack.c.l.b16 %v48
  %v248 = vunpack.c.h.b16 %v48
  %v249 = vunpack.c.l.b16 %v49
  %v250 = vunpack.c.l.b16 %v50
  %v251 = vunpack.c.h.b16 %v50
  %v252 = vunpack.c.l.b16 %v51
  %v253 = vunpack.c.h.b16 %v51
  %v254 = vunpack.c.l.b16 %v52
  %v255 = vunpack.c.l.b16 %v53
  %v256 = vunpack.c.h.b16 %v53
  %v257 = vunpack.c.l.b16 %v54
  %v258 = vunpack.c.h.b16 %v54
  %v259 = vunpack.c.l.b16 %v55
  %v260 = vunpack.c.l.b16 %v56
  %v261 = vunpack.c.h.b16 %v56
  %v262 = vunpack.c.l.b16 %v57
  %v263 = vunpack.c.h.b16 %v57
  %v264 = vunpack.c.l.b16 %v58
  %v265 = vunpack.c.l.b16 %v59
  %v266 = vunpack.c.h.b16 %v59
  %v267 = vunpack.c.l.b16 %v60
  %v268 = vunpack.c.h.b16 %v60
  %v269 = vunpack.c.l.b16 %v61
  %v270 = vpack.c.b16 %v195, %v190
  %v271 = vpack.c.b16 %v196, %v191
  %v272 = vpack.c.b16 %v197, %v192
  %v273 = vpack.c.b16 %v198, %v193
  %v274 = vpack.c.b16 %v199, %v194
  %v275 = vpack.c.b16 %v205, %v200
  %v276 = vpack.c.b16 %v206, %v201
  %v277 = vpack.c.b16 %v207, %v202
  %v278 = vpack.c.b16 %v208, %v203
  %v279 = vpack.c.b16 %v209, %v204
  %v280 = vpack.c.b16 %v215, %v210
  %v281 = vpack.c.b16 %v216, %v211
  %v282 = vpack.c.b16 %v217, %v212
  %v283 = vpack.c.b16 %v218, %v213
  %v284 = vpack.c.b16 %v219, %v214
  %v285 = vpack.c.b16 %v225, %v220
  %v286 = vpack.c.b16 %v226, %v221
  %v287 = vpack.c.b16 %v227, %v222
  %v288 = vpack.c.b16 %v228, %v223
  %v289 = vpack.c.b16 %v229, %v224
  %v290 = vpack.c.b16 %v235, %v230
  %v291 = vpack.c.b16 %v236, %v231
  %v292 = vpack.c.b16 %v237, %v232
  %v293 = vpack.c.b16 %v238, %v233
  %v294 = vpack.c.b16 %v239, %v234
  %v295 = vpack.c.b16 %v245, %v240
  %v296 = vpack.c.b16 %v246, %v241
  %v297 = vpack.c.b16 %v247, %v242
  %v298 = vpack.c.b16 %v248, %v243
  %v299 = vpack.c.b16 %v249, %v244
  %v300 = vpack.c.b16 %v255, %v250
  %v301 = vpack.c.b16 %v256, %v251
  %v302 = vpack.c.b16 %v257, %v252
  %v303 = vpack.c.b16 %v258, %v253
  %v304 = vpack.c.b16 %v259, %v254
  %v305 = vpack.c.b16 %v265, %v260
  %v306 = vpack.c.b16 %v266, %v261
  %v307 = vpack.c.b16 %v267, %v262
  %v308 = vpack.c.b16 %v268, %v263
  %v309 = vpack.c.b16 %v269, %v264
  %v430 = vunpack.c.l.b16 %v62
  %v431 = vunpack.c.h.b16 %v62
  %v432 = vunpack.c.l.b16 %v63
  %v433 = vunpack.c.h.b16 %v63
  %v434 = vunpack.c.l.b16 %v64
  %v435 = vunpack.c.h.b16 %v64
  %v436 = vunpack.c.l.b16 %v65
  %v437 = vunpack.c.h.b16 %v65
  %v438 = vunpack.c.l.b16 %v66
  %v439 = vunpack.c.h.b16 %v66
  %v440 = vunpack.c.l.b16 %v67
  %v441 = vunpack.c.h.b16 %v67
  %v442 = vunpack.c.l.b16 %v68
  %v443 = vunpack.c.h.b16 %v68
  %v444 = vunpack.c.l.b16 %v69
  %v445 = vunpack.c.h.b16 %v69
  %v446 = vunpack.c.l.b16 %v70
  %v447 = vunpack.c.h.b16 %v70
  %v448 = vunpack.c.l.b16 %v71
  %v449 = vunpack.c.h.b16 %v71
  %v450 = vunpack.c.l.b16 %v72
  %v451 = vunpack.c.h.b16 %v72
  %v452 = vunpack.c.l.b16 %v73
  %v453 = vunpack.c.h.b16 %v73
  %v454 = vunpack.c.l.b16 %v74
  %v455 = vunpack.c.h.b16 %v74
  %v456 = vunpack.c.l.b16 %v75
  %v457 = vunpack.c.h.b16 %v75
  %v458 = vunpack.c.l.b16 %v76
  %v459 = vunpack.c.h.b16 %v76
  %v460 = vunpack.c.l.b16 %v77
  %v461 = vunpack.c.h.b16 %v77
  %v462 = vunpack.c.l.b16 %v78
  %v463 = vunpack.c.h.b16 %v78
  %v464 = vunpack.c.l.b16 %v79
  %v465 = vunpack.c.h.b16 %v79
  %v466 = vunpack.c.l.b16 %v80
  %v467 = vunpack.c.h.b16 %v80
  %v468 = vunpack.c.l.b16 %v81
  %v469 = vunpack.c.h.b16 %v81
  %v470 = vunpack.c.l.b16 %v82
  %v471 = vunpack.c.h.b16 %v82
  %v472 = vunpack.c.l.b16 %v83
  %v473 = vunpack.c.h.b16 %v83
  %v474 = vunpack.c.l.b16 %v84
  %v475 = vunpack.c.h.b16 %v84
  %v476 = vunpack.c.l.b16 %v85
  %v477 = vunpack.c.h.b16 %v85
  %v478 = vunpack.c.l.b16 %v86
  %v479 = vunpack.c.h.b16 %v86
  %v480 = vunpack.c.l.b16 %v87
  %v481 = vunpack.c.h.b16 %v87
  %v482 = vunpack.c.l.b16 %v88
  %v483 = vunpack.c.h.b16 %v88
  %v484 = vunpack.c.l.b16 %v89
  %v485 = vunpack.c.h.b16 %v89
  %v486 = vunpack.c.l.b16 %v90
  %v487 = vunpack.c.h.b16 %v90
  %v488 = vunpack.c.l.b16 %v91
  %v489 = vunpack.c.h.b16 %v91
  %v490 = vunpack.c.l.b16 %v92
  %v491 = vunpack.c.h.b16 %v92
  %v492 = vunpack.c.l.b16 %v93
  %v493 = vunpack.c.h.b16 %v93
  %v494 = vunpack.c.l.b16 %v94
  %v495 = vunpack.c.h.b16 %v94
  %v496 = vunpack.c.l.b16 %v95
  %v497 = vunpack.c.h.b16 %v95
  %v498 = vunpack.c.l.b16 %v96
  %v499 = vunpack.c.h.b16 %v96
  %v500 = vunpack.c.l.b16 %v97
  %v501 = vunpack.c.h.b16 %v97
  %v502 = vunpack.c.l.b16 %v98
  %v503 = vunpack.c.h.b16 %v98
  %v504 = vunpack.c.l.b16 %v99
  %v505 = vunpack.c.h.b16 %v99
  %v506 = vunpack.c.l.b16 %v100
  %v507 = vunpack.c.h.b16 %v100
  %v508 = vunpack.c.l.b16 %v101
  %v509 = vunpack.c.h.b16 %v101
  %v510 = vunpack.c.l.b16 %v102
  %v511 = vunpack.c.h.b16 %v102
  %v512 = vunpack.c.l.b16 %v103
  %v513 = vunpack.c.h.b16 %v103
  %v514 = vunpack.c.l.b16 %v104
  %v515 = vunpack.c.h.b16 %v104
  %v516 = vunpack.c.l.b16 %v105
  %v517 = vunpack.c.h.b16 %v105
  %v518 = vunpack.c.l.b16 %v106
  %v519 = vunpack.c.h.b16 %v106
  %v520 = vunpack.c.l.b16 %v107
  %v521 = vunpack.c.h.b16 %v107
  %v522 = vunpack.c.l.b16 %v108
  %v523 = vunpack.c.h.b16 %v108
  %v524 = vunpack.c.l.b16 %v109
  %v525 = vunpack.c.h.b16 %v109
  %v526 = vunpack.c.l.b16 %v110
  %v527 = vunpack.c.h.b16 %v110
  %v528 = vunpack.c.l.b16 %v111
  %v529 = vunpack.c.h.b16 %v111
  %v530 = vunpack.c.l.b16 %v112
  %v531 = vunpack.c.h.b16 %v112
  %v532 = vunpack.c.l.b16 %v113
  %v533 = vunpack.c.h.b16 %v113
  %v534 = vunpack.c.l.b16 %v114
  %v535 = vunpack.c.h.b16 %v114
  %v536 = vunpack.c.l.b16 %v115
  %v537 = vunpack.c.h.b16 %v115
  %v538 = vunpack.c.l.b16 %v116
  %v539 = vunpack.c.h.b16 %v116
  %v540 = vunpack.c.l.b16 %v117
  %v541 = vunpack.c.h.b16 %v117
  %v542 = vunpack.c.l.b16 %v118
  %v543 = vunpack.c.h.b16 %v118
  %v544 = vunpack.c.l.b16 %v119
  %v545 = vunpack.c.h.b16 %v119
  %v546 = vunpack.c.l.b16 %v120
  %v547 = vunpack.c.h.b16 %v120
  %v548 = vunpack.c.l.b16 %v121
  %v549 = vunpack.c.h.b16 %v121
  %v550 = vunpack.c.l.b16 %v122
  %v551 = vunpack.c.h.b16 %v122
  %v552 = vunpack.c.l.b16 %v123
  %v553 = vunpack.c.h.b16 %v123
  %v554 = vunpack.c.l.b16 %v124
  %v555 = vunpack.c.h.b16 %v124
  %v556 = vunpack.c.l.b16 %v125
  %v557 = vunpack.c.h.b16 %v125
  %v558 = vunpack.c.l.b16 %v126
  %v559 = vunpack.c.h.b16 %v126
  %v560 = vunpack.c.l.b16 %v127
  %v561 = vunpack.c.h.b16 %v127
  %v562 = vunpack.c.l.b16 %v128
  %v563 = vunpack.c.h.b16 %v128
  %v564 = vunpack.c.l.b16 %v129
  %v565 = vunpack.c.h.b16 %v129
  %v566 = vunpack.c.l.b16 %v130
  %v567 = vunpack.c.h.b16 %v130
  %v568 = vunpack.c.l.b16 %v131
  %v569 = vunpack.c.h.b16 %v131
  %v570 = vunpack.c.l.b16 %v132
  %v571 = vunpack.c.h.b16 %v132
  %v572 = vunpack.c.l.b16 %v133
  %v573 = vunpack.c.h.b16 %v133
  %v574 = vunpack.c.l.b16 %v134
  %v575 = vunpack.c.h.b16 %v134
  %v576 = vunpack.c.l.b16 %v135
  %v577 = vunpack.c.h.b16 %v135
  %v578 = vunpack.c.l.b16 %v136
  %v579 = vunpack.c.h.b16 %v136
  %v580 = vunpack.c.l.b16 %v137
  %v581 = vunpack.c.h.b16 %v137
  %v582 = vunpack.c.l.b16 %v138
  %v583 = vunpack.c.h.b16 %v138
  %v584 = vunpack.c.l.b16 %v139
  %v585 = vunpack.c.h.b16 %v139
  %v586 = vunpack.c.l.b16 %v140
  %v587 = vunpack.c.h.b16 %v140
  %v588 = vunpack.c.l.b16 %v141
  %v589 = vunpack.c.h.b16 %v141
  %v590 = vpack.c.b16 %v432, %v430
  %v591 = vpack.c.b16 %v433, %v431
  %v592 = vpack.c.b16 %v436, %v434
  %v593 = vpack.c.b16 %v437, %v435
  %v594 = vpack.c.b16 %v440, %v438
  %v595 = vpack.c.b16 %v441, %v439
  %v596 = vpack.c.b16 %v444, %v442
  %v597 = vpack.c.b16 %v445, %v443
  %v598 = vpack.c.b16 %v448, %v446
  %v599 = vpack.c.b16 %v449, %v447
  %v600 = vpack.c.b16 %v452, %v450
  %v601 = vpack.c.b16 %v453, %v451
  %v602 = vpack.c.b16 %v456, %v454
  %v603 = vpack.c.b16 %v457, %v455
  %v604 = vpack.c.b16 %v460, %v458
  %v605 = vpack.c.b16 %v461, %v459
  %v606 = vpack.c.b16 %v464, %v462
  %v607 = vpack.c.b16 %v465, %v463
  %v608 = vpack.c.b16 %v468, %v466
  %v609 = vpack.c.b16 %v469, %v467
  %v610 = vpack.c.b16 %v472, %v470
  %v611 = vpack.c.b16 %v473, %v471
  %v612 = vpack.c.b16 %v476, %v474
  %v613 = vpack.c.b16 %v477, %v475
  %v614 = vpack.c.b16 %v480, %v478
  %v615 = vpack.c.b16 %v481, %v479
  %v616 = vpack.c.b16 %v484, %v482
  %v617 = vpack.c.b16 %v485, %v483
  %v618 = vpack.c.b16 %v488, %v486
  %v619 = vpack.c.b16 %v489, %v487
  %v620 = vpack.c.b16 %v492, %v490
  %v621 = vpack.c.b16 %v493, %v491
  %v622 = vpack.c.b16 %v496, %v494
  %v623 = vpack.c.b16 %v497, %v495
  %v624 = vpack.c.b16 %v500, %v498
  %v625 = vpack.c.b16 %v501, %v499
  %v626 = vpack.c.b16 %v504, %v502
  %v627 = vpack.c.b16 %v505, %v503
  %v628 = vpack.c.b16 %v508, %v506
  %v629 = vpack.c.b16 %v509, %v507
  %v630 = vpack.c.b16 %v512, %v510
  %v631 = vpack.c.b16 %v513, %v511
  %v632 = vpack.c.b16 %v516, %v514
  %v633 = vpack.c.b16 %v517, %v515
  %v634 = vpack.c.b16 %v520, %v518
  %v635 = vpack.c.b16 %v521, %v519
  %v636 = vpack.c.b16 %v524, %v522
  %v637 = vpack.c.b16 %v525, %v523
  %v638 = vpack.c.b16 %v528, %v526
  %v639 = vpack.c.b16 %v529, %v527
  %v640 = vpack.c.b16 %v532, %v530
  %v641 = vpack.c.b16 %v533, %v531
  %v642 = vpack.c.b16 %v536, %v534
  %v643 = vpack.c.b16 %v537, %v535
  %v644 = vpack.c.b16 %v540, %v538
  %v645 = vpack.c.b16 %v541, %v539
  %v646 = vpack.c.b16 %v544, %v542
  %v647 = vpack.c.b16 %v545, %v543
  %v648 = vpack.c.b16 %v548, %v546
  %v649 = vpack.c.b16 %v549, %v547
  %v650 = vpack.c.b16 %v552, %v550
  %v651 = vpack.c.b16 %v553, %v551
  %v652 = vpack.c.b16 %v556, %v554
  %v653 = vpack.c.b16 %v557, %v555
  %v654 = vpack.c.b16 %v560, %v558
  %v655 = vpack.c.b16 %v561, %v559
  %v656 = vpack.c.b16 %v564, %v562
  %v657 = vpack.c.b16 %v565, %v563
  %v658 = vpack.c.b16 %v568, %v566
  %v659 = vpack.c.b16 %v569, %v567
  %v660 = vpack.c.b16 %v572, %v570
  %v661 = vpack.c.b16 %v573, %v571
  %v662 = vpack.c.b16 %v576, %v574
  %v663 = vpack.c.b16 %v577, %v575
  %v664 = vpack.c.b16 %v580, %v578
  %v665 = vpack.c.b16 %v581, %v579
  %v666 = vpack.c.b16 %v584, %v582
  %v667 = vpack.c.b16 %v585, %v583
  %v668 = vpack.c.b16 %v588, %v586
  %v669 = vpack.c.b16 %v589, %v587
  %750 = vmatprep.subr.bf16.mxu0 %v591
  %751 = vmatpush1.bf16.msra.mxu0 %v590
  %752 = vmatprep.subr.bf16.mxu0 %v593
  %753 = vmatpush1.bf16.msra.mxu0 %v592
  %754 = vmatprep.subr.bf16.mxu0 %v595
  %755 = vmatpush1.bf16.msra.mxu0 %v594
  %756 = vmatprep.subr.bf16.mxu0 %v597
  %757 = vmatpush1.bf16.msra.mxu0 %v596
  %758 = vmatprep.subr.bf16.mxu0 %v599
  %759 = vmatpush1.bf16.msra.mxu0 %v598
  %760 = vmatprep.subr.bf16.mxu0 %v601
  %761 = vmatpush1.bf16.msra.mxu0 %v600
  %762 = vmatprep.subr.bf16.mxu0 %v603
  %763 = vmatpush1.bf16.msra.mxu0 %v602
  %764 = vmatprep.subr.bf16.mxu0 %v605
  %765 = vmatpush1.bf16.msra.mxu0 %v604
  %766 = vmatprep.subr.bf16.mxu0 %v607
  %767 = vmatpush1.bf16.msra.mxu0 %v606
  %768 = vmatprep.subr.bf16.mxu0 %v609
  %769 = vmatpush1.bf16.msra.mxu0 %v608
  %770 = vmatprep.subr.bf16.mxu0 %v611
  %771 = vmatpush1.bf16.msra.mxu0 %v610
  %772 = vmatprep.subr.bf16.mxu0 %v613
  %773 = vmatpush1.bf16.msra.mxu0 %v612
  %774 = vmatprep.subr.bf16.mxu0 %v615
  %775 = vmatpush1.bf16.msra.mxu0 %v614
  %776 = vmatprep.subr.bf16.mxu0 %v617
  %777 = vmatpush1.bf16.msra.mxu0 %v616
  %778 = vmatprep.subr.bf16.mxu0 %v619
  %779 = vmatpush1.bf16.msra.mxu0 %v618
  %780 = vmatprep.subr.bf16.mxu0 %v621
  %781 = vmatpush1.bf16.msra.mxu0 %v620
  %782 = vmatprep.mubr.bf16.mxu0 %v271
  %783 = vmatmul.mubr.bf16.gmra.mrb[0].mxu0 %v270
  %v784 = vpop.f32.mrb[0].mxu0
  %v785 = vadd.f32 0.0, %v784
  %v786 = vpop.f32.mrb[0].mxu0
  %v787 = vadd.f32 0.0, %v786
  %v788 = vpop.f32.mrb[0].mxu0
  %v789 = vadd.f32 0.0, %v788
  %v790 = vpop.f32.mrb[0].mxu0
  %v791 = vadd.f32 0.0, %v790
  %792 = vmatprep.mubr.bf16.mxu0 %v276
  %793 = vmatmul.mubr.bf16.gmra.mrb[0].mxu0 %v275
  %v794 = vpop.f32.mrb[0].mxu0
  %v795 = vadd.f32 0.0, %v794
  %v796 = vpop.f32.mrb[0].mxu0
  %v797 = vadd.f32 0.0, %v796
  %v798 = vpop.f32.mrb[0].mxu0
  %v799 = vadd.f32 0.0, %v798
  %v800 = vpop.f32.mrb[0].mxu0
  %v801 = vadd.f32 0.0, %v800
  %802 = vmatprep.mubr.bf16.mxu0 %v281
  %803 = vmatmul.mubr.bf16.gmra.mrb[0].mxu0 %v280
  %v804 = vpop.f32.mrb[0].mxu0
  %v805 = vadd.f32 0.0, %v804
  %v806 = vpop.f32.mrb[0].mxu0
  %v807 = vadd.f32 0.0, %v806
  %v808 = vpop.f32.mrb[0].mxu0
  %v809 = vadd.f32 0.0, %v808
  %v810 = vpop.f32.mrb[0].mxu0
  %v811 = vadd.f32 0.0, %v810
  %812 = vmatprep.mubr.bf16.mxu0 %v286
  %813 = vmatmul.mubr.bf16.gmra.mrb[0].mxu0 %v285
  %v814 = vpop.f32.mrb[0].mxu0
  %v815 = vadd.f32 0.0, %v814
  %v816 = vpop.f32.mrb[0].mxu0
  %v817 = vadd.f32 0.0, %v816
  %v818 = vpop.f32.mrb[0].mxu0
  %v819 = vadd.f32 0.0, %v818
  %v820 = vpop.f32.mrb[0].mxu0
  %v821 = vadd.f32 0.0, %v820
  %822 = vmatprep.mubr.bf16.mxu0 %v291
  %823 = vmatmul.mubr.bf16.gmra.mrb[0].mxu0 %v290
  %v824 = vpop.f32.mrb[0].mxu0
  %v825 = vadd.f32 0.0, %v824
  %v826 = vpop.f32.mrb[0].mxu0
  %v827 = vadd.f32 0.0, %v826
  %v828 = vpop.f32.mrb[0].mxu0
  %v829 = vadd.f32 0.0, %v828
  %v830 = vpop.f32.mrb[0].mxu0
  %v831 = vadd.f32 0.0, %v830
  %832 = vmatprep.mubr.bf16.mxu0 %v296
  %833 = vmatmul.mubr.bf16.gmra.mrb[0].mxu0 %v295
  %v834 = vpop.f32.mrb[0].mxu0
  %v835 = vadd.f32 0.0, %v834
  %v836 = vpop.f32.mrb[0].mxu0
  %v837 = vadd.f32 0.0, %v836
  %v838 = vpop.f32.mrb[0].mxu0
  %v839 = vadd.f32 0.0, %v838
  %v840 = vpop.f32.mrb[0].mxu0
  %v841 = vadd.f32 0.0, %v840
  %842 = vmatprep.mubr.bf16.mxu0 %v301
  %843 = vmatmul.mubr.bf16.gmra.mrb[0].mxu0 %v300
  %v844 = vpop.f32.mrb[0].mxu0
  %v845 = vadd.f32 0.0, %v844
  %v846 = vpop.f32.mrb[0].mxu0
  %v847 = vadd.f32 0.0, %v846
  %v848 = vpop.f32.mrb[0].mxu0
  %v849 = vadd.f32 0.0, %v848
  %v850 = vpop.f32.mrb[0].mxu0
  %v851 = vadd.f32 0.0, %v850
  %852 = vmatprep.mubr.bf16.mxu0 %v306
  %853 = vmatmul.mubr.bf16.gmra.mrb[0].mxu0 %v305
  %v854 = vpop.f32.mrb[0].mxu0
  %v855 = vadd.f32 0.0, %v854
  %v856 = vpop.f32.mrb[0].mxu0
  %v857 = vadd.f32 0.0, %v856
  %v858 = vpop.f32.mrb[0].mxu0
  %v859 = vadd.f32 0.0, %v858
  %v860 = vpop.f32.mrb[0].mxu0
  %v861 = vadd.f32 0.0, %v860
  %862 = vdwg.mxu0
  %863 = vmatprep.subr.bf16.mxu0 %v623
  %864 = vmatpush1.bf16.msra.mxu0 %v622
  %865 = vmatprep.subr.bf16.mxu0 %v625
  %866 = vmatpush1.bf16.msra.mxu0 %v624
  %867 = vmatprep.subr.bf16.mxu0 %v627
  %868 = vmatpush1.bf16.msra.mxu0 %v626
  %869 = vmatprep.subr.bf16.mxu0 %v629
  %870 = vmatpush1.bf16.msra.mxu0 %v628
  %871 = vmatprep.subr.bf16.mxu0 %v631
  %872 = vmatpush1.bf16.msra.mxu0 %v630
  %873 = vmatprep.subr.bf16.mxu0 %v633
  %874 = vmatpush1.bf16.msra.mxu0 %v632
  %875 = vmatprep.subr.bf16.mxu0 %v635
  %876 = vmatpush1.bf16.msra.mxu0 %v634
  %877 = vmatprep.subr.bf16.mxu0 %v637
  %878 = vmatpush1.bf16.msra.mxu0 %v636
  %879 = vmatprep.subr.bf16.mxu0 %v639
  %880 = vmatpush1.bf16.msra.mxu0 %v638
  %881 = vmatprep.subr.bf16.mxu0 %v641
  %882 = vmatpush1.bf16.msra.mxu0 %v640
  %883 = vmatprep.subr.bf16.mxu0 %v643
  %884 = vmatpush1.bf16.msra.mxu0 %v642
  %885 = vmatprep.subr.bf16.mxu0 %v645
  %886 = vmatpush1.bf16.msra.mxu0 %v644
  %887 = vmatprep.subr.bf16.mxu0 %v647
  %888 = vmatpush1.bf16.msra.mxu0 %v646
  %889 = vmatprep.subr.bf16.mxu0 %v649
  %890 = vmatpush1.bf16.msra.mxu0 %v648
  %891 = vmatprep.subr.bf16.mxu0 %v651
  %892 = vmatpush1.bf16.msra.mxu0 %v650
  %893 = vmatprep.subr.bf16.mxu0 %v653
  %894 = vmatpush1.bf16.msra.mxu0 %v652
  %895 = vmatprep.mubr.bf16.mxu0 %v273
  %896 = vmatmul.mubr.bf16.gmra.mrb[0].mxu0 %v272
  %v897 = vpop.f32.mrb[0].mxu0
  %v898 = vadd.f32 %v785, %v897
  %v899 = vpop.f32.mrb[0].mxu0
  %v900 = vadd.f32 %v787, %v899
  %v901 = vpop.f32.mrb[0].mxu0
  %v902 = vadd.f32 %v789, %v901
  %v903 = vpop.f32.mrb[0].mxu0
  %v904 = vadd.f32 %v791, %v903
  %905 = vmatprep.mubr.bf16.mxu0 %v278
  %906 = vmatmul.mubr.bf16.gmra.mrb[0].mxu0 %v277
  %v907 = vpop.f32.mrb[0].mxu0
  %v908 = vadd.f32 %v795, %v907
  %v909 = vpop.f32.mrb[0].mxu0
  %v910 = vadd.f32 %v797, %v909
  %v911 = vpop.f32.mrb[0].mxu0
  %v912 = vadd.f32 %v799, %v911
  %v913 = vpop.f32.mrb[0].mxu0
  %v914 = vadd.f32 %v801, %v913
  %915 = vmatprep.mubr.bf16.mxu0 %v283
  %916 = vmatmul.mubr.bf16.gmra.mrb[0].mxu0 %v282
  %v917 = vpop.f32.mrb[0].mxu0
  %v918 = vadd.f32 %v805, %v917
  %v919 = vpop.f32.mrb[0].mxu0
  %v920 = vadd.f32 %v807, %v919
  %v921 = vpop.f32.mrb[0].mxu0
  %v922 = vadd.f32 %v809, %v921
  %v923 = vpop.f32.mrb[0].mxu0
  %v924 = vadd.f32 %v811, %v923
  %925 = vmatprep.mubr.bf16.mxu0 %v288
  %926 = vmatmul.mubr.bf16.gmra.mrb[0].mxu0 %v287
  %v927 = vpop.f32.mrb[0].mxu0
  %v928 = vadd.f32 %v815, %v927
  %v929 = vpop.f32.mrb[0].mxu0
  %v930 = vadd.f32 %v817, %v929
  %v931 = vpop.f32.mrb[0].mxu0
  %v932 = vadd.f32 %v819, %v931
  %v933 = vpop.f32.mrb[0].mxu0
  %v934 = vadd.f32 %v821, %v933
  %935 = vmatprep.mubr.bf16.mxu0 %v293
  %936 = vmatmul.mubr.bf16.gmra.mrb[0].mxu0 %v292
  %v937 = vpop.f32.mrb[0].mxu0
  %v938 = vadd.f32 %v825, %v937
  %v939 = vpop.f32.mrb[0].mxu0
  %v940 = vadd.f32 %v827, %v939
  %v941 = vpop.f32.mrb[0].mxu0
  %v942 = vadd.f32 %v829, %v941
  %v943 = vpop.f32.mrb[0].mxu0
  %v944 = vadd.f32 %v831, %v943
  %945 = vmatprep.mubr.bf16.mxu0 %v298
  %946 = vmatmul.mubr.bf16.gmra.mrb[0].mxu0 %v297
  %v947 = vpop.f32.mrb[0].mxu0
  %v948 = vadd.f32 %v835, %v947
  %v949 = vpop.f32.mrb[0].mxu0
  %v950 = vadd.f32 %v837, %v949
  %v951 = vpop.f32.mrb[0].mxu0
  %v952 = vadd.f32 %v839, %v951
  %v953 = vpop.f32.mrb[0].mxu0
  %v954 = vadd.f32 %v841, %v953
  %955 = vmatprep.mubr.bf16.mxu0 %v303
  %956 = vmatmul.mubr.bf16.gmra.mrb[0].mxu0 %v302
  %v957 = vpop.f32.mrb[0].mxu0
  %v958 = vadd.f32 %v845, %v957
  %v959 = vpop.f32.mrb[0].mxu0
  %v960 = vadd.f32 %v847, %v959
  %v961 = vpop.f32.mrb[0].mxu0
  %v962 = vadd.f32 %v849, %v961
  %v963 = vpop.f32.mrb[0].mxu0
  %v964 = vadd.f32 %v851, %v963
  %965 = vmatprep.mubr.bf16.mxu0 %v308
  %966 = vmatmul.mubr.bf16.gmra.mrb[0].mxu0 %v307
  %v967 = vpop.f32.mrb[0].mxu0
  %v968 = vadd.f32 %v855, %v967
  %v969 = vpop.f32.mrb[0].mxu0
  %v970 = vadd.f32 %v857, %v969
  %v971 = vpop.f32.mrb[0].mxu0
  %v972 = vadd.f32 %v859, %v971
  %v973 = vpop.f32.mrb[0].mxu0
  %v974 = vadd.f32 %v861, %v973
  %975 = vdwg.mxu0
  %976 = vmatprep.subr.bf16.mxu0 %v655
  %977 = vmatpush1.bf16.msra.mxu0 %v654
  %978 = vmatprep.subr.bf16.mxu0 %v657
  %979 = vmatpush1.bf16.msra.mxu0 %v656
  %980 = vmatprep.subr.bf16.mxu0 %v659
  %981 = vmatpush1.bf16.msra.mxu0 %v658
  %982 = vmatprep.subr.bf16.mxu0 %v661
  %983 = vmatpush1.bf16.msra.mxu0 %v660
  %984 = vmatprep.subr.bf16.mxu0 %v663
  %985 = vmatpush1.bf16.msra.mxu0 %v662
  %986 = vmatprep.subr.bf16.mxu0 %v665
  %987 = vmatpush1.bf16.msra.mxu0 %v664
  %988 = vmatprep.subr.bf16.mxu0 %v667
  %989 = vmatpush1.bf16.msra.mxu0 %v666
  %990 = vmatprep.subr.bf16.mxu0 %v669
  %991 = vmatpush1.bf16.msra.mxu0 %v668
  %992 = vmatprep.subr.bf16.mxu0 0
  %993 = vmatpush1.bf16.msra.mxu0 0
  %994 = vmatprep.subr.bf16.mxu0 0
  %995 = vmatpush1.bf16.msra.mxu0 0
  %996 = vmatprep.subr.bf16.mxu0 0
  %997 = vmatpush1.bf16.msra.mxu0 0
  %998 = vmatprep.subr.bf16.mxu0 0
  %999 = vmatpush1.bf16.msra.mxu0 0
  %1000 = vmatprep.subr.bf16.mxu0 0
  %1001 = vmatpush1.bf16.msra.mxu0 0
  %1002 = vmatprep.subr.bf16.mxu0 0
  %1003 = vmatpush1.bf16.msra.mxu0 0
  %1004 = vmatprep.subr.bf16.mxu0 0
  %1005 = vmatpush1.bf16.msra.mxu0 0
  %1006 = vmatprep.subr.bf16.mxu0 0
  %1007 = vmatpush1.bf16.msra.mxu0 0
  %1008 = vmatprep.mubr.bf16.mxu0 0
  %1009 = vmatmul.mubr.bf16.gmra.mrb[0].mxu0 %v274
  %v1010 = vpop.f32.mrb[0].mxu0
  %v1011 = vadd.f32 %v898, %v1010
  %v1012 = vpop.f32.mrb[0].mxu0
  %v1013 = vadd.f32 %v900, %v1012
  %v1014 = vpop.f32.mrb[0].mxu0
  %v1015 = vadd.f32 %v902, %v1014
  %v1016 = vpop.f32.mrb[0].mxu0
  %v1017 = vadd.f32 %v904, %v1016
  %1018 = vmatprep.mubr.bf16.mxu0 0
  %1019 = vmatmul.mubr.bf16.gmra.mrb[0].mxu0 %v279
  %v1020 = vpop.f32.mrb[0].mxu0
  %v1021 = vadd.f32 %v908, %v1020
  %v1022 = vpop.f32.mrb[0].mxu0
  %v1023 = vadd.f32 %v910, %v1022
  %v1024 = vpop.f32.mrb[0].mxu0
  %v1025 = vadd.f32 %v912, %v1024
  %v1026 = vpop.f32.mrb[0].mxu0
  %v1027 = vadd.f32 %v914, %v1026
  %1028 = vmatprep.mubr.bf16.mxu0 0
  %1029 = vmatmul.mubr.bf16.gmra.mrb[0].mxu0 %v284
  %v1030 = vpop.f32.mrb[0].mxu0
  %v1031 = vadd.f32 %v918, %v1030
  %v1032 = vpop.f32.mrb[0].mxu0
  %v1033 = vadd.f32 %v920, %v1032
  %v1034 = vpop.f32.mrb[0].mxu0
  %v1035 = vadd.f32 %v922, %v1034
  %v1036 = vpop.f32.mrb[0].mxu0
  %v1037 = vadd.f32 %v924, %v1036
  %1038 = vmatprep.mubr.bf16.mxu0 0
  %1039 = vmatmul.mubr.bf16.gmra.mrb[0].mxu0 %v289
  %v1040 = vpop.f32.mrb[0].mxu0
  %v1041 = vadd.f32 %v928, %v1040
  %v1042 = vpop.f32.mrb[0].mxu0
  %v1043 = vadd.f32 %v930, %v1042
  %v1044 = vpop.f32.mrb[0].mxu0
  %v1045 = vadd.f32 %v932, %v1044
  %v1046 = vpop.f32.mrb[0].mxu0
  %v1047 = vadd.f32 %v934, %v1046
  %1048 = vmatprep.mubr.bf16.mxu0 0
  %1049 = vmatmul.mubr.bf16.gmra.mrb[0].mxu0 %v294
  %v1050 = vpop.f32.mrb[0].mxu0
  %v1051 = vadd.f32 %v938, %v1050
  %v1052 = vpop.f32.mrb[0].mxu0
  %v1053 = vadd.f32 %v940, %v1052
  %v1054 = vpop.f32.mrb[0].mxu0
  %v1055 = vadd.f32 %v942, %v1054
  %v1056 = vpop.f32.mrb[0].mxu0
  %v1057 = vadd.f32 %v944, %v1056
  %1058 = vmatprep.mubr.bf16.mxu0 0
  %1059 = vmatmul.mubr.bf16.gmra.mrb[0].mxu0 %v299
  %v1060 = vpop.f32.mrb[0].mxu0
  %v1061 = vadd.f32 %v948, %v1060
  %v1062 = vpop.f32.mrb[0].mxu0
  %v1063 = vadd.f32 %v950, %v1062
  %v1064 = vpop.f32.mrb[0].mxu0
  %v1065 = vadd.f32 %v952, %v1064
  %v1066 = vpop.f32.mrb[0].mxu0
  %v1067 = vadd.f32 %v954, %v1066
  %1068 = vmatprep.mubr.bf16.mxu0 0
  %1069 = vmatmul.mubr.bf16.gmra.mrb[0].mxu0 %v304
  %v1070 = vpop.f32.mrb[0].mxu0
  %v1071 = vadd.f32 %v958, %v1070
  %v1072 = vpop.f32.mrb[0].mxu0
  %v1073 = vadd.f32 %v960, %v1072
  %v1074 = vpop.f32.mrb[0].mxu0
  %v1075 = vadd.f32 %v962, %v1074
  %v1076 = vpop.f32.mrb[0].mxu0
  %v1077 = vadd.f32 %v964, %v1076
  %1078 = vmatprep.mubr.bf16.mxu0 0
  %1079 = vmatmul.mubr.bf16.gmra.mrb[0].mxu0 %v309
  %v1080 = vpop.f32.mrb[0].mxu0
  %v1081 = vadd.f32 %v968, %v1080
  %v1082 = vpop.f32.mrb[0].mxu0
  %v1083 = vadd.f32 %v970, %v1082
  %v1084 = vpop.f32.mrb[0].mxu0
  %v1085 = vadd.f32 %v972, %v1084
  %v1086 = vpop.f32.mrb[0].mxu0
  %v1087 = vadd.f32 %v974, %v1086
  %1088 = vdwg.mxu0
  %v1089 = vpack.c.bf16 %v1015, %v1011
  %v1090 = vpack.c.bf16 %v1017, %v1013
  %v1091 = vpack.c.bf16 %v1025, %v1021
  %v1092 = vpack.c.bf16 %v1027, %v1023
  %v1093 = vpack.c.bf16 %v1035, %v1031
  %v1094 = vpack.c.bf16 %v1037, %v1033
  %v1095 = vpack.c.bf16 %v1045, %v1041
  %v1096 = vpack.c.bf16 %v1047, %v1043
  %v1097 = vpack.c.bf16 %v1055, %v1051
  %v1098 = vpack.c.bf16 %v1057, %v1053
  %v1099 = vpack.c.bf16 %v1065, %v1061
  %v1100 = vpack.c.bf16 %v1067, %v1063
  %v1101 = vpack.c.bf16 %v1075, %v1071
  %v1102 = vpack.c.bf16 %v1077, %v1073
  %v1103 = vpack.c.bf16 %v1085, %v1081
  %v1104 = vpack.c.bf16 %v1087, %v1083
  %v1121 = vunpack.c.l.b16 %v1089
  %v1122 = vunpack.c.l.b16 %v1090
  %v1123 = vunpack.c.h.b16 %v1089
  %v1124 = vunpack.c.h.b16 %v1090
  %v1125 = vunpack.c.l.b16 %v1091
  %v1126 = vunpack.c.l.b16 %v1092
  %v1127 = vunpack.c.h.b16 %v1091
  %v1128 = vunpack.c.h.b16 %v1092
  %v1129 = vunpack.c.l.b16 %v1093
  %v1130 = vunpack.c.l.b16 %v1094
  %v1131 = vunpack.c.h.b16 %v1093
  %v1132 = vunpack.c.h.b16 %v1094
  %v1133 = vunpack.c.l.b16 %v1095
  %v1134 = vunpack.c.l.b16 %v1096
  %v1135 = vunpack.c.h.b16 %v1095
  %v1136 = vunpack.c.h.b16 %v1096
  %v1137 = vunpack.c.l.b16 %v1097
  %v1138 = vunpack.c.l.b16 %v1098
  %v1139 = vunpack.c.h.b16 %v1097
  %v1140 = vunpack.c.h.b16 %v1098
  %v1141 = vunpack.c.l.b16 %v1099
  %v1142 = vunpack.c.l.b16 %v1100
  %v1143 = vunpack.c.h.b16 %v1099
  %v1144 = vunpack.c.h.b16 %v1100
  %v1145 = vunpack.c.l.b16 %v1101
  %v1146 = vunpack.c.l.b16 %v1102
  %v1147 = vunpack.c.h.b16 %v1101
  %v1148 = vunpack.c.h.b16 %v1102
  %v1149 = vunpack.c.l.b16 %v1103
  %v1150 = vunpack.c.l.b16 %v1104
  %v1151 = vunpack.c.h.b16 %v1103
  %v1152 = vunpack.c.h.b16 %v1104
  %v1153 = vpack.c.b16 %v1122, %v1121
  %v1154 = vpack.c.b16 %v1124, %v1123
  %v1155 = vpack.c.b16 %v1126, %v1125
  %v1156 = vpack.c.b16 %v1128, %v1127
  %v1157 = vpack.c.b16 %v1130, %v1129
  %v1158 = vpack.c.b16 %v1132, %v1131
  %v1159 = vpack.c.b16 %v1134, %v1133
  %v1160 = vpack.c.b16 %v1136, %v1135
  %v1161 = vpack.c.b16 %v1138, %v1137
  %v1162 = vpack.c.b16 %v1140, %v1139
  %v1163 = vpack.c.b16 %v1142, %v1141
  %v1164 = vpack.c.b16 %v1144, %v1143
  %v1165 = vpack.c.b16 %v1146, %v1145
  %v1166 = vpack.c.b16 %v1148, %v1147
  %v1167 = vpack.c.b16 %v1150, %v1149
  %v1168 = vpack.c.b16 %v1152, %v1151
  %1185 = vst [vmem:[%s2] sm:$0xff] %v1153
  %1186 = vst [vmem:[%s2 + $0x8] sm:$0xff] %v1154
  %1187 = vst [vmem:[%s2 + $0x10] sm:$0xff] %v1155
  %1188 = vst [vmem:[%s2 + $0x18] sm:$0xff] %v1156
  %1189 = vst [vmem:[%s2 + $0x20] sm:$0xff] %v1157
  %1190 = vst [vmem:[%s2 + $0x28] sm:$0xff] %v1158
  %1191 = vst [vmem:[%s2 + $0x30] sm:$0xff] %v1159
  %1192 = vst [vmem:[%s2 + $0x38] sm:$0xff] %v1160
  %1193 = vst [vmem:[%s2 + $0x40] sm:$0xff] %v1161
  %1194 = vst [vmem:[%s2 + $0x48] sm:$0xff] %v1162
  %1195 = vst [vmem:[%s2 + $0x50] sm:$0xff] %v1163
  %1196 = vst [vmem:[%s2 + $0x58] sm:$0xff] %v1164
  %1197 = vst [vmem:[%s2 + $0x60] sm:$0xff] %v1165
  %1198 = vst [vmem:[%s2 + $0x68] sm:$0xff] %v1166
  %1199 = vst [vmem:[%s2 + $0x70] sm:$0xff] %v1167
  %1200 = vst [vmem:[%s2 + $0x78] sm:$0xff] %v1168
  %v1201 = vadd.f32 %v1011, %v1015
  %v1202 = vadd.f32 %v1201, %v1021
  %v1203 = vadd.f32 %v1202, %v1025
  %v1204 = vadd.f32 %v1203, %v1031
  %v1205 = vadd.f32 %v1204, %v1035
  %v1206 = vadd.f32 %v1205, %v1041
  %v1207 = vadd.f32 %v1206, %v1045
  %v1208 = vadd.f32 %v1207, %v1051
  %v1209 = vadd.f32 %v1208, %v1055
  %v1210 = vadd.f32 %v1209, %v1061
  %v1211 = vadd.f32 %v1210, %v1065
  %v1212 = vadd.f32 %v1211, %v1071
  %v1213 = vadd.f32 %v1212, %v1075
  %v1214 = vadd.f32 %v1213, %v1081
  %v1215 = vadd.f32 %v1214, %v1085
  %v1216 = vrot.slane %v1215, 4
  %v1217 = vadd.f32 %v1215, %v1216
  %v1218 = vrot.slane %v1217, 2
  %v1219 = vadd.f32 %v1217, %v1218
  %v1220 = vrot.slane %v1219, 1
  %v1221 = vadd.f32 %v1219, %v1220
  %v1222 = vadd.f32 %v1013, %v1017
  %v1223 = vadd.f32 %v1222, %v1023
  %v1224 = vadd.f32 %v1223, %v1027
  %v1225 = vadd.f32 %v1224, %v1033
  %v1226 = vadd.f32 %v1225, %v1037
  %v1227 = vadd.f32 %v1226, %v1043
  %v1228 = vadd.f32 %v1227, %v1047
  %v1229 = vadd.f32 %v1228, %v1053
  %v1230 = vadd.f32 %v1229, %v1057
  %v1231 = vadd.f32 %v1230, %v1063
  %v1232 = vadd.f32 %v1231, %v1067
  %v1233 = vadd.f32 %v1232, %v1073
  %v1234 = vadd.f32 %v1233, %v1077
  %v1235 = vadd.f32 %v1234, %v1083
  %v1236 = vadd.f32 %v1235, %v1087
  %v1237 = vrot.slane %v1236, 4
  %v1238 = vadd.f32 %v1236, %v1237
  %v1239 = vrot.slane %v1238, 2
  %v1240 = vadd.f32 %v1238, %v1239
  %v1241 = vrot.slane %v1240, 1
  %v1242 = vadd.f32 %v1240, %v1241
  %v1243 = vmul.f32 %v1011, %v1011
  %v1244 = vmul.f32 %v1013, %v1013
  %v1245 = vmul.f32 %v1015, %v1015
  %v1246 = vmul.f32 %v1017, %v1017
  %v1247 = vmul.f32 %v1021, %v1021
  %v1248 = vmul.f32 %v1023, %v1023
  %v1249 = vmul.f32 %v1025, %v1025
  %v1250 = vmul.f32 %v1027, %v1027
  %v1251 = vmul.f32 %v1031, %v1031
  %v1252 = vmul.f32 %v1033, %v1033
  %v1253 = vmul.f32 %v1035, %v1035
  %v1254 = vmul.f32 %v1037, %v1037
  %v1255 = vmul.f32 %v1041, %v1041
  %v1256 = vmul.f32 %v1043, %v1043
  %v1257 = vmul.f32 %v1045, %v1045
  %v1258 = vmul.f32 %v1047, %v1047
  %v1259 = vmul.f32 %v1051, %v1051
  %v1260 = vmul.f32 %v1053, %v1053
  %v1261 = vmul.f32 %v1055, %v1055
  %v1262 = vmul.f32 %v1057, %v1057
  %v1263 = vmul.f32 %v1061, %v1061
  %v1264 = vmul.f32 %v1063, %v1063
  %v1265 = vmul.f32 %v1065, %v1065
  %v1266 = vmul.f32 %v1067, %v1067
  %v1267 = vmul.f32 %v1071, %v1071
  %v1268 = vmul.f32 %v1073, %v1073
  %v1269 = vmul.f32 %v1075, %v1075
  %v1270 = vmul.f32 %v1077, %v1077
  %v1271 = vmul.f32 %v1081, %v1081
  %v1272 = vmul.f32 %v1083, %v1083
  %v1273 = vmul.f32 %v1085, %v1085
  %v1274 = vmul.f32 %v1087, %v1087
  %v1275 = vadd.f32 %v1243, %v1245
  %v1276 = vadd.f32 %v1275, %v1247
  %v1277 = vadd.f32 %v1276, %v1249
  %v1278 = vadd.f32 %v1277, %v1251
  %v1279 = vadd.f32 %v1278, %v1253
  %v1280 = vadd.f32 %v1279, %v1255
  %v1281 = vadd.f32 %v1280, %v1257
  %v1282 = vadd.f32 %v1281, %v1259
  %v1283 = vadd.f32 %v1282, %v1261
  %v1284 = vadd.f32 %v1283, %v1263
  %v1285 = vadd.f32 %v1284, %v1265
  %v1286 = vadd.f32 %v1285, %v1267
  %v1287 = vadd.f32 %v1286, %v1269
  %v1288 = vadd.f32 %v1287, %v1271
  %v1289 = vadd.f32 %v1288, %v1273
  %v1290 = vrot.slane %v1289, 4
  %v1291 = vadd.f32 %v1289, %v1290
  %v1292 = vrot.slane %v1291, 2
  %v1293 = vadd.f32 %v1291, %v1292
  %v1294 = vrot.slane %v1293, 1
  %v1295 = vadd.f32 %v1293, %v1294
  %v1296 = vadd.f32 %v1244, %v1246
  %v1297 = vadd.f32 %v1296, %v1248
  %v1298 = vadd.f32 %v1297, %v1250
  %v1299 = vadd.f32 %v1298, %v1252
  %v1300 = vadd.f32 %v1299, %v1254
  %v1301 = vadd.f32 %v1300, %v1256
  %v1302 = vadd.f32 %v1301, %v1258
  %v1303 = vadd.f32 %v1302, %v1260
  %v1304 = vadd.f32 %v1303, %v1262
  %v1305 = vadd.f32 %v1304, %v1264
  %v1306 = vadd.f32 %v1305, %v1266
  %v1307 = vadd.f32 %v1306, %v1268
  %v1308 = vadd.f32 %v1307, %v1270
  %v1309 = vadd.f32 %v1308, %v1272
  %v1310 = vadd.f32 %v1309, %v1274
  %v1311 = vrot.slane %v1310, 4
  %v1312 = vadd.f32 %v1310, %v1311
  %v1313 = vrot.slane %v1312, 2
  %v1314 = vadd.f32 %v1312, %v1313
  %v1315 = vrot.slane %v1314, 1
  %v1316 = vadd.f32 %v1314, %v1315
  %v1317 = vlaneseq
  %v1318 = vshrl.u32 %v1317, 7
  %vm1319 = vcmp.lt.s32.totalorder %v1318, 4
  %v1320 = vsel %vm1319, %v1221, %v1295
  %v1321 = vsel %vm1319, %v1242, %v1316
  %1322 = vst [vmem:[%s3] sm:$0xff] %v1320
  %1323 = vst [vmem:[%s3 + $0x8] sm:$0xff] %v1321
  // Predicated region
  $region10: #{resnet_forward.14} parent=0 // pred_check
    _
  $region11: #{resnet_forward.14} parent=0 // pred_check_branch
    %1325 = sbr.rel (0) target = $region13
  $region12: #{resnet_forward.14} parent=0 // pred_region
    _
  $region13: #{resnet_forward.14} parent=0 // pred_fallthru
    _
  // Predicated region
  $region14: #{resnet_forward.14} parent=0 // pred_check
    _
  $region15: #{resnet_forward.14} parent=0 // pred_check_branch
    %1327 = sbr.rel (0) target = $region17
  $region16: #{resnet_forward.14} parent=0 // pred_region
    _
  $region17: #{resnet_forward.14} parent=0 // pred_fallthru
    _
  // Predicated region
  $region18: #{resnet_forward.14} parent=0 // pred_check
    _
  $region19: #{resnet_forward.14} parent=0 // pred_check_branch
    %1329 = sbr.rel (0) target = $region21
  $region20: #{resnet_forward.14} parent=0 // pred_region
    _
  $region21: #{resnet_forward.14} parent=0 // pred_fallthru
    _
  // Predicated region
  $region22: #{resnet_forward.14} parent=0 // pred_check
    _
  $region23: #{resnet_forward.14} parent=0 // pred_check_branch
    %1331 = sbr.rel (0) target = $region25
  $region24: #{resnet_forward.14} parent=0 // pred_region
    _
  $region25: #{resnet_forward.14} parent=0 // pred_fallthru
    _

// kernel: resnet_forward.15
$region0: #{resnet_forward.15}
  #allocation0 [shape = 'u32[]', space=smem, size = 0x4, offset = 0x4, fixed_abs, tag = 'smem constant byte address 0x4 - core index']
  #allocation1 [shape = 'u32[144,128]{1,0:T(1,128)}', space=vmem, size = 0x12000, scoped, tag = 'internal scratch']
  %s0 = inlined_call_operand.vmem [shape: bf16[128,1152], index: 0, kind: input, shape index: {}]
  %s1 = inlined_call_operand.vmem [shape: bf16[1152,128], index: 1, kind: input, shape index: {}]
  %s2 = inlined_call_operand.vmem [shape: bf16[128,128], index: 2, kind: output, shape index: {0}]
  %s3 = inlined_call_operand.vmem [shape: f32[8,128], index: 3, kind: output, shape index: {1}]
  %4 = xla_tuple %s2, %s3
  %s5 = sld [smem:[#allocation0]]
  $region26: #{resnet_forward.15} parent=0
    _
  %s7 = ssub.s32 1, %s5
  %s8 = scalar_select 0, %s7, %s5
  // Predicated region
  $region2: #{resnet_forward.15} parent=0 // pred_check
    _
  $region3: #{resnet_forward.15} parent=0 // pred_check_branch
    %10 = sbr.rel (0) target = $region5
  $region4: #{resnet_forward.15} parent=0 // pred_region
    _
  $region5: #{resnet_forward.15} parent=0 // pred_fallthru
    _
  // Predicated region
  $region6: #{resnet_forward.15} parent=0 // pred_check
    _
  $region7: #{resnet_forward.15} parent=0 // pred_check_branch
    %12 = sbr.rel (0) target = $region9
  $region8: #{resnet_forward.15} parent=0 // pred_region
    _
  $region9: #{resnet_forward.15} parent=0 // pred_fallthru
    _
  %v14 = vld [vmem:[%s0] sm:$0xff]
  %v15 = vld [vmem:[%s0 + $0x8] sm:$0xff]
  %v16 = vld [vmem:[%s0 + $0x10] sm:$0xff]
  %v17 = vld [vmem:[%s0 + $0x18] sm:$0xff]
  %v18 = vld [vmem:[%s0 + $0x20] sm:$0xf]
  %v19 = vld [vmem:[%s0 + $0x24] sm:$0xff]
  %v20 = vld [vmem:[%s0 + $0x2c] sm:$0xff]
  %v21 = vld [vmem:[%s0 + $0x34] sm:$0xff]
  %v22 = vld [vmem:[%s0 + $0x3c] sm:$0xff]
  %v23 = vld [vmem:[%s0 + $0x44] sm:$0xf]
  %v24 = vld [vmem:[%s0 + $0x48] sm:$0xff]
  %v25 = vld [vmem:[%s0 + $0x50] sm:$0xff]
  %v26 = vld [vmem:[%s0 + $0x58] sm:$0xff]
  %v27 = vld [vmem:[%s0 + $0x60] sm:$0xff]
  %v28 = vld [vmem:[%s0 + $0x68] sm:$0xf]
  %v29 = vld [vmem:[%s0 + $0x6c] sm:$0xff]
  %v30 = vld [vmem:[%s0 + $0x74] sm:$0xff]
  %v31 = vld [vmem:[%s0 + $0x7c] sm:$0xff]
  %v32 = vld [vmem:[%s0 + $0x84] sm:$0xff]
  %v33 = vld [vmem:[%s0 + $0x8c] sm:$0xf]
  %v34 = vld [vmem:[%s0 + $0x90] sm:$0xff]
  %v35 = vld [vmem:[%s0 + $0x98] sm:$0xff]
  %v36 = vld [vmem:[%s0 + $0xa0] sm:$0xff]
  %v37 = vld [vmem:[%s0 + $0xa8] sm:$0xff]
  %v38 = vld [vmem:[%s0 + $0xb0] sm:$0xf]
  %v39 = vld [vmem:[%s0 + $0xb4] sm:$0xff]
  %v40 = vld [vmem:[%s0 + $0xbc] sm:$0xff]
  %v41 = vld [vmem:[%s0 + $0xc4] sm:$0xff]
  %v42 = vld [vmem:[%s0 + $0xcc] sm:$0xff]
  %v43 = vld [vmem:[%s0 + $0xd4] sm:$0xf]
  %v44 = vld [vmem:[%s0 + $0xd8] sm:$0xff]
  %v45 = vld [vmem:[%s0 + $0xe0] sm:$0xff]
  %v46 = vld [vmem:[%s0 + $0xe8] sm:$0xff]
  %v47 = vld [vmem:[%s0 + $0xf0] sm:$0xff]
  %v48 = vld [vmem:[%s0 + $0xf8] sm:$0xf]
  %v49 = vld [vmem:[%s0 + $0xfc] sm:$0xff]
  %v50 = vld [vmem:[%s0 + $0x104] sm:$0xff]
  %v51 = vld [vmem:[%s0 + $0x10c] sm:$0xff]
  %v52 = vld [vmem:[%s0 + $0x114] sm:$0xff]
  %v53 = vld [vmem:[%s0 + $0x11c] sm:$0xf]
  %v54 = vld [vmem:[%s0 + $0x120] sm:$0xff]
  %v55 = vld [vmem:[%s0 + $0x128] sm:$0xff]
  %v56 = vld [vmem:[%s0 + $0x130] sm:$0xff]
  %v57 = vld [vmem:[%s0 + $0x138] sm:$0xff]
  %v58 = vld [vmem:[%s0 + $0x140] sm:$0xf]
  %v59 = vld [vmem:[%s0 + $0x144] sm:$0xff]
  %v60 = vld [vmem:[%s0 + $0x14c] sm:$0xff]
  %v61 = vld [vmem:[%s0 + $0x154] sm:$0xff]
  %v62 = vld [vmem:[%s0 + $0x15c] sm:$0xff]
  %v63 = vld [vmem:[%s0 + $0x164] sm:$0xf]
  %v64 = vld [vmem:[%s0 + $0x168] sm:$0xff]
  %v65 = vld [vmem:[%s0 + $0x170] sm:$0xff]
  %v66 = vld [vmem:[%s0 + $0x178] sm:$0xff]
  %v67 = vld [vmem:[%s0 + $0x180] sm:$0xff]
  %v68 = vld [vmem:[%s0 + $0x188] sm:$0xf]
  %v69 = vld [vmem:[%s0 + $0x18c] sm:$0xff]
  %v70 = vld [vmem:[%s0 + $0x194] sm:$0xff]
  %v71 = vld [vmem:[%s0 + $0x19c] sm:$0xff]
  %v72 = vld [vmem:[%s0 + $0x1a4] sm:$0xff]
  %v73 = vld [vmem:[%s0 + $0x1ac] sm:$0xf]
  %v74 = vld [vmem:[%s0 + $0x1b0] sm:$0xff]
  %v75 = vld [vmem:[%s0 + $0x1b8] sm:$0xff]
  %v76 = vld [vmem:[%s0 + $0x1c0] sm:$0xff]
  %v77 = vld [vmem:[%s0 + $0x1c8] sm:$0xff]
  %v78 = vld [vmem:[%s0 + $0x1d0] sm:$0xf]
  %v79 = vld [vmem:[%s0 + $0x1d4] sm:$0xff]
  %v80 = vld [vmem:[%s0 + $0x1dc] sm:$0xff]
  %v81 = vld [vmem:[%s0 + $0x1e4] sm:$0xff]
  %v82 = vld [vmem:[%s0 + $0x1ec] sm:$0xff]
  %v83 = vld [vmem:[%s0 + $0x1f4] sm:$0xf]
  %v84 = vld [vmem:[%s0 + $0x1f8] sm:$0xff]
  %v85 = vld [vmem:[%s0 + $0x200] sm:$0xff]
  %v86 = vld [vmem:[%s0 + $0x208] sm:$0xff]
  %v87 = vld [vmem:[%s0 + $0x210] sm:$0xff]
  %v88 = vld [vmem:[%s0 + $0x218] sm:$0xf]
  %v89 = vld [vmem:[%s0 + $0x21c] sm:$0xff]
  %v90 = vld [vmem:[%s0 + $0x224] sm:$0xff]
  %v91 = vld [vmem:[%s0 + $0x22c] sm:$0xff]
  %v92 = vld [vmem:[%s0 + $0x234] sm:$0xff]
  %v93 = vld [vmem:[%s0 + $0x23c] sm:$0xf]
  %v94 = vld [vmem:[%s1] sm:$0xf]
  %v95 = vld [vmem:[%s1 + $0x4] sm:$0xf]
  %v96 = vld [vmem:[%s1 + $0x8] sm:$0xf]
  %v97 = vld [vmem:[%s1 + $0xc] sm:$0xf]
  %v98 = vld [vmem:[%s1 + $0x10] sm:$0xf]
  %v99 = vld [vmem:[%s1 + $0x14] sm:$0xf]
  %v100 = vld [vmem:[%s1 + $0x18] sm:$0xf]
  %v101 = vld [vmem:[%s1 + $0x1c] sm:$0xf]
  %v102 = vld [vmem:[%s1 + $0x20] sm:$0xf]
  %v103 = vld [vmem:[%s1 + $0x24] sm:$0xf]
  %v104 = vld [vmem:[%s1 + $0x28] sm:$0xf]
  %v105 = vld [vmem:[%s1 + $0x2c] sm:$0xf]
  %v106 = vld [vmem:[%s1 + $0x30] sm:$0xf]
  %v107 = vld [vmem:[%s1 + $0x34] sm:$0xf]
  %v108 = vld [vmem:[%s1 + $0x38] sm:$0xf]
  %v109 = vld [vmem:[%s1 + $0x3c] sm:$0xf]
  %v110 = vld [vmem:[%s1 + $0x40] sm:$0xf]
  %v111 = vld [vmem:[%s1 + $0x44] sm:$0xf]
  %v112 = vld [vmem:[%s1 + $0x48] sm:$0xf]
  %v113 = vld [vmem:[%s1 + $0x4c] sm:$0xf]
  %v114 = vld [vmem:[%s1 + $0x50] sm:$0xf]
  %v115 = vld [vmem:[%s1 + $0x54] sm:$0xf]
  %v116 = vld [vmem:[%s1 + $0x58] sm:$0xf]
  %v117 = vld [vmem:[%s1 + $0x5c] sm:$0xf]
  %v118 = vld [vmem:[%s1 + $0x60] sm:$0xf]
  %v119 = vld [vmem:[%s1 + $0x64] sm:$0xf]
  %v120 = vld [vmem:[%s1 + $0x68] sm:$0xf]
  %v121 = vld [vmem:[%s1 + $0x6c] sm:$0xf]
  %v122 = vld [vmem:[%s1 + $0x70] sm:$0xf]
  %v123 = vld [vmem:[%s1 + $0x74] sm:$0xf]
  %v124 = vld [vmem:[%s1 + $0x78] sm:$0xf]
  %v125 = vld [vmem:[%s1 + $0x7c] sm:$0xf]
  %v126 = vld [vmem:[%s1 + $0x80] sm:$0xf]
  %v127 = vld [vmem:[%s1 + $0x84] sm:$0xf]
  %v128 = vld [vmem:[%s1 + $0x88] sm:$0xf]
  %v129 = vld [vmem:[%s1 + $0x8c] sm:$0xf]
  %v130 = vld [vmem:[%s1 + $0x90] sm:$0xf]
  %v131 = vld [vmem:[%s1 + $0x94] sm:$0xf]
  %v132 = vld [vmem:[%s1 + $0x98] sm:$0xf]
  %v133 = vld [vmem:[%s1 + $0x9c] sm:$0xf]
  %v134 = vld [vmem:[%s1 + $0xa0] sm:$0xf]
  %v135 = vld [vmem:[%s1 + $0xa4] sm:$0xf]
  %v136 = vld [vmem:[%s1 + $0xa8] sm:$0xf]
  %v137 = vld [vmem:[%s1 + $0xac] sm:$0xf]
  %v138 = vld [vmem:[%s1 + $0xb0] sm:$0xf]
  %v139 = vld [vmem:[%s1 + $0xb4] sm:$0xf]
  %v140 = vld [vmem:[%s1 + $0xb8] sm:$0xf]
  %v141 = vld [vmem:[%s1 + $0xbc] sm:$0xf]
  %v142 = vld [vmem:[%s1 + $0xc0] sm:$0xf]
  %v143 = vld [vmem:[%s1 + $0xc4] sm:$0xf]
  %v144 = vld [vmem:[%s1 + $0xc8] sm:$0xf]
  %v145 = vld [vmem:[%s1 + $0xcc] sm:$0xf]
  %v146 = vld [vmem:[%s1 + $0xd0] sm:$0xf]
  %v147 = vld [vmem:[%s1 + $0xd4] sm:$0xf]
  %v148 = vld [vmem:[%s1 + $0xd8] sm:$0xf]
  %v149 = vld [vmem:[%s1 + $0xdc] sm:$0xf]
  %v150 = vld [vmem:[%s1 + $0xe0] sm:$0xf]
  %v151 = vld [vmem:[%s1 + $0xe4] sm:$0xf]
  %v152 = vld [vmem:[%s1 + $0xe8] sm:$0xf]
  %v153 = vld [vmem:[%s1 + $0xec] sm:$0xf]
  %v154 = vld [vmem:[%s1 + $0xf0] sm:$0xf]
  %v155 = vld [vmem:[%s1 + $0xf4] sm:$0xf]
  %v156 = vld [vmem:[%s1 + $0xf8] sm:$0xf]
  %v157 = vld [vmem:[%s1 + $0xfc] sm:$0xf]
  %v158 = vld [vmem:[%s1 + $0x100] sm:$0xf]
  %v159 = vld [vmem:[%s1 + $0x104] sm:$0xf]
  %v160 = vld [vmem:[%s1 + $0x108] sm:$0xf]
  %v161 = vld [vmem:[%s1 + $0x10c] sm:$0xf]
  %v162 = vld [vmem:[%s1 + $0x110] sm:$0xf]
  %v163 = vld [vmem:[%s1 + $0x114] sm:$0xf]
  %v164 = vld [vmem:[%s1 + $0x118] sm:$0xf]
  %v165 = vld [vmem:[%s1 + $0x11c] sm:$0xf]
  %v166 = vld [vmem:[%s1 + $0x120] sm:$0xf]
  %v167 = vld [vmem:[%s1 + $0x124] sm:$0xf]
  %v168 = vld [vmem:[%s1 + $0x128] sm:$0xf]
  %v169 = vld [vmem:[%s1 + $0x12c] sm:$0xf]
  %v170 = vld [vmem:[%s1 + $0x130] sm:$0xf]
  %v171 = vld [vmem:[%s1 + $0x134] sm:$0xf]
  %v172 = vld [vmem:[%s1 + $0x138] sm:$0xf]
  %v173 = vld [vmem:[%s1 + $0x13c] sm:$0xf]
  %v174 = vld [vmem:[%s1 + $0x140] sm:$0xf]
  %v175 = vld [vmem:[%s1 + $0x144] sm:$0xf]
  %v176 = vld [vmem:[%s1 + $0x148] sm:$0xf]
  %v177 = vld [vmem:[%s1 + $0x14c] sm:$0xf]
  %v178 = vld [vmem:[%s1 + $0x150] sm:$0xf]
  %v179 = vld [vmem:[%s1 + $0x154] sm:$0xf]
  %v180 = vld [vmem:[%s1 + $0x158] sm:$0xf]
  %v181 = vld [vmem:[%s1 + $0x15c] sm:$0xf]
  %v182 = vld [vmem:[%s1 + $0x160] sm:$0xf]
  %v183 = vld [vmem:[%s1 + $0x164] sm:$0xf]
  %v184 = vld [vmem:[%s1 + $0x168] sm:$0xf]
  %v185 = vld [vmem:[%s1 + $0x16c] sm:$0xf]
  %v186 = vld [vmem:[%s1 + $0x170] sm:$0xf]
  %v187 = vld [vmem:[%s1 + $0x174] sm:$0xf]
  %v188 = vld [vmem:[%s1 + $0x178] sm:$0xf]
  %v189 = vld [vmem:[%s1 + $0x17c] sm:$0xf]
  %v190 = vld [vmem:[%s1 + $0x180] sm:$0xf]
  %v191 = vld [vmem:[%s1 + $0x184] sm:$0xf]
  %v192 = vld [vmem:[%s1 + $0x188] sm:$0xf]
  %v193 = vld [vmem:[%s1 + $0x18c] sm:$0xf]
  %v194 = vld [vmem:[%s1 + $0x190] sm:$0xf]
  %v195 = vld [vmem:[%s1 + $0x194] sm:$0xf]
  %v196 = vld [vmem:[%s1 + $0x198] sm:$0xf]
  %v197 = vld [vmem:[%s1 + $0x19c] sm:$0xf]
  %v198 = vld [vmem:[%s1 + $0x1a0] sm:$0xf]
  %v199 = vld [vmem:[%s1 + $0x1a4] sm:$0xf]
  %v200 = vld [vmem:[%s1 + $0x1a8] sm:$0xf]
  %v201 = vld [vmem:[%s1 + $0x1ac] sm:$0xf]
  %v202 = vld [vmem:[%s1 + $0x1b0] sm:$0xf]
  %v203 = vld [vmem:[%s1 + $0x1b4] sm:$0xf]
  %v204 = vld [vmem:[%s1 + $0x1b8] sm:$0xf]
  %v205 = vld [vmem:[%s1 + $0x1bc] sm:$0xf]
  %v206 = vld [vmem:[%s1 + $0x1c0] sm:$0xf]
  %v207 = vld [vmem:[%s1 + $0x1c4] sm:$0xf]
  %v208 = vld [vmem:[%s1 + $0x1c8] sm:$0xf]
  %v209 = vld [vmem:[%s1 + $0x1cc] sm:$0xf]
  %v210 = vld [vmem:[%s1 + $0x1d0] sm:$0xf]
  %v211 = vld [vmem:[%s1 + $0x1d4] sm:$0xf]
  %v212 = vld [vmem:[%s1 + $0x1d8] sm:$0xf]
  %v213 = vld [vmem:[%s1 + $0x1dc] sm:$0xf]
  %v214 = vld [vmem:[%s1 + $0x1e0] sm:$0xf]
  %v215 = vld [vmem:[%s1 + $0x1e4] sm:$0xf]
  %v216 = vld [vmem:[%s1 + $0x1e8] sm:$0xf]
  %v217 = vld [vmem:[%s1 + $0x1ec] sm:$0xf]
  %v218 = vld [vmem:[%s1 + $0x1f0] sm:$0xf]
  %v219 = vld [vmem:[%s1 + $0x1f4] sm:$0xf]
  %v220 = vld [vmem:[%s1 + $0x1f8] sm:$0xf]
  %v221 = vld [vmem:[%s1 + $0x1fc] sm:$0xf]
  %v222 = vld [vmem:[%s1 + $0x200] sm:$0xf]
  %v223 = vld [vmem:[%s1 + $0x204] sm:$0xf]
  %v224 = vld [vmem:[%s1 + $0x208] sm:$0xf]
  %v225 = vld [vmem:[%s1 + $0x20c] sm:$0xf]
  %v226 = vld [vmem:[%s1 + $0x210] sm:$0xf]
  %v227 = vld [vmem:[%s1 + $0x214] sm:$0xf]
  %v228 = vld [vmem:[%s1 + $0x218] sm:$0xf]
  %v229 = vld [vmem:[%s1 + $0x21c] sm:$0xf]
  %v230 = vld [vmem:[%s1 + $0x220] sm:$0xf]
  %v231 = vld [vmem:[%s1 + $0x224] sm:$0xf]
  %v232 = vld [vmem:[%s1 + $0x228] sm:$0xf]
  %v233 = vld [vmem:[%s1 + $0x22c] sm:$0xf]
  %v234 = vld [vmem:[%s1 + $0x230] sm:$0xf]
  %v235 = vld [vmem:[%s1 + $0x234] sm:$0xf]
  %v236 = vld [vmem:[%s1 + $0x238] sm:$0xf]
  %v237 = vld [vmem:[%s1 + $0x23c] sm:$0xf]
  %v318 = vunpack.c.l.b16 %v14
  %v319 = vunpack.c.h.b16 %v14
  %v320 = vunpack.c.l.b16 %v15
  %v321 = vunpack.c.h.b16 %v15
  %v322 = vunpack.c.l.b16 %v16
  %v323 = vunpack.c.h.b16 %v16
  %v324 = vunpack.c.l.b16 %v17
  %v325 = vunpack.c.h.b16 %v17
  %v326 = vunpack.c.l.b16 %v18
  %v327 = vunpack.c.l.b16 %v19
  %v328 = vunpack.c.h.b16 %v19
  %v329 = vunpack.c.l.b16 %v20
  %v330 = vunpack.c.h.b16 %v20
  %v331 = vunpack.c.l.b16 %v21
  %v332 = vunpack.c.h.b16 %v21
  %v333 = vunpack.c.l.b16 %v22
  %v334 = vunpack.c.h.b16 %v22
  %v335 = vunpack.c.l.b16 %v23
  %v336 = vunpack.c.l.b16 %v24
  %v337 = vunpack.c.h.b16 %v24
  %v338 = vunpack.c.l.b16 %v25
  %v339 = vunpack.c.h.b16 %v25
  %v340 = vunpack.c.l.b16 %v26
  %v341 = vunpack.c.h.b16 %v26
  %v342 = vunpack.c.l.b16 %v27
  %v343 = vunpack.c.h.b16 %v27
  %v344 = vunpack.c.l.b16 %v28
  %v345 = vunpack.c.l.b16 %v29
  %v346 = vunpack.c.h.b16 %v29
  %v347 = vunpack.c.l.b16 %v30
  %v348 = vunpack.c.h.b16 %v30
  %v349 = vunpack.c.l.b16 %v31
  %v350 = vunpack.c.h.b16 %v31
  %v351 = vunpack.c.l.b16 %v32
  %v352 = vunpack.c.h.b16 %v32
  %v353 = vunpack.c.l.b16 %v33
  %v354 = vunpack.c.l.b16 %v34
  %v355 = vunpack.c.h.b16 %v34
  %v356 = vunpack.c.l.b16 %v35
  %v357 = vunpack.c.h.b16 %v35
  %v358 = vunpack.c.l.b16 %v36
  %v359 = vunpack.c.h.b16 %v36
  %v360 = vunpack.c.l.b16 %v37
  %v361 = vunpack.c.h.b16 %v37
  %v362 = vunpack.c.l.b16 %v38
  %v363 = vunpack.c.l.b16 %v39
  %v364 = vunpack.c.h.b16 %v39
  %v365 = vunpack.c.l.b16 %v40
  %v366 = vunpack.c.h.b16 %v40
  %v367 = vunpack.c.l.b16 %v41
  %v368 = vunpack.c.h.b16 %v41
  %v369 = vunpack.c.l.b16 %v42
  %v370 = vunpack.c.h.b16 %v42
  %v371 = vunpack.c.l.b16 %v43
  %v372 = vunpack.c.l.b16 %v44
  %v373 = vunpack.c.h.b16 %v44
  %v374 = vunpack.c.l.b16 %v45
  %v375 = vunpack.c.h.b16 %v45
  %v376 = vunpack.c.l.b16 %v46
  %v377 = vunpack.c.h.b16 %v46
  %v378 = vunpack.c.l.b16 %v47
  %v379 = vunpack.c.h.b16 %v47
  %v380 = vunpack.c.l.b16 %v48
  %v381 = vunpack.c.l.b16 %v49
  %v382 = vunpack.c.h.b16 %v49
  %v383 = vunpack.c.l.b16 %v50
  %v384 = vunpack.c.h.b16 %v50
  %v385 = vunpack.c.l.b16 %v51
  %v386 = vunpack.c.h.b16 %v51
  %v387 = vunpack.c.l.b16 %v52
  %v388 = vunpack.c.h.b16 %v52
  %v389 = vunpack.c.l.b16 %v53
  %v390 = vunpack.c.l.b16 %v54
  %v391 = vunpack.c.h.b16 %v54
  %v392 = vunpack.c.l.b16 %v55
  %v393 = vunpack.c.h.b16 %v55
  %v394 = vunpack.c.l.b16 %v56
  %v395 = vunpack.c.h.b16 %v56
  %v396 = vunpack.c.l.b16 %v57
  %v397 = vunpack.c.h.b16 %v57
  %v398 = vunpack.c.l.b16 %v58
  %v399 = vunpack.c.l.b16 %v59
  %v400 = vunpack.c.h.b16 %v59
  %v401 = vunpack.c.l.b16 %v60
  %v402 = vunpack.c.h.b16 %v60
  %v403 = vunpack.c.l.b16 %v61
  %v404 = vunpack.c.h.b16 %v61
  %v405 = vunpack.c.l.b16 %v62
  %v406 = vunpack.c.h.b16 %v62
  %v407 = vunpack.c.l.b16 %v63
  %v408 = vunpack.c.l.b16 %v64
  %v409 = vunpack.c.h.b16 %v64
  %v410 = vunpack.c.l.b16 %v65
  %v411 = vunpack.c.h.b16 %v65
  %v412 = vunpack.c.l.b16 %v66
  %v413 = vunpack.c.h.b16 %v66
  %v414 = vunpack.c.l.b16 %v67
  %v415 = vunpack.c.h.b16 %v67
  %v416 = vunpack.c.l.b16 %v68
  %v417 = vunpack.c.l.b16 %v69
  %v418 = vunpack.c.h.b16 %v69
  %v419 = vunpack.c.l.b16 %v70
  %v420 = vunpack.c.h.b16 %v70
  %v421 = vunpack.c.l.b16 %v71
  %v422 = vunpack.c.h.b16 %v71
  %v423 = vunpack.c.l.b16 %v72
  %v424 = vunpack.c.h.b16 %v72
  %v425 = vunpack.c.l.b16 %v73
  %v426 = vunpack.c.l.b16 %v74
  %v427 = vunpack.c.h.b16 %v74
  %v428 = vunpack.c.l.b16 %v75
  %v429 = vunpack.c.h.b16 %v75
  %v430 = vunpack.c.l.b16 %v76
  %v431 = vunpack.c.h.b16 %v76
  %v432 = vunpack.c.l.b16 %v77
  %v433 = vunpack.c.h.b16 %v77
  %v434 = vunpack.c.l.b16 %v78
  %v435 = vunpack.c.l.b16 %v79
  %v436 = vunpack.c.h.b16 %v79
  %v437 = vunpack.c.l.b16 %v80
  %v438 = vunpack.c.h.b16 %v80
  %v439 = vunpack.c.l.b16 %v81
  %v440 = vunpack.c.h.b16 %v81
  %v441 = vunpack.c.l.b16 %v82
  %v442 = vunpack.c.h.b16 %v82
  %v443 = vunpack.c.l.b16 %v83
  %v444 = vunpack.c.l.b16 %v84
  %v445 = vunpack.c.h.b16 %v84
  %v446 = vunpack.c.l.b16 %v85
  %v447 = vunpack.c.h.b16 %v85
  %v448 = vunpack.c.l.b16 %v86
  %v449 = vunpack.c.h.b16 %v86
  %v450 = vunpack.c.l.b16 %v87
  %v451 = vunpack.c.h.b16 %v87
  %v452 = vunpack.c.l.b16 %v88
  %v453 = vunpack.c.l.b16 %v89
  %v454 = vunpack.c.h.b16 %v89
  %v455 = vunpack.c.l.b16 %v90
  %v456 = vunpack.c.h.b16 %v90
  %v457 = vunpack.c.l.b16 %v91
  %v458 = vunpack.c.h.b16 %v91
  %v459 = vunpack.c.l.b16 %v92
  %v460 = vunpack.c.h.b16 %v92
  %v461 = vunpack.c.l.b16 %v93
  %v462 = vpack.c.b16 %v327, %v318
  %v463 = vpack.c.b16 %v328, %v319
  %v464 = vpack.c.b16 %v329, %v320
  %v465 = vpack.c.b16 %v330, %v321
  %v466 = vpack.c.b16 %v331, %v322
  %v467 = vpack.c.b16 %v332, %v323
  %v468 = vpack.c.b16 %v333, %v324
  %v469 = vpack.c.b16 %v334, %v325
  %v470 = vpack.c.b16 %v335, %v326
  %v471 = vpack.c.b16 %v345, %v336
  %v472 = vpack.c.b16 %v346, %v337
  %v473 = vpack.c.b16 %v347, %v338
  %v474 = vpack.c.b16 %v348, %v339
  %v475 = vpack.c.b16 %v349, %v340
  %v476 = vpack.c.b16 %v350, %v341
  %v477 = vpack.c.b16 %v351, %v342
  %v478 = vpack.c.b16 %v352, %v343
  %v479 = vpack.c.b16 %v353, %v344
  %v480 = vpack.c.b16 %v363, %v354
  %v481 = vpack.c.b16 %v364, %v355
  %v482 = vpack.c.b16 %v365, %v356
  %v483 = vpack.c.b16 %v366, %v357
  %v484 = vpack.c.b16 %v367, %v358
  %v485 = vpack.c.b16 %v368, %v359
  %v486 = vpack.c.b16 %v369, %v360
  %v487 = vpack.c.b16 %v370, %v361
  %v488 = vpack.c.b16 %v371, %v362
  %v489 = vpack.c.b16 %v381, %v372
  %v490 = vpack.c.b16 %v382, %v373
  %v491 = vpack.c.b16 %v383, %v374
  %v492 = vpack.c.b16 %v384, %v375
  %v493 = vpack.c.b16 %v385, %v376
  %v494 = vpack.c.b16 %v386, %v377
  %v495 = vpack.c.b16 %v387, %v378
  %v496 = vpack.c.b16 %v388, %v379
  %v497 = vpack.c.b16 %v389, %v380
  %v498 = vpack.c.b16 %v399, %v390
  %v499 = vpack.c.b16 %v400, %v391
  %v500 = vpack.c.b16 %v401, %v392
  %v501 = vpack.c.b16 %v402, %v393
  %v502 = vpack.c.b16 %v403, %v394
  %v503 = vpack.c.b16 %v404, %v395
  %v504 = vpack.c.b16 %v405, %v396
  %v505 = vpack.c.b16 %v406, %v397
  %v506 = vpack.c.b16 %v407, %v398
  %v507 = vpack.c.b16 %v417, %v408
  %v508 = vpack.c.b16 %v418, %v409
  %v509 = vpack.c.b16 %v419, %v410
  %v510 = vpack.c.b16 %v420, %v411
  %v511 = vpack.c.b16 %v421, %v412
  %v512 = vpack.c.b16 %v422, %v413
  %v513 = vpack.c.b16 %v423, %v414
  %v514 = vpack.c.b16 %v424, %v415
  %v515 = vpack.c.b16 %v425, %v416
  %v516 = vpack.c.b16 %v435, %v426
  %v517 = vpack.c.b16 %v436, %v427
  %v518 = vpack.c.b16 %v437, %v428
  %v519 = vpack.c.b16 %v438, %v429
  %v520 = vpack.c.b16 %v439, %v430
  %v521 = vpack.c.b16 %v440, %v431
  %v522 = vpack.c.b16 %v441, %v432
  %v523 = vpack.c.b16 %v442, %v433
  %v524 = vpack.c.b16 %v443, %v434
  %v525 = vpack.c.b16 %v453, %v444
  %v526 = vpack.c.b16 %v454, %v445
  %v527 = vpack.c.b16 %v455, %v446
  %v528 = vpack.c.b16 %v456, %v447
  %v529 = vpack.c.b16 %v457, %v448
  %v530 = vpack.c.b16 %v458, %v449
  %v531 = vpack.c.b16 %v459, %v450
  %v532 = vpack.c.b16 %v460, %v451
  %v533 = vpack.c.b16 %v461, %v452
  %v750 = vunpack.c.l.b16 %v94
  %v751 = vunpack.c.l.b16 %v95
  %v752 = vunpack.c.l.b16 %v96
  %v753 = vunpack.c.l.b16 %v97
  %v754 = vunpack.c.l.b16 %v98
  %v755 = vunpack.c.l.b16 %v99
  %v756 = vunpack.c.l.b16 %v100
  %v757 = vunpack.c.l.b16 %v101
  %v758 = vunpack.c.l.b16 %v102
  %v759 = vunpack.c.l.b16 %v103
  %v760 = vunpack.c.l.b16 %v104
  %v761 = vunpack.c.l.b16 %v105
  %v762 = vunpack.c.l.b16 %v106
  %v763 = vunpack.c.l.b16 %v107
  %v764 = vunpack.c.l.b16 %v108
  %v765 = vunpack.c.l.b16 %v109
  %v766 = vunpack.c.l.b16 %v110
  %v767 = vunpack.c.l.b16 %v111
  %v768 = vunpack.c.l.b16 %v112
  %v769 = vunpack.c.l.b16 %v113
  %v770 = vunpack.c.l.b16 %v114
  %v771 = vunpack.c.l.b16 %v115
  %v772 = vunpack.c.l.b16 %v116
  %v773 = vunpack.c.l.b16 %v117
  %v774 = vunpack.c.l.b16 %v118
  %v775 = vunpack.c.l.b16 %v119
  %v776 = vunpack.c.l.b16 %v120
  %v777 = vunpack.c.l.b16 %v121
  %v778 = vunpack.c.l.b16 %v122
  %v779 = vunpack.c.l.b16 %v123
  %v780 = vunpack.c.l.b16 %v124
  %v781 = vunpack.c.l.b16 %v125
  %v782 = vunpack.c.l.b16 %v126
  %v783 = vunpack.c.l.b16 %v127
  %v784 = vunpack.c.l.b16 %v128
  %v785 = vunpack.c.l.b16 %v129
  %v786 = vunpack.c.l.b16 %v130
  %v787 = vunpack.c.l.b16 %v131
  %v788 = vunpack.c.l.b16 %v132
  %v789 = vunpack.c.l.b16 %v133
  %v790 = vunpack.c.l.b16 %v134
  %v791 = vunpack.c.l.b16 %v135
  %v792 = vunpack.c.l.b16 %v136
  %v793 = vunpack.c.l.b16 %v137
  %v794 = vunpack.c.l.b16 %v138
  %v795 = vunpack.c.l.b16 %v139
  %v796 = vunpack.c.l.b16 %v140
  %v797 = vunpack.c.l.b16 %v141
  %v798 = vunpack.c.l.b16 %v142
  %v799 = vunpack.c.l.b16 %v143
  %v800 = vunpack.c.l.b16 %v144
  %v801 = vunpack.c.l.b16 %v145
  %v802 = vunpack.c.l.b16 %v146
  %v803 = vunpack.c.l.b16 %v147
  %v804 = vunpack.c.l.b16 %v148
  %v805 = vunpack.c.l.b16 %v149
  %v806 = vunpack.c.l.b16 %v150
  %v807 = vunpack.c.l.b16 %v151
  %v808 = vunpack.c.l.b16 %v152
  %v809 = vunpack.c.l.b16 %v153
  %v810 = vunpack.c.l.b16 %v154
  %v811 = vunpack.c.l.b16 %v155
  %v812 = vunpack.c.l.b16 %v156
  %v813 = vunpack.c.l.b16 %v157
  %v814 = vunpack.c.l.b16 %v158
  %v815 = vunpack.c.l.b16 %v159
  %v816 = vunpack.c.l.b16 %v160
  %v817 = vunpack.c.l.b16 %v161
  %v818 = vunpack.c.l.b16 %v162
  %v819 = vunpack.c.l.b16 %v163
  %v820 = vunpack.c.l.b16 %v164
  %v821 = vunpack.c.l.b16 %v165
  %v822 = vunpack.c.l.b16 %v166
  %v823 = vunpack.c.l.b16 %v167
  %v824 = vunpack.c.l.b16 %v168
  %v825 = vunpack.c.l.b16 %v169
  %v826 = vunpack.c.l.b16 %v170
  %v827 = vunpack.c.l.b16 %v171
  %v828 = vunpack.c.l.b16 %v172
  %v829 = vunpack.c.l.b16 %v173
  %v830 = vunpack.c.l.b16 %v174
  %v831 = vunpack.c.l.b16 %v175
  %v832 = vunpack.c.l.b16 %v176
  %v833 = vunpack.c.l.b16 %v177
  %v834 = vunpack.c.l.b16 %v178
  %v835 = vunpack.c.l.b16 %v179
  %v836 = vunpack.c.l.b16 %v180
  %v837 = vunpack.c.l.b16 %v181
  %v838 = vunpack.c.l.b16 %v182
  %v839 = vunpack.c.l.b16 %v183
  %v840 = vunpack.c.l.b16 %v184
  %v841 = vunpack.c.l.b16 %v185
  %v842 = vunpack.c.l.b16 %v186
  %v843 = vunpack.c.l.b16 %v187
  %v844 = vunpack.c.l.b16 %v188
  %v845 = vunpack.c.l.b16 %v189
  %v846 = vunpack.c.l.b16 %v190
  %v847 = vunpack.c.l.b16 %v191
  %v848 = vunpack.c.l.b16 %v192
  %v849 = vunpack.c.l.b16 %v193
  %v850 = vunpack.c.l.b16 %v194
  %v851 = vunpack.c.l.b16 %v195
  %v852 = vunpack.c.l.b16 %v196
  %v853 = vunpack.c.l.b16 %v197
  %v854 = vunpack.c.l.b16 %v198
  %v855 = vunpack.c.l.b16 %v199
  %v856 = vunpack.c.l.b16 %v200
  %v857 = vunpack.c.l.b16 %v201
  %v858 = vunpack.c.l.b16 %v202
  %v859 = vunpack.c.l.b16 %v203
  %v860 = vunpack.c.l.b16 %v204
  %v861 = vunpack.c.l.b16 %v205
  %v862 = vunpack.c.l.b16 %v206
  %v863 = vunpack.c.l.b16 %v207
  %v864 = vunpack.c.l.b16 %v208
  %v865 = vunpack.c.l.b16 %v209
  %v866 = vunpack.c.l.b16 %v210
  %v867 = vunpack.c.l.b16 %v211
  %v868 = vunpack.c.l.b16 %v212
  %v869 = vunpack.c.l.b16 %v213
  %v870 = vunpack.c.l.b16 %v214
  %v871 = vunpack.c.l.b16 %v215
  %v872 = vunpack.c.l.b16 %v216
  %v873 = vunpack.c.l.b16 %v217
  %v874 = vunpack.c.l.b16 %v218
  %v875 = vunpack.c.l.b16 %v219
  %v876 = vunpack.c.l.b16 %v220
  %v877 = vunpack.c.l.b16 %v221
  %v878 = vunpack.c.l.b16 %v222
  %v879 = vunpack.c.l.b16 %v223
  %v880 = vunpack.c.l.b16 %v224
  %v881 = vunpack.c.l.b16 %v225
  %v882 = vunpack.c.l.b16 %v226
  %v883 = vunpack.c.l.b16 %v227
  %v884 = vunpack.c.l.b16 %v228
  %v885 = vunpack.c.l.b16 %v229
  %v886 = vunpack.c.l.b16 %v230
  %v887 = vunpack.c.l.b16 %v231
  %v888 = vunpack.c.l.b16 %v232
  %v889 = vunpack.c.l.b16 %v233
  %v890 = vunpack.c.l.b16 %v234
  %v891 = vunpack.c.l.b16 %v235
  %v892 = vunpack.c.l.b16 %v236
  %v893 = vunpack.c.l.b16 %v237
  %v894 = vpack.c.b16 %v751, %v750
  %v895 = vpack.c.b16 %v753, %v752
  %v896 = vpack.c.b16 %v755, %v754
  %v897 = vpack.c.b16 %v757, %v756
  %v898 = vpack.c.b16 %v759, %v758
  %v899 = vpack.c.b16 %v761, %v760
  %v900 = vpack.c.b16 %v763, %v762
  %v901 = vpack.c.b16 %v765, %v764
  %v902 = vpack.c.b16 %v767, %v766
  %v903 = vpack.c.b16 %v769, %v768
  %v904 = vpack.c.b16 %v771, %v770
  %v905 = vpack.c.b16 %v773, %v772
  %v906 = vpack.c.b16 %v775, %v774
  %v907 = vpack.c.b16 %v777, %v776
  %v908 = vpack.c.b16 %v779, %v778
  %v909 = vpack.c.b16 %v781, %v780
  %v910 = vpack.c.b16 %v783, %v782
  %v911 = vpack.c.b16 %v785, %v784
  %v912 = vpack.c.b16 %v787, %v786
  %v913 = vpack.c.b16 %v789, %v788
  %v914 = vpack.c.b16 %v791, %v790
  %v915 = vpack.c.b16 %v793, %v792
  %v916 = vpack.c.b16 %v795, %v794
  %v917 = vpack.c.b16 %v797, %v796
  %v918 = vpack.c.b16 %v799, %v798
  %v919 = vpack.c.b16 %v801, %v800
  %v920 = vpack.c.b16 %v803, %v802
  %v921 = vpack.c.b16 %v805, %v804
  %v922 = vpack.c.b16 %v807, %v806
  %v923 = vpack.c.b16 %v809, %v808
  %v924 = vpack.c.b16 %v811, %v810
  %v925 = vpack.c.b16 %v813, %v812
  %v926 = vpack.c.b16 %v815, %v814
  %v927 = vpack.c.b16 %v817, %v816
  %v928 = vpack.c.b16 %v819, %v818
  %v929 = vpack.c.b16 %v821, %v820
  %v930 = vpack.c.b16 %v823, %v822
  %v931 = vpack.c.b16 %v825, %v824
  %v932 = vpack.c.b16 %v827, %v826
  %v933 = vpack.c.b16 %v829, %v828
  %v934 = vpack.c.b16 %v831, %v830
  %v935 = vpack.c.b16 %v833, %v832
  %v936 = vpack.c.b16 %v835, %v834
  %v937 = vpack.c.b16 %v837, %v836
  %v938 = vpack.c.b16 %v839, %v838
  %v939 = vpack.c.b16 %v841, %v840
  %v940 = vpack.c.b16 %v843, %v842
  %v941 = vpack.c.b16 %v845, %v844
  %v942 = vpack.c.b16 %v847, %v846
  %v943 = vpack.c.b16 %v849, %v848
  %v944 = vpack.c.b16 %v851, %v850
  %v945 = vpack.c.b16 %v853, %v852
  %v946 = vpack.c.b16 %v855, %v854
  %v947 = vpack.c.b16 %v857, %v856
  %v948 = vpack.c.b16 %v859, %v858
  %v949 = vpack.c.b16 %v861, %v860
  %v950 = vpack.c.b16 %v863, %v862
  %v951 = vpack.c.b16 %v865, %v864
  %v952 = vpack.c.b16 %v867, %v866
  %v953 = vpack.c.b16 %v869, %v868
  %v954 = vpack.c.b16 %v871, %v870
  %v955 = vpack.c.b16 %v873, %v872
  %v956 = vpack.c.b16 %v875, %v874
  %v957 = vpack.c.b16 %v877, %v876
  %v958 = vpack.c.b16 %v879, %v878
  %v959 = vpack.c.b16 %v881, %v880
  %v960 = vpack.c.b16 %v883, %v882
  %v961 = vpack.c.b16 %v885, %v884
  %v962 = vpack.c.b16 %v887, %v886
  %v963 = vpack.c.b16 %v889, %v888
  %v964 = vpack.c.b16 %v891, %v890
  %v965 = vpack.c.b16 %v893, %v892
  %1038 = vmatprep.subr.bf16.mxu0 0
  %1039 = vmatpush1.bf16.msra.mxu0 %v894
  %1040 = vmatprep.subr.bf16.mxu0 0
  %1041 = vmatpush1.bf16.msra.mxu0 %v895
  %1042 = vmatprep.subr.bf16.mxu0 0
  %1043 = vmatpush1.bf16.msra.mxu0 %v896
  %1044 = vmatprep.subr.bf16.mxu0 0
  %1045 = vmatpush1.bf16.msra.mxu0 %v897
  %1046 = vmatprep.subr.bf16.mxu0 0
  %1047 = vmatpush1.bf16.msra.mxu0 %v898
  %1048 = vmatprep.subr.bf16.mxu0 0
  %1049 = vmatpush1.bf16.msra.mxu0 %v899
  %1050 = vmatprep.subr.bf16.mxu0 0
  %1051 = vmatpush1.bf16.msra.mxu0 %v900
  %1052 = vmatprep.subr.bf16.mxu0 0
  %1053 = vmatpush1.bf16.msra.mxu0 %v901
  %1054 = vmatprep.subr.bf16.mxu0 0
  %1055 = vmatpush1.bf16.msra.mxu0 %v902
  %1056 = vmatprep.subr.bf16.mxu0 0
  %1057 = vmatpush1.bf16.msra.mxu0 %v903
  %1058 = vmatprep.subr.bf16.mxu0 0
  %1059 = vmatpush1.bf16.msra.mxu0 %v904
  %1060 = vmatprep.subr.bf16.mxu0 0
  %1061 = vmatpush1.bf16.msra.mxu0 %v905
  %1062 = vmatprep.subr.bf16.mxu0 0
  %1063 = vmatpush1.bf16.msra.mxu0 %v906
  %1064 = vmatprep.subr.bf16.mxu0 0
  %1065 = vmatpush1.bf16.msra.mxu0 %v907
  %1066 = vmatprep.subr.bf16.mxu0 0
  %1067 = vmatpush1.bf16.msra.mxu0 %v908
  %1068 = vmatprep.subr.bf16.mxu0 0
  %1069 = vmatpush1.bf16.msra.mxu0 %v909
  %1070 = vmatprep.mubr.bf16.mxu0 %v463
  %1071 = vmatmul.mubr.bf16.gmra.mrb[0].mxu0 %v462
  %v1072 = vpop.f32.mrb[0].mxu0
  %v1073 = vadd.f32 0.0, %v1072
  %v1074 = vpop.f32.mrb[0].mxu0
  %v1075 = vpop.f32.mrb[0].mxu0
  %v1076 = vadd.f32 0.0, %v1075
  %v1077 = vpop.f32.mrb[0].mxu0
  %1078 = vmatprep.mubr.bf16.mxu0 %v472
  %1079 = vmatmul.mubr.bf16.gmra.mrb[0].mxu0 %v471
  %v1080 = vpop.f32.mrb[0].mxu0
  %v1081 = vadd.f32 0.0, %v1080
  %v1082 = vpop.f32.mrb[0].mxu0
  %v1083 = vpop.f32.mrb[0].mxu0
  %v1084 = vadd.f32 0.0, %v1083
  %v1085 = vpop.f32.mrb[0].mxu0
  %1086 = vmatprep.mubr.bf16.mxu0 %v481
  %1087 = vmatmul.mubr.bf16.gmra.mrb[0].mxu0 %v480
  %v1088 = vpop.f32.mrb[0].mxu0
  %v1089 = vadd.f32 0.0, %v1088
  %v1090 = vpop.f32.mrb[0].mxu0
  %v1091 = vpop.f32.mrb[0].mxu0
  %v1092 = vadd.f32 0.0, %v1091
  %v1093 = vpop.f32.mrb[0].mxu0
  %1094 = vmatprep.mubr.bf16.mxu0 %v490
  %1095 = vmatmul.mubr.bf16.gmra.mrb[0].mxu0 %v489
  %v1096 = vpop.f32.mrb[0].mxu0
  %v1097 = vadd.f32 0.0, %v1096
  %v1098 = vpop.f32.mrb[0].mxu0
  %v1099 = vpop.f32.mrb[0].mxu0
  %v1100 = vadd.f32 0.0, %v1099
  %v1101 = vpop.f32.mrb[0].mxu0
  %1102 = vmatprep.mubr.bf16.mxu0 %v499
  %1103 = vmatmul.mubr.bf16.gmra.mrb[0].mxu0 %v498
  %v1104 = vpop.f32.mrb[0].mxu0
  %v1105 = vadd.f32 0.0, %v1104
  %v1106 = vpop.f32.mrb[0].mxu0
  %v1107 = vpop.f32.mrb[0].mxu0
  %v1108 = vadd.f32 0.0, %v1107
  %v1109 = vpop.f32.mrb[0].mxu0
  %1110 = vmatprep.mubr.bf16.mxu0 %v508
  %1111 = vmatmul.mubr.bf16.gmra.mrb[0].mxu0 %v507
  %v1112 = vpop.f32.mrb[0].mxu0
  %v1113 = vadd.f32 0.0, %v1112
  %v1114 = vpop.f32.mrb[0].mxu0
  %v1115 = vpop.f32.mrb[0].mxu0
  %v1116 = vadd.f32 0.0, %v1115
  %v1117 = vpop.f32.mrb[0].mxu0
  %1118 = vmatprep.mubr.bf16.mxu0 %v517
  %1119 = vmatmul.mubr.bf16.gmra.mrb[0].mxu0 %v516
  %v1120 = vpop.f32.mrb[0].mxu0
  %v1121 = vadd.f32 0.0, %v1120
  %v1122 = vpop.f32.mrb[0].mxu0
  %v1123 = vpop.f32.mrb[0].mxu0
  %v1124 = vadd.f32 0.0, %v1123
  %v1125 = vpop.f32.mrb[0].mxu0
  %1126 = vmatprep.mubr.bf16.mxu0 %v526
  %1127 = vmatmul.mubr.bf16.gmra.mrb[0].mxu0 %v525
  %v1128 = vpop.f32.mrb[0].mxu0
  %v1129 = vadd.f32 0.0, %v1128
  %v1130 = vpop.f32.mrb[0].mxu0
  %v1131 = vpop.f32.mrb[0].mxu0
  %v1132 = vadd.f32 0.0, %v1131
  %v1133 = vpop.f32.mrb[0].mxu0
  %1134 = vdwg.mxu0
  %1135 = vmatprep.subr.bf16.mxu0 0
  %1136 = vmatpush1.bf16.msra.mxu0 %v910
  %1137 = vmatprep.subr.bf16.mxu0 0
  %1138 = vmatpush1.bf16.msra.mxu0 %v911
  %1139 = vmatprep.subr.bf16.mxu0 0
  %1140 = vmatpush1.bf16.msra.mxu0 %v912
  %1141 = vmatprep.subr.bf16.mxu0 0
  %1142 = vmatpush1.bf16.msra.mxu0 %v913
  %1143 = vmatprep.subr.bf16.mxu0 0
  %1144 = vmatpush1.bf16.msra.mxu0 %v914
  %1145 = vmatprep.subr.bf16.mxu0 0
  %1146 = vmatpush1.bf16.msra.mxu0 %v915
  %1147 = vmatprep.subr.bf16.mxu0 0
  %1148 = vmatpush1.bf16.msra.mxu0 %v916
  %1149 = vmatprep.subr.bf16.mxu0 0
  %1150 = vmatpush1.bf16.msra.mxu0 %v917
  %1151 = vmatprep.subr.bf16.mxu0 0
  %1152 = vmatpush1.bf16.msra.mxu0 %v918
  %1153 = vmatprep.subr.bf16.mxu0 0
  %1154 = vmatpush1.bf16.msra.mxu0 %v919
  %1155 = vmatprep.subr.bf16.mxu0 0
  %1156 = vmatpush1.bf16.msra.mxu0 %v920
  %1157 = vmatprep.subr.bf16.mxu0 0
  %1158 = vmatpush1.bf16.msra.mxu0 %v921
  %1159 = vmatprep.subr.bf16.mxu0 0
  %1160 = vmatpush1.bf16.msra.mxu0 %v922
  %1161 = vmatprep.subr.bf16.mxu0 0
  %1162 = vmatpush1.bf16.msra.mxu0 %v923
  %1163 = vmatprep.subr.bf16.mxu0 0
  %1164 = vmatpush1.bf16.msra.mxu0 %v924
  %1165 = vmatprep.subr.bf16.mxu0 0
  %1166 = vmatpush1.bf16.msra.mxu0 %v925
  %1167 = vmatprep.mubr.bf16.mxu0 %v465
  %1168 = vmatmul.mubr.bf16.gmra.mrb[0].mxu0 %v464
  %v1169 = vpop.f32.mrb[0].mxu0
  %v1170 = vadd.f32 %v1073, %v1169
  %v1171 = vpop.f32.mrb[0].mxu0
  %v1172 = vpop.f32.mrb[0].mxu0
  %v1173 = vadd.f32 %v1076, %v1172
  %v1174 = vpop.f32.mrb[0].mxu0
  %1175 = vmatprep.mubr.bf16.mxu0 %v474
  %1176 = vmatmul.mubr.bf16.gmra.mrb[0].mxu0 %v473
  %v1177 = vpop.f32.mrb[0].mxu0
  %v1178 = vadd.f32 %v1081, %v1177
  %v1179 = vpop.f32.mrb[0].mxu0
  %v1180 = vpop.f32.mrb[0].mxu0
  %v1181 = vadd.f32 %v1084, %v1180
  %v1182 = vpop.f32.mrb[0].mxu0
  %1183 = vmatprep.mubr.bf16.mxu0 %v483
  %1184 = vmatmul.mubr.bf16.gmra.mrb[0].mxu0 %v482
  %v1185 = vpop.f32.mrb[0].mxu0
  %v1186 = vadd.f32 %v1089, %v1185
  %v1187 = vpop.f32.mrb[0].mxu0
  %v1188 = vpop.f32.mrb[0].mxu0
  %v1189 = vadd.f32 %v1092, %v1188
  %v1190 = vpop.f32.mrb[0].mxu0
  %1191 = vmatprep.mubr.bf16.mxu0 %v492
  %1192 = vmatmul.mubr.bf16.gmra.mrb[0].mxu0 %v491
  %v1193 = vpop.f32.mrb[0].mxu0
  %v1194 = vadd.f32 %v1097, %v1193
  %v1195 = vpop.f32.mrb[0].mxu0
  %v1196 = vpop.f32.mrb[0].mxu0
  %v1197 = vadd.f32 %v1100, %v1196
  %v1198 = vpop.f32.mrb[0].mxu0
  %1199 = vmatprep.mubr.bf16.mxu0 %v501
  %1200 = vmatmul.mubr.bf16.gmra.mrb[0].mxu0 %v500
  %v1201 = vpop.f32.mrb[0].mxu0
  %v1202 = vadd.f32 %v1105, %v1201
  %v1203 = vpop.f32.mrb[0].mxu0
  %v1204 = vpop.f32.mrb[0].mxu0
  %v1205 = vadd.f32 %v1108, %v1204
  %v1206 = vpop.f32.mrb[0].mxu0
  %1207 = vmatprep.mubr.bf16.mxu0 %v510
  %1208 = vmatmul.mubr.bf16.gmra.mrb[0].mxu0 %v509
  %v1209 = vpop.f32.mrb[0].mxu0
  %v1210 = vadd.f32 %v1113, %v1209
  %v1211 = vpop.f32.mrb[0].mxu0
  %v1212 = vpop.f32.mrb[0].mxu0
  %v1213 = vadd.f32 %v1116, %v1212
  %v1214 = vpop.f32.mrb[0].mxu0
  %1215 = vmatprep.mubr.bf16.mxu0 %v519
  %1216 = vmatmul.mubr.bf16.gmra.mrb[0].mxu0 %v518
  %v1217 = vpop.f32.mrb[0].mxu0
  %v1218 = vadd.f32 %v1121, %v1217
  %v1219 = vpop.f32.mrb[0].mxu0
  %v1220 = vpop.f32.mrb[0].mxu0
  %v1221 = vadd.f32 %v1124, %v1220
  %v1222 = vpop.f32.mrb[0].mxu0
  %1223 = vmatprep.mubr.bf16.mxu0 %v528
  %1224 = vmatmul.mubr.bf16.gmra.mrb[0].mxu0 %v527
  %v1225 = vpop.f32.mrb[0].mxu0
  %v1226 = vadd.f32 %v1129, %v1225
  %v1227 = vpop.f32.mrb[0].mxu0
  %v1228 = vpop.f32.mrb[0].mxu0
  %v1229 = vadd.f32 %v1132, %v1228
  %v1230 = vpop.f32.mrb[0].mxu0
  %1231 = vdwg.mxu0
  %1232 = vmatprep.subr.bf16.mxu0 0
  %1233 = vmatpush1.bf16.msra.mxu0 %v926
  %1234 = vmatprep.subr.bf16.mxu0 0
  %1235 = vmatpush1.bf16.msra.mxu0 %v927
  %1236 = vmatprep.subr.bf16.mxu0 0
  %1237 = vmatpush1.bf16.msra.mxu0 %v928
  %1238 = vmatprep.subr.bf16.mxu0 0
  %1239 = vmatpush1.bf16.msra.mxu0 %v929
  %1240 = vmatprep.subr.bf16.mxu0 0
  %1241 = vmatpush1.bf16.msra.mxu0 %v930
  %1242 = vmatprep.subr.bf16.mxu0 0
  %1243 = vmatpush1.bf16.msra.mxu0 %v931
  %1244 = vmatprep.subr.bf16.mxu0 0
  %1245 = vmatpush1.bf16.msra.mxu0 %v932
  %1246 = vmatprep.subr.bf16.mxu0 0
  %1247 = vmatpush1.bf16.msra.mxu0 %v933
  %1248 = vmatprep.subr.bf16.mxu0 0
  %1249 = vmatpush1.bf16.msra.mxu0 %v934
  %1250 = vmatprep.subr.bf16.mxu0 0
  %1251 = vmatpush1.bf16.msra.mxu0 %v935
  %1252 = vmatprep.subr.bf16.mxu0 0
  %1253 = vmatpush1.bf16.msra.mxu0 %v936
  %1254 = vmatprep.subr.bf16.mxu0 0
  %1255 = vmatpush1.bf16.msra.mxu0 %v937
  %1256 = vmatprep.subr.bf16.mxu0 0
  %1257 = vmatpush1.bf16.msra.mxu0 %v938
  %1258 = vmatprep.subr.bf16.mxu0 0
  %1259 = vmatpush1.bf16.msra.mxu0 %v939
  %1260 = vmatprep.subr.bf16.mxu0 0
  %1261 = vmatpush1.bf16.msra.mxu0 %v940
  %1262 = vmatprep.subr.bf16.mxu0 0
  %1263 = vmatpush1.bf16.msra.mxu0 %v941
  %1264 = vmatprep.mubr.bf16.mxu0 %v467
  %1265 = vmatmul.mubr.bf16.gmra.mrb[0].mxu0 %v466
  %v1266 = vpop.f32.mrb[0].mxu0
  %v1267 = vadd.f32 %v1170, %v1266
  %v1268 = vpop.f32.mrb[0].mxu0
  %v1269 = vpop.f32.mrb[0].mxu0
  %v1270 = vadd.f32 %v1173, %v1269
  %v1271 = vpop.f32.mrb[0].mxu0
  %1272 = vmatprep.mubr.bf16.mxu0 %v476
  %1273 = vmatmul.mubr.bf16.gmra.mrb[0].mxu0 %v475
  %v1274 = vpop.f32.mrb[0].mxu0
  %v1275 = vadd.f32 %v1178, %v1274
  %v1276 = vpop.f32.mrb[0].mxu0
  %v1277 = vpop.f32.mrb[0].mxu0
  %v1278 = vadd.f32 %v1181, %v1277
  %v1279 = vpop.f32.mrb[0].mxu0
  %1280 = vmatprep.mubr.bf16.mxu0 %v485
  %1281 = vmatmul.mubr.bf16.gmra.mrb[0].mxu0 %v484
  %v1282 = vpop.f32.mrb[0].mxu0
  %v1283 = vadd.f32 %v1186, %v1282
  %v1284 = vpop.f32.mrb[0].mxu0
  %v1285 = vpop.f32.mrb[0].mxu0
  %v1286 = vadd.f32 %v1189, %v1285
  %v1287 = vpop.f32.mrb[0].mxu0
  %1288 = vmatprep.mubr.bf16.mxu0 %v494
  %1289 = vmatmul.mubr.bf16.gmra.mrb[0].mxu0 %v493
  %v1290 = vpop.f32.mrb[0].mxu0
  %v1291 = vadd.f32 %v1194, %v1290
  %v1292 = vpop.f32.mrb[0].mxu0
  %v1293 = vpop.f32.mrb[0].mxu0
  %v1294 = vadd.f32 %v1197, %v1293
  %v1295 = vpop.f32.mrb[0].mxu0
  %1296 = vmatprep.mubr.bf16.mxu0 %v503
  %1297 = vmatmul.mubr.bf16.gmra.mrb[0].mxu0 %v502
  %v1298 = vpop.f32.mrb[0].mxu0
  %v1299 = vadd.f32 %v1202, %v1298
  %v1300 = vpop.f32.mrb[0].mxu0
  %v1301 = vpop.f32.mrb[0].mxu0
  %v1302 = vadd.f32 %v1205, %v1301
  %v1303 = vpop.f32.mrb[0].mxu0
  %1304 = vmatprep.mubr.bf16.mxu0 %v512
  %1305 = vmatmul.mubr.bf16.gmra.mrb[0].mxu0 %v511
  %v1306 = vpop.f32.mrb[0].mxu0
  %v1307 = vadd.f32 %v1210, %v1306
  %v1308 = vpop.f32.mrb[0].mxu0
  %v1309 = vpop.f32.mrb[0].mxu0
  %v1310 = vadd.f32 %v1213, %v1309
  %v1311 = vpop.f32.mrb[0].mxu0
  %1312 = vmatprep.mubr.bf16.mxu0 %v521
  %1313 = vmatmul.mubr.bf16.gmra.mrb[0].mxu0 %v520
  %v1314 = vpop.f32.mrb[0].mxu0
  %v1315 = vadd.f32 %v1218, %v1314
  %v1316 = vpop.f32.mrb[0].mxu0
  %v1317 = vpop.f32.mrb[0].mxu0
  %v1318 = vadd.f32 %v1221, %v1317
  %v1319 = vpop.f32.mrb[0].mxu0
  %1320 = vmatprep.mubr.bf16.mxu0 %v530
  %1321 = vmatmul.mubr.bf16.gmra.mrb[0].mxu0 %v529
  %v1322 = vpop.f32.mrb[0].mxu0
  %v1323 = vadd.f32 %v1226, %v1322
  %v1324 = vpop.f32.mrb[0].mxu0
  %v1325 = vpop.f32.mrb[0].mxu0
  %v1326 = vadd.f32 %v1229, %v1325
  %v1327 = vpop.f32.mrb[0].mxu0
  %1328 = vdwg.mxu0
  %1329 = vmatprep.subr.bf16.mxu0 0
  %1330 = vmatpush1.bf16.msra.mxu0 %v942
  %1331 = vmatprep.subr.bf16.mxu0 0
  %1332 = vmatpush1.bf16.msra.mxu0 %v943
  %1333 = vmatprep.subr.bf16.mxu0 0
  %1334 = vmatpush1.bf16.msra.mxu0 %v944
  %1335 = vmatprep.subr.bf16.mxu0 0
  %1336 = vmatpush1.bf16.msra.mxu0 %v945
  %1337 = vmatprep.subr.bf16.mxu0 0
  %1338 = vmatpush1.bf16.msra.mxu0 %v946
  %1339 = vmatprep.subr.bf16.mxu0 0
  %1340 = vmatpush1.bf16.msra.mxu0 %v947
  %1341 = vmatprep.subr.bf16.mxu0 0
  %1342 = vmatpush1.bf16.msra.mxu0 %v948
  %1343 = vmatprep.subr.bf16.mxu0 0
  %1344 = vmatpush1.bf16.msra.mxu0 %v949
  %1345 = vmatprep.subr.bf16.mxu0 0
  %1346 = vmatpush1.bf16.msra.mxu0 %v950
  %1347 = vmatprep.subr.bf16.mxu0 0
  %1348 = vmatpush1.bf16.msra.mxu0 %v951
  %1349 = vmatprep.subr.bf16.mxu0 0
  %1350 = vmatpush1.bf16.msra.mxu0 %v952
  %1351 = vmatprep.subr.bf16.mxu0 0
  %1352 = vmatpush1.bf16.msra.mxu0 %v953
  %1353 = vmatprep.subr.bf16.mxu0 0
  %1354 = vmatpush1.bf16.msra.mxu0 %v954
  %1355 = vmatprep.subr.bf16.mxu0 0
  %1356 = vmatpush1.bf16.msra.mxu0 %v955
  %1357 = vmatprep.subr.bf16.mxu0 0
  %1358 = vmatpush1.bf16.msra.mxu0 %v956
  %1359 = vmatprep.subr.bf16.mxu0 0
  %1360 = vmatpush1.bf16.msra.mxu0 %v957
  %1361 = vmatprep.mubr.bf16.mxu0 %v469
  %1362 = vmatmul.mubr.bf16.gmra.mrb[0].mxu0 %v468
  %v1363 = vpop.f32.mrb[0].mxu0
  %v1364 = vadd.f32 %v1267, %v1363
  %v1365 = vpop.f32.mrb[0].mxu0
  %v1366 = vpop.f32.mrb[0].mxu0
  %v1367 = vadd.f32 %v1270, %v1366
  %v1368 = vpop.f32.mrb[0].mxu0
  %1369 = vmatprep.mubr.bf16.mxu0 %v478
  %1370 = vmatmul.mubr.bf16.gmra.mrb[0].mxu0 %v477
  %v1371 = vpop.f32.mrb[0].mxu0
  %v1372 = vadd.f32 %v1275, %v1371
  %v1373 = vpop.f32.mrb[0].mxu0
  %v1374 = vpop.f32.mrb[0].mxu0
  %v1375 = vadd.f32 %v1278, %v1374
  %v1376 = vpop.f32.mrb[0].mxu0
  %1377 = vmatprep.mubr.bf16.mxu0 %v487
  %1378 = vmatmul.mubr.bf16.gmra.mrb[0].mxu0 %v486
  %v1379 = vpop.f32.mrb[0].mxu0
  %v1380 = vadd.f32 %v1283, %v1379
  %v1381 = vpop.f32.mrb[0].mxu0
  %v1382 = vpop.f32.mrb[0].mxu0
  %v1383 = vadd.f32 %v1286, %v1382
  %v1384 = vpop.f32.mrb[0].mxu0
  %1385 = vmatprep.mubr.bf16.mxu0 %v496
  %1386 = vmatmul.mubr.bf16.gmra.mrb[0].mxu0 %v495
  %v1387 = vpop.f32.mrb[0].mxu0
  %v1388 = vadd.f32 %v1291, %v1387
  %v1389 = vpop.f32.mrb[0].mxu0
  %v1390 = vpop.f32.mrb[0].mxu0
  %v1391 = vadd.f32 %v1294, %v1390
  %v1392 = vpop.f32.mrb[0].mxu0
  %1393 = vmatprep.mubr.bf16.mxu0 %v505
  %1394 = vmatmul.mubr.bf16.gmra.mrb[0].mxu0 %v504
  %v1395 = vpop.f32.mrb[0].mxu0
  %v1396 = vadd.f32 %v1299, %v1395
  %v1397 = vpop.f32.mrb[0].mxu0
  %v1398 = vpop.f32.mrb[0].mxu0
  %v1399 = vadd.f32 %v1302, %v1398
  %v1400 = vpop.f32.mrb[0].mxu0
  %1401 = vmatprep.mubr.bf16.mxu0 %v514
  %1402 = vmatmul.mubr.bf16.gmra.mrb[0].mxu0 %v513
  %v1403 = vpop.f32.mrb[0].mxu0
  %v1404 = vadd.f32 %v1307, %v1403
  %v1405 = vpop.f32.mrb[0].mxu0
  %v1406 = vpop.f32.mrb[0].mxu0
  %v1407 = vadd.f32 %v1310, %v1406
  %v1408 = vpop.f32.mrb[0].mxu0
  %1409 = vmatprep.mubr.bf16.mxu0 %v523
  %1410 = vmatmul.mubr.bf16.gmra.mrb[0].mxu0 %v522
  %v1411 = vpop.f32.mrb[0].mxu0
  %v1412 = vadd.f32 %v1315, %v1411
  %v1413 = vpop.f32.mrb[0].mxu0
  %v1414 = vpop.f32.mrb[0].mxu0
  %v1415 = vadd.f32 %v1318, %v1414
  %v1416 = vpop.f32.mrb[0].mxu0
  %1417 = vmatprep.mubr.bf16.mxu0 %v532
  %1418 = vmatmul.mubr.bf16.gmra.mrb[0].mxu0 %v531
  %v1419 = vpop.f32.mrb[0].mxu0
  %v1420 = vadd.f32 %v1323, %v1419
  %v1421 = vpop.f32.mrb[0].mxu0
  %v1422 = vpop.f32.mrb[0].mxu0
  %v1423 = vadd.f32 %v1326, %v1422
  %v1424 = vpop.f32.mrb[0].mxu0
  %1425 = vdwg.mxu0
  %1426 = vmatprep.subr.bf16.mxu0 0
  %1427 = vmatpush1.bf16.msra.mxu0 %v958
  %1428 = vmatprep.subr.bf16.mxu0 0
  %1429 = vmatpush1.bf16.msra.mxu0 %v959
  %1430 = vmatprep.subr.bf16.mxu0 0
  %1431 = vmatpush1.bf16.msra.mxu0 %v960
  %1432 = vmatprep.subr.bf16.mxu0 0
  %1433 = vmatpush1.bf16.msra.mxu0 %v961
  %1434 = vmatprep.subr.bf16.mxu0 0
  %1435 = vmatpush1.bf16.msra.mxu0 %v962
  %1436 = vmatprep.subr.bf16.mxu0 0
  %1437 = vmatpush1.bf16.msra.mxu0 %v963
  %1438 = vmatprep.subr.bf16.mxu0 0
  %1439 = vmatpush1.bf16.msra.mxu0 %v964
  %1440 = vmatprep.subr.bf16.mxu0 0
  %1441 = vmatpush1.bf16.msra.mxu0 %v965
  %1442 = vmatprep.subr.bf16.mxu0 0
  %1443 = vmatpush1.bf16.msra.mxu0 0
  %1444 = vmatprep.subr.bf16.mxu0 0
  %1445 = vmatpush1.bf16.msra.mxu0 0
  %1446 = vmatprep.subr.bf16.mxu0 0
  %1447 = vmatpush1.bf16.msra.mxu0 0
  %1448 = vmatprep.subr.bf16.mxu0 0
  %1449 = vmatpush1.bf16.msra.mxu0 0
  %1450 = vmatprep.subr.bf16.mxu0 0
  %1451 = vmatpush1.bf16.msra.mxu0 0
  %1452 = vmatprep.subr.bf16.mxu0 0
  %1453 = vmatpush1.bf16.msra.mxu0 0
  %1454 = vmatprep.subr.bf16.mxu0 0
  %1455 = vmatpush1.bf16.msra.mxu0 0
  %1456 = vmatprep.subr.bf16.mxu0 0
  %1457 = vmatpush1.bf16.msra.mxu0 0
  %1458 = vmatprep.mubr.bf16.mxu0 0
  %1459 = vmatmul.mubr.bf16.gmra.mrb[0].mxu0 %v470
  %v1460 = vpop.f32.mrb[0].mxu0
  %v1461 = vadd.f32 %v1364, %v1460
  %v1462 = vpop.f32.mrb[0].mxu0
  %v1463 = vpop.f32.mrb[0].mxu0
  %v1464 = vadd.f32 %v1367, %v1463
  %v1465 = vpop.f32.mrb[0].mxu0
  %1466 = vmatprep.mubr.bf16.mxu0 0
  %1467 = vmatmul.mubr.bf16.gmra.mrb[0].mxu0 %v479
  %v1468 = vpop.f32.mrb[0].mxu0
  %v1469 = vadd.f32 %v1372, %v1468
  %v1470 = vpop.f32.mrb[0].mxu0
  %v1471 = vpop.f32.mrb[0].mxu0
  %v1472 = vadd.f32 %v1375, %v1471
  %v1473 = vpop.f32.mrb[0].mxu0
  %1474 = vmatprep.mubr.bf16.mxu0 0
  %1475 = vmatmul.mubr.bf16.gmra.mrb[0].mxu0 %v488
  %v1476 = vpop.f32.mrb[0].mxu0
  %v1477 = vadd.f32 %v1380, %v1476
  %v1478 = vpop.f32.mrb[0].mxu0
  %v1479 = vpop.f32.mrb[0].mxu0
  %v1480 = vadd.f32 %v1383, %v1479
  %v1481 = vpop.f32.mrb[0].mxu0
  %1482 = vmatprep.mubr.bf16.mxu0 0
  %1483 = vmatmul.mubr.bf16.gmra.mrb[0].mxu0 %v497
  %v1484 = vpop.f32.mrb[0].mxu0
  %v1485 = vadd.f32 %v1388, %v1484
  %v1486 = vpop.f32.mrb[0].mxu0
  %v1487 = vpop.f32.mrb[0].mxu0
  %v1488 = vadd.f32 %v1391, %v1487
  %v1489 = vpop.f32.mrb[0].mxu0
  %1490 = vmatprep.mubr.bf16.mxu0 0
  %1491 = vmatmul.mubr.bf16.gmra.mrb[0].mxu0 %v506
  %v1492 = vpop.f32.mrb[0].mxu0
  %v1493 = vadd.f32 %v1396, %v1492
  %v1494 = vpop.f32.mrb[0].mxu0
  %v1495 = vpop.f32.mrb[0].mxu0
  %v1496 = vadd.f32 %v1399, %v1495
  %v1497 = vpop.f32.mrb[0].mxu0
  %1498 = vmatprep.mubr.bf16.mxu0 0
  %1499 = vmatmul.mubr.bf16.gmra.mrb[0].mxu0 %v515
  %v1500 = vpop.f32.mrb[0].mxu0
  %v1501 = vadd.f32 %v1404, %v1500
  %v1502 = vpop.f32.mrb[0].mxu0
  %v1503 = vpop.f32.mrb[0].mxu0
  %v1504 = vadd.f32 %v1407, %v1503
  %v1505 = vpop.f32.mrb[0].mxu0
  %1506 = vmatprep.mubr.bf16.mxu0 0
  %1507 = vmatmul.mubr.bf16.gmra.mrb[0].mxu0 %v524
  %v1508 = vpop.f32.mrb[0].mxu0
  %v1509 = vadd.f32 %v1412, %v1508
  %v1510 = vpop.f32.mrb[0].mxu0
  %v1511 = vpop.f32.mrb[0].mxu0
  %v1512 = vadd.f32 %v1415, %v1511
  %v1513 = vpop.f32.mrb[0].mxu0
  %1514 = vmatprep.mubr.bf16.mxu0 0
  %1515 = vmatmul.mubr.bf16.gmra.mrb[0].mxu0 %v533
  %v1516 = vpop.f32.mrb[0].mxu0
  %v1517 = vadd.f32 %v1420, %v1516
  %v1518 = vpop.f32.mrb[0].mxu0
  %v1519 = vpop.f32.mrb[0].mxu0
  %v1520 = vadd.f32 %v1423, %v1519
  %v1521 = vpop.f32.mrb[0].mxu0
  %1522 = vdwg.mxu0
  %v1523 = vpack.c.bf16 %v1464, %v1461
  %v1524 = vpack.c.bf16 %v1472, %v1469
  %v1525 = vpack.c.bf16 %v1480, %v1477
  %v1526 = vpack.c.bf16 %v1488, %v1485
  %v1527 = vpack.c.bf16 %v1496, %v1493
  %v1528 = vpack.c.bf16 %v1504, %v1501
  %v1529 = vpack.c.bf16 %v1512, %v1509
  %v1530 = vpack.c.bf16 %v1520, %v1517
  %v1539 = vunpack.c.l.b16 %v1523
  %v1540 = vunpack.c.h.b16 %v1523
  %v1541 = vunpack.c.l.b16 %v1524
  %v1542 = vunpack.c.h.b16 %v1524
  %v1543 = vunpack.c.l.b16 %v1525
  %v1544 = vunpack.c.h.b16 %v1525
  %v1545 = vunpack.c.l.b16 %v1526
  %v1546 = vunpack.c.h.b16 %v1526
  %v1547 = vunpack.c.l.b16 %v1527
  %v1548 = vunpack.c.h.b16 %v1527
  %v1549 = vunpack.c.l.b16 %v1528
  %v1550 = vunpack.c.h.b16 %v1528
  %v1551 = vunpack.c.l.b16 %v1529
  %v1552 = vunpack.c.h.b16 %v1529
  %v1553 = vunpack.c.l.b16 %v1530
  %v1554 = vunpack.c.h.b16 %v1530
  %v1555 = vpack.c.b16 %v1539, %v1539
  %v1556 = vpack.c.b16 %v1540, %v1540
  %v1557 = vpack.c.b16 %v1541, %v1541
  %v1558 = vpack.c.b16 %v1542, %v1542
  %v1559 = vpack.c.b16 %v1543, %v1543
  %v1560 = vpack.c.b16 %v1544, %v1544
  %v1561 = vpack.c.b16 %v1545, %v1545
  %v1562 = vpack.c.b16 %v1546, %v1546
  %v1563 = vpack.c.b16 %v1547, %v1547
  %v1564 = vpack.c.b16 %v1548, %v1548
  %v1565 = vpack.c.b16 %v1549, %v1549
  %v1566 = vpack.c.b16 %v1550, %v1550
  %v1567 = vpack.c.b16 %v1551, %v1551
  %v1568 = vpack.c.b16 %v1552, %v1552
  %v1569 = vpack.c.b16 %v1553, %v1553
  %v1570 = vpack.c.b16 %v1554, %v1554
  %1587 = vst [vmem:[%s2] sm:$0xf] %v1555
  %1588 = vst [vmem:[%s2 + $0x4] sm:$0xf] %v1556
  %1589 = vst [vmem:[%s2 + $0x8] sm:$0xf] %v1557
  %1590 = vst [vmem:[%s2 + $0xc] sm:$0xf] %v1558
  %1591 = vst [vmem:[%s2 + $0x10] sm:$0xf] %v1559
  %1592 = vst [vmem:[%s2 + $0x14] sm:$0xf] %v1560
  %1593 = vst [vmem:[%s2 + $0x18] sm:$0xf] %v1561
  %1594 = vst [vmem:[%s2 + $0x1c] sm:$0xf] %v1562
  %1595 = vst [vmem:[%s2 + $0x20] sm:$0xf] %v1563
  %1596 = vst [vmem:[%s2 + $0x24] sm:$0xf] %v1564
  %1597 = vst [vmem:[%s2 + $0x28] sm:$0xf] %v1565
  %1598 = vst [vmem:[%s2 + $0x2c] sm:$0xf] %v1566
  %1599 = vst [vmem:[%s2 + $0x30] sm:$0xf] %v1567
  %1600 = vst [vmem:[%s2 + $0x34] sm:$0xf] %v1568
  %1601 = vst [vmem:[%s2 + $0x38] sm:$0xf] %v1569
  %1602 = vst [vmem:[%s2 + $0x3c] sm:$0xf] %v1570
  %v1603 = vadd.f32 %v1461, %v1464
  %v1604 = vadd.f32 %v1603, %v1469
  %v1605 = vadd.f32 %v1604, %v1472
  %v1606 = vadd.f32 %v1605, %v1477
  %v1607 = vadd.f32 %v1606, %v1480
  %v1608 = vadd.f32 %v1607, %v1485
  %v1609 = vadd.f32 %v1608, %v1488
  %v1610 = vadd.f32 %v1609, %v1493
  %v1611 = vadd.f32 %v1610, %v1496
  %v1612 = vadd.f32 %v1611, %v1501
  %v1613 = vadd.f32 %v1612, %v1504
  %v1614 = vadd.f32 %v1613, %v1509
  %v1615 = vadd.f32 %v1614, %v1512
  %v1616 = vadd.f32 %v1615, %v1517
  %v1617 = vadd.f32 %v1616, %v1520
  %v1618 = vrot.slane %v1617, 4
  %v1619 = vadd.f32 %v1617, %v1618
  %v1620 = vrot.slane %v1619, 2
  %v1621 = vadd.f32 %v1619, %v1620
  %v1622 = vrot.slane %v1621, 1
  %v1623 = vadd.f32 %v1621, %v1622
  %v1624 = vmul.f32 %v1461, %v1461
  %v1625 = vmul.f32 %v1464, %v1464
  %v1626 = vmul.f32 %v1469, %v1469
  %v1627 = vmul.f32 %v1472, %v1472
  %v1628 = vmul.f32 %v1477, %v1477
  %v1629 = vmul.f32 %v1480, %v1480
  %v1630 = vmul.f32 %v1485, %v1485
  %v1631 = vmul.f32 %v1488, %v1488
  %v1632 = vmul.f32 %v1493, %v1493
  %v1633 = vmul.f32 %v1496, %v1496
  %v1634 = vmul.f32 %v1501, %v1501
  %v1635 = vmul.f32 %v1504, %v1504
  %v1636 = vmul.f32 %v1509, %v1509
  %v1637 = vmul.f32 %v1512, %v1512
  %v1638 = vmul.f32 %v1517, %v1517
  %v1639 = vmul.f32 %v1520, %v1520
  %v1640 = vadd.f32 %v1624, %v1625
  %v1641 = vadd.f32 %v1640, %v1626
  %v1642 = vadd.f32 %v1641, %v1627
  %v1643 = vadd.f32 %v1642, %v1628
  %v1644 = vadd.f32 %v1643, %v1629
  %v1645 = vadd.f32 %v1644, %v1630
  %v1646 = vadd.f32 %v1645, %v1631
  %v1647 = vadd.f32 %v1646, %v1632
  %v1648 = vadd.f32 %v1647, %v1633
  %v1649 = vadd.f32 %v1648, %v1634
  %v1650 = vadd.f32 %v1649, %v1635
  %v1651 = vadd.f32 %v1650, %v1636
  %v1652 = vadd.f32 %v1651, %v1637
  %v1653 = vadd.f32 %v1652, %v1638
  %v1654 = vadd.f32 %v1653, %v1639
  %v1655 = vrot.slane %v1654, 4
  %v1656 = vadd.f32 %v1654, %v1655
  %v1657 = vrot.slane %v1656, 2
  %v1658 = vadd.f32 %v1656, %v1657
  %v1659 = vrot.slane %v1658, 1
  %v1660 = vadd.f32 %v1658, %v1659
  %v1661 = vlaneseq
  %v1662 = vshrl.u32 %v1661, 7
  %vm1663 = vcmp.lt.s32.totalorder %v1662, 4
  %v1664 = vsel %vm1663, %v1623, %v1660
  %1665 = vst [vmem:[%s3] sm:$0xff] %v1664
  // Predicated region
  $region10: #{resnet_forward.15} parent=0 // pred_check
    _
  $region11: #{resnet_forward.15} parent=0 // pred_check_branch
    %1667 = sbr.rel (0) target = $region13
  $region12: #{resnet_forward.15} parent=0 // pred_region
    _
  $region13: #{resnet_forward.15} parent=0 // pred_fallthru
    _
  // Predicated region
  $region14: #{resnet_forward.15} parent=0 // pred_check
    _
  $region15: #{resnet_forward.15} parent=0 // pred_check_branch
    %1669 = sbr.rel (0) target = $region17
  $region16: #{resnet_forward.15} parent=0 // pred_region
    _
  $region17: #{resnet_forward.15} parent=0 // pred_fallthru
    _
  // Predicated region
  $region18: #{resnet_forward.15} parent=0 // pred_check
    _
  $region19: #{resnet_forward.15} parent=0 // pred_check_branch
    %1671 = sbr.rel (0) target = $region21
  $region20: #{resnet_forward.15} parent=0 // pred_region
    _
  $region21: #{resnet_forward.15} parent=0 // pred_fallthru
    _
  // Predicated region
  $region22: #{resnet_forward.15} parent=0 // pred_check
    _
  $region23: #{resnet_forward.15} parent=0 // pred_check_branch
    %1673 = sbr.rel (0) target = $region25
  $region24: #{resnet_forward.15} parent=0 // pred_region
    _
  $region25: #{resnet_forward.15} parent=0 // pred_fallthru
    _

</llo_original>
